<compile_context>
chip_gen: v7x
topology: tpu7x:2x2x1
jax: 0.10.0
libtpu: 0.0.40
codegen_flags: <defaults>
</compile_context>

<pallas_src>
import functools

import jax
import jax.numpy as jnp
import numpy as np
from jax.experimental import pallas as pl
from jax.experimental.pallas import tpu as pltpu

VMEM_SPEC = pl.BlockSpec(memory_space=pltpu.MemorySpace.VMEM)


# ------------------------------ slab layouts -------------------------------- #

def _round8(n):
    return ((n + 7) // 8) * 8


def _wmat_layout(input_size, hidden, num_layers, dim_ff):
    """Row layout for the packed weight-matrix slab (rows x 128 lanes)."""
    width = max(128, 3 * hidden, dim_ff, 2 * hidden * num_layers)
    layout, r = {}, 0

    def add(name, nrows, ncols):
        nonlocal r
        layout[name] = (r, nrows, ncols)
        r += _round8(nrows)

    add("embed", input_size, hidden)
    for l in range(num_layers):
        add(f"enc{l}_wqkv", hidden, 3 * hidden)
        add(f"enc{l}_wo", hidden, hidden)
        add(f"enc{l}_w1", hidden, dim_ff)
        add(f"enc{l}_w2", dim_ff, hidden)
    # all decoder cross-attn K/V weights concatenated -> one hoisted matmul
    add("dec_ckv", hidden, 2 * hidden * num_layers)
    for l in range(num_layers):
        add(f"dec{l}_swqkv", hidden, 3 * hidden)
        add(f"dec{l}_swo", hidden, hidden)
        add(f"dec{l}_cwq", hidden, hidden)
        add(f"dec{l}_cwo", hidden, hidden)
        add(f"dec{l}_w1", hidden, dim_ff)
        add(f"dec{l}_w2", dim_ff, hidden)
    return layout, r, width


def _vec_layout(hidden, num_layers, dim_ff, max_seq_len):
    """Row layout for the packed vector slab (biases / LN params / pos table)."""
    width = max(128, 3 * hidden, dim_ff, 2 * hidden * num_layers)
    layout, r = {}, 0

    def add(name, nrows, ncols):
        nonlocal r
        layout[name] = (r, nrows, ncols)
        r += nrows

    add("pos", max_seq_len, hidden)        # pos_table + embedding bias, pre-summed
    add("out_w", 1, hidden)
    add("out_b", 1, 1)
    add("ckv_b", 1, 2 * hidden * num_layers)
    for l in range(num_layers):
        for nm, nc in (("bqkv", 3 * hidden), ("bo", hidden), ("b1", dim_ff),
                       ("b2", hidden), ("g1", hidden), ("beta1", hidden),
                       ("g2", hidden), ("beta2", hidden)):
            add(f"enc{l}_{nm}", 1, nc)
    for l in range(num_layers):
        for nm, nc in (("sbqkv", 3 * hidden), ("sbo", hidden), ("cbq", hidden),
                       ("cbo", hidden), ("b1", dim_ff), ("b2", hidden),
                       ("g1", hidden), ("beta1", hidden), ("g2", hidden),
                       ("beta2", hidden), ("g3", hidden), ("beta3", hidden)):
            add(f"dec{l}_{nm}", 1, nc)
    return layout, r, width


# ------------------------------ fused kernel -------------------------------- #

def _transformer_kernel(x_ref, w_ref, v_ref, cc_ref, o_ref, *,
                        wlayout, vlayout, seq, batch, hidden, nhead, num_layers):
    sb = seq * batch
    hd = hidden // nhead
    scale = 1.0 / float(np.sqrt(hd))
    eps = 1e-5
    f32 = jnp.float32

    def W(name):
        r0, nr, nc = wlayout[name]
        return w_ref[r0:r0 + nr, 0:nc]

    def V(name):
        r0, nr, nc = vlayout[name]
        return v_ref[r0:r0 + nr, 0:nc]

    # Call-time constants (one tiny DMA): per-head-stacked additive
    # batch-separation mask and the last-token one-hot selector.
    bias_stacked = cc_ref[0:nhead * sb, :]                   # (nhead*sb, sb)
    sel_last = cc_ref[nhead * sb:nhead * sb + batch, :]      # (batch, sb)

    # Per-head lane masks (built once, reused by every attention block).
    lane = jax.lax.broadcasted_iota(jnp.int32, (1, hidden), 1)
    head_masks = [jnp.where((lane >= h * hd) & (lane < (h + 1) * hd), 1.0, 0.0)
                  for h in range(nhead)]

    def layer_norm(z, g, b):
        mu = jnp.mean(z, axis=-1, keepdims=True)
        ms = jnp.mean(z * z, axis=-1, keepdims=True)          # E[z^2] - mu^2
        return (z - mu) * jax.lax.rsqrt(ms - mu * mu + eps) * g + b

    def attention(q, k, v, wo, bo):
        # Heads stacked along sublanes: row block h of q_blk holds q masked to
        # head h's lanes, so q_blk @ k^T yields per-head scores and ONE
        # max/exp/sum/reciprocal pass serves all heads at once.
        q = q * scale
        q_blk = jnp.concatenate([q * head_masks[h] for h in range(nhead)], axis=0)
        s = jax.lax.dot_general(q_blk, k, (((1,), (1,)), ((), ())),
                                preferred_element_type=f32)   # (nhead*sb, sb)
        s = s + bias_stacked
        s = s - jnp.max(s, axis=-1, keepdims=True)
        p = jnp.exp(s)
        p = p * pl.reciprocal(jnp.sum(p, axis=-1, keepdims=True), approx=True)
        ctx = jnp.dot(p, v, preferred_element_type=f32)       # (nhead*sb, hidden)
        # Head merge folded into the output projection; accumulator initialized
        # with the head-0 contribution (no zero broadcast).
        out = jnp.dot(ctx[0:sb, 0:hd], wo[0:hd, :], preferred_element_type=f32)
        for h in range(1, nhead):
            c0, c1 = h * hd, (h + 1) * hd
            out = out + jnp.dot(ctx[h * sb:(h + 1) * sb, c0:c1], wo[c0:c1, :],
                                preferred_element_type=f32)
        return out + bo

    def self_attn(t, wqkv, bqkv, wo, bo):
        qkv = jnp.dot(t, wqkv, preferred_element_type=f32) + bqkv   # fused QKV
        return attention(qkv[:, 0:hidden], qkv[:, hidden:2 * hidden],
                         qkv[:, 2 * hidden:3 * hidden], wo, bo)

    def ffn(t, w1, b1, w2, b2):
        mid = jnp.maximum(jnp.dot(t, w1, preferred_element_type=f32) + b1, 0.0)
        return jnp.dot(mid, w2, preferred_element_type=f32) + b2

    # ---- embedding + positional encoding (pos rows already include embed_b) ----
    p0 = vlayout["pos"][0]
    pos_blk = v_ref[p0:p0 + seq, 0:hidden]                     # (seq, hidden)
    pos_rows = jnp.concatenate([pos_blk] * batch, axis=0)      # batch-major (sb, hidden)
    h0 = jnp.dot(x_ref[...], W("embed"), preferred_element_type=f32) + pos_rows

    # ---- encoder stack (post-norm, ReLU FFN) ----
    enc = h0
    for l in range(num_layers):
        a = self_attn(enc, W(f"enc{l}_wqkv"), V(f"enc{l}_bqkv"),
                      W(f"enc{l}_wo"), V(f"enc{l}_bo"))
        enc = layer_norm(enc + a, V(f"enc{l}_g1"), V(f"enc{l}_beta1"))
        f = ffn(enc, W(f"enc{l}_w1"), V(f"enc{l}_b1"),
                W(f"enc{l}_w2"), V(f"enc{l}_b2"))
        enc = layer_norm(enc + f, V(f"enc{l}_g2"), V(f"enc{l}_beta2"))

    # ---- decoder cross-attention K/V for ALL layers in ONE matmul (enc fixed) ----
    kv_all = jnp.dot(enc, W("dec_ckv"), preferred_element_type=f32) + V("ckv_b")

    # ---- decoder stack ----
    dec = h0
    for l in range(num_layers):
        a = self_attn(dec, W(f"dec{l}_swqkv"), V(f"dec{l}_sbqkv"),
                      W(f"dec{l}_swo"), V(f"dec{l}_sbo"))
        dec = layer_norm(dec + a, V(f"dec{l}_g1"), V(f"dec{l}_beta1"))
        cq = jnp.dot(dec, W(f"dec{l}_cwq"), preferred_element_type=f32) + V(f"dec{l}_cbq")
        ck = kv_all[:, 2 * hidden * l: 2 * hidden * l + hidden]
        cv = kv_all[:, 2 * hidden * l + hidden: 2 * hidden * (l + 1)]
        a = attention(cq, ck, cv, W(f"dec{l}_cwo"), V(f"dec{l}_cbo"))
        dec = layer_norm(dec + a, V(f"dec{l}_g2"), V(f"dec{l}_beta2"))
        f = ffn(dec, W(f"dec{l}_w1"), V(f"dec{l}_b1"),
                W(f"dec{l}_w2"), V(f"dec{l}_b2"))
        dec = layer_norm(dec + f, V(f"dec{l}_g3"), V(f"dec{l}_beta3"))

    # ---- final (hidden -> 1) projection on last-position tokens only ----
    last = jnp.dot(sel_last, dec, preferred_element_type=f32)   # (batch, hidden)
    o_ref[...] = (jnp.sum(last * V("out_w"), axis=-1, keepdims=True) + V("out_b"))


# ------------------------------- wrapper ------------------------------------ #

@functools.partial(jax.jit, static_argnames=("input_size", "hidden", "num_layers",
                                             "dim_ff", "max_seq_len", "nhead"))
def transformer_forward(x, wmat, vec, *, input_size, hidden, num_layers,
                        dim_ff, max_seq_len, nhead=4):
    """x: (batch, seq, input_size) f32 -> (batch,) f32."""
    batch, seq, _ = x.shape
    sb = seq * batch

    # Batch-major token slab: row-major collapse, a layout-preserving reshape
    # (bitcast) -- no copy kernel, no transpose.
    x_tok = x.reshape(sb, input_size)

    # Trace-time numpy constants baked into one operand: the block-diagonal
    # batch mask tiled per head, plus the last-token one-hot selector.
    bid = np.repeat(np.arange(batch), seq)
    mask = np.where(bid[:, None] == bid[None, :], 0.0, -1e30).astype(np.float32)
    bias_stacked = np.tile(mask, (nhead, 1))                    # (nhead*sb, sb)
    sel = np.zeros((batch, sb), np.float32)
    sel[np.arange(batch), np.arange(batch) * seq + seq - 1] = 1.0
    cc = jnp.asarray(np.concatenate([bias_stacked, sel], axis=0))

    wlayout, _, _ = _wmat_layout(input_size, hidden, num_layers, dim_ff)
    vlayout, _, _ = _vec_layout(hidden, num_layers, dim_ff, max_seq_len)

    kernel = functools.partial(
        _transformer_kernel, wlayout=wlayout, vlayout=vlayout, seq=seq,
        batch=batch, hidden=hidden, nhead=nhead, num_layers=num_layers)

    out = pl.pallas_call(
        kernel,
        out_shape=jax.ShapeDtypeStruct((batch, 1), jnp.float32),
        in_specs=[VMEM_SPEC] * 4,
        out_specs=VMEM_SPEC,
    )(x_tok, wmat, vec, cc)
    # (batch, 1) -> (batch,) is a trailing-unit-dim squeeze (bitcast, no copy).
    return out[:, 0]


# --------------------------- deterministic params --------------------------- #
# Logical params (for the reference) are stored pre-transposed (in, out) and
# stacked across layers; pack_params flattens them into the two kernel slabs.

def init_params(key, input_size, hidden, num_layers, dim_ff, max_seq_len):
    keys = iter(jax.random.split(key, 1024))

    def w(shape, scale=0.05):
        return jax.random.normal(next(keys), shape, jnp.float32) * scale

    def mha_params():
        return dict(wqkv=w((hidden, 3 * hidden)), bqkv=w((1, 3 * hidden)),
                    wo=w((hidden, hidden)), bo=w((1, hidden)))

    def ones():
        return jnp.ones((1, hidden), jnp.float32)

    def zeros():
        return jnp.zeros((1, hidden), jnp.float32)

    def enc_layer():
        p = mha_params()
        return dict(wqkv=p["wqkv"], bqkv=p["bqkv"], wo=p["wo"], bo=p["bo"],
                    w1=w((hidden, dim_ff)), b1=w((1, dim_ff)),
                    w2=w((dim_ff, hidden)), b2=w((1, hidden)),
                    g1=ones(), beta1=zeros(), g2=ones(), beta2=zeros())

    def dec_layer():
        ps, pc = mha_params(), mha_params()
        return dict(s_wqkv=ps["wqkv"], s_bqkv=ps["bqkv"], s_wo=ps["wo"], s_bo=ps["bo"],
                    c_wqkv=pc["wqkv"], c_bqkv=pc["bqkv"], c_wo=pc["wo"], c_bo=pc["bo"],
                    w1=w((hidden, dim_ff)), b1=w((1, dim_ff)),
                    w2=w((dim_ff, hidden)), b2=w((1, hidden)),
                    g1=ones(), beta1=zeros(), g2=ones(), beta2=zeros(),
                    g3=ones(), beta3=zeros())

    def stack_layers(layer_fn, n):
        layers = [layer_fn() for _ in range(n)]
        return {k: jnp.stack([l[k] for l in layers], axis=0) for k in layers[0]}

    return dict(embed_wt=w((input_size, hidden)), embed_b=w((1, hidden)),
                pos_table=w((max_seq_len, hidden)),
                enc=stack_layers(enc_layer, num_layers),
                dec=stack_layers(dec_layer, num_layers),
                out_w=w((1, hidden)), out_b=w((1, 1)))


def pack_params(params, *, input_size, hidden, num_layers, dim_ff, max_seq_len):
    """Pack logical params into the two kernel slabs (runs once, outside jit)."""
    wlayout, wrows, wwidth = _wmat_layout(input_size, hidden, num_layers, dim_ff)
    vlayout, vrows, vwidth = _vec_layout(hidden, num_layers, dim_ff, max_seq_len)
    wmat = np.zeros((wrows, wwidth), np.float32)
    vec = np.zeros((vrows, vwidth), np.float32)

    def putw(name, arr):
        arr = np.asarray(arr, np.float32)
        r0, nr, nc = wlayout[name]
        assert arr.shape == (nr, nc), (name, arr.shape, (nr, nc))
        wmat[r0:r0 + nr, :nc] = arr

    def putv(name, arr):
        arr = np.asarray(arr, np.float32)
        if arr.ndim == 1:
            arr = arr[None, :]
        r0, nr, nc = vlayout[name]
        assert arr.shape == (nr, nc), (name, arr.shape, (nr, nc))
        vec[r0:r0 + nr, :nc] = arr

    enc, dec = params["enc"], params["dec"]
    putw("embed", params["embed_wt"])
    for l in range(num_layers):
        putw(f"enc{l}_wqkv", enc["wqkv"][l])
        putw(f"enc{l}_wo", enc["wo"][l])
        putw(f"enc{l}_w1", enc["w1"][l])
        putw(f"enc{l}_w2", enc["w2"][l])
    ckv = np.concatenate([np.asarray(dec["c_wqkv"][l])[:, hidden:]
                          for l in range(num_layers)], axis=1)
    putw("dec_ckv", ckv)
    for l in range(num_layers):
        putw(f"dec{l}_swqkv", dec["s_wqkv"][l])
        putw(f"dec{l}_swo", dec["s_wo"][l])
        putw(f"dec{l}_cwq", np.asarray(dec["c_wqkv"][l])[:, :hidden])
        putw(f"dec{l}_cwo", dec["c_wo"][l])
        putw(f"dec{l}_w1", dec["w1"][l])
        putw(f"dec{l}_w2", dec["w2"][l])

    putv("pos", np.asarray(params["pos_table"]) + np.asarray(params["embed_b"]))
    putv("out_w", params["out_w"])
    putv("out_b", params["out_b"])
    ckv_b = np.concatenate([np.asarray(dec["c_bqkv"][l])[:, hidden:]
                            for l in range(num_layers)], axis=1)
    putv("ckv_b", ckv_b)
    for l in range(num_layers):
        putv(f"enc{l}_bqkv", enc["bqkv"][l]); putv(f"enc{l}_bo", enc["bo"][l])
        putv(f"enc{l}_b1", enc["b1"][l]);     putv(f"enc{l}_b2", enc["b2"][l])
        putv(f"enc{l}_g1", enc["g1"][l]);     putv(f"enc{l}_beta1", enc["beta1"][l])
        putv(f"enc{l}_g2", enc["g2"][l]);     putv(f"enc{l}_beta2", enc["beta2"][l])
    for l in range(num_layers):
        putv(f"dec{l}_sbqkv", dec["s_bqkv"][l]); putv(f"dec{l}_sbo", dec["s_bo"][l])
        putv(f"dec{l}_cbq", np.asarray(dec["c_bqkv"][l])[:, :hidden])
        putv(f"dec{l}_cbo", dec["c_bo"][l])
        putv(f"dec{l}_b1", dec["b1"][l]);     putv(f"dec{l}_b2", dec["b2"][l])
        putv(f"dec{l}_g1", dec["g1"][l]);     putv(f"dec{l}_beta1", dec["beta1"][l])
        putv(f"dec{l}_g2", dec["g2"][l]);     putv(f"dec{l}_beta2", dec["beta2"][l])
        putv(f"dec{l}_g3", dec["g3"][l]);     putv(f"dec{l}_beta3", dec["beta3"][l])

    return jnp.asarray(wmat), jnp.asarray(vec)


# ----------------------------- pure-JAX reference --------------------------- #

def reference_forward(x, params, nhead=4):
    P = jax.lax.Precision.HIGHEST
    batch, seq, _ = x.shape
    hidden = params["embed_wt"].shape[1]
    hd = hidden // nhead
    sb = seq * batch

    def ln(z, g, b, eps=1e-5):
        mu = jnp.mean(z, -1, keepdims=True)
        var = jnp.mean((z - mu) ** 2, -1, keepdims=True)
        return (z - mu) / jnp.sqrt(var + eps) * g + b

    def mha(q_in, kv_in, wqkv, bqkv, wo, bo):
        q = jnp.dot(q_in, wqkv[:, :hidden], precision=P) + bqkv[:, :hidden]
        k = jnp.dot(kv_in, wqkv[:, hidden:2 * hidden], precision=P) + bqkv[:, hidden:2 * hidden]
        v = jnp.dot(kv_in, wqkv[:, 2 * hidden:], precision=P) + bqkv[:, 2 * hidden:]

        def heads(t):
            return t.reshape(seq, batch, nhead, hd).transpose(1, 2, 0, 3)

        qh, kh, vh = heads(q), heads(k), heads(v)
        s = jnp.einsum("bhqd,bhkd->bhqk", qh / float(np.sqrt(hd)), kh, precision=P)
        p = jax.nn.softmax(s, axis=-1)
        ctx = jnp.einsum("bhqk,bhkd->bhqd", p, vh, precision=P)
        ctx = ctx.transpose(2, 0, 1, 3).reshape(sb, hidden)
        return jnp.dot(ctx, wo, precision=P) + bo

    def ffn(t, w1, b1, w2, b2):
        h = jnp.maximum(jnp.dot(t, w1, precision=P) + b1, 0.0)
        return jnp.dot(h, w2, precision=P) + b2

    x_sf = jnp.transpose(x, (1, 0, 2)).reshape(sb, -1)
    pos_sf = jnp.repeat(params["pos_table"][:seq], batch, axis=0)
    emb = jnp.dot(x_sf, params["embed_wt"], precision=P) + params["embed_b"] + pos_sf

    ep, dp = params["enc"], params["dec"]
    num_layers = ep["wqkv"].shape[0]

    enc = emb
    for l in range(num_layers):
        a = mha(enc, enc, ep["wqkv"][l], ep["bqkv"][l], ep["wo"][l], ep["bo"][l])
        enc = ln(enc + a, ep["g1"][l], ep["beta1"][l])
        f = ffn(enc, ep["w1"][l], ep["b1"][l], ep["w2"][l], ep["b2"][l])
        enc = ln(enc + f, ep["g2"][l], ep["beta2"][l])

    dec = emb
    for l in range(num_layers):
        a = mha(dec, dec, dp["s_wqkv"][l], dp["s_bqkv"][l], dp["s_wo"][l], dp["s_bo"][l])
        dec = ln(dec + a, dp["g1"][l], dp["beta1"][l])
        a = mha(dec, enc, dp["c_wqkv"][l], dp["c_bqkv"][l], dp["c_wo"][l], dp["c_bo"][l])
        dec = ln(dec + a, dp["g2"][l], dp["beta2"][l])
        f = ffn(dec, dp["w1"][l], dp["b1"][l], dp["w2"][l], dp["b2"][l])
        dec = ln(dec + f, dp["g3"][l], dp["beta3"][l])

    last = dec.reshape(seq, batch, hidden)[-1]
    return jnp.sum(last * params["out_w"], axis=-1) + params["out_b"][0, 0]


# ----------------------------------- main ----------------------------------- #

if __name__ == "__main__":
    input_size, hidden_size, num_layers = 8, 32, 2
    nhead, dim_ff, max_seq_len = 4, 64, 100
    batch, seq = 2, 8

    key = jax.random.PRNGKey(0)
    pkey, xkey = jax.random.split(key)
    params = init_params(pkey, input_size, hidden_size, num_layers, dim_ff, max_seq_len)
    wmat, vec = pack_params(params, input_size=input_size, hidden=hidden_size,
                            num_layers=num_layers, dim_ff=dim_ff,
                            max_seq_len=max_seq_len)
    x = jax.random.normal(xkey, (batch, seq, input_size), jnp.float32)

    out = transformer_forward(x, wmat, vec, input_size=input_size,
                              hidden=hidden_size, num_layers=num_layers,
                              dim_ff=dim_ff, max_seq_len=max_seq_len, nhead=nhead)
    out = jax.block_until_ready(out)

    assert out.shape == (batch,), out.shape
    ref = reference_forward(x, params, nhead=nhead)
    np.testing.assert_allclose(np.asarray(out), np.asarray(ref), rtol=2e-2, atol=2e-2)

    print("KERNEL_OK")
</pallas_src>

<mosaic_0001>
module attributes {stable_mosaic.version = 11 : i64} {
  func.func @_transformer_kernel(%arg0: memref<16x8xf32, #tpu.memory_space<vmem>>, %arg1: memref<808x128xf32, #tpu.memory_space<vmem>>, %arg2: memref<143x128xf32, #tpu.memory_space<vmem>>, %arg3: memref<66x16xf32, #tpu.memory_space<vmem>>, %arg4: memref<2x1xf32, #tpu.memory_space<vmem>>) attributes {dimension_semantics = [], scalar_prefetch = 0 : i64, scratch_operands = 0 : i64, tpu.core_type = #tpu.core_type<tc>} {
    %c0 = arith.constant 0 : index
    %c0_0 = arith.constant 0 : index
    %0 = vector.load %arg3[%c0, %c0_0] : memref<66x16xf32, #tpu.memory_space<vmem>>, vector<64x16xf32>
    %c64 = arith.constant 64 : index
    %c0_1 = arith.constant 0 : index
    %1 = vector.load %arg3[%c64, %c0_1] : memref<66x16xf32, #tpu.memory_space<vmem>>, vector<2x16xf32>
    %2 = tpu.iota {dimensions = array<i32: 1>} : vector<1x32xi32>
    %c0_i32 = arith.constant 0 : i32
    %3 = vector.broadcast %c0_i32 : i32 to vector<1x32xi32>
    %4 = arith.cmpi sge, %2, %3 : vector<1x32xi32>
    %c8_i32 = arith.constant 8 : i32
    %5 = vector.broadcast %c8_i32 : i32 to vector<1x32xi32>
    %6 = arith.cmpi slt, %2, %5 : vector<1x32xi32>
    %7 = arith.andi %4, %6 : vector<1x32xi1>
    %cst = arith.constant 1.000000e+00 : f32
    %cst_2 = arith.constant 0.000000e+00 : f32
    %8 = vector.broadcast %cst : f32 to vector<1x32xf32>
    %9 = vector.broadcast %cst_2 : f32 to vector<1x32xf32>
    %10 = arith.select %7, %8, %9 : vector<1x32xi1>, vector<1x32xf32>
    %c8_i32_3 = arith.constant 8 : i32
    %11 = vector.broadcast %c8_i32_3 : i32 to vector<1x32xi32>
    %12 = arith.cmpi sge, %2, %11 : vector<1x32xi32>
    %c16_i32 = arith.constant 16 : i32
    %13 = vector.broadcast %c16_i32 : i32 to vector<1x32xi32>
    %14 = arith.cmpi slt, %2, %13 : vector<1x32xi32>
    %15 = arith.andi %12, %14 : vector<1x32xi1>
    %cst_4 = arith.constant 1.000000e+00 : f32
    %cst_5 = arith.constant 0.000000e+00 : f32
    %16 = vector.broadcast %cst_4 : f32 to vector<1x32xf32>
    %17 = vector.broadcast %cst_5 : f32 to vector<1x32xf32>
    %18 = arith.select %15, %16, %17 : vector<1x32xi1>, vector<1x32xf32>
    %c16_i32_6 = arith.constant 16 : i32
    %19 = vector.broadcast %c16_i32_6 : i32 to vector<1x32xi32>
    %20 = arith.cmpi sge, %2, %19 : vector<1x32xi32>
    %c24_i32 = arith.constant 24 : i32
    %21 = vector.broadcast %c24_i32 : i32 to vector<1x32xi32>
    %22 = arith.cmpi slt, %2, %21 : vector<1x32xi32>
    %23 = arith.andi %20, %22 : vector<1x32xi1>
    %cst_7 = arith.constant 1.000000e+00 : f32
    %cst_8 = arith.constant 0.000000e+00 : f32
    %24 = vector.broadcast %cst_7 : f32 to vector<1x32xf32>
    %25 = vector.broadcast %cst_8 : f32 to vector<1x32xf32>
    %26 = arith.select %23, %24, %25 : vector<1x32xi1>, vector<1x32xf32>
    %c24_i32_9 = arith.constant 24 : i32
    %27 = vector.broadcast %c24_i32_9 : i32 to vector<1x32xi32>
    %28 = arith.cmpi sge, %2, %27 : vector<1x32xi32>
    %c32_i32 = arith.constant 32 : i32
    %29 = vector.broadcast %c32_i32 : i32 to vector<1x32xi32>
    %30 = arith.cmpi slt, %2, %29 : vector<1x32xi32>
    %31 = arith.andi %28, %30 : vector<1x32xi1>
    %cst_10 = arith.constant 1.000000e+00 : f32
    %cst_11 = arith.constant 0.000000e+00 : f32
    %32 = vector.broadcast %cst_10 : f32 to vector<1x32xf32>
    %33 = vector.broadcast %cst_11 : f32 to vector<1x32xf32>
    %34 = arith.select %31, %32, %33 : vector<1x32xi1>, vector<1x32xf32>
    %c0_12 = arith.constant 0 : index
    %c0_13 = arith.constant 0 : index
    %35 = vector.load %arg2[%c0_12, %c0_13] : memref<143x128xf32, #tpu.memory_space<vmem>>, vector<8x32xf32>
    %36 = tpu.concatenate %35, %35 in 0 : vector<8x32xf32>, vector<8x32xf32> -> vector<16x32xf32>
    %c0_14 = arith.constant 0 : index
    %c0_15 = arith.constant 0 : index
    %37 = vector.load %arg0[%c0_14, %c0_15] : memref<16x8xf32, #tpu.memory_space<vmem>>, vector<16x8xf32>
    %c0_16 = arith.constant 0 : index
    %c0_17 = arith.constant 0 : index
    %38 = vector.load %arg1[%c0_16, %c0_17] : memref<808x128xf32, #tpu.memory_space<vmem>>, vector<8x32xf32>
    %cst_18 = arith.constant dense<0.000000e+00> : vector<16x32xf32>
    %39 = tpu.matmul %37, %38, %cst_18 {dimension_numbers = #tpu.dot_dimension_numbers<[1], [0], [0], [1], [0, 0, 1, 1], [], []>} : vector<16x8xf32>, vector<8x32xf32>, vector<16x32xf32> -> vector<16x32xf32>
    %40 = arith.addf %39, %36 : vector<16x32xf32>
    %c8 = arith.constant 8 : index
    %c0_19 = arith.constant 0 : index
    %41 = vector.load %arg1[%c8, %c0_19] : memref<808x128xf32, #tpu.memory_space<vmem>>, vector<32x96xf32>
    %c103 = arith.constant 103 : index
    %c0_20 = arith.constant 0 : index
    %42 = vector.load %arg2[%c103, %c0_20] : memref<143x128xf32, #tpu.memory_space<vmem>>, vector<1x96xf32>
    %c40 = arith.constant 40 : index
    %c0_21 = arith.constant 0 : index
    %43 = vector.load %arg1[%c40, %c0_21] : memref<808x128xf32, #tpu.memory_space<vmem>>, vector<32x32xf32>
    %c104 = arith.constant 104 : index
    %c0_22 = arith.constant 0 : index
    %44 = vector.load %arg2[%c104, %c0_22] : memref<143x128xf32, #tpu.memory_space<vmem>>, vector<1x32xf32>
    %cst_23 = arith.constant dense<0.000000e+00> : vector<16x96xf32>
    %45 = tpu.matmul %40, %41, %cst_23 {dimension_numbers = #tpu.dot_dimension_numbers<[1], [0], [0], [1], [0, 0, 1, 1], [], []>} : vector<16x32xf32>, vector<32x96xf32>, vector<16x96xf32> -> vector<16x96xf32>
    %46 = vector.broadcast %42 : vector<1x96xf32> to vector<16x96xf32>
    %47 = arith.addf %45, %46 : vector<16x96xf32>
    %48 = vector.extract_strided_slice %47 {offsets = [0, 0], sizes = [16, 32], strides = [1, 1]} : vector<16x96xf32> to vector<16x32xf32>
    %49 = vector.extract_strided_slice %47 {offsets = [0, 32], sizes = [16, 32], strides = [1, 1]} : vector<16x96xf32> to vector<16x32xf32>
    %50 = vector.extract_strided_slice %47 {offsets = [0, 64], sizes = [16, 32], strides = [1, 1]} : vector<16x96xf32> to vector<16x32xf32>
    %cst_24 = arith.constant 0.353553385 : f32
    %51 = vector.broadcast %cst_24 : f32 to vector<16x32xf32>
    %52 = arith.mulf %48, %51 : vector<16x32xf32>
    %53 = vector.broadcast %10 : vector<1x32xf32> to vector<16x32xf32>
    %54 = arith.mulf %52, %53 : vector<16x32xf32>
    %55 = vector.broadcast %18 : vector<1x32xf32> to vector<16x32xf32>
    %56 = arith.mulf %52, %55 : vector<16x32xf32>
    %57 = vector.broadcast %26 : vector<1x32xf32> to vector<16x32xf32>
    %58 = arith.mulf %52, %57 : vector<16x32xf32>
    %59 = vector.broadcast %34 : vector<1x32xf32> to vector<16x32xf32>
    %60 = arith.mulf %52, %59 : vector<16x32xf32>
    %61 = tpu.concatenate %54, %56, %58, %60 in 0 : vector<16x32xf32>, vector<16x32xf32>, vector<16x32xf32>, vector<16x32xf32> -> vector<64x32xf32>
    %cst_25 = arith.constant dense<0.000000e+00> : vector<64x16xf32>
    %62 = tpu.matmul %61, %49, %cst_25 {dimension_numbers = #tpu.dot_dimension_numbers<[1], [1], [0], [0], [0, 0, 1, 0], [], []>} : vector<64x32xf32>, vector<16x32xf32>, vector<64x16xf32> -> vector<64x16xf32>
    %63 = arith.addf %62, %0 : vector<64x16xf32>
    %cst_26 = arith.constant dense<0xFF800000> : vector<64xf32>
    %64 = vector.multi_reduction <maximumf>, %63, %cst_26 [1] : vector<64x16xf32> to vector<64xf32>
    %65 = vector.shape_cast %64 : vector<64xf32> to vector<64x1xf32>
    %66 = vector.broadcast %65 : vector<64x1xf32> to vector<64x16xf32>
    %67 = arith.subf %63, %66 : vector<64x16xf32>
    %68 = math.exp %67 : vector<64x16xf32>
    %cst_27 = arith.constant dense<0.000000e+00> : vector<64xf32>
    %69 = vector.multi_reduction <add>, %68, %cst_27 [1] : vector<64x16xf32> to vector<64xf32>
    %70 = vector.shape_cast %69 : vector<64xf32> to vector<64x1xf32>
    %71 = tpu.reciprocal %70 {approx = true} : vector<64x1xf32> -> vector<64x1xf32>
    %72 = vector.broadcast %71 : vector<64x1xf32> to vector<64x16xf32>
    %73 = arith.mulf %68, %72 : vector<64x16xf32>
    %cst_28 = arith.constant dense<0.000000e+00> : vector<64x32xf32>
    %74 = tpu.matmul %73, %50, %cst_28 {dimension_numbers = #tpu.dot_dimension_numbers<[1], [0], [0], [1], [0, 0, 1, 1], [], []>} : vector<64x16xf32>, vector<16x32xf32>, vector<64x32xf32> -> vector<64x32xf32>
    %75 = vector.extract_strided_slice %74 {offsets = [0, 0], sizes = [16, 8], strides = [1, 1]} : vector<64x32xf32> to vector<16x8xf32>
    %76 = vector.extract_strided_slice %43 {offsets = [0, 0], sizes = [8, 32], strides = [1, 1]} : vector<32x32xf32> to vector<8x32xf32>
    %cst_29 = arith.constant dense<0.000000e+00> : vector<16x32xf32>
    %77 = tpu.matmul %75, %76, %cst_29 {dimension_numbers = #tpu.dot_dimension_numbers<[1], [0], [0], [1], [0, 0, 1, 1], [], []>} : vector<16x8xf32>, vector<8x32xf32>, vector<16x32xf32> -> vector<16x32xf32>
    %78 = vector.extract_strided_slice %74 {offsets = [16, 8], sizes = [16, 8], strides = [1, 1]} : vector<64x32xf32> to vector<16x8xf32>
    %79 = vector.extract_strided_slice %43 {offsets = [8, 0], sizes = [8, 32], strides = [1, 1]} : vector<32x32xf32> to vector<8x32xf32>
    %cst_30 = arith.constant dense<0.000000e+00> : vector<16x32xf32>
    %80 = tpu.matmul %78, %79, %cst_30 {dimension_numbers = #tpu.dot_dimension_numbers<[1], [0], [0], [1], [0, 0, 1, 1], [], []>} : vector<16x8xf32>, vector<8x32xf32>, vector<16x32xf32> -> vector<16x32xf32>
    %81 = arith.addf %77, %80 : vector<16x32xf32>
    %82 = vector.extract_strided_slice %74 {offsets = [32, 16], sizes = [16, 8], strides = [1, 1]} : vector<64x32xf32> to vector<16x8xf32>
    %83 = vector.extract_strided_slice %43 {offsets = [16, 0], sizes = [8, 32], strides = [1, 1]} : vector<32x32xf32> to vector<8x32xf32>
    %cst_31 = arith.constant dense<0.000000e+00> : vector<16x32xf32>
    %84 = tpu.matmul %82, %83, %cst_31 {dimension_numbers = #tpu.dot_dimension_numbers<[1], [0], [0], [1], [0, 0, 1, 1], [], []>} : vector<16x8xf32>, vector<8x32xf32>, vector<16x32xf32> -> vector<16x32xf32>
    %85 = arith.addf %81, %84 : vector<16x32xf32>
    %86 = vector.extract_strided_slice %74 {offsets = [48, 24], sizes = [16, 8], strides = [1, 1]} : vector<64x32xf32> to vector<16x8xf32>
    %87 = vector.extract_strided_slice %43 {offsets = [24, 0], sizes = [8, 32], strides = [1, 1]} : vector<32x32xf32> to vector<8x32xf32>
    %cst_32 = arith.constant dense<0.000000e+00> : vector<16x32xf32>
    %88 = tpu.matmul %86, %87, %cst_32 {dimension_numbers = #tpu.dot_dimension_numbers<[1], [0], [0], [1], [0, 0, 1, 1], [], []>} : vector<16x8xf32>, vector<8x32xf32>, vector<16x32xf32> -> vector<16x32xf32>
    %89 = arith.addf %85, %88 : vector<16x32xf32>
    %90 = vector.broadcast %44 : vector<1x32xf32> to vector<16x32xf32>
    %91 = arith.addf %89, %90 : vector<16x32xf32>
    %92 = arith.addf %40, %91 : vector<16x32xf32>
    %c107 = arith.constant 107 : index
    %c0_33 = arith.constant 0 : index
    %93 = vector.load %arg2[%c107, %c0_33] : memref<143x128xf32, #tpu.memory_space<vmem>>, vector<1x32xf32>
    %c108 = arith.constant 108 : index
    %c0_34 = arith.constant 0 : index
    %94 = vector.load %arg2[%c108, %c0_34] : memref<143x128xf32, #tpu.memory_space<vmem>>, vector<1x32xf32>
    %cst_35 = arith.constant dense<0.000000e+00> : vector<16xf32>
    %95 = vector.multi_reduction <add>, %92, %cst_35 [1] : vector<16x32xf32> to vector<16xf32>
    %96 = vector.shape_cast %95 : vector<16xf32> to vector<16x1xf32>
    %cst_36 = arith.constant 3.200000e+01 : f32
    %97 = vector.broadcast %cst_36 : f32 to vector<16x1xf32>
    %98 = arith.divf %96, %97 : vector<16x1xf32>
    %99 = arith.mulf %92, %92 : vector<16x32xf32>
    %cst_37 = arith.constant dense<0.000000e+00> : vector<16xf32>
    %100 = vector.multi_reduction <add>, %99, %cst_37 [1] : vector<16x32xf32> to vector<16xf32>
    %101 = vector.shape_cast %100 : vector<16xf32> to vector<16x1xf32>
    %cst_38 = arith.constant 3.200000e+01 : f32
    %102 = vector.broadcast %cst_38 : f32 to vector<16x1xf32>
    %103 = arith.divf %101, %102 : vector<16x1xf32>
    %104 = vector.broadcast %98 : vector<16x1xf32> to vector<16x32xf32>
    %105 = arith.subf %92, %104 : vector<16x32xf32>
    %106 = arith.mulf %98, %98 : vector<16x1xf32>
    %107 = arith.subf %103, %106 : vector<16x1xf32>
    %cst_39 = arith.constant 9.99999974E-6 : f32
    %108 = vector.broadcast %cst_39 : f32 to vector<16x1xf32>
    %109 = arith.addf %107, %108 : vector<16x1xf32>
    %110 = math.rsqrt %109 : vector<16x1xf32>
    %111 = vector.broadcast %110 : vector<16x1xf32> to vector<16x32xf32>
    %112 = arith.mulf %105, %111 : vector<16x32xf32>
    %113 = vector.broadcast %93 : vector<1x32xf32> to vector<16x32xf32>
    %114 = arith.mulf %112, %113 : vector<16x32xf32>
    %115 = vector.broadcast %94 : vector<1x32xf32> to vector<16x32xf32>
    %116 = arith.addf %114, %115 : vector<16x32xf32>
    %c72 = arith.constant 72 : index
    %c0_40 = arith.constant 0 : index
    %117 = vector.load %arg1[%c72, %c0_40] : memref<808x128xf32, #tpu.memory_space<vmem>>, vector<32x64xf32>
    %c105 = arith.constant 105 : index
    %c0_41 = arith.constant 0 : index
    %118 = vector.load %arg2[%c105, %c0_41] : memref<143x128xf32, #tpu.memory_space<vmem>>, vector<1x64xf32>
    %c104_42 = arith.constant 104 : index
    %c0_43 = arith.constant 0 : index
    %119 = vector.load %arg1[%c104_42, %c0_43] : memref<808x128xf32, #tpu.memory_space<vmem>>, vector<64x32xf32>
    %c106 = arith.constant 106 : index
    %c0_44 = arith.constant 0 : index
    %120 = vector.load %arg2[%c106, %c0_44] : memref<143x128xf32, #tpu.memory_space<vmem>>, vector<1x32xf32>
    %cst_45 = arith.constant dense<0.000000e+00> : vector<16x64xf32>
    %121 = tpu.matmul %116, %117, %cst_45 {dimension_numbers = #tpu.dot_dimension_numbers<[1], [0], [0], [1], [0, 0, 1, 1], [], []>} : vector<16x32xf32>, vector<32x64xf32>, vector<16x64xf32> -> vector<16x64xf32>
    %122 = vector.broadcast %118 : vector<1x64xf32> to vector<16x64xf32>
    %123 = arith.addf %121, %122 : vector<16x64xf32>
    %cst_46 = arith.constant 0.000000e+00 : f32
    %124 = vector.broadcast %cst_46 : f32 to vector<16x64xf32>
    %125 = arith.maximumf %123, %124 : vector<16x64xf32>
    %cst_47 = arith.constant dense<0.000000e+00> : vector<16x32xf32>
    %126 = tpu.matmul %125, %119, %cst_47 {dimension_numbers = #tpu.dot_dimension_numbers<[1], [0], [0], [1], [0, 0, 1, 1], [], []>} : vector<16x64xf32>, vector<64x32xf32>, vector<16x32xf32> -> vector<16x32xf32>
    %127 = vector.broadcast %120 : vector<1x32xf32> to vector<16x32xf32>
    %128 = arith.addf %126, %127 : vector<16x32xf32>
    %129 = arith.addf %116, %128 : vector<16x32xf32>
    %c109 = arith.constant 109 : index
    %c0_48 = arith.constant 0 : index
    %130 = vector.load %arg2[%c109, %c0_48] : memref<143x128xf32, #tpu.memory_space<vmem>>, vector<1x32xf32>
    %c110 = arith.constant 110 : index
    %c0_49 = arith.constant 0 : index
    %131 = vector.load %arg2[%c110, %c0_49] : memref<143x128xf32, #tpu.memory_space<vmem>>, vector<1x32xf32>
    %cst_50 = arith.constant dense<0.000000e+00> : vector<16xf32>
    %132 = vector.multi_reduction <add>, %129, %cst_50 [1] : vector<16x32xf32> to vector<16xf32>
    %133 = vector.shape_cast %132 : vector<16xf32> to vector<16x1xf32>
    %cst_51 = arith.constant 3.200000e+01 : f32
    %134 = vector.broadcast %cst_51 : f32 to vector<16x1xf32>
    %135 = arith.divf %133, %134 : vector<16x1xf32>
    %136 = arith.mulf %129, %129 : vector<16x32xf32>
    %cst_52 = arith.constant dense<0.000000e+00> : vector<16xf32>
    %137 = vector.multi_reduction <add>, %136, %cst_52 [1] : vector<16x32xf32> to vector<16xf32>
    %138 = vector.shape_cast %137 : vector<16xf32> to vector<16x1xf32>
    %cst_53 = arith.constant 3.200000e+01 : f32
    %139 = vector.broadcast %cst_53 : f32 to vector<16x1xf32>
    %140 = arith.divf %138, %139 : vector<16x1xf32>
    %141 = vector.broadcast %135 : vector<16x1xf32> to vector<16x32xf32>
    %142 = arith.subf %129, %141 : vector<16x32xf32>
    %143 = arith.mulf %135, %135 : vector<16x1xf32>
    %144 = arith.subf %140, %143 : vector<16x1xf32>
    %cst_54 = arith.constant 9.99999974E-6 : f32
    %145 = vector.broadcast %cst_54 : f32 to vector<16x1xf32>
    %146 = arith.addf %144, %145 : vector<16x1xf32>
    %147 = math.rsqrt %146 : vector<16x1xf32>
    %148 = vector.broadcast %147 : vector<16x1xf32> to vector<16x32xf32>
    %149 = arith.mulf %142, %148 : vector<16x32xf32>
    %150 = vector.broadcast %130 : vector<1x32xf32> to vector<16x32xf32>
    %151 = arith.mulf %149, %150 : vector<16x32xf32>
    %152 = vector.broadcast %131 : vector<1x32xf32> to vector<16x32xf32>
    %153 = arith.addf %151, %152 : vector<16x32xf32>
    %c168 = arith.constant 168 : index
    %c0_55 = arith.constant 0 : index
    %154 = vector.load %arg1[%c168, %c0_55] : memref<808x128xf32, #tpu.memory_space<vmem>>, vector<32x96xf32>
    %c111 = arith.constant 111 : index
    %c0_56 = arith.constant 0 : index
    %155 = vector.load %arg2[%c111, %c0_56] : memref<143x128xf32, #tpu.memory_space<vmem>>, vector<1x96xf32>
    %c200 = arith.constant 200 : index
    %c0_57 = arith.constant 0 : index
    %156 = vector.load %arg1[%c200, %c0_57] : memref<808x128xf32, #tpu.memory_space<vmem>>, vector<32x32xf32>
    %c112 = arith.constant 112 : index
    %c0_58 = arith.constant 0 : index
    %157 = vector.load %arg2[%c112, %c0_58] : memref<143x128xf32, #tpu.memory_space<vmem>>, vector<1x32xf32>
    %cst_59 = arith.constant dense<0.000000e+00> : vector<16x96xf32>
    %158 = tpu.matmul %153, %154, %cst_59 {dimension_numbers = #tpu.dot_dimension_numbers<[1], [0], [0], [1], [0, 0, 1, 1], [], []>} : vector<16x32xf32>, vector<32x96xf32>, vector<16x96xf32> -> vector<16x96xf32>
    %159 = vector.broadcast %155 : vector<1x96xf32> to vector<16x96xf32>
    %160 = arith.addf %158, %159 : vector<16x96xf32>
    %161 = vector.extract_strided_slice %160 {offsets = [0, 0], sizes = [16, 32], strides = [1, 1]} : vector<16x96xf32> to vector<16x32xf32>
    %162 = vector.extract_strided_slice %160 {offsets = [0, 32], sizes = [16, 32], strides = [1, 1]} : vector<16x96xf32> to vector<16x32xf32>
    %163 = vector.extract_strided_slice %160 {offsets = [0, 64], sizes = [16, 32], strides = [1, 1]} : vector<16x96xf32> to vector<16x32xf32>
    %cst_60 = arith.constant 0.353553385 : f32
    %164 = vector.broadcast %cst_60 : f32 to vector<16x32xf32>
    %165 = arith.mulf %161, %164 : vector<16x32xf32>
    %166 = vector.broadcast %10 : vector<1x32xf32> to vector<16x32xf32>
    %167 = arith.mulf %165, %166 : vector<16x32xf32>
    %168 = vector.broadcast %18 : vector<1x32xf32> to vector<16x32xf32>
    %169 = arith.mulf %165, %168 : vector<16x32xf32>
    %170 = vector.broadcast %26 : vector<1x32xf32> to vector<16x32xf32>
    %171 = arith.mulf %165, %170 : vector<16x32xf32>
    %172 = vector.broadcast %34 : vector<1x32xf32> to vector<16x32xf32>
    %173 = arith.mulf %165, %172 : vector<16x32xf32>
    %174 = tpu.concatenate %167, %169, %171, %173 in 0 : vector<16x32xf32>, vector<16x32xf32>, vector<16x32xf32>, vector<16x32xf32> -> vector<64x32xf32>
    %cst_61 = arith.constant dense<0.000000e+00> : vector<64x16xf32>
    %175 = tpu.matmul %174, %162, %cst_61 {dimension_numbers = #tpu.dot_dimension_numbers<[1], [1], [0], [0], [0, 0, 1, 0], [], []>} : vector<64x32xf32>, vector<16x32xf32>, vector<64x16xf32> -> vector<64x16xf32>
    %176 = arith.addf %175, %0 : vector<64x16xf32>
    %cst_62 = arith.constant dense<0xFF800000> : vector<64xf32>
    %177 = vector.multi_reduction <maximumf>, %176, %cst_62 [1] : vector<64x16xf32> to vector<64xf32>
    %178 = vector.shape_cast %177 : vector<64xf32> to vector<64x1xf32>
    %179 = vector.broadcast %178 : vector<64x1xf32> to vector<64x16xf32>
    %180 = arith.subf %176, %179 : vector<64x16xf32>
    %181 = math.exp %180 : vector<64x16xf32>
    %cst_63 = arith.constant dense<0.000000e+00> : vector<64xf32>
    %182 = vector.multi_reduction <add>, %181, %cst_63 [1] : vector<64x16xf32> to vector<64xf32>
    %183 = vector.shape_cast %182 : vector<64xf32> to vector<64x1xf32>
    %184 = tpu.reciprocal %183 {approx = true} : vector<64x1xf32> -> vector<64x1xf32>
    %185 = vector.broadcast %184 : vector<64x1xf32> to vector<64x16xf32>
    %186 = arith.mulf %181, %185 : vector<64x16xf32>
    %cst_64 = arith.constant dense<0.000000e+00> : vector<64x32xf32>
    %187 = tpu.matmul %186, %163, %cst_64 {dimension_numbers = #tpu.dot_dimension_numbers<[1], [0], [0], [1], [0, 0, 1, 1], [], []>} : vector<64x16xf32>, vector<16x32xf32>, vector<64x32xf32> -> vector<64x32xf32>
    %188 = vector.extract_strided_slice %187 {offsets = [0, 0], sizes = [16, 8], strides = [1, 1]} : vector<64x32xf32> to vector<16x8xf32>
    %189 = vector.extract_strided_slice %156 {offsets = [0, 0], sizes = [8, 32], strides = [1, 1]} : vector<32x32xf32> to vector<8x32xf32>
    %cst_65 = arith.constant dense<0.000000e+00> : vector<16x32xf32>
    %190 = tpu.matmul %188, %189, %cst_65 {dimension_numbers = #tpu.dot_dimension_numbers<[1], [0], [0], [1], [0, 0, 1, 1], [], []>} : vector<16x8xf32>, vector<8x32xf32>, vector<16x32xf32> -> vector<16x32xf32>
    %191 = vector.extract_strided_slice %187 {offsets = [16, 8], sizes = [16, 8], strides = [1, 1]} : vector<64x32xf32> to vector<16x8xf32>
    %192 = vector.extract_strided_slice %156 {offsets = [8, 0], sizes = [8, 32], strides = [1, 1]} : vector<32x32xf32> to vector<8x32xf32>
    %cst_66 = arith.constant dense<0.000000e+00> : vector<16x32xf32>
    %193 = tpu.matmul %191, %192, %cst_66 {dimension_numbers = #tpu.dot_dimension_numbers<[1], [0], [0], [1], [0, 0, 1, 1], [], []>} : vector<16x8xf32>, vector<8x32xf32>, vector<16x32xf32> -> vector<16x32xf32>
    %194 = arith.addf %190, %193 : vector<16x32xf32>
    %195 = vector.extract_strided_slice %187 {offsets = [32, 16], sizes = [16, 8], strides = [1, 1]} : vector<64x32xf32> to vector<16x8xf32>
    %196 = vector.extract_strided_slice %156 {offsets = [16, 0], sizes = [8, 32], strides = [1, 1]} : vector<32x32xf32> to vector<8x32xf32>
    %cst_67 = arith.constant dense<0.000000e+00> : vector<16x32xf32>
    %197 = tpu.matmul %195, %196, %cst_67 {dimension_numbers = #tpu.dot_dimension_numbers<[1], [0], [0], [1], [0, 0, 1, 1], [], []>} : vector<16x8xf32>, vector<8x32xf32>, vector<16x32xf32> -> vector<16x32xf32>
    %198 = arith.addf %194, %197 : vector<16x32xf32>
    %199 = vector.extract_strided_slice %187 {offsets = [48, 24], sizes = [16, 8], strides = [1, 1]} : vector<64x32xf32> to vector<16x8xf32>
    %200 = vector.extract_strided_slice %156 {offsets = [24, 0], sizes = [8, 32], strides = [1, 1]} : vector<32x32xf32> to vector<8x32xf32>
    %cst_68 = arith.constant dense<0.000000e+00> : vector<16x32xf32>
    %201 = tpu.matmul %199, %200, %cst_68 {dimension_numbers = #tpu.dot_dimension_numbers<[1], [0], [0], [1], [0, 0, 1, 1], [], []>} : vector<16x8xf32>, vector<8x32xf32>, vector<16x32xf32> -> vector<16x32xf32>
    %202 = arith.addf %198, %201 : vector<16x32xf32>
    %203 = vector.broadcast %157 : vector<1x32xf32> to vector<16x32xf32>
    %204 = arith.addf %202, %203 : vector<16x32xf32>
    %205 = arith.addf %153, %204 : vector<16x32xf32>
    %c115 = arith.constant 115 : index
    %c0_69 = arith.constant 0 : index
    %206 = vector.load %arg2[%c115, %c0_69] : memref<143x128xf32, #tpu.memory_space<vmem>>, vector<1x32xf32>
    %c116 = arith.constant 116 : index
    %c0_70 = arith.constant 0 : index
    %207 = vector.load %arg2[%c116, %c0_70] : memref<143x128xf32, #tpu.memory_space<vmem>>, vector<1x32xf32>
    %cst_71 = arith.constant dense<0.000000e+00> : vector<16xf32>
    %208 = vector.multi_reduction <add>, %205, %cst_71 [1] : vector<16x32xf32> to vector<16xf32>
    %209 = vector.shape_cast %208 : vector<16xf32> to vector<16x1xf32>
    %cst_72 = arith.constant 3.200000e+01 : f32
    %210 = vector.broadcast %cst_72 : f32 to vector<16x1xf32>
    %211 = arith.divf %209, %210 : vector<16x1xf32>
    %212 = arith.mulf %205, %205 : vector<16x32xf32>
    %cst_73 = arith.constant dense<0.000000e+00> : vector<16xf32>
    %213 = vector.multi_reduction <add>, %212, %cst_73 [1] : vector<16x32xf32> to vector<16xf32>
    %214 = vector.shape_cast %213 : vector<16xf32> to vector<16x1xf32>
    %cst_74 = arith.constant 3.200000e+01 : f32
    %215 = vector.broadcast %cst_74 : f32 to vector<16x1xf32>
    %216 = arith.divf %214, %215 : vector<16x1xf32>
    %217 = vector.broadcast %211 : vector<16x1xf32> to vector<16x32xf32>
    %218 = arith.subf %205, %217 : vector<16x32xf32>
    %219 = arith.mulf %211, %211 : vector<16x1xf32>
    %220 = arith.subf %216, %219 : vector<16x1xf32>
    %cst_75 = arith.constant 9.99999974E-6 : f32
    %221 = vector.broadcast %cst_75 : f32 to vector<16x1xf32>
    %222 = arith.addf %220, %221 : vector<16x1xf32>
    %223 = math.rsqrt %222 : vector<16x1xf32>
    %224 = vector.broadcast %223 : vector<16x1xf32> to vector<16x32xf32>
    %225 = arith.mulf %218, %224 : vector<16x32xf32>
    %226 = vector.broadcast %206 : vector<1x32xf32> to vector<16x32xf32>
    %227 = arith.mulf %225, %226 : vector<16x32xf32>
    %228 = vector.broadcast %207 : vector<1x32xf32> to vector<16x32xf32>
    %229 = arith.addf %227, %228 : vector<16x32xf32>
    %c232 = arith.constant 232 : index
    %c0_76 = arith.constant 0 : index
    %230 = vector.load %arg1[%c232, %c0_76] : memref<808x128xf32, #tpu.memory_space<vmem>>, vector<32x64xf32>
    %c113 = arith.constant 113 : index
    %c0_77 = arith.constant 0 : index
    %231 = vector.load %arg2[%c113, %c0_77] : memref<143x128xf32, #tpu.memory_space<vmem>>, vector<1x64xf32>
    %c264 = arith.constant 264 : index
    %c0_78 = arith.constant 0 : index
    %232 = vector.load %arg1[%c264, %c0_78] : memref<808x128xf32, #tpu.memory_space<vmem>>, vector<64x32xf32>
    %c114 = arith.constant 114 : index
    %c0_79 = arith.constant 0 : index
    %233 = vector.load %arg2[%c114, %c0_79] : memref<143x128xf32, #tpu.memory_space<vmem>>, vector<1x32xf32>
    %cst_80 = arith.constant dense<0.000000e+00> : vector<16x64xf32>
    %234 = tpu.matmul %229, %230, %cst_80 {dimension_numbers = #tpu.dot_dimension_numbers<[1], [0], [0], [1], [0, 0, 1, 1], [], []>} : vector<16x32xf32>, vector<32x64xf32>, vector<16x64xf32> -> vector<16x64xf32>
    %235 = vector.broadcast %231 : vector<1x64xf32> to vector<16x64xf32>
    %236 = arith.addf %234, %235 : vector<16x64xf32>
    %cst_81 = arith.constant 0.000000e+00 : f32
    %237 = vector.broadcast %cst_81 : f32 to vector<16x64xf32>
    %238 = arith.maximumf %236, %237 : vector<16x64xf32>
    %cst_82 = arith.constant dense<0.000000e+00> : vector<16x32xf32>
    %239 = tpu.matmul %238, %232, %cst_82 {dimension_numbers = #tpu.dot_dimension_numbers<[1], [0], [0], [1], [0, 0, 1, 1], [], []>} : vector<16x64xf32>, vector<64x32xf32>, vector<16x32xf32> -> vector<16x32xf32>
    %240 = vector.broadcast %233 : vector<1x32xf32> to vector<16x32xf32>
    %241 = arith.addf %239, %240 : vector<16x32xf32>
    %242 = arith.addf %229, %241 : vector<16x32xf32>
    %c117 = arith.constant 117 : index
    %c0_83 = arith.constant 0 : index
    %243 = vector.load %arg2[%c117, %c0_83] : memref<143x128xf32, #tpu.memory_space<vmem>>, vector<1x32xf32>
    %c118 = arith.constant 118 : index
    %c0_84 = arith.constant 0 : index
    %244 = vector.load %arg2[%c118, %c0_84] : memref<143x128xf32, #tpu.memory_space<vmem>>, vector<1x32xf32>
    %cst_85 = arith.constant dense<0.000000e+00> : vector<16xf32>
    %245 = vector.multi_reduction <add>, %242, %cst_85 [1] : vector<16x32xf32> to vector<16xf32>
    %246 = vector.shape_cast %245 : vector<16xf32> to vector<16x1xf32>
    %cst_86 = arith.constant 3.200000e+01 : f32
    %247 = vector.broadcast %cst_86 : f32 to vector<16x1xf32>
    %248 = arith.divf %246, %247 : vector<16x1xf32>
    %249 = arith.mulf %242, %242 : vector<16x32xf32>
    %cst_87 = arith.constant dense<0.000000e+00> : vector<16xf32>
    %250 = vector.multi_reduction <add>, %249, %cst_87 [1] : vector<16x32xf32> to vector<16xf32>
    %251 = vector.shape_cast %250 : vector<16xf32> to vector<16x1xf32>
    %cst_88 = arith.constant 3.200000e+01 : f32
    %252 = vector.broadcast %cst_88 : f32 to vector<16x1xf32>
    %253 = arith.divf %251, %252 : vector<16x1xf32>
    %254 = vector.broadcast %248 : vector<16x1xf32> to vector<16x32xf32>
    %255 = arith.subf %242, %254 : vector<16x32xf32>
    %256 = arith.mulf %248, %248 : vector<16x1xf32>
    %257 = arith.subf %253, %256 : vector<16x1xf32>
    %cst_89 = arith.constant 9.99999974E-6 : f32
    %258 = vector.broadcast %cst_89 : f32 to vector<16x1xf32>
    %259 = arith.addf %257, %258 : vector<16x1xf32>
    %260 = math.rsqrt %259 : vector<16x1xf32>
    %261 = vector.broadcast %260 : vector<16x1xf32> to vector<16x32xf32>
    %262 = arith.mulf %255, %261 : vector<16x32xf32>
    %263 = vector.broadcast %243 : vector<1x32xf32> to vector<16x32xf32>
    %264 = arith.mulf %262, %263 : vector<16x32xf32>
    %265 = vector.broadcast %244 : vector<1x32xf32> to vector<16x32xf32>
    %266 = arith.addf %264, %265 : vector<16x32xf32>
    %c328 = arith.constant 328 : index
    %c0_90 = arith.constant 0 : index
    %267 = vector.load %arg1[%c328, %c0_90] : memref<808x128xf32, #tpu.memory_space<vmem>>, vector<32x128xf32>
    %cst_91 = arith.constant dense<0.000000e+00> : vector<16x128xf32>
    %268 = tpu.matmul %266, %267, %cst_91 {dimension_numbers = #tpu.dot_dimension_numbers<[1], [0], [0], [1], [0, 0, 1, 1], [], []>} : vector<16x32xf32>, vector<32x128xf32>, vector<16x128xf32> -> vector<16x128xf32>
    %c102 = arith.constant 102 : index
    %c0_92 = arith.constant 0 : index
    %269 = vector.load %arg2[%c102, %c0_92] : memref<143x128xf32, #tpu.memory_space<vmem>>, vector<1x128xf32>
    %270 = vector.broadcast %269 : vector<1x128xf32> to vector<16x128xf32>
    %271 = arith.addf %268, %270 : vector<16x128xf32>
    %c360 = arith.constant 360 : index
    %c0_93 = arith.constant 0 : index
    %272 = vector.load %arg1[%c360, %c0_93] : memref<808x128xf32, #tpu.memory_space<vmem>>, vector<32x96xf32>
    %c119 = arith.constant 119 : index
    %c0_94 = arith.constant 0 : index
    %273 = vector.load %arg2[%c119, %c0_94] : memref<143x128xf32, #tpu.memory_space<vmem>>, vector<1x96xf32>
    %c392 = arith.constant 392 : index
    %c0_95 = arith.constant 0 : index
    %274 = vector.load %arg1[%c392, %c0_95] : memref<808x128xf32, #tpu.memory_space<vmem>>, vector<32x32xf32>
    %c120 = arith.constant 120 : index
    %c0_96 = arith.constant 0 : index
    %275 = vector.load %arg2[%c120, %c0_96] : memref<143x128xf32, #tpu.memory_space<vmem>>, vector<1x32xf32>
    %cst_97 = arith.constant dense<0.000000e+00> : vector<16x96xf32>
    %276 = tpu.matmul %40, %272, %cst_97 {dimension_numbers = #tpu.dot_dimension_numbers<[1], [0], [0], [1], [0, 0, 1, 1], [], []>} : vector<16x32xf32>, vector<32x96xf32>, vector<16x96xf32> -> vector<16x96xf32>
    %277 = vector.broadcast %273 : vector<1x96xf32> to vector<16x96xf32>
    %278 = arith.addf %276, %277 : vector<16x96xf32>
    %279 = vector.extract_strided_slice %278 {offsets = [0, 0], sizes = [16, 32], strides = [1, 1]} : vector<16x96xf32> to vector<16x32xf32>
    %280 = vector.extract_strided_slice %278 {offsets = [0, 32], sizes = [16, 32], strides = [1, 1]} : vector<16x96xf32> to vector<16x32xf32>
    %281 = vector.extract_strided_slice %278 {offsets = [0, 64], sizes = [16, 32], strides = [1, 1]} : vector<16x96xf32> to vector<16x32xf32>
    %cst_98 = arith.constant 0.353553385 : f32
    %282 = vector.broadcast %cst_98 : f32 to vector<16x32xf32>
    %283 = arith.mulf %279, %282 : vector<16x32xf32>
    %284 = vector.broadcast %10 : vector<1x32xf32> to vector<16x32xf32>
    %285 = arith.mulf %283, %284 : vector<16x32xf32>
    %286 = vector.broadcast %18 : vector<1x32xf32> to vector<16x32xf32>
    %287 = arith.mulf %283, %286 : vector<16x32xf32>
    %288 = vector.broadcast %26 : vector<1x32xf32> to vector<16x32xf32>
    %289 = arith.mulf %283, %288 : vector<16x32xf32>
    %290 = vector.broadcast %34 : vector<1x32xf32> to vector<16x32xf32>
    %291 = arith.mulf %283, %290 : vector<16x32xf32>
    %292 = tpu.concatenate %285, %287, %289, %291 in 0 : vector<16x32xf32>, vector<16x32xf32>, vector<16x32xf32>, vector<16x32xf32> -> vector<64x32xf32>
    %cst_99 = arith.constant dense<0.000000e+00> : vector<64x16xf32>
    %293 = tpu.matmul %292, %280, %cst_99 {dimension_numbers = #tpu.dot_dimension_numbers<[1], [1], [0], [0], [0, 0, 1, 0], [], []>} : vector<64x32xf32>, vector<16x32xf32>, vector<64x16xf32> -> vector<64x16xf32>
    %294 = arith.addf %293, %0 : vector<64x16xf32>
    %cst_100 = arith.constant dense<0xFF800000> : vector<64xf32>
    %295 = vector.multi_reduction <maximumf>, %294, %cst_100 [1] : vector<64x16xf32> to vector<64xf32>
    %296 = vector.shape_cast %295 : vector<64xf32> to vector<64x1xf32>
    %297 = vector.broadcast %296 : vector<64x1xf32> to vector<64x16xf32>
    %298 = arith.subf %294, %297 : vector<64x16xf32>
    %299 = math.exp %298 : vector<64x16xf32>
    %cst_101 = arith.constant dense<0.000000e+00> : vector<64xf32>
    %300 = vector.multi_reduction <add>, %299, %cst_101 [1] : vector<64x16xf32> to vector<64xf32>
    %301 = vector.shape_cast %300 : vector<64xf32> to vector<64x1xf32>
    %302 = tpu.reciprocal %301 {approx = true} : vector<64x1xf32> -> vector<64x1xf32>
    %303 = vector.broadcast %302 : vector<64x1xf32> to vector<64x16xf32>
    %304 = arith.mulf %299, %303 : vector<64x16xf32>
    %cst_102 = arith.constant dense<0.000000e+00> : vector<64x32xf32>
    %305 = tpu.matmul %304, %281, %cst_102 {dimension_numbers = #tpu.dot_dimension_numbers<[1], [0], [0], [1], [0, 0, 1, 1], [], []>} : vector<64x16xf32>, vector<16x32xf32>, vector<64x32xf32> -> vector<64x32xf32>
    %306 = vector.extract_strided_slice %305 {offsets = [0, 0], sizes = [16, 8], strides = [1, 1]} : vector<64x32xf32> to vector<16x8xf32>
    %307 = vector.extract_strided_slice %274 {offsets = [0, 0], sizes = [8, 32], strides = [1, 1]} : vector<32x32xf32> to vector<8x32xf32>
    %cst_103 = arith.constant dense<0.000000e+00> : vector<16x32xf32>
    %308 = tpu.matmul %306, %307, %cst_103 {dimension_numbers = #tpu.dot_dimension_numbers<[1], [0], [0], [1], [0, 0, 1, 1], [], []>} : vector<16x8xf32>, vector<8x32xf32>, vector<16x32xf32> -> vector<16x32xf32>
    %309 = vector.extract_strided_slice %305 {offsets = [16, 8], sizes = [16, 8], strides = [1, 1]} : vector<64x32xf32> to vector<16x8xf32>
    %310 = vector.extract_strided_slice %274 {offsets = [8, 0], sizes = [8, 32], strides = [1, 1]} : vector<32x32xf32> to vector<8x32xf32>
    %cst_104 = arith.constant dense<0.000000e+00> : vector<16x32xf32>
    %311 = tpu.matmul %309, %310, %cst_104 {dimension_numbers = #tpu.dot_dimension_numbers<[1], [0], [0], [1], [0, 0, 1, 1], [], []>} : vector<16x8xf32>, vector<8x32xf32>, vector<16x32xf32> -> vector<16x32xf32>
    %312 = arith.addf %308, %311 : vector<16x32xf32>
    %313 = vector.extract_strided_slice %305 {offsets = [32, 16], sizes = [16, 8], strides = [1, 1]} : vector<64x32xf32> to vector<16x8xf32>
    %314 = vector.extract_strided_slice %274 {offsets = [16, 0], sizes = [8, 32], strides = [1, 1]} : vector<32x32xf32> to vector<8x32xf32>
    %cst_105 = arith.constant dense<0.000000e+00> : vector<16x32xf32>
    %315 = tpu.matmul %313, %314, %cst_105 {dimension_numbers = #tpu.dot_dimension_numbers<[1], [0], [0], [1], [0, 0, 1, 1], [], []>} : vector<16x8xf32>, vector<8x32xf32>, vector<16x32xf32> -> vector<16x32xf32>
    %316 = arith.addf %312, %315 : vector<16x32xf32>
    %317 = vector.extract_strided_slice %305 {offsets = [48, 24], sizes = [16, 8], strides = [1, 1]} : vector<64x32xf32> to vector<16x8xf32>
    %318 = vector.extract_strided_slice %274 {offsets = [24, 0], sizes = [8, 32], strides = [1, 1]} : vector<32x32xf32> to vector<8x32xf32>
    %cst_106 = arith.constant dense<0.000000e+00> : vector<16x32xf32>
    %319 = tpu.matmul %317, %318, %cst_106 {dimension_numbers = #tpu.dot_dimension_numbers<[1], [0], [0], [1], [0, 0, 1, 1], [], []>} : vector<16x8xf32>, vector<8x32xf32>, vector<16x32xf32> -> vector<16x32xf32>
    %320 = arith.addf %316, %319 : vector<16x32xf32>
    %321 = vector.broadcast %275 : vector<1x32xf32> to vector<16x32xf32>
    %322 = arith.addf %320, %321 : vector<16x32xf32>
    %323 = arith.addf %40, %322 : vector<16x32xf32>
    %c125 = arith.constant 125 : index
    %c0_107 = arith.constant 0 : index
    %324 = vector.load %arg2[%c125, %c0_107] : memref<143x128xf32, #tpu.memory_space<vmem>>, vector<1x32xf32>
    %c126 = arith.constant 126 : index
    %c0_108 = arith.constant 0 : index
    %325 = vector.load %arg2[%c126, %c0_108] : memref<143x128xf32, #tpu.memory_space<vmem>>, vector<1x32xf32>
    %cst_109 = arith.constant dense<0.000000e+00> : vector<16xf32>
    %326 = vector.multi_reduction <add>, %323, %cst_109 [1] : vector<16x32xf32> to vector<16xf32>
    %327 = vector.shape_cast %326 : vector<16xf32> to vector<16x1xf32>
    %cst_110 = arith.constant 3.200000e+01 : f32
    %328 = vector.broadcast %cst_110 : f32 to vector<16x1xf32>
    %329 = arith.divf %327, %328 : vector<16x1xf32>
    %330 = arith.mulf %323, %323 : vector<16x32xf32>
    %cst_111 = arith.constant dense<0.000000e+00> : vector<16xf32>
    %331 = vector.multi_reduction <add>, %330, %cst_111 [1] : vector<16x32xf32> to vector<16xf32>
    %332 = vector.shape_cast %331 : vector<16xf32> to vector<16x1xf32>
    %cst_112 = arith.constant 3.200000e+01 : f32
    %333 = vector.broadcast %cst_112 : f32 to vector<16x1xf32>
    %334 = arith.divf %332, %333 : vector<16x1xf32>
    %335 = vector.broadcast %329 : vector<16x1xf32> to vector<16x32xf32>
    %336 = arith.subf %323, %335 : vector<16x32xf32>
    %337 = arith.mulf %329, %329 : vector<16x1xf32>
    %338 = arith.subf %334, %337 : vector<16x1xf32>
    %cst_113 = arith.constant 9.99999974E-6 : f32
    %339 = vector.broadcast %cst_113 : f32 to vector<16x1xf32>
    %340 = arith.addf %338, %339 : vector<16x1xf32>
    %341 = math.rsqrt %340 : vector<16x1xf32>
    %342 = vector.broadcast %341 : vector<16x1xf32> to vector<16x32xf32>
    %343 = arith.mulf %336, %342 : vector<16x32xf32>
    %344 = vector.broadcast %324 : vector<1x32xf32> to vector<16x32xf32>
    %345 = arith.mulf %343, %344 : vector<16x32xf32>
    %346 = vector.broadcast %325 : vector<1x32xf32> to vector<16x32xf32>
    %347 = arith.addf %345, %346 : vector<16x32xf32>
    %c424 = arith.constant 424 : index
    %c0_114 = arith.constant 0 : index
    %348 = vector.load %arg1[%c424, %c0_114] : memref<808x128xf32, #tpu.memory_space<vmem>>, vector<32x32xf32>
    %cst_115 = arith.constant dense<0.000000e+00> : vector<16x32xf32>
    %349 = tpu.matmul %347, %348, %cst_115 {dimension_numbers = #tpu.dot_dimension_numbers<[1], [0], [0], [1], [0, 0, 1, 1], [], []>} : vector<16x32xf32>, vector<32x32xf32>, vector<16x32xf32> -> vector<16x32xf32>
    %c121 = arith.constant 121 : index
    %c0_116 = arith.constant 0 : index
    %350 = vector.load %arg2[%c121, %c0_116] : memref<143x128xf32, #tpu.memory_space<vmem>>, vector<1x32xf32>
    %351 = vector.broadcast %350 : vector<1x32xf32> to vector<16x32xf32>
    %352 = arith.addf %349, %351 : vector<16x32xf32>
    %353 = vector.extract_strided_slice %271 {offsets = [0, 0], sizes = [16, 32], strides = [1, 1]} : vector<16x128xf32> to vector<16x32xf32>
    %354 = vector.extract_strided_slice %271 {offsets = [0, 32], sizes = [16, 32], strides = [1, 1]} : vector<16x128xf32> to vector<16x32xf32>
    %c456 = arith.constant 456 : index
    %c0_117 = arith.constant 0 : index
    %355 = vector.load %arg1[%c456, %c0_117] : memref<808x128xf32, #tpu.memory_space<vmem>>, vector<32x32xf32>
    %c122 = arith.constant 122 : index
    %c0_118 = arith.constant 0 : index
    %356 = vector.load %arg2[%c122, %c0_118] : memref<143x128xf32, #tpu.memory_space<vmem>>, vector<1x32xf32>
    %cst_119 = arith.constant 0.353553385 : f32
    %357 = vector.broadcast %cst_119 : f32 to vector<16x32xf32>
    %358 = arith.mulf %352, %357 : vector<16x32xf32>
    %359 = vector.broadcast %10 : vector<1x32xf32> to vector<16x32xf32>
    %360 = arith.mulf %358, %359 : vector<16x32xf32>
    %361 = vector.broadcast %18 : vector<1x32xf32> to vector<16x32xf32>
    %362 = arith.mulf %358, %361 : vector<16x32xf32>
    %363 = vector.broadcast %26 : vector<1x32xf32> to vector<16x32xf32>
    %364 = arith.mulf %358, %363 : vector<16x32xf32>
    %365 = vector.broadcast %34 : vector<1x32xf32> to vector<16x32xf32>
    %366 = arith.mulf %358, %365 : vector<16x32xf32>
    %367 = tpu.concatenate %360, %362, %364, %366 in 0 : vector<16x32xf32>, vector<16x32xf32>, vector<16x32xf32>, vector<16x32xf32> -> vector<64x32xf32>
    %cst_120 = arith.constant dense<0.000000e+00> : vector<64x16xf32>
    %368 = tpu.matmul %367, %353, %cst_120 {dimension_numbers = #tpu.dot_dimension_numbers<[1], [1], [0], [0], [0, 0, 1, 0], [], []>} : vector<64x32xf32>, vector<16x32xf32>, vector<64x16xf32> -> vector<64x16xf32>
    %369 = arith.addf %368, %0 : vector<64x16xf32>
    %cst_121 = arith.constant dense<0xFF800000> : vector<64xf32>
    %370 = vector.multi_reduction <maximumf>, %369, %cst_121 [1] : vector<64x16xf32> to vector<64xf32>
    %371 = vector.shape_cast %370 : vector<64xf32> to vector<64x1xf32>
    %372 = vector.broadcast %371 : vector<64x1xf32> to vector<64x16xf32>
    %373 = arith.subf %369, %372 : vector<64x16xf32>
    %374 = math.exp %373 : vector<64x16xf32>
    %cst_122 = arith.constant dense<0.000000e+00> : vector<64xf32>
    %375 = vector.multi_reduction <add>, %374, %cst_122 [1] : vector<64x16xf32> to vector<64xf32>
    %376 = vector.shape_cast %375 : vector<64xf32> to vector<64x1xf32>
    %377 = tpu.reciprocal %376 {approx = true} : vector<64x1xf32> -> vector<64x1xf32>
    %378 = vector.broadcast %377 : vector<64x1xf32> to vector<64x16xf32>
    %379 = arith.mulf %374, %378 : vector<64x16xf32>
    %cst_123 = arith.constant dense<0.000000e+00> : vector<64x32xf32>
    %380 = tpu.matmul %379, %354, %cst_123 {dimension_numbers = #tpu.dot_dimension_numbers<[1], [0], [0], [1], [0, 0, 1, 1], [], []>} : vector<64x16xf32>, vector<16x32xf32>, vector<64x32xf32> -> vector<64x32xf32>
    %381 = vector.extract_strided_slice %380 {offsets = [0, 0], sizes = [16, 8], strides = [1, 1]} : vector<64x32xf32> to vector<16x8xf32>
    %382 = vector.extract_strided_slice %355 {offsets = [0, 0], sizes = [8, 32], strides = [1, 1]} : vector<32x32xf32> to vector<8x32xf32>
    %cst_124 = arith.constant dense<0.000000e+00> : vector<16x32xf32>
    %383 = tpu.matmul %381, %382, %cst_124 {dimension_numbers = #tpu.dot_dimension_numbers<[1], [0], [0], [1], [0, 0, 1, 1], [], []>} : vector<16x8xf32>, vector<8x32xf32>, vector<16x32xf32> -> vector<16x32xf32>
    %384 = vector.extract_strided_slice %380 {offsets = [16, 8], sizes = [16, 8], strides = [1, 1]} : vector<64x32xf32> to vector<16x8xf32>
    %385 = vector.extract_strided_slice %355 {offsets = [8, 0], sizes = [8, 32], strides = [1, 1]} : vector<32x32xf32> to vector<8x32xf32>
    %cst_125 = arith.constant dense<0.000000e+00> : vector<16x32xf32>
    %386 = tpu.matmul %384, %385, %cst_125 {dimension_numbers = #tpu.dot_dimension_numbers<[1], [0], [0], [1], [0, 0, 1, 1], [], []>} : vector<16x8xf32>, vector<8x32xf32>, vector<16x32xf32> -> vector<16x32xf32>
    %387 = arith.addf %383, %386 : vector<16x32xf32>
    %388 = vector.extract_strided_slice %380 {offsets = [32, 16], sizes = [16, 8], strides = [1, 1]} : vector<64x32xf32> to vector<16x8xf32>
    %389 = vector.extract_strided_slice %355 {offsets = [16, 0], sizes = [8, 32], strides = [1, 1]} : vector<32x32xf32> to vector<8x32xf32>
    %cst_126 = arith.constant dense<0.000000e+00> : vector<16x32xf32>
    %390 = tpu.matmul %388, %389, %cst_126 {dimension_numbers = #tpu.dot_dimension_numbers<[1], [0], [0], [1], [0, 0, 1, 1], [], []>} : vector<16x8xf32>, vector<8x32xf32>, vector<16x32xf32> -> vector<16x32xf32>
    %391 = arith.addf %387, %390 : vector<16x32xf32>
    %392 = vector.extract_strided_slice %380 {offsets = [48, 24], sizes = [16, 8], strides = [1, 1]} : vector<64x32xf32> to vector<16x8xf32>
    %393 = vector.extract_strided_slice %355 {offsets = [24, 0], sizes = [8, 32], strides = [1, 1]} : vector<32x32xf32> to vector<8x32xf32>
    %cst_127 = arith.constant dense<0.000000e+00> : vector<16x32xf32>
    %394 = tpu.matmul %392, %393, %cst_127 {dimension_numbers = #tpu.dot_dimension_numbers<[1], [0], [0], [1], [0, 0, 1, 1], [], []>} : vector<16x8xf32>, vector<8x32xf32>, vector<16x32xf32> -> vector<16x32xf32>
    %395 = arith.addf %391, %394 : vector<16x32xf32>
    %396 = vector.broadcast %356 : vector<1x32xf32> to vector<16x32xf32>
    %397 = arith.addf %395, %396 : vector<16x32xf32>
    %398 = arith.addf %347, %397 : vector<16x32xf32>
    %c127 = arith.constant 127 : index
    %c0_128 = arith.constant 0 : index
    %399 = vector.load %arg2[%c127, %c0_128] : memref<143x128xf32, #tpu.memory_space<vmem>>, vector<1x32xf32>
    %c128 = arith.constant 128 : index
    %c0_129 = arith.constant 0 : index
    %400 = vector.load %arg2[%c128, %c0_129] : memref<143x128xf32, #tpu.memory_space<vmem>>, vector<1x32xf32>
    %cst_130 = arith.constant dense<0.000000e+00> : vector<16xf32>
    %401 = vector.multi_reduction <add>, %398, %cst_130 [1] : vector<16x32xf32> to vector<16xf32>
    %402 = vector.shape_cast %401 : vector<16xf32> to vector<16x1xf32>
    %cst_131 = arith.constant 3.200000e+01 : f32
    %403 = vector.broadcast %cst_131 : f32 to vector<16x1xf32>
    %404 = arith.divf %402, %403 : vector<16x1xf32>
    %405 = arith.mulf %398, %398 : vector<16x32xf32>
    %cst_132 = arith.constant dense<0.000000e+00> : vector<16xf32>
    %406 = vector.multi_reduction <add>, %405, %cst_132 [1] : vector<16x32xf32> to vector<16xf32>
    %407 = vector.shape_cast %406 : vector<16xf32> to vector<16x1xf32>
    %cst_133 = arith.constant 3.200000e+01 : f32
    %408 = vector.broadcast %cst_133 : f32 to vector<16x1xf32>
    %409 = arith.divf %407, %408 : vector<16x1xf32>
    %410 = vector.broadcast %404 : vector<16x1xf32> to vector<16x32xf32>
    %411 = arith.subf %398, %410 : vector<16x32xf32>
    %412 = arith.mulf %404, %404 : vector<16x1xf32>
    %413 = arith.subf %409, %412 : vector<16x1xf32>
    %cst_134 = arith.constant 9.99999974E-6 : f32
    %414 = vector.broadcast %cst_134 : f32 to vector<16x1xf32>
    %415 = arith.addf %413, %414 : vector<16x1xf32>
    %416 = math.rsqrt %415 : vector<16x1xf32>
    %417 = vector.broadcast %416 : vector<16x1xf32> to vector<16x32xf32>
    %418 = arith.mulf %411, %417 : vector<16x32xf32>
    %419 = vector.broadcast %399 : vector<1x32xf32> to vector<16x32xf32>
    %420 = arith.mulf %418, %419 : vector<16x32xf32>
    %421 = vector.broadcast %400 : vector<1x32xf32> to vector<16x32xf32>
    %422 = arith.addf %420, %421 : vector<16x32xf32>
    %c488 = arith.constant 488 : index
    %c0_135 = arith.constant 0 : index
    %423 = vector.load %arg1[%c488, %c0_135] : memref<808x128xf32, #tpu.memory_space<vmem>>, vector<32x64xf32>
    %c123 = arith.constant 123 : index
    %c0_136 = arith.constant 0 : index
    %424 = vector.load %arg2[%c123, %c0_136] : memref<143x128xf32, #tpu.memory_space<vmem>>, vector<1x64xf32>
    %c520 = arith.constant 520 : index
    %c0_137 = arith.constant 0 : index
    %425 = vector.load %arg1[%c520, %c0_137] : memref<808x128xf32, #tpu.memory_space<vmem>>, vector<64x32xf32>
    %c124 = arith.constant 124 : index
    %c0_138 = arith.constant 0 : index
    %426 = vector.load %arg2[%c124, %c0_138] : memref<143x128xf32, #tpu.memory_space<vmem>>, vector<1x32xf32>
    %cst_139 = arith.constant dense<0.000000e+00> : vector<16x64xf32>
    %427 = tpu.matmul %422, %423, %cst_139 {dimension_numbers = #tpu.dot_dimension_numbers<[1], [0], [0], [1], [0, 0, 1, 1], [], []>} : vector<16x32xf32>, vector<32x64xf32>, vector<16x64xf32> -> vector<16x64xf32>
    %428 = vector.broadcast %424 : vector<1x64xf32> to vector<16x64xf32>
    %429 = arith.addf %427, %428 : vector<16x64xf32>
    %cst_140 = arith.constant 0.000000e+00 : f32
    %430 = vector.broadcast %cst_140 : f32 to vector<16x64xf32>
    %431 = arith.maximumf %429, %430 : vector<16x64xf32>
    %cst_141 = arith.constant dense<0.000000e+00> : vector<16x32xf32>
    %432 = tpu.matmul %431, %425, %cst_141 {dimension_numbers = #tpu.dot_dimension_numbers<[1], [0], [0], [1], [0, 0, 1, 1], [], []>} : vector<16x64xf32>, vector<64x32xf32>, vector<16x32xf32> -> vector<16x32xf32>
    %433 = vector.broadcast %426 : vector<1x32xf32> to vector<16x32xf32>
    %434 = arith.addf %432, %433 : vector<16x32xf32>
    %435 = arith.addf %422, %434 : vector<16x32xf32>
    %c129 = arith.constant 129 : index
    %c0_142 = arith.constant 0 : index
    %436 = vector.load %arg2[%c129, %c0_142] : memref<143x128xf32, #tpu.memory_space<vmem>>, vector<1x32xf32>
    %c130 = arith.constant 130 : index
    %c0_143 = arith.constant 0 : index
    %437 = vector.load %arg2[%c130, %c0_143] : memref<143x128xf32, #tpu.memory_space<vmem>>, vector<1x32xf32>
    %cst_144 = arith.constant dense<0.000000e+00> : vector<16xf32>
    %438 = vector.multi_reduction <add>, %435, %cst_144 [1] : vector<16x32xf32> to vector<16xf32>
    %439 = vector.shape_cast %438 : vector<16xf32> to vector<16x1xf32>
    %cst_145 = arith.constant 3.200000e+01 : f32
    %440 = vector.broadcast %cst_145 : f32 to vector<16x1xf32>
    %441 = arith.divf %439, %440 : vector<16x1xf32>
    %442 = arith.mulf %435, %435 : vector<16x32xf32>
    %cst_146 = arith.constant dense<0.000000e+00> : vector<16xf32>
    %443 = vector.multi_reduction <add>, %442, %cst_146 [1] : vector<16x32xf32> to vector<16xf32>
    %444 = vector.shape_cast %443 : vector<16xf32> to vector<16x1xf32>
    %cst_147 = arith.constant 3.200000e+01 : f32
    %445 = vector.broadcast %cst_147 : f32 to vector<16x1xf32>
    %446 = arith.divf %444, %445 : vector<16x1xf32>
    %447 = vector.broadcast %441 : vector<16x1xf32> to vector<16x32xf32>
    %448 = arith.subf %435, %447 : vector<16x32xf32>
    %449 = arith.mulf %441, %441 : vector<16x1xf32>
    %450 = arith.subf %446, %449 : vector<16x1xf32>
    %cst_148 = arith.constant 9.99999974E-6 : f32
    %451 = vector.broadcast %cst_148 : f32 to vector<16x1xf32>
    %452 = arith.addf %450, %451 : vector<16x1xf32>
    %453 = math.rsqrt %452 : vector<16x1xf32>
    %454 = vector.broadcast %453 : vector<16x1xf32> to vector<16x32xf32>
    %455 = arith.mulf %448, %454 : vector<16x32xf32>
    %456 = vector.broadcast %436 : vector<1x32xf32> to vector<16x32xf32>
    %457 = arith.mulf %455, %456 : vector<16x32xf32>
    %458 = vector.broadcast %437 : vector<1x32xf32> to vector<16x32xf32>
    %459 = arith.addf %457, %458 : vector<16x32xf32>
    %c584 = arith.constant 584 : index
    %c0_149 = arith.constant 0 : index
    %460 = vector.load %arg1[%c584, %c0_149] : memref<808x128xf32, #tpu.memory_space<vmem>>, vector<32x96xf32>
    %c131 = arith.constant 131 : index
    %c0_150 = arith.constant 0 : index
    %461 = vector.load %arg2[%c131, %c0_150] : memref<143x128xf32, #tpu.memory_space<vmem>>, vector<1x96xf32>
    %c616 = arith.constant 616 : index
    %c0_151 = arith.constant 0 : index
    %462 = vector.load %arg1[%c616, %c0_151] : memref<808x128xf32, #tpu.memory_space<vmem>>, vector<32x32xf32>
    %c132 = arith.constant 132 : index
    %c0_152 = arith.constant 0 : index
    %463 = vector.load %arg2[%c132, %c0_152] : memref<143x128xf32, #tpu.memory_space<vmem>>, vector<1x32xf32>
    %cst_153 = arith.constant dense<0.000000e+00> : vector<16x96xf32>
    %464 = tpu.matmul %459, %460, %cst_153 {dimension_numbers = #tpu.dot_dimension_numbers<[1], [0], [0], [1], [0, 0, 1, 1], [], []>} : vector<16x32xf32>, vector<32x96xf32>, vector<16x96xf32> -> vector<16x96xf32>
    %465 = vector.broadcast %461 : vector<1x96xf32> to vector<16x96xf32>
    %466 = arith.addf %464, %465 : vector<16x96xf32>
    %467 = vector.extract_strided_slice %466 {offsets = [0, 0], sizes = [16, 32], strides = [1, 1]} : vector<16x96xf32> to vector<16x32xf32>
    %468 = vector.extract_strided_slice %466 {offsets = [0, 32], sizes = [16, 32], strides = [1, 1]} : vector<16x96xf32> to vector<16x32xf32>
    %469 = vector.extract_strided_slice %466 {offsets = [0, 64], sizes = [16, 32], strides = [1, 1]} : vector<16x96xf32> to vector<16x32xf32>
    %cst_154 = arith.constant 0.353553385 : f32
    %470 = vector.broadcast %cst_154 : f32 to vector<16x32xf32>
    %471 = arith.mulf %467, %470 : vector<16x32xf32>
    %472 = vector.broadcast %10 : vector<1x32xf32> to vector<16x32xf32>
    %473 = arith.mulf %471, %472 : vector<16x32xf32>
    %474 = vector.broadcast %18 : vector<1x32xf32> to vector<16x32xf32>
    %475 = arith.mulf %471, %474 : vector<16x32xf32>
    %476 = vector.broadcast %26 : vector<1x32xf32> to vector<16x32xf32>
    %477 = arith.mulf %471, %476 : vector<16x32xf32>
    %478 = vector.broadcast %34 : vector<1x32xf32> to vector<16x32xf32>
    %479 = arith.mulf %471, %478 : vector<16x32xf32>
    %480 = tpu.concatenate %473, %475, %477, %479 in 0 : vector<16x32xf32>, vector<16x32xf32>, vector<16x32xf32>, vector<16x32xf32> -> vector<64x32xf32>
    %cst_155 = arith.constant dense<0.000000e+00> : vector<64x16xf32>
    %481 = tpu.matmul %480, %468, %cst_155 {dimension_numbers = #tpu.dot_dimension_numbers<[1], [1], [0], [0], [0, 0, 1, 0], [], []>} : vector<64x32xf32>, vector<16x32xf32>, vector<64x16xf32> -> vector<64x16xf32>
    %482 = arith.addf %481, %0 : vector<64x16xf32>
    %cst_156 = arith.constant dense<0xFF800000> : vector<64xf32>
    %483 = vector.multi_reduction <maximumf>, %482, %cst_156 [1] : vector<64x16xf32> to vector<64xf32>
    %484 = vector.shape_cast %483 : vector<64xf32> to vector<64x1xf32>
    %485 = vector.broadcast %484 : vector<64x1xf32> to vector<64x16xf32>
    %486 = arith.subf %482, %485 : vector<64x16xf32>
    %487 = math.exp %486 : vector<64x16xf32>
    %cst_157 = arith.constant dense<0.000000e+00> : vector<64xf32>
    %488 = vector.multi_reduction <add>, %487, %cst_157 [1] : vector<64x16xf32> to vector<64xf32>
    %489 = vector.shape_cast %488 : vector<64xf32> to vector<64x1xf32>
    %490 = tpu.reciprocal %489 {approx = true} : vector<64x1xf32> -> vector<64x1xf32>
    %491 = vector.broadcast %490 : vector<64x1xf32> to vector<64x16xf32>
    %492 = arith.mulf %487, %491 : vector<64x16xf32>
    %cst_158 = arith.constant dense<0.000000e+00> : vector<64x32xf32>
    %493 = tpu.matmul %492, %469, %cst_158 {dimension_numbers = #tpu.dot_dimension_numbers<[1], [0], [0], [1], [0, 0, 1, 1], [], []>} : vector<64x16xf32>, vector<16x32xf32>, vector<64x32xf32> -> vector<64x32xf32>
    %494 = vector.extract_strided_slice %493 {offsets = [0, 0], sizes = [16, 8], strides = [1, 1]} : vector<64x32xf32> to vector<16x8xf32>
    %495 = vector.extract_strided_slice %462 {offsets = [0, 0], sizes = [8, 32], strides = [1, 1]} : vector<32x32xf32> to vector<8x32xf32>
    %cst_159 = arith.constant dense<0.000000e+00> : vector<16x32xf32>
    %496 = tpu.matmul %494, %495, %cst_159 {dimension_numbers = #tpu.dot_dimension_numbers<[1], [0], [0], [1], [0, 0, 1, 1], [], []>} : vector<16x8xf32>, vector<8x32xf32>, vector<16x32xf32> -> vector<16x32xf32>
    %497 = vector.extract_strided_slice %493 {offsets = [16, 8], sizes = [16, 8], strides = [1, 1]} : vector<64x32xf32> to vector<16x8xf32>
    %498 = vector.extract_strided_slice %462 {offsets = [8, 0], sizes = [8, 32], strides = [1, 1]} : vector<32x32xf32> to vector<8x32xf32>
    %cst_160 = arith.constant dense<0.000000e+00> : vector<16x32xf32>
    %499 = tpu.matmul %497, %498, %cst_160 {dimension_numbers = #tpu.dot_dimension_numbers<[1], [0], [0], [1], [0, 0, 1, 1], [], []>} : vector<16x8xf32>, vector<8x32xf32>, vector<16x32xf32> -> vector<16x32xf32>
    %500 = arith.addf %496, %499 : vector<16x32xf32>
    %501 = vector.extract_strided_slice %493 {offsets = [32, 16], sizes = [16, 8], strides = [1, 1]} : vector<64x32xf32> to vector<16x8xf32>
    %502 = vector.extract_strided_slice %462 {offsets = [16, 0], sizes = [8, 32], strides = [1, 1]} : vector<32x32xf32> to vector<8x32xf32>
    %cst_161 = arith.constant dense<0.000000e+00> : vector<16x32xf32>
    %503 = tpu.matmul %501, %502, %cst_161 {dimension_numbers = #tpu.dot_dimension_numbers<[1], [0], [0], [1], [0, 0, 1, 1], [], []>} : vector<16x8xf32>, vector<8x32xf32>, vector<16x32xf32> -> vector<16x32xf32>
    %504 = arith.addf %500, %503 : vector<16x32xf32>
    %505 = vector.extract_strided_slice %493 {offsets = [48, 24], sizes = [16, 8], strides = [1, 1]} : vector<64x32xf32> to vector<16x8xf32>
    %506 = vector.extract_strided_slice %462 {offsets = [24, 0], sizes = [8, 32], strides = [1, 1]} : vector<32x32xf32> to vector<8x32xf32>
    %cst_162 = arith.constant dense<0.000000e+00> : vector<16x32xf32>
    %507 = tpu.matmul %505, %506, %cst_162 {dimension_numbers = #tpu.dot_dimension_numbers<[1], [0], [0], [1], [0, 0, 1, 1], [], []>} : vector<16x8xf32>, vector<8x32xf32>, vector<16x32xf32> -> vector<16x32xf32>
    %508 = arith.addf %504, %507 : vector<16x32xf32>
    %509 = vector.broadcast %463 : vector<1x32xf32> to vector<16x32xf32>
    %510 = arith.addf %508, %509 : vector<16x32xf32>
    %511 = arith.addf %459, %510 : vector<16x32xf32>
    %c137 = arith.constant 137 : index
    %c0_163 = arith.constant 0 : index
    %512 = vector.load %arg2[%c137, %c0_163] : memref<143x128xf32, #tpu.memory_space<vmem>>, vector<1x32xf32>
    %c138 = arith.constant 138 : index
    %c0_164 = arith.constant 0 : index
    %513 = vector.load %arg2[%c138, %c0_164] : memref<143x128xf32, #tpu.memory_space<vmem>>, vector<1x32xf32>
    %cst_165 = arith.constant dense<0.000000e+00> : vector<16xf32>
    %514 = vector.multi_reduction <add>, %511, %cst_165 [1] : vector<16x32xf32> to vector<16xf32>
    %515 = vector.shape_cast %514 : vector<16xf32> to vector<16x1xf32>
    %cst_166 = arith.constant 3.200000e+01 : f32
    %516 = vector.broadcast %cst_166 : f32 to vector<16x1xf32>
    %517 = arith.divf %515, %516 : vector<16x1xf32>
    %518 = arith.mulf %511, %511 : vector<16x32xf32>
    %cst_167 = arith.constant dense<0.000000e+00> : vector<16xf32>
    %519 = vector.multi_reduction <add>, %518, %cst_167 [1] : vector<16x32xf32> to vector<16xf32>
    %520 = vector.shape_cast %519 : vector<16xf32> to vector<16x1xf32>
    %cst_168 = arith.constant 3.200000e+01 : f32
    %521 = vector.broadcast %cst_168 : f32 to vector<16x1xf32>
    %522 = arith.divf %520, %521 : vector<16x1xf32>
    %523 = vector.broadcast %517 : vector<16x1xf32> to vector<16x32xf32>
    %524 = arith.subf %511, %523 : vector<16x32xf32>
    %525 = arith.mulf %517, %517 : vector<16x1xf32>
    %526 = arith.subf %522, %525 : vector<16x1xf32>
    %cst_169 = arith.constant 9.99999974E-6 : f32
    %527 = vector.broadcast %cst_169 : f32 to vector<16x1xf32>
    %528 = arith.addf %526, %527 : vector<16x1xf32>
    %529 = math.rsqrt %528 : vector<16x1xf32>
    %530 = vector.broadcast %529 : vector<16x1xf32> to vector<16x32xf32>
    %531 = arith.mulf %524, %530 : vector<16x32xf32>
    %532 = vector.broadcast %512 : vector<1x32xf32> to vector<16x32xf32>
    %533 = arith.mulf %531, %532 : vector<16x32xf32>
    %534 = vector.broadcast %513 : vector<1x32xf32> to vector<16x32xf32>
    %535 = arith.addf %533, %534 : vector<16x32xf32>
    %c648 = arith.constant 648 : index
    %c0_170 = arith.constant 0 : index
    %536 = vector.load %arg1[%c648, %c0_170] : memref<808x128xf32, #tpu.memory_space<vmem>>, vector<32x32xf32>
    %cst_171 = arith.constant dense<0.000000e+00> : vector<16x32xf32>
    %537 = tpu.matmul %535, %536, %cst_171 {dimension_numbers = #tpu.dot_dimension_numbers<[1], [0], [0], [1], [0, 0, 1, 1], [], []>} : vector<16x32xf32>, vector<32x32xf32>, vector<16x32xf32> -> vector<16x32xf32>
    %c133 = arith.constant 133 : index
    %c0_172 = arith.constant 0 : index
    %538 = vector.load %arg2[%c133, %c0_172] : memref<143x128xf32, #tpu.memory_space<vmem>>, vector<1x32xf32>
    %539 = vector.broadcast %538 : vector<1x32xf32> to vector<16x32xf32>
    %540 = arith.addf %537, %539 : vector<16x32xf32>
    %541 = vector.extract_strided_slice %271 {offsets = [0, 64], sizes = [16, 32], strides = [1, 1]} : vector<16x128xf32> to vector<16x32xf32>
    %542 = vector.extract_strided_slice %271 {offsets = [0, 96], sizes = [16, 32], strides = [1, 1]} : vector<16x128xf32> to vector<16x32xf32>
    %c680 = arith.constant 680 : index
    %c0_173 = arith.constant 0 : index
    %543 = vector.load %arg1[%c680, %c0_173] : memref<808x128xf32, #tpu.memory_space<vmem>>, vector<32x32xf32>
    %c134 = arith.constant 134 : index
    %c0_174 = arith.constant 0 : index
    %544 = vector.load %arg2[%c134, %c0_174] : memref<143x128xf32, #tpu.memory_space<vmem>>, vector<1x32xf32>
    %cst_175 = arith.constant 0.353553385 : f32
    %545 = vector.broadcast %cst_175 : f32 to vector<16x32xf32>
    %546 = arith.mulf %540, %545 : vector<16x32xf32>
    %547 = vector.broadcast %10 : vector<1x32xf32> to vector<16x32xf32>
    %548 = arith.mulf %546, %547 : vector<16x32xf32>
    %549 = vector.broadcast %18 : vector<1x32xf32> to vector<16x32xf32>
    %550 = arith.mulf %546, %549 : vector<16x32xf32>
    %551 = vector.broadcast %26 : vector<1x32xf32> to vector<16x32xf32>
    %552 = arith.mulf %546, %551 : vector<16x32xf32>
    %553 = vector.broadcast %34 : vector<1x32xf32> to vector<16x32xf32>
    %554 = arith.mulf %546, %553 : vector<16x32xf32>
    %555 = tpu.concatenate %548, %550, %552, %554 in 0 : vector<16x32xf32>, vector<16x32xf32>, vector<16x32xf32>, vector<16x32xf32> -> vector<64x32xf32>
    %cst_176 = arith.constant dense<0.000000e+00> : vector<64x16xf32>
    %556 = tpu.matmul %555, %541, %cst_176 {dimension_numbers = #tpu.dot_dimension_numbers<[1], [1], [0], [0], [0, 0, 1, 0], [], []>} : vector<64x32xf32>, vector<16x32xf32>, vector<64x16xf32> -> vector<64x16xf32>
    %557 = arith.addf %556, %0 : vector<64x16xf32>
    %cst_177 = arith.constant dense<0xFF800000> : vector<64xf32>
    %558 = vector.multi_reduction <maximumf>, %557, %cst_177 [1] : vector<64x16xf32> to vector<64xf32>
    %559 = vector.shape_cast %558 : vector<64xf32> to vector<64x1xf32>
    %560 = vector.broadcast %559 : vector<64x1xf32> to vector<64x16xf32>
    %561 = arith.subf %557, %560 : vector<64x16xf32>
    %562 = math.exp %561 : vector<64x16xf32>
    %cst_178 = arith.constant dense<0.000000e+00> : vector<64xf32>
    %563 = vector.multi_reduction <add>, %562, %cst_178 [1] : vector<64x16xf32> to vector<64xf32>
    %564 = vector.shape_cast %563 : vector<64xf32> to vector<64x1xf32>
    %565 = tpu.reciprocal %564 {approx = true} : vector<64x1xf32> -> vector<64x1xf32>
    %566 = vector.broadcast %565 : vector<64x1xf32> to vector<64x16xf32>
    %567 = arith.mulf %562, %566 : vector<64x16xf32>
    %cst_179 = arith.constant dense<0.000000e+00> : vector<64x32xf32>
    %568 = tpu.matmul %567, %542, %cst_179 {dimension_numbers = #tpu.dot_dimension_numbers<[1], [0], [0], [1], [0, 0, 1, 1], [], []>} : vector<64x16xf32>, vector<16x32xf32>, vector<64x32xf32> -> vector<64x32xf32>
    %569 = vector.extract_strided_slice %568 {offsets = [0, 0], sizes = [16, 8], strides = [1, 1]} : vector<64x32xf32> to vector<16x8xf32>
    %570 = vector.extract_strided_slice %543 {offsets = [0, 0], sizes = [8, 32], strides = [1, 1]} : vector<32x32xf32> to vector<8x32xf32>
    %cst_180 = arith.constant dense<0.000000e+00> : vector<16x32xf32>
    %571 = tpu.matmul %569, %570, %cst_180 {dimension_numbers = #tpu.dot_dimension_numbers<[1], [0], [0], [1], [0, 0, 1, 1], [], []>} : vector<16x8xf32>, vector<8x32xf32>, vector<16x32xf32> -> vector<16x32xf32>
    %572 = vector.extract_strided_slice %568 {offsets = [16, 8], sizes = [16, 8], strides = [1, 1]} : vector<64x32xf32> to vector<16x8xf32>
    %573 = vector.extract_strided_slice %543 {offsets = [8, 0], sizes = [8, 32], strides = [1, 1]} : vector<32x32xf32> to vector<8x32xf32>
    %cst_181 = arith.constant dense<0.000000e+00> : vector<16x32xf32>
    %574 = tpu.matmul %572, %573, %cst_181 {dimension_numbers = #tpu.dot_dimension_numbers<[1], [0], [0], [1], [0, 0, 1, 1], [], []>} : vector<16x8xf32>, vector<8x32xf32>, vector<16x32xf32> -> vector<16x32xf32>
    %575 = arith.addf %571, %574 : vector<16x32xf32>
    %576 = vector.extract_strided_slice %568 {offsets = [32, 16], sizes = [16, 8], strides = [1, 1]} : vector<64x32xf32> to vector<16x8xf32>
    %577 = vector.extract_strided_slice %543 {offsets = [16, 0], sizes = [8, 32], strides = [1, 1]} : vector<32x32xf32> to vector<8x32xf32>
    %cst_182 = arith.constant dense<0.000000e+00> : vector<16x32xf32>
    %578 = tpu.matmul %576, %577, %cst_182 {dimension_numbers = #tpu.dot_dimension_numbers<[1], [0], [0], [1], [0, 0, 1, 1], [], []>} : vector<16x8xf32>, vector<8x32xf32>, vector<16x32xf32> -> vector<16x32xf32>
    %579 = arith.addf %575, %578 : vector<16x32xf32>
    %580 = vector.extract_strided_slice %568 {offsets = [48, 24], sizes = [16, 8], strides = [1, 1]} : vector<64x32xf32> to vector<16x8xf32>
    %581 = vector.extract_strided_slice %543 {offsets = [24, 0], sizes = [8, 32], strides = [1, 1]} : vector<32x32xf32> to vector<8x32xf32>
    %cst_183 = arith.constant dense<0.000000e+00> : vector<16x32xf32>
    %582 = tpu.matmul %580, %581, %cst_183 {dimension_numbers = #tpu.dot_dimension_numbers<[1], [0], [0], [1], [0, 0, 1, 1], [], []>} : vector<16x8xf32>, vector<8x32xf32>, vector<16x32xf32> -> vector<16x32xf32>
    %583 = arith.addf %579, %582 : vector<16x32xf32>
    %584 = vector.broadcast %544 : vector<1x32xf32> to vector<16x32xf32>
    %585 = arith.addf %583, %584 : vector<16x32xf32>
    %586 = arith.addf %535, %585 : vector<16x32xf32>
    %c139 = arith.constant 139 : index
    %c0_184 = arith.constant 0 : index
    %587 = vector.load %arg2[%c139, %c0_184] : memref<143x128xf32, #tpu.memory_space<vmem>>, vector<1x32xf32>
    %c140 = arith.constant 140 : index
    %c0_185 = arith.constant 0 : index
    %588 = vector.load %arg2[%c140, %c0_185] : memref<143x128xf32, #tpu.memory_space<vmem>>, vector<1x32xf32>
    %cst_186 = arith.constant dense<0.000000e+00> : vector<16xf32>
    %589 = vector.multi_reduction <add>, %586, %cst_186 [1] : vector<16x32xf32> to vector<16xf32>
    %590 = vector.shape_cast %589 : vector<16xf32> to vector<16x1xf32>
    %cst_187 = arith.constant 3.200000e+01 : f32
    %591 = vector.broadcast %cst_187 : f32 to vector<16x1xf32>
    %592 = arith.divf %590, %591 : vector<16x1xf32>
    %593 = arith.mulf %586, %586 : vector<16x32xf32>
    %cst_188 = arith.constant dense<0.000000e+00> : vector<16xf32>
    %594 = vector.multi_reduction <add>, %593, %cst_188 [1] : vector<16x32xf32> to vector<16xf32>
    %595 = vector.shape_cast %594 : vector<16xf32> to vector<16x1xf32>
    %cst_189 = arith.constant 3.200000e+01 : f32
    %596 = vector.broadcast %cst_189 : f32 to vector<16x1xf32>
    %597 = arith.divf %595, %596 : vector<16x1xf32>
    %598 = vector.broadcast %592 : vector<16x1xf32> to vector<16x32xf32>
    %599 = arith.subf %586, %598 : vector<16x32xf32>
    %600 = arith.mulf %592, %592 : vector<16x1xf32>
    %601 = arith.subf %597, %600 : vector<16x1xf32>
    %cst_190 = arith.constant 9.99999974E-6 : f32
    %602 = vector.broadcast %cst_190 : f32 to vector<16x1xf32>
    %603 = arith.addf %601, %602 : vector<16x1xf32>
    %604 = math.rsqrt %603 : vector<16x1xf32>
    %605 = vector.broadcast %604 : vector<16x1xf32> to vector<16x32xf32>
    %606 = arith.mulf %599, %605 : vector<16x32xf32>
    %607 = vector.broadcast %587 : vector<1x32xf32> to vector<16x32xf32>
    %608 = arith.mulf %606, %607 : vector<16x32xf32>
    %609 = vector.broadcast %588 : vector<1x32xf32> to vector<16x32xf32>
    %610 = arith.addf %608, %609 : vector<16x32xf32>
    %c712 = arith.constant 712 : index
    %c0_191 = arith.constant 0 : index
    %611 = vector.load %arg1[%c712, %c0_191] : memref<808x128xf32, #tpu.memory_space<vmem>>, vector<32x64xf32>
    %c135 = arith.constant 135 : index
    %c0_192 = arith.constant 0 : index
    %612 = vector.load %arg2[%c135, %c0_192] : memref<143x128xf32, #tpu.memory_space<vmem>>, vector<1x64xf32>
    %c744 = arith.constant 744 : index
    %c0_193 = arith.constant 0 : index
    %613 = vector.load %arg1[%c744, %c0_193] : memref<808x128xf32, #tpu.memory_space<vmem>>, vector<64x32xf32>
    %c136 = arith.constant 136 : index
    %c0_194 = arith.constant 0 : index
    %614 = vector.load %arg2[%c136, %c0_194] : memref<143x128xf32, #tpu.memory_space<vmem>>, vector<1x32xf32>
    %cst_195 = arith.constant dense<0.000000e+00> : vector<16x64xf32>
    %615 = tpu.matmul %610, %611, %cst_195 {dimension_numbers = #tpu.dot_dimension_numbers<[1], [0], [0], [1], [0, 0, 1, 1], [], []>} : vector<16x32xf32>, vector<32x64xf32>, vector<16x64xf32> -> vector<16x64xf32>
    %616 = vector.broadcast %612 : vector<1x64xf32> to vector<16x64xf32>
    %617 = arith.addf %615, %616 : vector<16x64xf32>
    %cst_196 = arith.constant 0.000000e+00 : f32
    %618 = vector.broadcast %cst_196 : f32 to vector<16x64xf32>
    %619 = arith.maximumf %617, %618 : vector<16x64xf32>
    %cst_197 = arith.constant dense<0.000000e+00> : vector<16x32xf32>
    %620 = tpu.matmul %619, %613, %cst_197 {dimension_numbers = #tpu.dot_dimension_numbers<[1], [0], [0], [1], [0, 0, 1, 1], [], []>} : vector<16x64xf32>, vector<64x32xf32>, vector<16x32xf32> -> vector<16x32xf32>
    %621 = vector.broadcast %614 : vector<1x32xf32> to vector<16x32xf32>
    %622 = arith.addf %620, %621 : vector<16x32xf32>
    %623 = arith.addf %610, %622 : vector<16x32xf32>
    %c141 = arith.constant 141 : index
    %c0_198 = arith.constant 0 : index
    %624 = vector.load %arg2[%c141, %c0_198] : memref<143x128xf32, #tpu.memory_space<vmem>>, vector<1x32xf32>
    %c142 = arith.constant 142 : index
    %c0_199 = arith.constant 0 : index
    %625 = vector.load %arg2[%c142, %c0_199] : memref<143x128xf32, #tpu.memory_space<vmem>>, vector<1x32xf32>
    %cst_200 = arith.constant dense<0.000000e+00> : vector<16xf32>
    %626 = vector.multi_reduction <add>, %623, %cst_200 [1] : vector<16x32xf32> to vector<16xf32>
    %627 = vector.shape_cast %626 : vector<16xf32> to vector<16x1xf32>
    %cst_201 = arith.constant 3.200000e+01 : f32
    %628 = vector.broadcast %cst_201 : f32 to vector<16x1xf32>
    %629 = arith.divf %627, %628 : vector<16x1xf32>
    %630 = arith.mulf %623, %623 : vector<16x32xf32>
    %cst_202 = arith.constant dense<0.000000e+00> : vector<16xf32>
    %631 = vector.multi_reduction <add>, %630, %cst_202 [1] : vector<16x32xf32> to vector<16xf32>
    %632 = vector.shape_cast %631 : vector<16xf32> to vector<16x1xf32>
    %cst_203 = arith.constant 3.200000e+01 : f32
    %633 = vector.broadcast %cst_203 : f32 to vector<16x1xf32>
    %634 = arith.divf %632, %633 : vector<16x1xf32>
    %635 = vector.broadcast %629 : vector<16x1xf32> to vector<16x32xf32>
    %636 = arith.subf %623, %635 : vector<16x32xf32>
    %637 = arith.mulf %629, %629 : vector<16x1xf32>
    %638 = arith.subf %634, %637 : vector<16x1xf32>
    %cst_204 = arith.constant 9.99999974E-6 : f32
    %639 = vector.broadcast %cst_204 : f32 to vector<16x1xf32>
    %640 = arith.addf %638, %639 : vector<16x1xf32>
    %641 = math.rsqrt %640 : vector<16x1xf32>
    %642 = vector.broadcast %641 : vector<16x1xf32> to vector<16x32xf32>
    %643 = arith.mulf %636, %642 : vector<16x32xf32>
    %644 = vector.broadcast %624 : vector<1x32xf32> to vector<16x32xf32>
    %645 = arith.mulf %643, %644 : vector<16x32xf32>
    %646 = vector.broadcast %625 : vector<1x32xf32> to vector<16x32xf32>
    %647 = arith.addf %645, %646 : vector<16x32xf32>
    %cst_205 = arith.constant dense<0.000000e+00> : vector<2x32xf32>
    %648 = tpu.matmul %1, %647, %cst_205 {dimension_numbers = #tpu.dot_dimension_numbers<[1], [0], [0], [1], [0, 0, 1, 1], [], []>} : vector<2x16xf32>, vector<16x32xf32>, vector<2x32xf32> -> vector<2x32xf32>
    %c100 = arith.constant 100 : index
    %c0_206 = arith.constant 0 : index
    %649 = vector.load %arg2[%c100, %c0_206] : memref<143x128xf32, #tpu.memory_space<vmem>>, vector<1x32xf32>
    %650 = vector.broadcast %649 : vector<1x32xf32> to vector<2x32xf32>
    %651 = arith.mulf %648, %650 : vector<2x32xf32>
    %cst_207 = arith.constant dense<0.000000e+00> : vector<2xf32>
    %652 = vector.multi_reduction <add>, %651, %cst_207 [1] : vector<2x32xf32> to vector<2xf32>
    %653 = vector.shape_cast %652 : vector<2xf32> to vector<2x1xf32>
    %c101 = arith.constant 101 : index
    %c0_208 = arith.constant 0 : index
    %654 = vector.load %arg2[%c101, %c0_208] : memref<143x128xf32, #tpu.memory_space<vmem>>, vector<1x1xf32>
    %655 = vector.broadcast %654 : vector<1x1xf32> to vector<2x1xf32>
    %656 = arith.addf %653, %655 : vector<2x1xf32>
    %c0_209 = arith.constant 0 : index
    %c0_210 = arith.constant 0 : index
    %657 = vector.load %arg4[%c0_209, %c0_210] : memref<2x1xf32, #tpu.memory_space<vmem>>, vector<2x1xf32>
    tpu.vector_store %arg4[%c0_209, %c0_210], %656 {strides = array<i32>} : memref<2x1xf32, #tpu.memory_space<vmem>>, vector<2x1xf32>,
    return
  }
}

</mosaic_0001>

<llo_original>
// kernel: transformer_forward.1
$region0: #{transformer_forward.1}
  #allocation0 [shape = 'u32[]', space=smem, size = 0x4, offset = 0x4, fixed_abs, tag = 'smem constant byte address 0x4 - core index']
  #allocation1 [shape = 'u32[144,128]{1,0:T(1,128)}', space=vmem, size = 0x12000, scoped, tag = 'internal scratch']
  %s0 = inlined_call_operand.hbm [shape: f32[16,8], index: 0, kind: input, shape index: {}]
  %s1 = inlined_call_operand.hbm [shape: f32[808,128], index: 1, kind: input, shape index: {}]
  %s2 = inlined_call_operand.hbm [shape: f32[143,128], index: 2, kind: input, shape index: {}]
  %s3 = inlined_call_operand.hbm [shape: f32[66,16], index: 3, kind: input, shape index: {}]
  %s4 = inlined_call_operand.vmem [shape: f32[2,1], index: 4, kind: output, shape index: {}]
  %s5 = sld [smem:[#allocation0]]
  $region42: #{transformer_forward.1} parent=0
    _
  %s7 = ssub.s32 1, %s5
  %s8 = scalar_select 0, %s7, %s5
  $region1: #{transformer_forward.1} parent=0
    #allocation2 [shape = 'u8[8192]{0}', space=vmem, size = 0x2000, scoped, tag = 'input window, operand 0, single buffered']
    #allocation3 [shape = 's32[1]{0}', space=sflag, size = 0x4, scoped, tag = 'scoped memory for transformer_forward.1']
    #allocation4 [shape = 'u8[413696]{0}', space=vmem, size = 0x65000, scoped, tag = 'input window, operand 1, single buffered']
    #allocation5 [shape = 's32[1]{0}', space=sflag, size = 0x4, scoped, tag = 'scoped memory for transformer_forward.1']
    #allocation6 [shape = 'u8[73728]{0}', space=vmem, size = 0x12000, scoped, tag = 'input window, operand 2, single buffered']
    #allocation7 [shape = 'u8[36864]{0}', space=vmem, size = 0x9000, scoped, tag = 'input window, operand 3, single buffered']
    #allocation8 [shape = 's32[1]{0}', space=sflag, size = 0x4, scoped, tag = 'scoped memory for transformer_forward.1']
    %9 = vsyncpa [#allocation3], 0
    %10 = vsyncpa [#allocation5], 0
    %11 = vsyncpa [#allocation8], 0
    // Predicated region
    $region2: #{transformer_forward.1} parent=1 // pred_check
      _
    $region3: #{transformer_forward.1} parent=1 // pred_check_branch
      %13 = sbr.rel (0) target = $region5
    $region4: #{transformer_forward.1} parent=1 // pred_region
      %s15 = ssub.s32 256, 256
      %16 = vsyncadd [#allocation3], %s15
      %s17 = sshll.u32 [#allocation2], 4
      %s18 = int_to_ptr.vmem [resolvable:$true] %s17
      %23 = dma.hbm_to_vmem [thread:$0]  %s0, 256, %s18, [#allocation3], 128, 128, 8
    $region5: #{transformer_forward.1} parent=1 // pred_fallthru
      _
    // Predicated region
    $region6: #{transformer_forward.1} parent=1 // pred_check
      _
    $region7: #{transformer_forward.1} parent=1 // pred_check_branch
      %25 = sbr.rel (0) target = $region9
    $region8: #{transformer_forward.1} parent=1 // pred_region
      %s27 = ssub.s32 12928, 12928
      %28 = vsyncadd [#allocation5], %s27
      %s29 = sshll.u32 [#allocation4], 4
      %s30 = int_to_ptr.vmem [resolvable:$true] %s29
      %35 = dma.hbm_to_vmem [thread:$0]  %s1, 12928, %s30, [#allocation5], 128, 128, 8
    $region9: #{transformer_forward.1} parent=1 // pred_fallthru
      _
    // Predicated region
    $region10: #{transformer_forward.1} parent=1 // pred_check
      _
    $region11: #{transformer_forward.1} parent=1 // pred_check_branch
      %37 = sbr.rel (0) target = $region13
    $region12: #{transformer_forward.1} parent=1 // pred_region
      %s39 = ssub.s32 2304, 2304
      %40 = vsyncadd [#allocation5], %s39
      %s41 = sshll.u32 [#allocation6], 4
      %s42 = int_to_ptr.vmem [resolvable:$true] %s41
      %47 = dma.hbm_to_vmem [thread:$0]  %s2, 2304, %s42, [#allocation5], 128, 128, 8
    $region13: #{transformer_forward.1} parent=1 // pred_fallthru
      _
    // Predicated region
    $region14: #{transformer_forward.1} parent=1 // pred_check
      _
    $region15: #{transformer_forward.1} parent=1 // pred_check_branch
      %49 = sbr.rel (0) target = $region17
    $region16: #{transformer_forward.1} parent=1 // pred_region
      %s51 = ssub.s32 1152, 1152
      %52 = vsyncadd [#allocation8], %s51
      %s53 = sshll.u32 [#allocation7], 4
      %s54 = int_to_ptr.vmem [resolvable:$true] %s53
      %59 = dma.hbm_to_vmem [thread:$0]  %s3, 1152, %s54, [#allocation8], 128, 128, 8
    $region17: #{transformer_forward.1} parent=1 // pred_fallthru
      _
    // Predicated region
    $region18: #{transformer_forward.1} parent=1 // pred_check
      _
    $region19: #{transformer_forward.1} parent=1 // pred_check_branch
      %61 = sbr.rel (0) target = $region21
    $region20: #{transformer_forward.1} parent=1 // pred_region
      %62 = dma.done [#allocation3], 256
    $region21: #{transformer_forward.1} parent=1 // pred_fallthru
      _
    // Predicated region
    $region22: #{transformer_forward.1} parent=1 // pred_check
      _
    $region23: #{transformer_forward.1} parent=1 // pred_check_branch
      %64 = sbr.rel (0) target = $region25
    $region24: #{transformer_forward.1} parent=1 // pred_region
      %65 = dma.done [#allocation5], 12928
    $region25: #{transformer_forward.1} parent=1 // pred_fallthru
      _
    // Predicated region
    $region26: #{transformer_forward.1} parent=1 // pred_check
      _
    $region27: #{transformer_forward.1} parent=1 // pred_check_branch
      %67 = sbr.rel (0) target = $region29
    $region28: #{transformer_forward.1} parent=1 // pred_region
      %68 = dma.done [#allocation5], 2304
    $region29: #{transformer_forward.1} parent=1 // pred_fallthru
      _
    // Predicated region
    $region30: #{transformer_forward.1} parent=1 // pred_check
      _
    $region31: #{transformer_forward.1} parent=1 // pred_check_branch
      %70 = sbr.rel (0) target = $region33
    $region32: #{transformer_forward.1} parent=1 // pred_region
      %71 = dma.done [#allocation8], 1152
    $region33: #{transformer_forward.1} parent=1 // pred_fallthru
      _
    %v72 = vld [vmem:[#allocation7] sm:$0xff]
    %v73 = vld [vmem:[#allocation7 + $0x8] sm:$0xff]
    %v74 = vld [vmem:[#allocation7 + $0x10] sm:$0xff]
    %v75 = vld [vmem:[#allocation7 + $0x18] sm:$0xff]
    %v76 = vld [vmem:[#allocation7 + $0x20] sm:$0xff]
    %v77 = vld [vmem:[#allocation7 + $0x28] sm:$0xff]
    %v78 = vld [vmem:[#allocation7 + $0x30] sm:$0xff]
    %v79 = vld [vmem:[#allocation7 + $0x38] sm:$0xff]
    %v80 = vld [vmem:[#allocation7 + $0x40] sm:$0x3]
    %v81 = vlaneseq
    %v82 = vand.u32 %v81, 127
    %vm83 = vcmp.ge.s32.totalorder %v82, 0
    %vm84 = vcmp.lt.s32.totalorder %v82, 8
    %vm85 = vmand %vm83, %vm84
    %v86 = vsel %vm85, 1.0, 0.0
    %vm87 = vcmp.ge.s32.totalorder %v82, 8
    %vm88 = vcmp.lt.s32.totalorder %v82, 16
    %vm89 = vmand %vm87, %vm88
    %v90 = vsel %vm89, 1.0, 0.0
    %vm91 = vcmp.ge.s32.totalorder %v82, 16
    %vm92 = vcmp.lt.s32.totalorder %v82, 24
    %vm93 = vmand %vm91, %vm92
    %v94 = vsel %vm93, 1.0, 0.0
    %vm95 = vcmp.ge.s32.totalorder %v82, 24
    %vm96 = vcmp.lt.s32.totalorder %v82, 32
    %vm97 = vmand %vm95, %vm96
    %v98 = vsel %vm97, 1.0, 0.0
    %v99 = vld [vmem:[#allocation6] sm:$0xff]
    %v100 = vld [vmem:[#allocation2] sm:$0xff]
    %v101 = vld [vmem:[#allocation2 + $0x8] sm:$0xff]
    %v102 = vld [vmem:[#allocation4] sm:$0xff]
    %vm103 = vcmask 64512
    %v105 = vsel %vm103, %v100, 0
    %v108 = vsel %vm103, %v101, 0
    %110 = vmatprep.subr.mxu0 0.0
    %111 = vmatpush1.msra.mxu0 %v102
    %112 = vmatprep.subr.mxu0 0.0
    %113 = vmatpush1.msra.mxu0 0.0
    %114 = vmatprep.subr.mxu0 0.0
    %115 = vmatpush1.msra.mxu0 0.0
    %116 = vmatprep.subr.mxu0 0.0
    %117 = vmatpush1.msra.mxu0 0.0
    %118 = vmatprep.subr.mxu0 0.0
    %119 = vmatpush1.msra.mxu0 0.0
    %120 = vmatprep.subr.mxu0 0.0
    %121 = vmatpush1.msra.mxu0 0.0
    %122 = vmatprep.subr.mxu0 0.0
    %123 = vmatpush1.msra.mxu0 0.0
    %124 = vmatprep.subr.mxu0 0.0
    %125 = vmatpush1.msra.mxu0 0.0
    %126 = vmatprep.subr.mxu0 0.0
    %127 = vmatpush1.msra.mxu0 0.0
    %128 = vmatprep.subr.mxu0 0.0
    %129 = vmatpush1.msra.mxu0 0.0
    %130 = vmatprep.subr.mxu0 0.0
    %131 = vmatpush1.msra.mxu0 0.0
    %132 = vmatprep.subr.mxu0 0.0
    %133 = vmatpush1.msra.mxu0 0.0
    %134 = vmatprep.subr.mxu0 0.0
    %135 = vmatpush1.msra.mxu0 0.0
    %136 = vmatprep.subr.mxu0 0.0
    %137 = vmatpush1.msra.mxu0 0.0
    %138 = vmatprep.subr.mxu0 0.0
    %139 = vmatpush1.msra.mxu0 0.0
    %140 = vmatprep.subr.mxu0 0.0
    %141 = vmatpush1.msra.mxu0 0.0
    %142 = vmatprep.subr.mxu0 0.0
    %143 = vmatpush1.msra.mxu0 0.0
    %144 = vmatprep.subr.mxu0 0.0
    %145 = vmatpush1.msra.mxu0 0.0
    %146 = vmatprep.subr.mxu0 0.0
    %147 = vmatpush1.msra.mxu0 0.0
    %148 = vmatprep.subr.mxu0 0.0
    %149 = vmatpush1.msra.mxu0 0.0
    %150 = vmatprep.subr.mxu0 0.0
    %151 = vmatpush1.msra.mxu0 0.0
    %152 = vmatprep.subr.mxu0 0.0
    %153 = vmatpush1.msra.mxu0 0.0
    %154 = vmatprep.subr.mxu0 0.0
    %155 = vmatpush1.msra.mxu0 0.0
    %156 = vmatprep.subr.mxu0 0.0
    %157 = vmatpush1.msra.mxu0 0.0
    %158 = vmatprep.subr.mxu0 0.0
    %159 = vmatpush1.msra.mxu0 0.0
    %160 = vmatprep.subr.mxu0 0.0
    %161 = vmatpush1.msra.mxu0 0.0
    %162 = vmatprep.subr.mxu0 0.0
    %163 = vmatpush1.msra.mxu0 0.0
    %164 = vmatprep.subr.mxu0 0.0
    %165 = vmatpush1.msra.mxu0 0.0
    %166 = vmatprep.subr.mxu0 0.0
    %167 = vmatpush1.msra.mxu0 0.0
    %168 = vmatprep.subr.mxu0 0.0
    %169 = vmatpush1.msra.mxu0 0.0
    %170 = vmatprep.subr.mxu0 0.0
    %171 = vmatpush1.msra.mxu0 0.0
    %172 = vmatprep.subr.mxu0 0.0
    %173 = vmatpush1.msra.mxu0 0.0
    %174 = vmatprep.mubr.f32.mxu0 0.0
    %175 = vmatmul.mubr.f32.gmra.mrb[0].mxu0 %v105
    %v176 = vpop.f32.mrb[0].mxu0
    %v177 = vadd.f32 %v99, %v176
    %v178 = vpop.f32.mrb[0].mxu0
    %179 = vmatprep.mubr.f32.mxu0 0.0
    %180 = vmatmul.mubr.f32.gmra.mrb[0].mxu0 %v108
    %v181 = vpop.f32.mrb[0].mxu0
    %v182 = vadd.f32 %v99, %v181
    %v183 = vpop.f32.mrb[0].mxu0
    %184 = vdwg.mxu0
    %v185 = vld [vmem:[#allocation4 + $0x8] sm:$0xff]
    %v186 = vld [vmem:[#allocation4 + $0x10] sm:$0xff]
    %v187 = vld [vmem:[#allocation4 + $0x18] sm:$0xff]
    %v188 = vld [vmem:[#allocation4 + $0x20] sm:$0xff]
    %v189 = vld [vmem:[#allocation6 + $0x67] sm:$0x1]
    %v190 = vld [vmem:[#allocation4 + $0x28] sm:$0xff]
    %v191 = vld [vmem:[#allocation4 + $0x30] sm:$0xff]
    %v192 = vld [vmem:[#allocation4 + $0x38] sm:$0xff]
    %v193 = vld [vmem:[#allocation4 + $0x40] sm:$0xff]
    %v194 = vld [vmem:[#allocation6 + $0x68] sm:$0x1]
    %v195 = vlaneseq
    %v196 = vshrl.u32 %v195, 7
    %v197 = vsub.s32 0, %v196
    %v198 = vrot.slane %v189, %v197
    %vm199 = vcmask 261120
    %v201 = vsel %vm199, %v177, 0
    %v204 = vsel %vm199, %v182, 0
    %206 = vmatprep.subr.mxu0 0.0
    %207 = vmatpush1.msra.mxu0 %v185
    %208 = vmatprep.subr.mxu0 0.0
    %209 = vmatpush1.msra.mxu0 %v186
    %210 = vmatprep.subr.mxu0 0.0
    %211 = vmatpush1.msra.mxu0 %v187
    %212 = vmatprep.subr.mxu0 0.0
    %213 = vmatpush1.msra.mxu0 %v188
    %214 = vmatprep.subr.mxu0 0.0
    %215 = vmatpush1.msra.mxu0 0.0
    %216 = vmatprep.subr.mxu0 0.0
    %217 = vmatpush1.msra.mxu0 0.0
    %218 = vmatprep.subr.mxu0 0.0
    %219 = vmatpush1.msra.mxu0 0.0
    %220 = vmatprep.subr.mxu0 0.0
    %221 = vmatpush1.msra.mxu0 0.0
    %222 = vmatprep.subr.mxu0 0.0
    %223 = vmatpush1.msra.mxu0 0.0
    %224 = vmatprep.subr.mxu0 0.0
    %225 = vmatpush1.msra.mxu0 0.0
    %226 = vmatprep.subr.mxu0 0.0
    %227 = vmatpush1.msra.mxu0 0.0
    %228 = vmatprep.subr.mxu0 0.0
    %229 = vmatpush1.msra.mxu0 0.0
    %230 = vmatprep.subr.mxu0 0.0
    %231 = vmatpush1.msra.mxu0 0.0
    %232 = vmatprep.subr.mxu0 0.0
    %233 = vmatpush1.msra.mxu0 0.0
    %234 = vmatprep.subr.mxu0 0.0
    %235 = vmatpush1.msra.mxu0 0.0
    %236 = vmatprep.subr.mxu0 0.0
    %237 = vmatpush1.msra.mxu0 0.0
    %238 = vmatprep.subr.mxu0 0.0
    %239 = vmatpush1.msra.mxu0 0.0
    %240 = vmatprep.subr.mxu0 0.0
    %241 = vmatpush1.msra.mxu0 0.0
    %242 = vmatprep.subr.mxu0 0.0
    %243 = vmatpush1.msra.mxu0 0.0
    %244 = vmatprep.subr.mxu0 0.0
    %245 = vmatpush1.msra.mxu0 0.0
    %246 = vmatprep.subr.mxu0 0.0
    %247 = vmatpush1.msra.mxu0 0.0
    %248 = vmatprep.subr.mxu0 0.0
    %249 = vmatpush1.msra.mxu0 0.0
    %250 = vmatprep.subr.mxu0 0.0
    %251 = vmatpush1.msra.mxu0 0.0
    %252 = vmatprep.subr.mxu0 0.0
    %253 = vmatpush1.msra.mxu0 0.0
    %254 = vmatprep.subr.mxu0 0.0
    %255 = vmatpush1.msra.mxu0 0.0
    %256 = vmatprep.subr.mxu0 0.0
    %257 = vmatpush1.msra.mxu0 0.0
    %258 = vmatprep.subr.mxu0 0.0
    %259 = vmatpush1.msra.mxu0 0.0
    %260 = vmatprep.subr.mxu0 0.0
    %261 = vmatpush1.msra.mxu0 0.0
    %262 = vmatprep.subr.mxu0 0.0
    %263 = vmatpush1.msra.mxu0 0.0
    %264 = vmatprep.subr.mxu0 0.0
    %265 = vmatpush1.msra.mxu0 0.0
    %266 = vmatprep.subr.mxu0 0.0
    %267 = vmatpush1.msra.mxu0 0.0
    %268 = vmatprep.subr.mxu0 0.0
    %269 = vmatpush1.msra.mxu0 0.0
    %270 = vmatprep.mubr.f32.mxu0 0.0
    %271 = vmatmul.mubr.f32.gmra.mrb[0].mxu0 %v201
    %v272 = vpop.f32.mrb[0].mxu0
    %v273 = vadd.f32 %v198, %v272
    %v274 = vpop.f32.mrb[0].mxu0
    %275 = vmatprep.mubr.f32.mxu0 0.0
    %276 = vmatmul.mubr.f32.gmra.mrb[0].mxu0 %v204
    %v277 = vpop.f32.mrb[0].mxu0
    %v278 = vadd.f32 %v198, %v277
    %v279 = vpop.f32.mrb[0].mxu0
    %280 = vdwg.mxu0
    %v281 = vmul.f32 %v273, 0.35355338
    %v282 = vmul.f32 %v278, 0.35355338
    %v283 = vmul.f32 %v281, %v86
    %v284 = vmul.f32 %v282, %v86
    %v285 = vmul.f32 %v281, %v90
    %v286 = vmul.f32 %v282, %v90
    %v287 = vmul.f32 %v281, %v94
    %v288 = vmul.f32 %v282, %v94
    %v289 = vmul.f32 %v281, %v98
    %v290 = vmul.f32 %v282, %v98
    %293 = vrot.lane.b32.xlu0 %v273, 96
    %v294 = vpop.permute.xlu0 %293
    %295 = vrot.lane.b32.xlu0 %v278, 96
    %v296 = vpop.permute.xlu0 %295
    %v298 = vsel %vm199, %v283, 0
    %v301 = vsel %vm199, %v284, 0
    %v304 = vsel %vm199, %v285, 0
    %v307 = vsel %vm199, %v286, 0
    %v310 = vsel %vm199, %v287, 0
    %v313 = vsel %vm199, %v288, 0
    %v316 = vsel %vm199, %v289, 0
    %v319 = vsel %vm199, %v290, 0
    %v321 = vsel %vm199, %v294, 0
    %v323 = vsel %vm199, %v296, 0
    %325 = vmatprep.subr.mxu0 0.0
    %326 = vmatpush1.xpose.msra.mxu0 %v321
    %327 = vmatprep.subr.mxu0 0.0
    %328 = vmatpush1.xpose.msra.mxu0 %v323
    %329 = vmatprep.subr.mxu0 0.0
    %330 = vmatpush1.xpose.msra.mxu0 0.0
    %331 = vmatprep.subr.mxu0 0.0
    %332 = vmatpush1.xpose.msra.mxu0 0.0
    %333 = vmatprep.subr.mxu0 0.0
    %334 = vmatpush1.xpose.msra.mxu0 0.0
    %335 = vmatprep.subr.mxu0 0.0
    %336 = vmatpush1.xpose.msra.mxu0 0.0
    %337 = vmatprep.subr.mxu0 0.0
    %338 = vmatpush1.xpose.msra.mxu0 0.0
    %339 = vmatprep.subr.mxu0 0.0
    %340 = vmatpush1.xpose.msra.mxu0 0.0
    %341 = vmatprep.subr.mxu0 0.0
    %342 = vmatpush1.xpose.msra.mxu0 0.0
    %343 = vmatprep.subr.mxu0 0.0
    %344 = vmatpush1.xpose.msra.mxu0 0.0
    %345 = vmatprep.subr.mxu0 0.0
    %346 = vmatpush1.xpose.msra.mxu0 0.0
    %347 = vmatprep.subr.mxu0 0.0
    %348 = vmatpush1.xpose.msra.mxu0 0.0
    %349 = vmatprep.subr.mxu0 0.0
    %350 = vmatpush1.xpose.msra.mxu0 0.0
    %351 = vmatprep.subr.mxu0 0.0
    %352 = vmatpush1.xpose.msra.mxu0 0.0
    %353 = vmatprep.subr.mxu0 0.0
    %354 = vmatpush1.xpose.msra.mxu0 0.0
    %355 = vmatprep.subr.mxu0 0.0
    %356 = vmatpush1.xpose.msra.mxu0 0.0
    %357 = vmatprep.subr.mxu0 0.0
    %358 = vmatpush1.xpose.msra.mxu0 0.0
    %359 = vmatprep.subr.mxu0 0.0
    %360 = vmatpush1.xpose.msra.mxu0 0.0
    %361 = vmatprep.subr.mxu0 0.0
    %362 = vmatpush1.xpose.msra.mxu0 0.0
    %363 = vmatprep.subr.mxu0 0.0
    %364 = vmatpush1.xpose.msra.mxu0 0.0
    %365 = vmatprep.subr.mxu0 0.0
    %366 = vmatpush1.xpose.msra.mxu0 0.0
    %367 = vmatprep.subr.mxu0 0.0
    %368 = vmatpush1.xpose.msra.mxu0 0.0
    %369 = vmatprep.subr.mxu0 0.0
    %370 = vmatpush1.xpose.msra.mxu0 0.0
    %371 = vmatprep.subr.mxu0 0.0
    %372 = vmatpush1.xpose.msra.mxu0 0.0
    %373 = vmatprep.subr.mxu0 0.0
    %374 = vmatpush1.xpose.msra.mxu0 0.0
    %375 = vmatprep.subr.mxu0 0.0
    %376 = vmatpush1.xpose.msra.mxu0 0.0
    %377 = vmatprep.subr.mxu0 0.0
    %378 = vmatpush1.xpose.msra.mxu0 0.0
    %379 = vmatprep.subr.mxu0 0.0
    %380 = vmatpush1.xpose.msra.mxu0 0.0
    %381 = vmatprep.subr.mxu0 0.0
    %382 = vmatpush1.xpose.msra.mxu0 0.0
    %383 = vmatprep.subr.mxu0 0.0
    %384 = vmatpush1.xpose.msra.mxu0 0.0
    %385 = vmatprep.subr.mxu0 0.0
    %386 = vmatpush1.xpose.msra.mxu0 0.0
    %387 = vmatprep.subr.mxu0 0.0
    %388 = vmatpush1.xpose.msra.mxu0 0.0
    %389 = vmatprep.mubr.f32.mxu0 0.0
    %390 = vmatmul.mubr.f32.gmra.mrb[0].mxu0 %v298
    %v391 = vpop.f32.mrb[0].mxu0
    %v392 = vadd.f32 %v72, %v391
    %v393 = vpop.f32.mrb[0].mxu0
    %394 = vmatprep.mubr.f32.mxu0 0.0
    %395 = vmatmul.mubr.f32.gmra.mrb[0].mxu0 %v301
    %v396 = vpop.f32.mrb[0].mxu0
    %v397 = vadd.f32 %v73, %v396
    %v398 = vpop.f32.mrb[0].mxu0
    %399 = vmatprep.mubr.f32.mxu0 0.0
    %400 = vmatmul.mubr.f32.gmra.mrb[0].mxu0 %v304
    %v401 = vpop.f32.mrb[0].mxu0
    %v402 = vadd.f32 %v74, %v401
    %v403 = vpop.f32.mrb[0].mxu0
    %404 = vmatprep.mubr.f32.mxu0 0.0
    %405 = vmatmul.mubr.f32.gmra.mrb[0].mxu0 %v307
    %v406 = vpop.f32.mrb[0].mxu0
    %v407 = vadd.f32 %v75, %v406
    %v408 = vpop.f32.mrb[0].mxu0
    %409 = vmatprep.mubr.f32.mxu0 0.0
    %410 = vmatmul.mubr.f32.gmra.mrb[0].mxu0 %v310
    %v411 = vpop.f32.mrb[0].mxu0
    %v412 = vadd.f32 %v76, %v411
    %v413 = vpop.f32.mrb[0].mxu0
    %414 = vmatprep.mubr.f32.mxu0 0.0
    %415 = vmatmul.mubr.f32.gmra.mrb[0].mxu0 %v313
    %v416 = vpop.f32.mrb[0].mxu0
    %v417 = vadd.f32 %v77, %v416
    %v418 = vpop.f32.mrb[0].mxu0
    %419 = vmatprep.mubr.f32.mxu0 0.0
    %420 = vmatmul.mubr.f32.gmra.mrb[0].mxu0 %v316
    %v421 = vpop.f32.mrb[0].mxu0
    %v422 = vadd.f32 %v78, %v421
    %v423 = vpop.f32.mrb[0].mxu0
    %424 = vmatprep.mubr.f32.mxu0 0.0
    %425 = vmatmul.mubr.f32.gmra.mrb[0].mxu0 %v319
    %v426 = vpop.f32.mrb[0].mxu0
    %v427 = vadd.f32 %v79, %v426
    %v428 = vpop.f32.mrb[0].mxu0
    %429 = vdwg.mxu0
    %vm430 = vcmask 130048
    %v431 = vsel %vm430, %v392, -inf
    %432 = vmax.xlane.f32.xlu0 %v431
    %v433 = vpop.xlane.xlu0 %432
    %v434 = vsel %vm430, %v397, -inf
    %435 = vmax.xlane.f32.xlu0 %v434
    %v436 = vpop.xlane.xlu0 %435
    %v437 = vsel %vm430, %v402, -inf
    %438 = vmax.xlane.f32.xlu0 %v437
    %v439 = vpop.xlane.xlu0 %438
    %v440 = vsel %vm430, %v407, -inf
    %441 = vmax.xlane.f32.xlu0 %v440
    %v442 = vpop.xlane.xlu0 %441
    %v443 = vsel %vm430, %v412, -inf
    %444 = vmax.xlane.f32.xlu0 %v443
    %v445 = vpop.xlane.xlu0 %444
    %v446 = vsel %vm430, %v417, -inf
    %447 = vmax.xlane.f32.xlu0 %v446
    %v448 = vpop.xlane.xlu0 %447
    %v449 = vsel %vm430, %v422, -inf
    %450 = vmax.xlane.f32.xlu0 %v449
    %v451 = vpop.xlane.xlu0 %450
    %v452 = vsel %vm430, %v427, -inf
    %453 = vmax.xlane.f32.xlu0 %v452
    %v454 = vpop.xlane.xlu0 %453
    %v455 = vsub.f32 %v392, %v433
    %v456 = vsub.f32 %v397, %v436
    %v457 = vsub.f32 %v402, %v439
    %v458 = vsub.f32 %v407, %v442
    %v459 = vsub.f32 %v412, %v445
    %v460 = vsub.f32 %v417, %v448
    %v461 = vsub.f32 %v422, %v451
    %v462 = vsub.f32 %v427, %v454
    %v463 = vmul.f32 %v455, 1.442695
    %v464 = vpow.pop %v463
    %v465 = vmul.f32 %v456, 1.442695
    %v466 = vpow.pop %v465
    %v467 = vmul.f32 %v457, 1.442695
    %v468 = vpow.pop %v467
    %v469 = vmul.f32 %v458, 1.442695
    %v470 = vpow.pop %v469
    %v471 = vmul.f32 %v459, 1.442695
    %v472 = vpow.pop %v471
    %v473 = vmul.f32 %v460, 1.442695
    %v474 = vpow.pop %v473
    %v475 = vmul.f32 %v461, 1.442695
    %v476 = vpow.pop %v475
    %v477 = vmul.f32 %v462, 1.442695
    %v478 = vpow.pop %v477
    %v479 = vsel %vm430, %v464, 0.0
    %480 = vadd.xlane.f32.xlu0 %v479
    %v481 = vpop.xlane.xlu0 %480
    %v482 = vsel %vm430, %v466, 0.0
    %483 = vadd.xlane.f32.xlu0 %v482
    %v484 = vpop.xlane.xlu0 %483
    %v485 = vsel %vm430, %v468, 0.0
    %486 = vadd.xlane.f32.xlu0 %v485
    %v487 = vpop.xlane.xlu0 %486
    %v488 = vsel %vm430, %v470, 0.0
    %489 = vadd.xlane.f32.xlu0 %v488
    %v490 = vpop.xlane.xlu0 %489
    %v491 = vsel %vm430, %v472, 0.0
    %492 = vadd.xlane.f32.xlu0 %v491
    %v493 = vpop.xlane.xlu0 %492
    %v494 = vsel %vm430, %v474, 0.0
    %495 = vadd.xlane.f32.xlu0 %v494
    %v496 = vpop.xlane.xlu0 %495
    %v497 = vsel %vm430, %v476, 0.0
    %498 = vadd.xlane.f32.xlu0 %v497
    %v499 = vpop.xlane.xlu0 %498
    %v500 = vsel %vm430, %v478, 0.0
    %501 = vadd.xlane.f32.xlu0 %v500
    %v502 = vpop.xlane.xlu0 %501
    %v503 = vrcp.pop %v481
    %v504 = vrcp.pop %v484
    %v505 = vrcp.pop %v487
    %v506 = vrcp.pop %v490
    %v507 = vrcp.pop %v493
    %v508 = vrcp.pop %v496
    %v509 = vrcp.pop %v499
    %v510 = vrcp.pop %v502
    %v511 = vmul.f32 %v464, %v503
    %v512 = vmul.f32 %v466, %v504
    %v513 = vmul.f32 %v468, %v505
    %v514 = vmul.f32 %v470, %v506
    %v515 = vmul.f32 %v472, %v507
    %v516 = vmul.f32 %v474, %v508
    %v517 = vmul.f32 %v476, %v509
    %v518 = vmul.f32 %v478, %v510
    %519 = vrot.lane.b32.xlu0 %v273, 64
    %v520 = vpop.permute.xlu0 %519
    %521 = vrot.lane.b32.xlu0 %v278, 64
    %v522 = vpop.permute.xlu0 %521
    %v526 = vsel %vm430, %v511, 0
    %v529 = vsel %vm430, %v512, 0
    %v532 = vsel %vm430, %v513, 0
    %v535 = vsel %vm430, %v514, 0
    %v538 = vsel %vm430, %v515, 0
    %v541 = vsel %vm430, %v516, 0
    %v544 = vsel %vm430, %v517, 0
    %v547 = vsel %vm430, %v518, 0
    %549 = vmatprep.subr.mxu0 0.0
    %550 = vmatpush1.msra.mxu0 %v520
    %551 = vmatprep.subr.mxu0 0.0
    %552 = vmatpush1.msra.mxu0 %v522
    %553 = vmatprep.subr.mxu0 0.0
    %554 = vmatpush1.msra.mxu0 0.0
    %555 = vmatprep.subr.mxu0 0.0
    %556 = vmatpush1.msra.mxu0 0.0
    %557 = vmatprep.subr.mxu0 0.0
    %558 = vmatpush1.msra.mxu0 0.0
    %559 = vmatprep.subr.mxu0 0.0
    %560 = vmatpush1.msra.mxu0 0.0
    %561 = vmatprep.subr.mxu0 0.0
    %562 = vmatpush1.msra.mxu0 0.0
    %563 = vmatprep.subr.mxu0 0.0
    %564 = vmatpush1.msra.mxu0 0.0
    %565 = vmatprep.subr.mxu0 0.0
    %566 = vmatpush1.msra.mxu0 0.0
    %567 = vmatprep.subr.mxu0 0.0
    %568 = vmatpush1.msra.mxu0 0.0
    %569 = vmatprep.subr.mxu0 0.0
    %570 = vmatpush1.msra.mxu0 0.0
    %571 = vmatprep.subr.mxu0 0.0
    %572 = vmatpush1.msra.mxu0 0.0
    %573 = vmatprep.subr.mxu0 0.0
    %574 = vmatpush1.msra.mxu0 0.0
    %575 = vmatprep.subr.mxu0 0.0
    %576 = vmatpush1.msra.mxu0 0.0
    %577 = vmatprep.subr.mxu0 0.0
    %578 = vmatpush1.msra.mxu0 0.0
    %579 = vmatprep.subr.mxu0 0.0
    %580 = vmatpush1.msra.mxu0 0.0
    %581 = vmatprep.subr.mxu0 0.0
    %582 = vmatpush1.msra.mxu0 0.0
    %583 = vmatprep.subr.mxu0 0.0
    %584 = vmatpush1.msra.mxu0 0.0
    %585 = vmatprep.subr.mxu0 0.0
    %586 = vmatpush1.msra.mxu0 0.0
    %587 = vmatprep.subr.mxu0 0.0
    %588 = vmatpush1.msra.mxu0 0.0
    %589 = vmatprep.subr.mxu0 0.0
    %590 = vmatpush1.msra.mxu0 0.0
    %591 = vmatprep.subr.mxu0 0.0
    %592 = vmatpush1.msra.mxu0 0.0
    %593 = vmatprep.subr.mxu0 0.0
    %594 = vmatpush1.msra.mxu0 0.0
    %595 = vmatprep.subr.mxu0 0.0
    %596 = vmatpush1.msra.mxu0 0.0
    %597 = vmatprep.subr.mxu0 0.0
    %598 = vmatpush1.msra.mxu0 0.0
    %599 = vmatprep.subr.mxu0 0.0
    %600 = vmatpush1.msra.mxu0 0.0
    %601 = vmatprep.subr.mxu0 0.0
    %602 = vmatpush1.msra.mxu0 0.0
    %603 = vmatprep.subr.mxu0 0.0
    %604 = vmatpush1.msra.mxu0 0.0
    %605 = vmatprep.subr.mxu0 0.0
    %606 = vmatpush1.msra.mxu0 0.0
    %607 = vmatprep.subr.mxu0 0.0
    %608 = vmatpush1.msra.mxu0 0.0
    %609 = vmatprep.subr.mxu0 0.0
    %610 = vmatpush1.msra.mxu0 0.0
    %611 = vmatprep.subr.mxu0 0.0
    %612 = vmatpush1.msra.mxu0 0.0
    %613 = vmatprep.mubr.f32.mxu0 0.0
    %614 = vmatmul.mubr.f32.gmra.mrb[0].mxu0 %v526
    %v615 = vpop.f32.mrb[0].mxu0
    %v616 = vadd.f32 0.0, %v615
    %v617 = vpop.f32.mrb[0].mxu0
    %618 = vmatprep.mubr.f32.mxu0 0.0
    %619 = vmatmul.mubr.f32.gmra.mrb[0].mxu0 %v529
    %v620 = vpop.f32.mrb[0].mxu0
    %v621 = vadd.f32 0.0, %v620
    %v622 = vpop.f32.mrb[0].mxu0
    %623 = vmatprep.mubr.f32.mxu0 0.0
    %624 = vmatmul.mubr.f32.gmra.mrb[0].mxu0 %v532
    %v625 = vpop.f32.mrb[0].mxu0
    %v626 = vadd.f32 0.0, %v625
    %v627 = vpop.f32.mrb[0].mxu0
    %628 = vmatprep.mubr.f32.mxu0 0.0
    %629 = vmatmul.mubr.f32.gmra.mrb[0].mxu0 %v535
    %v630 = vpop.f32.mrb[0].mxu0
    %v631 = vadd.f32 0.0, %v630
    %v632 = vpop.f32.mrb[0].mxu0
    %633 = vmatprep.mubr.f32.mxu0 0.0
    %634 = vmatmul.mubr.f32.gmra.mrb[0].mxu0 %v538
    %v635 = vpop.f32.mrb[0].mxu0
    %v636 = vadd.f32 0.0, %v635
    %v637 = vpop.f32.mrb[0].mxu0
    %638 = vmatprep.mubr.f32.mxu0 0.0
    %639 = vmatmul.mubr.f32.gmra.mrb[0].mxu0 %v541
    %v640 = vpop.f32.mrb[0].mxu0
    %v641 = vadd.f32 0.0, %v640
    %v642 = vpop.f32.mrb[0].mxu0
    %643 = vmatprep.mubr.f32.mxu0 0.0
    %644 = vmatmul.mubr.f32.gmra.mrb[0].mxu0 %v544
    %v645 = vpop.f32.mrb[0].mxu0
    %v646 = vadd.f32 0.0, %v645
    %v647 = vpop.f32.mrb[0].mxu0
    %648 = vmatprep.mubr.f32.mxu0 0.0
    %649 = vmatmul.mubr.f32.gmra.mrb[0].mxu0 %v547
    %v650 = vpop.f32.mrb[0].mxu0
    %v651 = vadd.f32 0.0, %v650
    %v652 = vpop.f32.mrb[0].mxu0
    %653 = vdwg.mxu0
    %656 = vrot.lane.b32.xlu0 %v626, 120
    %v657 = vpop.permute.xlu0 %656
    %658 = vrot.lane.b32.xlu0 %v631, 120
    %v659 = vpop.permute.xlu0 %658
    %v660 = vsel %vm103, %v657, 0
    %v662 = vsel %vm103, %v659, 0
    %664 = vmatprep.subr.mxu0 0.0
    %665 = vmatpush1.msra.mxu0 %v191
    %666 = vmatprep.subr.mxu0 0.0
    %667 = vmatpush1.msra.mxu0 0.0
    %668 = vmatprep.subr.mxu0 0.0
    %669 = vmatpush1.msra.mxu0 0.0
    %670 = vmatprep.subr.mxu0 0.0
    %671 = vmatpush1.msra.mxu0 0.0
    %672 = vmatprep.subr.mxu0 0.0
    %673 = vmatpush1.msra.mxu0 0.0
    %674 = vmatprep.subr.mxu0 0.0
    %675 = vmatpush1.msra.mxu0 0.0
    %676 = vmatprep.subr.mxu0 0.0
    %677 = vmatpush1.msra.mxu0 0.0
    %678 = vmatprep.subr.mxu0 0.0
    %679 = vmatpush1.msra.mxu0 0.0
    %680 = vmatprep.subr.mxu0 0.0
    %681 = vmatpush1.msra.mxu0 0.0
    %682 = vmatprep.subr.mxu0 0.0
    %683 = vmatpush1.msra.mxu0 0.0
    %684 = vmatprep.subr.mxu0 0.0
    %685 = vmatpush1.msra.mxu0 0.0
    %686 = vmatprep.subr.mxu0 0.0
    %687 = vmatpush1.msra.mxu0 0.0
    %688 = vmatprep.subr.mxu0 0.0
    %689 = vmatpush1.msra.mxu0 0.0
    %690 = vmatprep.subr.mxu0 0.0
    %691 = vmatpush1.msra.mxu0 0.0
    %692 = vmatprep.subr.mxu0 0.0
    %693 = vmatpush1.msra.mxu0 0.0
    %694 = vmatprep.subr.mxu0 0.0
    %695 = vmatpush1.msra.mxu0 0.0
    %696 = vmatprep.subr.mxu0 0.0
    %697 = vmatpush1.msra.mxu0 0.0
    %698 = vmatprep.subr.mxu0 0.0
    %699 = vmatpush1.msra.mxu0 0.0
    %700 = vmatprep.subr.mxu0 0.0
    %701 = vmatpush1.msra.mxu0 0.0
    %702 = vmatprep.subr.mxu0 0.0
    %703 = vmatpush1.msra.mxu0 0.0
    %704 = vmatprep.subr.mxu0 0.0
    %705 = vmatpush1.msra.mxu0 0.0
    %706 = vmatprep.subr.mxu0 0.0
    %707 = vmatpush1.msra.mxu0 0.0
    %708 = vmatprep.subr.mxu0 0.0
    %709 = vmatpush1.msra.mxu0 0.0
    %710 = vmatprep.subr.mxu0 0.0
    %711 = vmatpush1.msra.mxu0 0.0
    %712 = vmatprep.subr.mxu0 0.0
    %713 = vmatpush1.msra.mxu0 0.0
    %714 = vmatprep.subr.mxu0 0.0
    %715 = vmatpush1.msra.mxu0 0.0
    %716 = vmatprep.subr.mxu0 0.0
    %717 = vmatpush1.msra.mxu0 0.0
    %718 = vmatprep.subr.mxu0 0.0
    %719 = vmatpush1.msra.mxu0 0.0
    %720 = vmatprep.subr.mxu0 0.0
    %721 = vmatpush1.msra.mxu0 0.0
    %722 = vmatprep.subr.mxu0 0.0
    %723 = vmatpush1.msra.mxu0 0.0
    %724 = vmatprep.subr.mxu0 0.0
    %725 = vmatpush1.msra.mxu0 0.0
    %726 = vmatprep.subr.mxu0 0.0
    %727 = vmatpush1.msra.mxu0 0.0
    %728 = vmatprep.mubr.f32.mxu0 0.0
    %729 = vmatmul.mubr.f32.gmra.mrb[0].mxu0 %v660
    %v730 = vpop.f32.mrb[0].mxu0
    %v731 = vadd.f32 0.0, %v730
    %v732 = vpop.f32.mrb[0].mxu0
    %733 = vmatprep.mubr.f32.mxu0 0.0
    %734 = vmatmul.mubr.f32.gmra.mrb[0].mxu0 %v662
    %v735 = vpop.f32.mrb[0].mxu0
    %v736 = vadd.f32 0.0, %v735
    %v737 = vpop.f32.mrb[0].mxu0
    %738 = vdwg.mxu0
    %v740 = vsel %vm103, %v616, 0
    %v743 = vsel %vm103, %v621, 0
    %745 = vmatprep.subr.mxu0 0.0
    %746 = vmatpush1.msra.mxu0 %v190
    %747 = vmatprep.subr.mxu0 0.0
    %748 = vmatpush1.msra.mxu0 0.0
    %749 = vmatprep.subr.mxu0 0.0
    %750 = vmatpush1.msra.mxu0 0.0
    %751 = vmatprep.subr.mxu0 0.0
    %752 = vmatpush1.msra.mxu0 0.0
    %753 = vmatprep.subr.mxu0 0.0
    %754 = vmatpush1.msra.mxu0 0.0
    %755 = vmatprep.subr.mxu0 0.0
    %756 = vmatpush1.msra.mxu0 0.0
    %757 = vmatprep.subr.mxu0 0.0
    %758 = vmatpush1.msra.mxu0 0.0
    %759 = vmatprep.subr.mxu0 0.0
    %760 = vmatpush1.msra.mxu0 0.0
    %761 = vmatprep.subr.mxu0 0.0
    %762 = vmatpush1.msra.mxu0 0.0
    %763 = vmatprep.subr.mxu0 0.0
    %764 = vmatpush1.msra.mxu0 0.0
    %765 = vmatprep.subr.mxu0 0.0
    %766 = vmatpush1.msra.mxu0 0.0
    %767 = vmatprep.subr.mxu0 0.0
    %768 = vmatpush1.msra.mxu0 0.0
    %769 = vmatprep.subr.mxu0 0.0
    %770 = vmatpush1.msra.mxu0 0.0
    %771 = vmatprep.subr.mxu0 0.0
    %772 = vmatpush1.msra.mxu0 0.0
    %773 = vmatprep.subr.mxu0 0.0
    %774 = vmatpush1.msra.mxu0 0.0
    %775 = vmatprep.subr.mxu0 0.0
    %776 = vmatpush1.msra.mxu0 0.0
    %777 = vmatprep.subr.mxu0 0.0
    %778 = vmatpush1.msra.mxu0 0.0
    %779 = vmatprep.subr.mxu0 0.0
    %780 = vmatpush1.msra.mxu0 0.0
    %781 = vmatprep.subr.mxu0 0.0
    %782 = vmatpush1.msra.mxu0 0.0
    %783 = vmatprep.subr.mxu0 0.0
    %784 = vmatpush1.msra.mxu0 0.0
    %785 = vmatprep.subr.mxu0 0.0
    %786 = vmatpush1.msra.mxu0 0.0
    %787 = vmatprep.subr.mxu0 0.0
    %788 = vmatpush1.msra.mxu0 0.0
    %789 = vmatprep.subr.mxu0 0.0
    %790 = vmatpush1.msra.mxu0 0.0
    %791 = vmatprep.subr.mxu0 0.0
    %792 = vmatpush1.msra.mxu0 0.0
    %793 = vmatprep.subr.mxu0 0.0
    %794 = vmatpush1.msra.mxu0 0.0
    %795 = vmatprep.subr.mxu0 0.0
    %796 = vmatpush1.msra.mxu0 0.0
    %797 = vmatprep.subr.mxu0 0.0
    %798 = vmatpush1.msra.mxu0 0.0
    %799 = vmatprep.subr.mxu0 0.0
    %800 = vmatpush1.msra.mxu0 0.0
    %801 = vmatprep.subr.mxu0 0.0
    %802 = vmatpush1.msra.mxu0 0.0
    %803 = vmatprep.subr.mxu0 0.0
    %804 = vmatpush1.msra.mxu0 0.0
    %805 = vmatprep.subr.mxu0 0.0
    %806 = vmatpush1.msra.mxu0 0.0
    %807 = vmatprep.subr.mxu0 0.0
    %808 = vmatpush1.msra.mxu0 0.0
    %809 = vmatprep.mubr.f32.mxu0 0.0
    %810 = vmatmul.mubr.f32.gmra.mrb[0].mxu0 %v740
    %v811 = vpop.f32.mrb[0].mxu0
    %v812 = vadd.f32 %v731, %v811
    %v813 = vpop.f32.mrb[0].mxu0
    %814 = vmatprep.mubr.f32.mxu0 0.0
    %815 = vmatmul.mubr.f32.gmra.mrb[0].mxu0 %v743
    %v816 = vpop.f32.mrb[0].mxu0
    %v817 = vadd.f32 %v736, %v816
    %v818 = vpop.f32.mrb[0].mxu0
    %819 = vdwg.mxu0
    %822 = vrot.lane.b32.xlu0 %v636, 112
    %v823 = vpop.permute.xlu0 %822
    %824 = vrot.lane.b32.xlu0 %v641, 112
    %v825 = vpop.permute.xlu0 %824
    %v826 = vsel %vm103, %v823, 0
    %v828 = vsel %vm103, %v825, 0
    %830 = vmatprep.subr.mxu0 0.0
    %831 = vmatpush1.msra.mxu0 %v192
    %832 = vmatprep.subr.mxu0 0.0
    %833 = vmatpush1.msra.mxu0 0.0
    %834 = vmatprep.subr.mxu0 0.0
    %835 = vmatpush1.msra.mxu0 0.0
    %836 = vmatprep.subr.mxu0 0.0
    %837 = vmatpush1.msra.mxu0 0.0
    %838 = vmatprep.subr.mxu0 0.0
    %839 = vmatpush1.msra.mxu0 0.0
    %840 = vmatprep.subr.mxu0 0.0
    %841 = vmatpush1.msra.mxu0 0.0
    %842 = vmatprep.subr.mxu0 0.0
    %843 = vmatpush1.msra.mxu0 0.0
    %844 = vmatprep.subr.mxu0 0.0
    %845 = vmatpush1.msra.mxu0 0.0
    %846 = vmatprep.subr.mxu0 0.0
    %847 = vmatpush1.msra.mxu0 0.0
    %848 = vmatprep.subr.mxu0 0.0
    %849 = vmatpush1.msra.mxu0 0.0
    %850 = vmatprep.subr.mxu0 0.0
    %851 = vmatpush1.msra.mxu0 0.0
    %852 = vmatprep.subr.mxu0 0.0
    %853 = vmatpush1.msra.mxu0 0.0
    %854 = vmatprep.subr.mxu0 0.0
    %855 = vmatpush1.msra.mxu0 0.0
    %856 = vmatprep.subr.mxu0 0.0
    %857 = vmatpush1.msra.mxu0 0.0
    %858 = vmatprep.subr.mxu0 0.0
    %859 = vmatpush1.msra.mxu0 0.0
    %860 = vmatprep.subr.mxu0 0.0
    %861 = vmatpush1.msra.mxu0 0.0
    %862 = vmatprep.subr.mxu0 0.0
    %863 = vmatpush1.msra.mxu0 0.0
    %864 = vmatprep.subr.mxu0 0.0
    %865 = vmatpush1.msra.mxu0 0.0
    %866 = vmatprep.subr.mxu0 0.0
    %867 = vmatpush1.msra.mxu0 0.0
    %868 = vmatprep.subr.mxu0 0.0
    %869 = vmatpush1.msra.mxu0 0.0
    %870 = vmatprep.subr.mxu0 0.0
    %871 = vmatpush1.msra.mxu0 0.0
    %872 = vmatprep.subr.mxu0 0.0
    %873 = vmatpush1.msra.mxu0 0.0
    %874 = vmatprep.subr.mxu0 0.0
    %875 = vmatpush1.msra.mxu0 0.0
    %876 = vmatprep.subr.mxu0 0.0
    %877 = vmatpush1.msra.mxu0 0.0
    %878 = vmatprep.subr.mxu0 0.0
    %879 = vmatpush1.msra.mxu0 0.0
    %880 = vmatprep.subr.mxu0 0.0
    %881 = vmatpush1.msra.mxu0 0.0
    %882 = vmatprep.subr.mxu0 0.0
    %883 = vmatpush1.msra.mxu0 0.0
    %884 = vmatprep.subr.mxu0 0.0
    %885 = vmatpush1.msra.mxu0 0.0
    %886 = vmatprep.subr.mxu0 0.0
    %887 = vmatpush1.msra.mxu0 0.0
    %888 = vmatprep.subr.mxu0 0.0
    %889 = vmatpush1.msra.mxu0 0.0
    %890 = vmatprep.subr.mxu0 0.0
    %891 = vmatpush1.msra.mxu0 0.0
    %892 = vmatprep.subr.mxu0 0.0
    %893 = vmatpush1.msra.mxu0 0.0
    %894 = vmatprep.mubr.f32.mxu0 0.0
    %895 = vmatmul.mubr.f32.gmra.mrb[0].mxu0 %v826
    %v896 = vpop.f32.mrb[0].mxu0
    %v897 = vadd.f32 0.0, %v896
    %v898 = vpop.f32.mrb[0].mxu0
    %899 = vmatprep.mubr.f32.mxu0 0.0
    %900 = vmatmul.mubr.f32.gmra.mrb[0].mxu0 %v828
    %v901 = vpop.f32.mrb[0].mxu0
    %v902 = vadd.f32 0.0, %v901
    %v903 = vpop.f32.mrb[0].mxu0
    %904 = vdwg.mxu0
    %v905 = vadd.f32 %v812, %v897
    %v906 = vadd.f32 %v817, %v902
    %909 = vrot.lane.b32.xlu0 %v646, 104
    %v910 = vpop.permute.xlu0 %909
    %911 = vrot.lane.b32.xlu0 %v651, 104
    %v912 = vpop.permute.xlu0 %911
    %v913 = vsel %vm103, %v910, 0
    %v915 = vsel %vm103, %v912, 0
    %917 = vmatprep.subr.mxu0 0.0
    %918 = vmatpush1.msra.mxu0 %v193
    %919 = vmatprep.subr.mxu0 0.0
    %920 = vmatpush1.msra.mxu0 0.0
    %921 = vmatprep.subr.mxu0 0.0
    %922 = vmatpush1.msra.mxu0 0.0
    %923 = vmatprep.subr.mxu0 0.0
    %924 = vmatpush1.msra.mxu0 0.0
    %925 = vmatprep.subr.mxu0 0.0
    %926 = vmatpush1.msra.mxu0 0.0
    %927 = vmatprep.subr.mxu0 0.0
    %928 = vmatpush1.msra.mxu0 0.0
    %929 = vmatprep.subr.mxu0 0.0
    %930 = vmatpush1.msra.mxu0 0.0
    %931 = vmatprep.subr.mxu0 0.0
    %932 = vmatpush1.msra.mxu0 0.0
    %933 = vmatprep.subr.mxu0 0.0
    %934 = vmatpush1.msra.mxu0 0.0
    %935 = vmatprep.subr.mxu0 0.0
    %936 = vmatpush1.msra.mxu0 0.0
    %937 = vmatprep.subr.mxu0 0.0
    %938 = vmatpush1.msra.mxu0 0.0
    %939 = vmatprep.subr.mxu0 0.0
    %940 = vmatpush1.msra.mxu0 0.0
    %941 = vmatprep.subr.mxu0 0.0
    %942 = vmatpush1.msra.mxu0 0.0
    %943 = vmatprep.subr.mxu0 0.0
    %944 = vmatpush1.msra.mxu0 0.0
    %945 = vmatprep.subr.mxu0 0.0
    %946 = vmatpush1.msra.mxu0 0.0
    %947 = vmatprep.subr.mxu0 0.0
    %948 = vmatpush1.msra.mxu0 0.0
    %949 = vmatprep.subr.mxu0 0.0
    %950 = vmatpush1.msra.mxu0 0.0
    %951 = vmatprep.subr.mxu0 0.0
    %952 = vmatpush1.msra.mxu0 0.0
    %953 = vmatprep.subr.mxu0 0.0
    %954 = vmatpush1.msra.mxu0 0.0
    %955 = vmatprep.subr.mxu0 0.0
    %956 = vmatpush1.msra.mxu0 0.0
    %957 = vmatprep.subr.mxu0 0.0
    %958 = vmatpush1.msra.mxu0 0.0
    %959 = vmatprep.subr.mxu0 0.0
    %960 = vmatpush1.msra.mxu0 0.0
    %961 = vmatprep.subr.mxu0 0.0
    %962 = vmatpush1.msra.mxu0 0.0
    %963 = vmatprep.subr.mxu0 0.0
    %964 = vmatpush1.msra.mxu0 0.0
    %965 = vmatprep.subr.mxu0 0.0
    %966 = vmatpush1.msra.mxu0 0.0
    %967 = vmatprep.subr.mxu0 0.0
    %968 = vmatpush1.msra.mxu0 0.0
    %969 = vmatprep.subr.mxu0 0.0
    %970 = vmatpush1.msra.mxu0 0.0
    %971 = vmatprep.subr.mxu0 0.0
    %972 = vmatpush1.msra.mxu0 0.0
    %973 = vmatprep.subr.mxu0 0.0
    %974 = vmatpush1.msra.mxu0 0.0
    %975 = vmatprep.subr.mxu0 0.0
    %976 = vmatpush1.msra.mxu0 0.0
    %977 = vmatprep.subr.mxu0 0.0
    %978 = vmatpush1.msra.mxu0 0.0
    %979 = vmatprep.subr.mxu0 0.0
    %980 = vmatpush1.msra.mxu0 0.0
    %981 = vmatprep.mubr.f32.mxu0 0.0
    %982 = vmatmul.mubr.f32.gmra.mrb[0].mxu0 %v913
    %v983 = vpop.f32.mrb[0].mxu0
    %v984 = vadd.f32 0.0, %v983
    %v985 = vpop.f32.mrb[0].mxu0
    %986 = vmatprep.mubr.f32.mxu0 0.0
    %987 = vmatmul.mubr.f32.gmra.mrb[0].mxu0 %v915
    %v988 = vpop.f32.mrb[0].mxu0
    %v989 = vadd.f32 0.0, %v988
    %v990 = vpop.f32.mrb[0].mxu0
    %991 = vdwg.mxu0
    %v992 = vadd.f32 %v905, %v984
    %v993 = vadd.f32 %v906, %v989
    %v994 = vlaneseq
    %v995 = vshrl.u32 %v994, 7
    %v996 = vsub.s32 0, %v995
    %v997 = vrot.slane %v194, %v996
    %v998 = vadd.f32 %v992, %v997
    %v999 = vadd.f32 %v993, %v997
    %v1000 = vadd.f32 %v177, %v998
    %v1001 = vadd.f32 %v182, %v999
    %v1002 = vld [vmem:[#allocation6 + $0x6b] sm:$0x1]
    %v1003 = vld [vmem:[#allocation6 + $0x6c] sm:$0x1]
    %v1004 = vsel %vm199, %v1000, 0.0
    %1005 = vadd.xlane.f32.xlu0 %v1004
    %v1006 = vpop.xlane.xlu0 %1005
    %v1007 = vsel %vm199, %v1001, 0.0
    %1008 = vadd.xlane.f32.xlu0 %v1007
    %v1009 = vpop.xlane.xlu0 %1008
    %v1010 = vrcp.pop 32.0
    %v1011 = vmul.f32 %v1006, %v1010
    %v1012 = vmul.f32 %v1009, %v1010
    %v1013 = vmul.f32 %v1000, %v1000
    %v1014 = vmul.f32 %v1001, %v1001
    %v1015 = vsel %vm199, %v1013, 0.0
    %1016 = vadd.xlane.f32.xlu0 %v1015
    %v1017 = vpop.xlane.xlu0 %1016
    %v1018 = vsel %vm199, %v1014, 0.0
    %1019 = vadd.xlane.f32.xlu0 %v1018
    %v1020 = vpop.xlane.xlu0 %1019
    %v1021 = vmul.f32 %v1017, %v1010
    %v1022 = vmul.f32 %v1020, %v1010
    %v1023 = vsub.f32 %v1000, %v1011
    %v1024 = vsub.f32 %v1001, %v1012
    %v1025 = vmul.f32 %v1011, %v1011
    %v1026 = vmul.f32 %v1012, %v1012
    %v1027 = vsub.f32 %v1021, %v1025
    %v1028 = vsub.f32 %v1022, %v1026
    %v1029 = vadd.f32 %v1027, 1e-05
    %v1030 = vadd.f32 %v1028, 1e-05
    %v1031 = vrsqrt.pop %v1029
    %v1032 = vrsqrt.pop %v1030
    %v1033 = vmul.f32 %v1023, %v1031
    %v1034 = vmul.f32 %v1024, %v1032
    %v1035 = vlaneseq
    %v1036 = vshrl.u32 %v1035, 7
    %v1037 = vsub.s32 0, %v1036
    %v1038 = vrot.slane %v1002, %v1037
    %v1039 = vmul.f32 %v1033, %v1038
    %v1040 = vmul.f32 %v1034, %v1038
    %v1041 = vlaneseq
    %v1042 = vshrl.u32 %v1041, 7
    %v1043 = vsub.s32 0, %v1042
    %v1044 = vrot.slane %v1003, %v1043
    %v1045 = vadd.f32 %v1039, %v1044
    %v1046 = vadd.f32 %v1040, %v1044
    %v1047 = vld [vmem:[#allocation4 + $0x48] sm:$0xff]
    %v1048 = vld [vmem:[#allocation4 + $0x50] sm:$0xff]
    %v1049 = vld [vmem:[#allocation4 + $0x58] sm:$0xff]
    %v1050 = vld [vmem:[#allocation4 + $0x60] sm:$0xff]
    %v1051 = vld [vmem:[#allocation6 + $0x69] sm:$0x1]
    %v1052 = vld [vmem:[#allocation4 + $0x68] sm:$0xff]
    %v1053 = vld [vmem:[#allocation4 + $0x70] sm:$0xff]
    %v1054 = vld [vmem:[#allocation4 + $0x78] sm:$0xff]
    %v1055 = vld [vmem:[#allocation4 + $0x80] sm:$0xff]
    %v1056 = vld [vmem:[#allocation4 + $0x88] sm:$0xff]
    %v1057 = vld [vmem:[#allocation4 + $0x90] sm:$0xff]
    %v1058 = vld [vmem:[#allocation4 + $0x98] sm:$0xff]
    %v1059 = vld [vmem:[#allocation4 + $0xa0] sm:$0xff]
    %v1060 = vld [vmem:[#allocation6 + $0x6a] sm:$0x1]
    %v1061 = vlaneseq
    %v1062 = vshrl.u32 %v1061, 7
    %v1063 = vsub.s32 0, %v1062
    %v1064 = vrot.slane %v1051, %v1063
    %v1066 = vsel %vm199, %v1045, 0
    %v1069 = vsel %vm199, %v1046, 0
    %1071 = vmatprep.subr.mxu0 0.0
    %1072 = vmatpush1.msra.mxu0 %v1047
    %1073 = vmatprep.subr.mxu0 0.0
    %1074 = vmatpush1.msra.mxu0 %v1048
    %1075 = vmatprep.subr.mxu0 0.0
    %1076 = vmatpush1.msra.mxu0 %v1049
    %1077 = vmatprep.subr.mxu0 0.0
    %1078 = vmatpush1.msra.mxu0 %v1050
    %1079 = vmatprep.subr.mxu0 0.0
    %1080 = vmatpush1.msra.mxu0 0.0
    %1081 = vmatprep.subr.mxu0 0.0
    %1082 = vmatpush1.msra.mxu0 0.0
    %1083 = vmatprep.subr.mxu0 0.0
    %1084 = vmatpush1.msra.mxu0 0.0
    %1085 = vmatprep.subr.mxu0 0.0
    %1086 = vmatpush1.msra.mxu0 0.0
    %1087 = vmatprep.subr.mxu0 0.0
    %1088 = vmatpush1.msra.mxu0 0.0
    %1089 = vmatprep.subr.mxu0 0.0
    %1090 = vmatpush1.msra.mxu0 0.0
    %1091 = vmatprep.subr.mxu0 0.0
    %1092 = vmatpush1.msra.mxu0 0.0
    %1093 = vmatprep.subr.mxu0 0.0
    %1094 = vmatpush1.msra.mxu0 0.0
    %1095 = vmatprep.subr.mxu0 0.0
    %1096 = vmatpush1.msra.mxu0 0.0
    %1097 = vmatprep.subr.mxu0 0.0
    %1098 = vmatpush1.msra.mxu0 0.0
    %1099 = vmatprep.subr.mxu0 0.0
    %1100 = vmatpush1.msra.mxu0 0.0
    %1101 = vmatprep.subr.mxu0 0.0
    %1102 = vmatpush1.msra.mxu0 0.0
    %1103 = vmatprep.subr.mxu0 0.0
    %1104 = vmatpush1.msra.mxu0 0.0
    %1105 = vmatprep.subr.mxu0 0.0
    %1106 = vmatpush1.msra.mxu0 0.0
    %1107 = vmatprep.subr.mxu0 0.0
    %1108 = vmatpush1.msra.mxu0 0.0
    %1109 = vmatprep.subr.mxu0 0.0
    %1110 = vmatpush1.msra.mxu0 0.0
    %1111 = vmatprep.subr.mxu0 0.0
    %1112 = vmatpush1.msra.mxu0 0.0
    %1113 = vmatprep.subr.mxu0 0.0
    %1114 = vmatpush1.msra.mxu0 0.0
    %1115 = vmatprep.subr.mxu0 0.0
    %1116 = vmatpush1.msra.mxu0 0.0
    %1117 = vmatprep.subr.mxu0 0.0
    %1118 = vmatpush1.msra.mxu0 0.0
    %1119 = vmatprep.subr.mxu0 0.0
    %1120 = vmatpush1.msra.mxu0 0.0
    %1121 = vmatprep.subr.mxu0 0.0
    %1122 = vmatpush1.msra.mxu0 0.0
    %1123 = vmatprep.subr.mxu0 0.0
    %1124 = vmatpush1.msra.mxu0 0.0
    %1125 = vmatprep.subr.mxu0 0.0
    %1126 = vmatpush1.msra.mxu0 0.0
    %1127 = vmatprep.subr.mxu0 0.0
    %1128 = vmatpush1.msra.mxu0 0.0
    %1129 = vmatprep.subr.mxu0 0.0
    %1130 = vmatpush1.msra.mxu0 0.0
    %1131 = vmatprep.subr.mxu0 0.0
    %1132 = vmatpush1.msra.mxu0 0.0
    %1133 = vmatprep.subr.mxu0 0.0
    %1134 = vmatpush1.msra.mxu0 0.0
    %1135 = vmatprep.mubr.f32.mxu0 0.0
    %1136 = vmatmul.mubr.f32.gmra.mrb[0].mxu0 %v1066
    %v1137 = vpop.f32.mrb[0].mxu0
    %v1138 = vadd.f32 %v1064, %v1137
    %v1139 = vpop.f32.mrb[0].mxu0
    %1140 = vmatprep.mubr.f32.mxu0 0.0
    %1141 = vmatmul.mubr.f32.gmra.mrb[0].mxu0 %v1069
    %v1142 = vpop.f32.mrb[0].mxu0
    %v1143 = vadd.f32 %v1064, %v1142
    %v1144 = vpop.f32.mrb[0].mxu0
    %1145 = vdwg.mxu0
    %v1146 = vmax.f32 %v1138, 0.0
    %v1147 = vmax.f32 %v1143, 0.0
    %v1148 = vlaneseq
    %v1149 = vshrl.u32 %v1148, 7
    %v1150 = vsub.s32 0, %v1149
    %v1151 = vrot.slane %v1060, %v1150
    %vm1152 = vcmask 523264
    %v1154 = vsel %vm1152, %v1146, 0
    %v1157 = vsel %vm1152, %v1147, 0
    %1159 = vmatprep.subr.mxu0 0.0
    %1160 = vmatpush1.msra.mxu0 %v1052
    %1161 = vmatprep.subr.mxu0 0.0
    %1162 = vmatpush1.msra.mxu0 %v1053
    %1163 = vmatprep.subr.mxu0 0.0
    %1164 = vmatpush1.msra.mxu0 %v1054
    %1165 = vmatprep.subr.mxu0 0.0
    %1166 = vmatpush1.msra.mxu0 %v1055
    %1167 = vmatprep.subr.mxu0 0.0
    %1168 = vmatpush1.msra.mxu0 %v1056
    %1169 = vmatprep.subr.mxu0 0.0
    %1170 = vmatpush1.msra.mxu0 %v1057
    %1171 = vmatprep.subr.mxu0 0.0
    %1172 = vmatpush1.msra.mxu0 %v1058
    %1173 = vmatprep.subr.mxu0 0.0
    %1174 = vmatpush1.msra.mxu0 %v1059
    %1175 = vmatprep.subr.mxu0 0.0
    %1176 = vmatpush1.msra.mxu0 0.0
    %1177 = vmatprep.subr.mxu0 0.0
    %1178 = vmatpush1.msra.mxu0 0.0
    %1179 = vmatprep.subr.mxu0 0.0
    %1180 = vmatpush1.msra.mxu0 0.0
    %1181 = vmatprep.subr.mxu0 0.0
    %1182 = vmatpush1.msra.mxu0 0.0
    %1183 = vmatprep.subr.mxu0 0.0
    %1184 = vmatpush1.msra.mxu0 0.0
    %1185 = vmatprep.subr.mxu0 0.0
    %1186 = vmatpush1.msra.mxu0 0.0
    %1187 = vmatprep.subr.mxu0 0.0
    %1188 = vmatpush1.msra.mxu0 0.0
    %1189 = vmatprep.subr.mxu0 0.0
    %1190 = vmatpush1.msra.mxu0 0.0
    %1191 = vmatprep.subr.mxu0 0.0
    %1192 = vmatpush1.msra.mxu0 0.0
    %1193 = vmatprep.subr.mxu0 0.0
    %1194 = vmatpush1.msra.mxu0 0.0
    %1195 = vmatprep.subr.mxu0 0.0
    %1196 = vmatpush1.msra.mxu0 0.0
    %1197 = vmatprep.subr.mxu0 0.0
    %1198 = vmatpush1.msra.mxu0 0.0
    %1199 = vmatprep.subr.mxu0 0.0
    %1200 = vmatpush1.msra.mxu0 0.0
    %1201 = vmatprep.subr.mxu0 0.0
    %1202 = vmatpush1.msra.mxu0 0.0
    %1203 = vmatprep.subr.mxu0 0.0
    %1204 = vmatpush1.msra.mxu0 0.0
    %1205 = vmatprep.subr.mxu0 0.0
    %1206 = vmatpush1.msra.mxu0 0.0
    %1207 = vmatprep.subr.mxu0 0.0
    %1208 = vmatpush1.msra.mxu0 0.0
    %1209 = vmatprep.subr.mxu0 0.0
    %1210 = vmatpush1.msra.mxu0 0.0
    %1211 = vmatprep.subr.mxu0 0.0
    %1212 = vmatpush1.msra.mxu0 0.0
    %1213 = vmatprep.subr.mxu0 0.0
    %1214 = vmatpush1.msra.mxu0 0.0
    %1215 = vmatprep.subr.mxu0 0.0
    %1216 = vmatpush1.msra.mxu0 0.0
    %1217 = vmatprep.subr.mxu0 0.0
    %1218 = vmatpush1.msra.mxu0 0.0
    %1219 = vmatprep.subr.mxu0 0.0
    %1220 = vmatpush1.msra.mxu0 0.0
    %1221 = vmatprep.subr.mxu0 0.0
    %1222 = vmatpush1.msra.mxu0 0.0
    %1223 = vmatprep.mubr.f32.mxu0 0.0
    %1224 = vmatmul.mubr.f32.gmra.mrb[0].mxu0 %v1154
    %v1225 = vpop.f32.mrb[0].mxu0
    %v1226 = vadd.f32 %v1151, %v1225
    %v1227 = vpop.f32.mrb[0].mxu0
    %1228 = vmatprep.mubr.f32.mxu0 0.0
    %1229 = vmatmul.mubr.f32.gmra.mrb[0].mxu0 %v1157
    %v1230 = vpop.f32.mrb[0].mxu0
    %v1231 = vadd.f32 %v1151, %v1230
    %v1232 = vpop.f32.mrb[0].mxu0
    %1233 = vdwg.mxu0
    %v1234 = vadd.f32 %v1045, %v1226
    %v1235 = vadd.f32 %v1046, %v1231
    %v1236 = vld [vmem:[#allocation6 + $0x6d] sm:$0x1]
    %v1237 = vld [vmem:[#allocation6 + $0x6e] sm:$0x1]
    %v1238 = vsel %vm199, %v1234, 0.0
    %1239 = vadd.xlane.f32.xlu0 %v1238
    %v1240 = vpop.xlane.xlu0 %1239
    %v1241 = vsel %vm199, %v1235, 0.0
    %1242 = vadd.xlane.f32.xlu0 %v1241
    %v1243 = vpop.xlane.xlu0 %1242
    %v1244 = vmul.f32 %v1240, %v1010
    %v1245 = vmul.f32 %v1243, %v1010
    %v1246 = vmul.f32 %v1234, %v1234
    %v1247 = vmul.f32 %v1235, %v1235
    %v1248 = vsel %vm199, %v1246, 0.0
    %1249 = vadd.xlane.f32.xlu0 %v1248
    %v1250 = vpop.xlane.xlu0 %1249
    %v1251 = vsel %vm199, %v1247, 0.0
    %1252 = vadd.xlane.f32.xlu0 %v1251
    %v1253 = vpop.xlane.xlu0 %1252
    %v1254 = vmul.f32 %v1250, %v1010
    %v1255 = vmul.f32 %v1253, %v1010
    %v1256 = vsub.f32 %v1234, %v1244
    %v1257 = vsub.f32 %v1235, %v1245
    %v1258 = vmul.f32 %v1244, %v1244
    %v1259 = vmul.f32 %v1245, %v1245
    %v1260 = vsub.f32 %v1254, %v1258
    %v1261 = vsub.f32 %v1255, %v1259
    %v1262 = vadd.f32 %v1260, 1e-05
    %v1263 = vadd.f32 %v1261, 1e-05
    %v1264 = vrsqrt.pop %v1262
    %v1265 = vrsqrt.pop %v1263
    %v1266 = vmul.f32 %v1256, %v1264
    %v1267 = vmul.f32 %v1257, %v1265
    %v1268 = vlaneseq
    %v1269 = vshrl.u32 %v1268, 7
    %v1270 = vsub.s32 0, %v1269
    %v1271 = vrot.slane %v1236, %v1270
    %v1272 = vmul.f32 %v1266, %v1271
    %v1273 = vmul.f32 %v1267, %v1271
    %v1274 = vlaneseq
    %v1275 = vshrl.u32 %v1274, 7
    %v1276 = vsub.s32 0, %v1275
    %v1277 = vrot.slane %v1237, %v1276
    %v1278 = vadd.f32 %v1272, %v1277
    %v1279 = vadd.f32 %v1273, %v1277
    %v1280 = vld [vmem:[#allocation4 + $0xa8] sm:$0xff]
    %v1281 = vld [vmem:[#allocation4 + $0xb0] sm:$0xff]
    %v1282 = vld [vmem:[#allocation4 + $0xb8] sm:$0xff]
    %v1283 = vld [vmem:[#allocation4 + $0xc0] sm:$0xff]
    %v1284 = vld [vmem:[#allocation6 + $0x6f] sm:$0x1]
    %v1285 = vld [vmem:[#allocation4 + $0xc8] sm:$0xff]
    %v1286 = vld [vmem:[#allocation4 + $0xd0] sm:$0xff]
    %v1287 = vld [vmem:[#allocation4 + $0xd8] sm:$0xff]
    %v1288 = vld [vmem:[#allocation4 + $0xe0] sm:$0xff]
    %v1289 = vld [vmem:[#allocation6 + $0x70] sm:$0x1]
    %v1290 = vlaneseq
    %v1291 = vshrl.u32 %v1290, 7
    %v1292 = vsub.s32 0, %v1291
    %v1293 = vrot.slane %v1284, %v1292
    %v1295 = vsel %vm199, %v1278, 0
    %v1298 = vsel %vm199, %v1279, 0
    %1300 = vmatprep.subr.mxu0 0.0
    %1301 = vmatpush1.msra.mxu0 %v1280
    %1302 = vmatprep.subr.mxu0 0.0
    %1303 = vmatpush1.msra.mxu0 %v1281
    %1304 = vmatprep.subr.mxu0 0.0
    %1305 = vmatpush1.msra.mxu0 %v1282
    %1306 = vmatprep.subr.mxu0 0.0
    %1307 = vmatpush1.msra.mxu0 %v1283
    %1308 = vmatprep.subr.mxu0 0.0
    %1309 = vmatpush1.msra.mxu0 0.0
    %1310 = vmatprep.subr.mxu0 0.0
    %1311 = vmatpush1.msra.mxu0 0.0
    %1312 = vmatprep.subr.mxu0 0.0
    %1313 = vmatpush1.msra.mxu0 0.0
    %1314 = vmatprep.subr.mxu0 0.0
    %1315 = vmatpush1.msra.mxu0 0.0
    %1316 = vmatprep.subr.mxu0 0.0
    %1317 = vmatpush1.msra.mxu0 0.0
    %1318 = vmatprep.subr.mxu0 0.0
    %1319 = vmatpush1.msra.mxu0 0.0
    %1320 = vmatprep.subr.mxu0 0.0
    %1321 = vmatpush1.msra.mxu0 0.0
    %1322 = vmatprep.subr.mxu0 0.0
    %1323 = vmatpush1.msra.mxu0 0.0
    %1324 = vmatprep.subr.mxu0 0.0
    %1325 = vmatpush1.msra.mxu0 0.0
    %1326 = vmatprep.subr.mxu0 0.0
    %1327 = vmatpush1.msra.mxu0 0.0
    %1328 = vmatprep.subr.mxu0 0.0
    %1329 = vmatpush1.msra.mxu0 0.0
    %1330 = vmatprep.subr.mxu0 0.0
    %1331 = vmatpush1.msra.mxu0 0.0
    %1332 = vmatprep.subr.mxu0 0.0
    %1333 = vmatpush1.msra.mxu0 0.0
    %1334 = vmatprep.subr.mxu0 0.0
    %1335 = vmatpush1.msra.mxu0 0.0
    %1336 = vmatprep.subr.mxu0 0.0
    %1337 = vmatpush1.msra.mxu0 0.0
    %1338 = vmatprep.subr.mxu0 0.0
    %1339 = vmatpush1.msra.mxu0 0.0
    %1340 = vmatprep.subr.mxu0 0.0
    %1341 = vmatpush1.msra.mxu0 0.0
    %1342 = vmatprep.subr.mxu0 0.0
    %1343 = vmatpush1.msra.mxu0 0.0
    %1344 = vmatprep.subr.mxu0 0.0
    %1345 = vmatpush1.msra.mxu0 0.0
    %1346 = vmatprep.subr.mxu0 0.0
    %1347 = vmatpush1.msra.mxu0 0.0
    %1348 = vmatprep.subr.mxu0 0.0
    %1349 = vmatpush1.msra.mxu0 0.0
    %1350 = vmatprep.subr.mxu0 0.0
    %1351 = vmatpush1.msra.mxu0 0.0
    %1352 = vmatprep.subr.mxu0 0.0
    %1353 = vmatpush1.msra.mxu0 0.0
    %1354 = vmatprep.subr.mxu0 0.0
    %1355 = vmatpush1.msra.mxu0 0.0
    %1356 = vmatprep.subr.mxu0 0.0
    %1357 = vmatpush1.msra.mxu0 0.0
    %1358 = vmatprep.subr.mxu0 0.0
    %1359 = vmatpush1.msra.mxu0 0.0
    %1360 = vmatprep.subr.mxu0 0.0
    %1361 = vmatpush1.msra.mxu0 0.0
    %1362 = vmatprep.subr.mxu0 0.0
    %1363 = vmatpush1.msra.mxu0 0.0
    %1364 = vmatprep.mubr.f32.mxu0 0.0
    %1365 = vmatmul.mubr.f32.gmra.mrb[0].mxu0 %v1295
    %v1366 = vpop.f32.mrb[0].mxu0
    %v1367 = vadd.f32 %v1293, %v1366
    %v1368 = vpop.f32.mrb[0].mxu0
    %1369 = vmatprep.mubr.f32.mxu0 0.0
    %1370 = vmatmul.mubr.f32.gmra.mrb[0].mxu0 %v1298
    %v1371 = vpop.f32.mrb[0].mxu0
    %v1372 = vadd.f32 %v1293, %v1371
    %v1373 = vpop.f32.mrb[0].mxu0
    %1374 = vdwg.mxu0
    %v1375 = vmul.f32 %v1367, 0.35355338
    %v1376 = vmul.f32 %v1372, 0.35355338
    %v1377 = vmul.f32 %v1375, %v86
    %v1378 = vmul.f32 %v1376, %v86
    %v1379 = vmul.f32 %v1375, %v90
    %v1380 = vmul.f32 %v1376, %v90
    %v1381 = vmul.f32 %v1375, %v94
    %v1382 = vmul.f32 %v1376, %v94
    %v1383 = vmul.f32 %v1375, %v98
    %v1384 = vmul.f32 %v1376, %v98
    %1387 = vrot.lane.b32.xlu0 %v1367, 96
    %v1388 = vpop.permute.xlu0 %1387
    %1389 = vrot.lane.b32.xlu0 %v1372, 96
    %v1390 = vpop.permute.xlu0 %1389
    %v1392 = vsel %vm199, %v1377, 0
    %v1395 = vsel %vm199, %v1378, 0
    %v1398 = vsel %vm199, %v1379, 0
    %v1401 = vsel %vm199, %v1380, 0
    %v1404 = vsel %vm199, %v1381, 0
    %v1407 = vsel %vm199, %v1382, 0
    %v1410 = vsel %vm199, %v1383, 0
    %v1413 = vsel %vm199, %v1384, 0
    %v1415 = vsel %vm199, %v1388, 0
    %v1417 = vsel %vm199, %v1390, 0
    %1419 = vmatprep.subr.mxu0 0.0
    %1420 = vmatpush1.xpose.msra.mxu0 %v1415
    %1421 = vmatprep.subr.mxu0 0.0
    %1422 = vmatpush1.xpose.msra.mxu0 %v1417
    %1423 = vmatprep.subr.mxu0 0.0
    %1424 = vmatpush1.xpose.msra.mxu0 0.0
    %1425 = vmatprep.subr.mxu0 0.0
    %1426 = vmatpush1.xpose.msra.mxu0 0.0
    %1427 = vmatprep.subr.mxu0 0.0
    %1428 = vmatpush1.xpose.msra.mxu0 0.0
    %1429 = vmatprep.subr.mxu0 0.0
    %1430 = vmatpush1.xpose.msra.mxu0 0.0
    %1431 = vmatprep.subr.mxu0 0.0
    %1432 = vmatpush1.xpose.msra.mxu0 0.0
    %1433 = vmatprep.subr.mxu0 0.0
    %1434 = vmatpush1.xpose.msra.mxu0 0.0
    %1435 = vmatprep.subr.mxu0 0.0
    %1436 = vmatpush1.xpose.msra.mxu0 0.0
    %1437 = vmatprep.subr.mxu0 0.0
    %1438 = vmatpush1.xpose.msra.mxu0 0.0
    %1439 = vmatprep.subr.mxu0 0.0
    %1440 = vmatpush1.xpose.msra.mxu0 0.0
    %1441 = vmatprep.subr.mxu0 0.0
    %1442 = vmatpush1.xpose.msra.mxu0 0.0
    %1443 = vmatprep.subr.mxu0 0.0
    %1444 = vmatpush1.xpose.msra.mxu0 0.0
    %1445 = vmatprep.subr.mxu0 0.0
    %1446 = vmatpush1.xpose.msra.mxu0 0.0
    %1447 = vmatprep.subr.mxu0 0.0
    %1448 = vmatpush1.xpose.msra.mxu0 0.0
    %1449 = vmatprep.subr.mxu0 0.0
    %1450 = vmatpush1.xpose.msra.mxu0 0.0
    %1451 = vmatprep.subr.mxu0 0.0
    %1452 = vmatpush1.xpose.msra.mxu0 0.0
    %1453 = vmatprep.subr.mxu0 0.0
    %1454 = vmatpush1.xpose.msra.mxu0 0.0
    %1455 = vmatprep.subr.mxu0 0.0
    %1456 = vmatpush1.xpose.msra.mxu0 0.0
    %1457 = vmatprep.subr.mxu0 0.0
    %1458 = vmatpush1.xpose.msra.mxu0 0.0
    %1459 = vmatprep.subr.mxu0 0.0
    %1460 = vmatpush1.xpose.msra.mxu0 0.0
    %1461 = vmatprep.subr.mxu0 0.0
    %1462 = vmatpush1.xpose.msra.mxu0 0.0
    %1463 = vmatprep.subr.mxu0 0.0
    %1464 = vmatpush1.xpose.msra.mxu0 0.0
    %1465 = vmatprep.subr.mxu0 0.0
    %1466 = vmatpush1.xpose.msra.mxu0 0.0
    %1467 = vmatprep.subr.mxu0 0.0
    %1468 = vmatpush1.xpose.msra.mxu0 0.0
    %1469 = vmatprep.subr.mxu0 0.0
    %1470 = vmatpush1.xpose.msra.mxu0 0.0
    %1471 = vmatprep.subr.mxu0 0.0
    %1472 = vmatpush1.xpose.msra.mxu0 0.0
    %1473 = vmatprep.subr.mxu0 0.0
    %1474 = vmatpush1.xpose.msra.mxu0 0.0
    %1475 = vmatprep.subr.mxu0 0.0
    %1476 = vmatpush1.xpose.msra.mxu0 0.0
    %1477 = vmatprep.subr.mxu0 0.0
    %1478 = vmatpush1.xpose.msra.mxu0 0.0
    %1479 = vmatprep.subr.mxu0 0.0
    %1480 = vmatpush1.xpose.msra.mxu0 0.0
    %1481 = vmatprep.subr.mxu0 0.0
    %1482 = vmatpush1.xpose.msra.mxu0 0.0
    %1483 = vmatprep.mubr.f32.mxu0 0.0
    %1484 = vmatmul.mubr.f32.gmra.mrb[0].mxu0 %v1392
    %v1485 = vpop.f32.mrb[0].mxu0
    %v1486 = vadd.f32 %v72, %v1485
    %v1487 = vpop.f32.mrb[0].mxu0
    %1488 = vmatprep.mubr.f32.mxu0 0.0
    %1489 = vmatmul.mubr.f32.gmra.mrb[0].mxu0 %v1395
    %v1490 = vpop.f32.mrb[0].mxu0
    %v1491 = vadd.f32 %v73, %v1490
    %v1492 = vpop.f32.mrb[0].mxu0
    %1493 = vmatprep.mubr.f32.mxu0 0.0
    %1494 = vmatmul.mubr.f32.gmra.mrb[0].mxu0 %v1398
    %v1495 = vpop.f32.mrb[0].mxu0
    %v1496 = vadd.f32 %v74, %v1495
    %v1497 = vpop.f32.mrb[0].mxu0
    %1498 = vmatprep.mubr.f32.mxu0 0.0
    %1499 = vmatmul.mubr.f32.gmra.mrb[0].mxu0 %v1401
    %v1500 = vpop.f32.mrb[0].mxu0
    %v1501 = vadd.f32 %v75, %v1500
    %v1502 = vpop.f32.mrb[0].mxu0
    %1503 = vmatprep.mubr.f32.mxu0 0.0
    %1504 = vmatmul.mubr.f32.gmra.mrb[0].mxu0 %v1404
    %v1505 = vpop.f32.mrb[0].mxu0
    %v1506 = vadd.f32 %v76, %v1505
    %v1507 = vpop.f32.mrb[0].mxu0
    %1508 = vmatprep.mubr.f32.mxu0 0.0
    %1509 = vmatmul.mubr.f32.gmra.mrb[0].mxu0 %v1407
    %v1510 = vpop.f32.mrb[0].mxu0
    %v1511 = vadd.f32 %v77, %v1510
    %v1512 = vpop.f32.mrb[0].mxu0
    %1513 = vmatprep.mubr.f32.mxu0 0.0
    %1514 = vmatmul.mubr.f32.gmra.mrb[0].mxu0 %v1410
    %v1515 = vpop.f32.mrb[0].mxu0
    %v1516 = vadd.f32 %v78, %v1515
    %v1517 = vpop.f32.mrb[0].mxu0
    %1518 = vmatprep.mubr.f32.mxu0 0.0
    %1519 = vmatmul.mubr.f32.gmra.mrb[0].mxu0 %v1413
    %v1520 = vpop.f32.mrb[0].mxu0
    %v1521 = vadd.f32 %v79, %v1520
    %v1522 = vpop.f32.mrb[0].mxu0
    %1523 = vdwg.mxu0
    %v1524 = vsel %vm430, %v1486, -inf
    %1525 = vmax.xlane.f32.xlu0 %v1524
    %v1526 = vpop.xlane.xlu0 %1525
    %v1527 = vsel %vm430, %v1491, -inf
    %1528 = vmax.xlane.f32.xlu0 %v1527
    %v1529 = vpop.xlane.xlu0 %1528
    %v1530 = vsel %vm430, %v1496, -inf
    %1531 = vmax.xlane.f32.xlu0 %v1530
    %v1532 = vpop.xlane.xlu0 %1531
    %v1533 = vsel %vm430, %v1501, -inf
    %1534 = vmax.xlane.f32.xlu0 %v1533
    %v1535 = vpop.xlane.xlu0 %1534
    %v1536 = vsel %vm430, %v1506, -inf
    %1537 = vmax.xlane.f32.xlu0 %v1536
    %v1538 = vpop.xlane.xlu0 %1537
    %v1539 = vsel %vm430, %v1511, -inf
    %1540 = vmax.xlane.f32.xlu0 %v1539
    %v1541 = vpop.xlane.xlu0 %1540
    %v1542 = vsel %vm430, %v1516, -inf
    %1543 = vmax.xlane.f32.xlu0 %v1542
    %v1544 = vpop.xlane.xlu0 %1543
    %v1545 = vsel %vm430, %v1521, -inf
    %1546 = vmax.xlane.f32.xlu0 %v1545
    %v1547 = vpop.xlane.xlu0 %1546
    %v1548 = vsub.f32 %v1486, %v1526
    %v1549 = vsub.f32 %v1491, %v1529
    %v1550 = vsub.f32 %v1496, %v1532
    %v1551 = vsub.f32 %v1501, %v1535
    %v1552 = vsub.f32 %v1506, %v1538
    %v1553 = vsub.f32 %v1511, %v1541
    %v1554 = vsub.f32 %v1516, %v1544
    %v1555 = vsub.f32 %v1521, %v1547
    %v1556 = vmul.f32 %v1548, 1.442695
    %v1557 = vpow.pop %v1556
    %v1558 = vmul.f32 %v1549, 1.442695
    %v1559 = vpow.pop %v1558
    %v1560 = vmul.f32 %v1550, 1.442695
    %v1561 = vpow.pop %v1560
    %v1562 = vmul.f32 %v1551, 1.442695
    %v1563 = vpow.pop %v1562
    %v1564 = vmul.f32 %v1552, 1.442695
    %v1565 = vpow.pop %v1564
    %v1566 = vmul.f32 %v1553, 1.442695
    %v1567 = vpow.pop %v1566
    %v1568 = vmul.f32 %v1554, 1.442695
    %v1569 = vpow.pop %v1568
    %v1570 = vmul.f32 %v1555, 1.442695
    %v1571 = vpow.pop %v1570
    %v1572 = vsel %vm430, %v1557, 0.0
    %1573 = vadd.xlane.f32.xlu0 %v1572
    %v1574 = vpop.xlane.xlu0 %1573
    %v1575 = vsel %vm430, %v1559, 0.0
    %1576 = vadd.xlane.f32.xlu0 %v1575
    %v1577 = vpop.xlane.xlu0 %1576
    %v1578 = vsel %vm430, %v1561, 0.0
    %1579 = vadd.xlane.f32.xlu0 %v1578
    %v1580 = vpop.xlane.xlu0 %1579
    %v1581 = vsel %vm430, %v1563, 0.0
    %1582 = vadd.xlane.f32.xlu0 %v1581
    %v1583 = vpop.xlane.xlu0 %1582
    %v1584 = vsel %vm430, %v1565, 0.0
    %1585 = vadd.xlane.f32.xlu0 %v1584
    %v1586 = vpop.xlane.xlu0 %1585
    %v1587 = vsel %vm430, %v1567, 0.0
    %1588 = vadd.xlane.f32.xlu0 %v1587
    %v1589 = vpop.xlane.xlu0 %1588
    %v1590 = vsel %vm430, %v1569, 0.0
    %1591 = vadd.xlane.f32.xlu0 %v1590
    %v1592 = vpop.xlane.xlu0 %1591
    %v1593 = vsel %vm430, %v1571, 0.0
    %1594 = vadd.xlane.f32.xlu0 %v1593
    %v1595 = vpop.xlane.xlu0 %1594
    %v1596 = vrcp.pop %v1574
    %v1597 = vrcp.pop %v1577
    %v1598 = vrcp.pop %v1580
    %v1599 = vrcp.pop %v1583
    %v1600 = vrcp.pop %v1586
    %v1601 = vrcp.pop %v1589
    %v1602 = vrcp.pop %v1592
    %v1603 = vrcp.pop %v1595
    %v1604 = vmul.f32 %v1557, %v1596
    %v1605 = vmul.f32 %v1559, %v1597
    %v1606 = vmul.f32 %v1561, %v1598
    %v1607 = vmul.f32 %v1563, %v1599
    %v1608 = vmul.f32 %v1565, %v1600
    %v1609 = vmul.f32 %v1567, %v1601
    %v1610 = vmul.f32 %v1569, %v1602
    %v1611 = vmul.f32 %v1571, %v1603
    %1612 = vrot.lane.b32.xlu0 %v1367, 64
    %v1613 = vpop.permute.xlu0 %1612
    %1614 = vrot.lane.b32.xlu0 %v1372, 64
    %v1615 = vpop.permute.xlu0 %1614
    %v1619 = vsel %vm430, %v1604, 0
    %v1622 = vsel %vm430, %v1605, 0
    %v1625 = vsel %vm430, %v1606, 0
    %v1628 = vsel %vm430, %v1607, 0
    %v1631 = vsel %vm430, %v1608, 0
    %v1634 = vsel %vm430, %v1609, 0
    %v1637 = vsel %vm430, %v1610, 0
    %v1640 = vsel %vm430, %v1611, 0
    %1642 = vmatprep.subr.mxu0 0.0
    %1643 = vmatpush1.msra.mxu0 %v1613
    %1644 = vmatprep.subr.mxu0 0.0
    %1645 = vmatpush1.msra.mxu0 %v1615
    %1646 = vmatprep.subr.mxu0 0.0
    %1647 = vmatpush1.msra.mxu0 0.0
    %1648 = vmatprep.subr.mxu0 0.0
    %1649 = vmatpush1.msra.mxu0 0.0
    %1650 = vmatprep.subr.mxu0 0.0
    %1651 = vmatpush1.msra.mxu0 0.0
    %1652 = vmatprep.subr.mxu0 0.0
    %1653 = vmatpush1.msra.mxu0 0.0
    %1654 = vmatprep.subr.mxu0 0.0
    %1655 = vmatpush1.msra.mxu0 0.0
    %1656 = vmatprep.subr.mxu0 0.0
    %1657 = vmatpush1.msra.mxu0 0.0
    %1658 = vmatprep.subr.mxu0 0.0
    %1659 = vmatpush1.msra.mxu0 0.0
    %1660 = vmatprep.subr.mxu0 0.0
    %1661 = vmatpush1.msra.mxu0 0.0
    %1662 = vmatprep.subr.mxu0 0.0
    %1663 = vmatpush1.msra.mxu0 0.0
    %1664 = vmatprep.subr.mxu0 0.0
    %1665 = vmatpush1.msra.mxu0 0.0
    %1666 = vmatprep.subr.mxu0 0.0
    %1667 = vmatpush1.msra.mxu0 0.0
    %1668 = vmatprep.subr.mxu0 0.0
    %1669 = vmatpush1.msra.mxu0 0.0
    %1670 = vmatprep.subr.mxu0 0.0
    %1671 = vmatpush1.msra.mxu0 0.0
    %1672 = vmatprep.subr.mxu0 0.0
    %1673 = vmatpush1.msra.mxu0 0.0
    %1674 = vmatprep.subr.mxu0 0.0
    %1675 = vmatpush1.msra.mxu0 0.0
    %1676 = vmatprep.subr.mxu0 0.0
    %1677 = vmatpush1.msra.mxu0 0.0
    %1678 = vmatprep.subr.mxu0 0.0
    %1679 = vmatpush1.msra.mxu0 0.0
    %1680 = vmatprep.subr.mxu0 0.0
    %1681 = vmatpush1.msra.mxu0 0.0
    %1682 = vmatprep.subr.mxu0 0.0
    %1683 = vmatpush1.msra.mxu0 0.0
    %1684 = vmatprep.subr.mxu0 0.0
    %1685 = vmatpush1.msra.mxu0 0.0
    %1686 = vmatprep.subr.mxu0 0.0
    %1687 = vmatpush1.msra.mxu0 0.0
    %1688 = vmatprep.subr.mxu0 0.0
    %1689 = vmatpush1.msra.mxu0 0.0
    %1690 = vmatprep.subr.mxu0 0.0
    %1691 = vmatpush1.msra.mxu0 0.0
    %1692 = vmatprep.subr.mxu0 0.0
    %1693 = vmatpush1.msra.mxu0 0.0
    %1694 = vmatprep.subr.mxu0 0.0
    %1695 = vmatpush1.msra.mxu0 0.0
    %1696 = vmatprep.subr.mxu0 0.0
    %1697 = vmatpush1.msra.mxu0 0.0
    %1698 = vmatprep.subr.mxu0 0.0
    %1699 = vmatpush1.msra.mxu0 0.0
    %1700 = vmatprep.subr.mxu0 0.0
    %1701 = vmatpush1.msra.mxu0 0.0
    %1702 = vmatprep.subr.mxu0 0.0
    %1703 = vmatpush1.msra.mxu0 0.0
    %1704 = vmatprep.subr.mxu0 0.0
    %1705 = vmatpush1.msra.mxu0 0.0
    %1706 = vmatprep.mubr.f32.mxu0 0.0
    %1707 = vmatmul.mubr.f32.gmra.mrb[0].mxu0 %v1619
    %v1708 = vpop.f32.mrb[0].mxu0
    %v1709 = vadd.f32 0.0, %v1708
    %v1710 = vpop.f32.mrb[0].mxu0
    %1711 = vmatprep.mubr.f32.mxu0 0.0
    %1712 = vmatmul.mubr.f32.gmra.mrb[0].mxu0 %v1622
    %v1713 = vpop.f32.mrb[0].mxu0
    %v1714 = vadd.f32 0.0, %v1713
    %v1715 = vpop.f32.mrb[0].mxu0
    %1716 = vmatprep.mubr.f32.mxu0 0.0
    %1717 = vmatmul.mubr.f32.gmra.mrb[0].mxu0 %v1625
    %v1718 = vpop.f32.mrb[0].mxu0
    %v1719 = vadd.f32 0.0, %v1718
    %v1720 = vpop.f32.mrb[0].mxu0
    %1721 = vmatprep.mubr.f32.mxu0 0.0
    %1722 = vmatmul.mubr.f32.gmra.mrb[0].mxu0 %v1628
    %v1723 = vpop.f32.mrb[0].mxu0
    %v1724 = vadd.f32 0.0, %v1723
    %v1725 = vpop.f32.mrb[0].mxu0
    %1726 = vmatprep.mubr.f32.mxu0 0.0
    %1727 = vmatmul.mubr.f32.gmra.mrb[0].mxu0 %v1631
    %v1728 = vpop.f32.mrb[0].mxu0
    %v1729 = vadd.f32 0.0, %v1728
    %v1730 = vpop.f32.mrb[0].mxu0
    %1731 = vmatprep.mubr.f32.mxu0 0.0
    %1732 = vmatmul.mubr.f32.gmra.mrb[0].mxu0 %v1634
    %v1733 = vpop.f32.mrb[0].mxu0
    %v1734 = vadd.f32 0.0, %v1733
    %v1735 = vpop.f32.mrb[0].mxu0
    %1736 = vmatprep.mubr.f32.mxu0 0.0
    %1737 = vmatmul.mubr.f32.gmra.mrb[0].mxu0 %v1637
    %v1738 = vpop.f32.mrb[0].mxu0
    %v1739 = vadd.f32 0.0, %v1738
    %v1740 = vpop.f32.mrb[0].mxu0
    %1741 = vmatprep.mubr.f32.mxu0 0.0
    %1742 = vmatmul.mubr.f32.gmra.mrb[0].mxu0 %v1640
    %v1743 = vpop.f32.mrb[0].mxu0
    %v1744 = vadd.f32 0.0, %v1743
    %v1745 = vpop.f32.mrb[0].mxu0
    %1746 = vdwg.mxu0
    %1749 = vrot.lane.b32.xlu0 %v1719, 120
    %v1750 = vpop.permute.xlu0 %1749
    %1751 = vrot.lane.b32.xlu0 %v1724, 120
    %v1752 = vpop.permute.xlu0 %1751
    %v1753 = vsel %vm103, %v1750, 0
    %v1755 = vsel %vm103, %v1752, 0
    %1757 = vmatprep.subr.mxu0 0.0
    %1758 = vmatpush1.msra.mxu0 %v1286
    %1759 = vmatprep.subr.mxu0 0.0
    %1760 = vmatpush1.msra.mxu0 0.0
    %1761 = vmatprep.subr.mxu0 0.0
    %1762 = vmatpush1.msra.mxu0 0.0
    %1763 = vmatprep.subr.mxu0 0.0
    %1764 = vmatpush1.msra.mxu0 0.0
    %1765 = vmatprep.subr.mxu0 0.0
    %1766 = vmatpush1.msra.mxu0 0.0
    %1767 = vmatprep.subr.mxu0 0.0
    %1768 = vmatpush1.msra.mxu0 0.0
    %1769 = vmatprep.subr.mxu0 0.0
    %1770 = vmatpush1.msra.mxu0 0.0
    %1771 = vmatprep.subr.mxu0 0.0
    %1772 = vmatpush1.msra.mxu0 0.0
    %1773 = vmatprep.subr.mxu0 0.0
    %1774 = vmatpush1.msra.mxu0 0.0
    %1775 = vmatprep.subr.mxu0 0.0
    %1776 = vmatpush1.msra.mxu0 0.0
    %1777 = vmatprep.subr.mxu0 0.0
    %1778 = vmatpush1.msra.mxu0 0.0
    %1779 = vmatprep.subr.mxu0 0.0
    %1780 = vmatpush1.msra.mxu0 0.0
    %1781 = vmatprep.subr.mxu0 0.0
    %1782 = vmatpush1.msra.mxu0 0.0
    %1783 = vmatprep.subr.mxu0 0.0
    %1784 = vmatpush1.msra.mxu0 0.0
    %1785 = vmatprep.subr.mxu0 0.0
    %1786 = vmatpush1.msra.mxu0 0.0
    %1787 = vmatprep.subr.mxu0 0.0
    %1788 = vmatpush1.msra.mxu0 0.0
    %1789 = vmatprep.subr.mxu0 0.0
    %1790 = vmatpush1.msra.mxu0 0.0
    %1791 = vmatprep.subr.mxu0 0.0
    %1792 = vmatpush1.msra.mxu0 0.0
    %1793 = vmatprep.subr.mxu0 0.0
    %1794 = vmatpush1.msra.mxu0 0.0
    %1795 = vmatprep.subr.mxu0 0.0
    %1796 = vmatpush1.msra.mxu0 0.0
    %1797 = vmatprep.subr.mxu0 0.0
    %1798 = vmatpush1.msra.mxu0 0.0
    %1799 = vmatprep.subr.mxu0 0.0
    %1800 = vmatpush1.msra.mxu0 0.0
    %1801 = vmatprep.subr.mxu0 0.0
    %1802 = vmatpush1.msra.mxu0 0.0
    %1803 = vmatprep.subr.mxu0 0.0
    %1804 = vmatpush1.msra.mxu0 0.0
    %1805 = vmatprep.subr.mxu0 0.0
    %1806 = vmatpush1.msra.mxu0 0.0
    %1807 = vmatprep.subr.mxu0 0.0
    %1808 = vmatpush1.msra.mxu0 0.0
    %1809 = vmatprep.subr.mxu0 0.0
    %1810 = vmatpush1.msra.mxu0 0.0
    %1811 = vmatprep.subr.mxu0 0.0
    %1812 = vmatpush1.msra.mxu0 0.0
    %1813 = vmatprep.subr.mxu0 0.0
    %1814 = vmatpush1.msra.mxu0 0.0
    %1815 = vmatprep.subr.mxu0 0.0
    %1816 = vmatpush1.msra.mxu0 0.0
    %1817 = vmatprep.subr.mxu0 0.0
    %1818 = vmatpush1.msra.mxu0 0.0
    %1819 = vmatprep.subr.mxu0 0.0
    %1820 = vmatpush1.msra.mxu0 0.0
    %1821 = vmatprep.mubr.f32.mxu0 0.0
    %1822 = vmatmul.mubr.f32.gmra.mrb[0].mxu0 %v1753
    %v1823 = vpop.f32.mrb[0].mxu0
    %v1824 = vadd.f32 0.0, %v1823
    %v1825 = vpop.f32.mrb[0].mxu0
    %1826 = vmatprep.mubr.f32.mxu0 0.0
    %1827 = vmatmul.mubr.f32.gmra.mrb[0].mxu0 %v1755
    %v1828 = vpop.f32.mrb[0].mxu0
    %v1829 = vadd.f32 0.0, %v1828
    %v1830 = vpop.f32.mrb[0].mxu0
    %1831 = vdwg.mxu0
    %v1833 = vsel %vm103, %v1709, 0
    %v1836 = vsel %vm103, %v1714, 0
    %1838 = vmatprep.subr.mxu0 0.0
    %1839 = vmatpush1.msra.mxu0 %v1285
    %1840 = vmatprep.subr.mxu0 0.0
    %1841 = vmatpush1.msra.mxu0 0.0
    %1842 = vmatprep.subr.mxu0 0.0
    %1843 = vmatpush1.msra.mxu0 0.0
    %1844 = vmatprep.subr.mxu0 0.0
    %1845 = vmatpush1.msra.mxu0 0.0
    %1846 = vmatprep.subr.mxu0 0.0
    %1847 = vmatpush1.msra.mxu0 0.0
    %1848 = vmatprep.subr.mxu0 0.0
    %1849 = vmatpush1.msra.mxu0 0.0
    %1850 = vmatprep.subr.mxu0 0.0
    %1851 = vmatpush1.msra.mxu0 0.0
    %1852 = vmatprep.subr.mxu0 0.0
    %1853 = vmatpush1.msra.mxu0 0.0
    %1854 = vmatprep.subr.mxu0 0.0
    %1855 = vmatpush1.msra.mxu0 0.0
    %1856 = vmatprep.subr.mxu0 0.0
    %1857 = vmatpush1.msra.mxu0 0.0
    %1858 = vmatprep.subr.mxu0 0.0
    %1859 = vmatpush1.msra.mxu0 0.0
    %1860 = vmatprep.subr.mxu0 0.0
    %1861 = vmatpush1.msra.mxu0 0.0
    %1862 = vmatprep.subr.mxu0 0.0
    %1863 = vmatpush1.msra.mxu0 0.0
    %1864 = vmatprep.subr.mxu0 0.0
    %1865 = vmatpush1.msra.mxu0 0.0
    %1866 = vmatprep.subr.mxu0 0.0
    %1867 = vmatpush1.msra.mxu0 0.0
    %1868 = vmatprep.subr.mxu0 0.0
    %1869 = vmatpush1.msra.mxu0 0.0
    %1870 = vmatprep.subr.mxu0 0.0
    %1871 = vmatpush1.msra.mxu0 0.0
    %1872 = vmatprep.subr.mxu0 0.0
    %1873 = vmatpush1.msra.mxu0 0.0
    %1874 = vmatprep.subr.mxu0 0.0
    %1875 = vmatpush1.msra.mxu0 0.0
    %1876 = vmatprep.subr.mxu0 0.0
    %1877 = vmatpush1.msra.mxu0 0.0
    %1878 = vmatprep.subr.mxu0 0.0
    %1879 = vmatpush1.msra.mxu0 0.0
    %1880 = vmatprep.subr.mxu0 0.0
    %1881 = vmatpush1.msra.mxu0 0.0
    %1882 = vmatprep.subr.mxu0 0.0
    %1883 = vmatpush1.msra.mxu0 0.0
    %1884 = vmatprep.subr.mxu0 0.0
    %1885 = vmatpush1.msra.mxu0 0.0
    %1886 = vmatprep.subr.mxu0 0.0
    %1887 = vmatpush1.msra.mxu0 0.0
    %1888 = vmatprep.subr.mxu0 0.0
    %1889 = vmatpush1.msra.mxu0 0.0
    %1890 = vmatprep.subr.mxu0 0.0
    %1891 = vmatpush1.msra.mxu0 0.0
    %1892 = vmatprep.subr.mxu0 0.0
    %1893 = vmatpush1.msra.mxu0 0.0
    %1894 = vmatprep.subr.mxu0 0.0
    %1895 = vmatpush1.msra.mxu0 0.0
    %1896 = vmatprep.subr.mxu0 0.0
    %1897 = vmatpush1.msra.mxu0 0.0
    %1898 = vmatprep.subr.mxu0 0.0
    %1899 = vmatpush1.msra.mxu0 0.0
    %1900 = vmatprep.subr.mxu0 0.0
    %1901 = vmatpush1.msra.mxu0 0.0
    %1902 = vmatprep.mubr.f32.mxu0 0.0
    %1903 = vmatmul.mubr.f32.gmra.mrb[0].mxu0 %v1833
    %v1904 = vpop.f32.mrb[0].mxu0
    %v1905 = vadd.f32 %v1824, %v1904
    %v1906 = vpop.f32.mrb[0].mxu0
    %1907 = vmatprep.mubr.f32.mxu0 0.0
    %1908 = vmatmul.mubr.f32.gmra.mrb[0].mxu0 %v1836
    %v1909 = vpop.f32.mrb[0].mxu0
    %v1910 = vadd.f32 %v1829, %v1909
    %v1911 = vpop.f32.mrb[0].mxu0
    %1912 = vdwg.mxu0
    %1915 = vrot.lane.b32.xlu0 %v1729, 112
    %v1916 = vpop.permute.xlu0 %1915
    %1917 = vrot.lane.b32.xlu0 %v1734, 112
    %v1918 = vpop.permute.xlu0 %1917
    %v1919 = vsel %vm103, %v1916, 0
    %v1921 = vsel %vm103, %v1918, 0
    %1923 = vmatprep.subr.mxu0 0.0
    %1924 = vmatpush1.msra.mxu0 %v1287
    %1925 = vmatprep.subr.mxu0 0.0
    %1926 = vmatpush1.msra.mxu0 0.0
    %1927 = vmatprep.subr.mxu0 0.0
    %1928 = vmatpush1.msra.mxu0 0.0
    %1929 = vmatprep.subr.mxu0 0.0
    %1930 = vmatpush1.msra.mxu0 0.0
    %1931 = vmatprep.subr.mxu0 0.0
    %1932 = vmatpush1.msra.mxu0 0.0
    %1933 = vmatprep.subr.mxu0 0.0
    %1934 = vmatpush1.msra.mxu0 0.0
    %1935 = vmatprep.subr.mxu0 0.0
    %1936 = vmatpush1.msra.mxu0 0.0
    %1937 = vmatprep.subr.mxu0 0.0
    %1938 = vmatpush1.msra.mxu0 0.0
    %1939 = vmatprep.subr.mxu0 0.0
    %1940 = vmatpush1.msra.mxu0 0.0
    %1941 = vmatprep.subr.mxu0 0.0
    %1942 = vmatpush1.msra.mxu0 0.0
    %1943 = vmatprep.subr.mxu0 0.0
    %1944 = vmatpush1.msra.mxu0 0.0
    %1945 = vmatprep.subr.mxu0 0.0
    %1946 = vmatpush1.msra.mxu0 0.0
    %1947 = vmatprep.subr.mxu0 0.0
    %1948 = vmatpush1.msra.mxu0 0.0
    %1949 = vmatprep.subr.mxu0 0.0
    %1950 = vmatpush1.msra.mxu0 0.0
    %1951 = vmatprep.subr.mxu0 0.0
    %1952 = vmatpush1.msra.mxu0 0.0
    %1953 = vmatprep.subr.mxu0 0.0
    %1954 = vmatpush1.msra.mxu0 0.0
    %1955 = vmatprep.subr.mxu0 0.0
    %1956 = vmatpush1.msra.mxu0 0.0
    %1957 = vmatprep.subr.mxu0 0.0
    %1958 = vmatpush1.msra.mxu0 0.0
    %1959 = vmatprep.subr.mxu0 0.0
    %1960 = vmatpush1.msra.mxu0 0.0
    %1961 = vmatprep.subr.mxu0 0.0
    %1962 = vmatpush1.msra.mxu0 0.0
    %1963 = vmatprep.subr.mxu0 0.0
    %1964 = vmatpush1.msra.mxu0 0.0
    %1965 = vmatprep.subr.mxu0 0.0
    %1966 = vmatpush1.msra.mxu0 0.0
    %1967 = vmatprep.subr.mxu0 0.0
    %1968 = vmatpush1.msra.mxu0 0.0
    %1969 = vmatprep.subr.mxu0 0.0
    %1970 = vmatpush1.msra.mxu0 0.0
    %1971 = vmatprep.subr.mxu0 0.0
    %1972 = vmatpush1.msra.mxu0 0.0
    %1973 = vmatprep.subr.mxu0 0.0
    %1974 = vmatpush1.msra.mxu0 0.0
    %1975 = vmatprep.subr.mxu0 0.0
    %1976 = vmatpush1.msra.mxu0 0.0
    %1977 = vmatprep.subr.mxu0 0.0
    %1978 = vmatpush1.msra.mxu0 0.0
    %1979 = vmatprep.subr.mxu0 0.0
    %1980 = vmatpush1.msra.mxu0 0.0
    %1981 = vmatprep.subr.mxu0 0.0
    %1982 = vmatpush1.msra.mxu0 0.0
    %1983 = vmatprep.subr.mxu0 0.0
    %1984 = vmatpush1.msra.mxu0 0.0
    %1985 = vmatprep.subr.mxu0 0.0
    %1986 = vmatpush1.msra.mxu0 0.0
    %1987 = vmatprep.mubr.f32.mxu0 0.0
    %1988 = vmatmul.mubr.f32.gmra.mrb[0].mxu0 %v1919
    %v1989 = vpop.f32.mrb[0].mxu0
    %v1990 = vadd.f32 0.0, %v1989
    %v1991 = vpop.f32.mrb[0].mxu0
    %1992 = vmatprep.mubr.f32.mxu0 0.0
    %1993 = vmatmul.mubr.f32.gmra.mrb[0].mxu0 %v1921
    %v1994 = vpop.f32.mrb[0].mxu0
    %v1995 = vadd.f32 0.0, %v1994
    %v1996 = vpop.f32.mrb[0].mxu0
    %1997 = vdwg.mxu0
    %v1998 = vadd.f32 %v1905, %v1990
    %v1999 = vadd.f32 %v1910, %v1995
    %2002 = vrot.lane.b32.xlu0 %v1739, 104
    %v2003 = vpop.permute.xlu0 %2002
    %2004 = vrot.lane.b32.xlu0 %v1744, 104
    %v2005 = vpop.permute.xlu0 %2004
    %v2006 = vsel %vm103, %v2003, 0
    %v2008 = vsel %vm103, %v2005, 0
    %2010 = vmatprep.subr.mxu0 0.0
    %2011 = vmatpush1.msra.mxu0 %v1288
    %2012 = vmatprep.subr.mxu0 0.0
    %2013 = vmatpush1.msra.mxu0 0.0
    %2014 = vmatprep.subr.mxu0 0.0
    %2015 = vmatpush1.msra.mxu0 0.0
    %2016 = vmatprep.subr.mxu0 0.0
    %2017 = vmatpush1.msra.mxu0 0.0
    %2018 = vmatprep.subr.mxu0 0.0
    %2019 = vmatpush1.msra.mxu0 0.0
    %2020 = vmatprep.subr.mxu0 0.0
    %2021 = vmatpush1.msra.mxu0 0.0
    %2022 = vmatprep.subr.mxu0 0.0
    %2023 = vmatpush1.msra.mxu0 0.0
    %2024 = vmatprep.subr.mxu0 0.0
    %2025 = vmatpush1.msra.mxu0 0.0
    %2026 = vmatprep.subr.mxu0 0.0
    %2027 = vmatpush1.msra.mxu0 0.0
    %2028 = vmatprep.subr.mxu0 0.0
    %2029 = vmatpush1.msra.mxu0 0.0
    %2030 = vmatprep.subr.mxu0 0.0
    %2031 = vmatpush1.msra.mxu0 0.0
    %2032 = vmatprep.subr.mxu0 0.0
    %2033 = vmatpush1.msra.mxu0 0.0
    %2034 = vmatprep.subr.mxu0 0.0
    %2035 = vmatpush1.msra.mxu0 0.0
    %2036 = vmatprep.subr.mxu0 0.0
    %2037 = vmatpush1.msra.mxu0 0.0
    %2038 = vmatprep.subr.mxu0 0.0
    %2039 = vmatpush1.msra.mxu0 0.0
    %2040 = vmatprep.subr.mxu0 0.0
    %2041 = vmatpush1.msra.mxu0 0.0
    %2042 = vmatprep.subr.mxu0 0.0
    %2043 = vmatpush1.msra.mxu0 0.0
    %2044 = vmatprep.subr.mxu0 0.0
    %2045 = vmatpush1.msra.mxu0 0.0
    %2046 = vmatprep.subr.mxu0 0.0
    %2047 = vmatpush1.msra.mxu0 0.0
    %2048 = vmatprep.subr.mxu0 0.0
    %2049 = vmatpush1.msra.mxu0 0.0
    %2050 = vmatprep.subr.mxu0 0.0
    %2051 = vmatpush1.msra.mxu0 0.0
    %2052 = vmatprep.subr.mxu0 0.0
    %2053 = vmatpush1.msra.mxu0 0.0
    %2054 = vmatprep.subr.mxu0 0.0
    %2055 = vmatpush1.msra.mxu0 0.0
    %2056 = vmatprep.subr.mxu0 0.0
    %2057 = vmatpush1.msra.mxu0 0.0
    %2058 = vmatprep.subr.mxu0 0.0
    %2059 = vmatpush1.msra.mxu0 0.0
    %2060 = vmatprep.subr.mxu0 0.0
    %2061 = vmatpush1.msra.mxu0 0.0
    %2062 = vmatprep.subr.mxu0 0.0
    %2063 = vmatpush1.msra.mxu0 0.0
    %2064 = vmatprep.subr.mxu0 0.0
    %2065 = vmatpush1.msra.mxu0 0.0
    %2066 = vmatprep.subr.mxu0 0.0
    %2067 = vmatpush1.msra.mxu0 0.0
    %2068 = vmatprep.subr.mxu0 0.0
    %2069 = vmatpush1.msra.mxu0 0.0
    %2070 = vmatprep.subr.mxu0 0.0
    %2071 = vmatpush1.msra.mxu0 0.0
    %2072 = vmatprep.subr.mxu0 0.0
    %2073 = vmatpush1.msra.mxu0 0.0
    %2074 = vmatprep.mubr.f32.mxu0 0.0
    %2075 = vmatmul.mubr.f32.gmra.mrb[0].mxu0 %v2006
    %v2076 = vpop.f32.mrb[0].mxu0
    %v2077 = vadd.f32 0.0, %v2076
    %v2078 = vpop.f32.mrb[0].mxu0
    %2079 = vmatprep.mubr.f32.mxu0 0.0
    %2080 = vmatmul.mubr.f32.gmra.mrb[0].mxu0 %v2008
    %v2081 = vpop.f32.mrb[0].mxu0
    %v2082 = vadd.f32 0.0, %v2081
    %v2083 = vpop.f32.mrb[0].mxu0
    %2084 = vdwg.mxu0
    %v2085 = vadd.f32 %v1998, %v2077
    %v2086 = vadd.f32 %v1999, %v2082
    %v2087 = vlaneseq
    %v2088 = vshrl.u32 %v2087, 7
    %v2089 = vsub.s32 0, %v2088
    %v2090 = vrot.slane %v1289, %v2089
    %v2091 = vadd.f32 %v2085, %v2090
    %v2092 = vadd.f32 %v2086, %v2090
    %v2093 = vadd.f32 %v1278, %v2091
    %v2094 = vadd.f32 %v1279, %v2092
    %v2095 = vld [vmem:[#allocation6 + $0x73] sm:$0x1]
    %v2096 = vld [vmem:[#allocation6 + $0x74] sm:$0x1]
    %v2097 = vsel %vm199, %v2093, 0.0
    %2098 = vadd.xlane.f32.xlu0 %v2097
    %v2099 = vpop.xlane.xlu0 %2098
    %v2100 = vsel %vm199, %v2094, 0.0
    %2101 = vadd.xlane.f32.xlu0 %v2100
    %v2102 = vpop.xlane.xlu0 %2101
    %v2103 = vmul.f32 %v2099, %v1010
    %v2104 = vmul.f32 %v2102, %v1010
    %v2105 = vmul.f32 %v2093, %v2093
    %v2106 = vmul.f32 %v2094, %v2094
    %v2107 = vsel %vm199, %v2105, 0.0
    %2108 = vadd.xlane.f32.xlu0 %v2107
    %v2109 = vpop.xlane.xlu0 %2108
    %v2110 = vsel %vm199, %v2106, 0.0
    %2111 = vadd.xlane.f32.xlu0 %v2110
    %v2112 = vpop.xlane.xlu0 %2111
    %v2113 = vmul.f32 %v2109, %v1010
    %v2114 = vmul.f32 %v2112, %v1010
    %v2115 = vsub.f32 %v2093, %v2103
    %v2116 = vsub.f32 %v2094, %v2104
    %v2117 = vmul.f32 %v2103, %v2103
    %v2118 = vmul.f32 %v2104, %v2104
    %v2119 = vsub.f32 %v2113, %v2117
    %v2120 = vsub.f32 %v2114, %v2118
    %v2121 = vadd.f32 %v2119, 1e-05
    %v2122 = vadd.f32 %v2120, 1e-05
    %v2123 = vrsqrt.pop %v2121
    %v2124 = vrsqrt.pop %v2122
    %v2125 = vmul.f32 %v2115, %v2123
    %v2126 = vmul.f32 %v2116, %v2124
    %v2127 = vlaneseq
    %v2128 = vshrl.u32 %v2127, 7
    %v2129 = vsub.s32 0, %v2128
    %v2130 = vrot.slane %v2095, %v2129
    %v2131 = vmul.f32 %v2125, %v2130
    %v2132 = vmul.f32 %v2126, %v2130
    %v2133 = vlaneseq
    %v2134 = vshrl.u32 %v2133, 7
    %v2135 = vsub.s32 0, %v2134
    %v2136 = vrot.slane %v2096, %v2135
    %v2137 = vadd.f32 %v2131, %v2136
    %v2138 = vadd.f32 %v2132, %v2136
    %v2139 = vld [vmem:[#allocation4 + $0xe8] sm:$0xff]
    %v2140 = vld [vmem:[#allocation4 + $0xf0] sm:$0xff]
    %v2141 = vld [vmem:[#allocation4 + $0xf8] sm:$0xff]
    %v2142 = vld [vmem:[#allocation4 + $0x100] sm:$0xff]
    %v2143 = vld [vmem:[#allocation6 + $0x71] sm:$0x1]
    %v2144 = vld [vmem:[#allocation4 + $0x108] sm:$0xff]
    %v2145 = vld [vmem:[#allocation4 + $0x110] sm:$0xff]
    %v2146 = vld [vmem:[#allocation4 + $0x118] sm:$0xff]
    %v2147 = vld [vmem:[#allocation4 + $0x120] sm:$0xff]
    %v2148 = vld [vmem:[#allocation4 + $0x128] sm:$0xff]
    %v2149 = vld [vmem:[#allocation4 + $0x130] sm:$0xff]
    %v2150 = vld [vmem:[#allocation4 + $0x138] sm:$0xff]
    %v2151 = vld [vmem:[#allocation4 + $0x140] sm:$0xff]
    %v2152 = vld [vmem:[#allocation6 + $0x72] sm:$0x1]
    %v2153 = vlaneseq
    %v2154 = vshrl.u32 %v2153, 7
    %v2155 = vsub.s32 0, %v2154
    %v2156 = vrot.slane %v2143, %v2155
    %v2158 = vsel %vm199, %v2137, 0
    %v2161 = vsel %vm199, %v2138, 0
    %2163 = vmatprep.subr.mxu0 0.0
    %2164 = vmatpush1.msra.mxu0 %v2139
    %2165 = vmatprep.subr.mxu0 0.0
    %2166 = vmatpush1.msra.mxu0 %v2140
    %2167 = vmatprep.subr.mxu0 0.0
    %2168 = vmatpush1.msra.mxu0 %v2141
    %2169 = vmatprep.subr.mxu0 0.0
    %2170 = vmatpush1.msra.mxu0 %v2142
    %2171 = vmatprep.subr.mxu0 0.0
    %2172 = vmatpush1.msra.mxu0 0.0
    %2173 = vmatprep.subr.mxu0 0.0
    %2174 = vmatpush1.msra.mxu0 0.0
    %2175 = vmatprep.subr.mxu0 0.0
    %2176 = vmatpush1.msra.mxu0 0.0
    %2177 = vmatprep.subr.mxu0 0.0
    %2178 = vmatpush1.msra.mxu0 0.0
    %2179 = vmatprep.subr.mxu0 0.0
    %2180 = vmatpush1.msra.mxu0 0.0
    %2181 = vmatprep.subr.mxu0 0.0
    %2182 = vmatpush1.msra.mxu0 0.0
    %2183 = vmatprep.subr.mxu0 0.0
    %2184 = vmatpush1.msra.mxu0 0.0
    %2185 = vmatprep.subr.mxu0 0.0
    %2186 = vmatpush1.msra.mxu0 0.0
    %2187 = vmatprep.subr.mxu0 0.0
    %2188 = vmatpush1.msra.mxu0 0.0
    %2189 = vmatprep.subr.mxu0 0.0
    %2190 = vmatpush1.msra.mxu0 0.0
    %2191 = vmatprep.subr.mxu0 0.0
    %2192 = vmatpush1.msra.mxu0 0.0
    %2193 = vmatprep.subr.mxu0 0.0
    %2194 = vmatpush1.msra.mxu0 0.0
    %2195 = vmatprep.subr.mxu0 0.0
    %2196 = vmatpush1.msra.mxu0 0.0
    %2197 = vmatprep.subr.mxu0 0.0
    %2198 = vmatpush1.msra.mxu0 0.0
    %2199 = vmatprep.subr.mxu0 0.0
    %2200 = vmatpush1.msra.mxu0 0.0
    %2201 = vmatprep.subr.mxu0 0.0
    %2202 = vmatpush1.msra.mxu0 0.0
    %2203 = vmatprep.subr.mxu0 0.0
    %2204 = vmatpush1.msra.mxu0 0.0
    %2205 = vmatprep.subr.mxu0 0.0
    %2206 = vmatpush1.msra.mxu0 0.0
    %2207 = vmatprep.subr.mxu0 0.0
    %2208 = vmatpush1.msra.mxu0 0.0
    %2209 = vmatprep.subr.mxu0 0.0
    %2210 = vmatpush1.msra.mxu0 0.0
    %2211 = vmatprep.subr.mxu0 0.0
    %2212 = vmatpush1.msra.mxu0 0.0
    %2213 = vmatprep.subr.mxu0 0.0
    %2214 = vmatpush1.msra.mxu0 0.0
    %2215 = vmatprep.subr.mxu0 0.0
    %2216 = vmatpush1.msra.mxu0 0.0
    %2217 = vmatprep.subr.mxu0 0.0
    %2218 = vmatpush1.msra.mxu0 0.0
    %2219 = vmatprep.subr.mxu0 0.0
    %2220 = vmatpush1.msra.mxu0 0.0
    %2221 = vmatprep.subr.mxu0 0.0
    %2222 = vmatpush1.msra.mxu0 0.0
    %2223 = vmatprep.subr.mxu0 0.0
    %2224 = vmatpush1.msra.mxu0 0.0
    %2225 = vmatprep.subr.mxu0 0.0
    %2226 = vmatpush1.msra.mxu0 0.0
    %2227 = vmatprep.mubr.f32.mxu0 0.0
    %2228 = vmatmul.mubr.f32.gmra.mrb[0].mxu0 %v2158
    %v2229 = vpop.f32.mrb[0].mxu0
    %v2230 = vadd.f32 %v2156, %v2229
    %v2231 = vpop.f32.mrb[0].mxu0
    %2232 = vmatprep.mubr.f32.mxu0 0.0
    %2233 = vmatmul.mubr.f32.gmra.mrb[0].mxu0 %v2161
    %v2234 = vpop.f32.mrb[0].mxu0
    %v2235 = vadd.f32 %v2156, %v2234
    %v2236 = vpop.f32.mrb[0].mxu0
    %2237 = vdwg.mxu0
    %v2238 = vmax.f32 %v2230, 0.0
    %v2239 = vmax.f32 %v2235, 0.0
    %v2240 = vlaneseq
    %v2241 = vshrl.u32 %v2240, 7
    %v2242 = vsub.s32 0, %v2241
    %v2243 = vrot.slane %v2152, %v2242
    %v2245 = vsel %vm1152, %v2238, 0
    %v2248 = vsel %vm1152, %v2239, 0
    %2250 = vmatprep.subr.mxu0 0.0
    %2251 = vmatpush1.msra.mxu0 %v2144
    %2252 = vmatprep.subr.mxu0 0.0
    %2253 = vmatpush1.msra.mxu0 %v2145
    %2254 = vmatprep.subr.mxu0 0.0
    %2255 = vmatpush1.msra.mxu0 %v2146
    %2256 = vmatprep.subr.mxu0 0.0
    %2257 = vmatpush1.msra.mxu0 %v2147
    %2258 = vmatprep.subr.mxu0 0.0
    %2259 = vmatpush1.msra.mxu0 %v2148
    %2260 = vmatprep.subr.mxu0 0.0
    %2261 = vmatpush1.msra.mxu0 %v2149
    %2262 = vmatprep.subr.mxu0 0.0
    %2263 = vmatpush1.msra.mxu0 %v2150
    %2264 = vmatprep.subr.mxu0 0.0
    %2265 = vmatpush1.msra.mxu0 %v2151
    %2266 = vmatprep.subr.mxu0 0.0
    %2267 = vmatpush1.msra.mxu0 0.0
    %2268 = vmatprep.subr.mxu0 0.0
    %2269 = vmatpush1.msra.mxu0 0.0
    %2270 = vmatprep.subr.mxu0 0.0
    %2271 = vmatpush1.msra.mxu0 0.0
    %2272 = vmatprep.subr.mxu0 0.0
    %2273 = vmatpush1.msra.mxu0 0.0
    %2274 = vmatprep.subr.mxu0 0.0
    %2275 = vmatpush1.msra.mxu0 0.0
    %2276 = vmatprep.subr.mxu0 0.0
    %2277 = vmatpush1.msra.mxu0 0.0
    %2278 = vmatprep.subr.mxu0 0.0
    %2279 = vmatpush1.msra.mxu0 0.0
    %2280 = vmatprep.subr.mxu0 0.0
    %2281 = vmatpush1.msra.mxu0 0.0
    %2282 = vmatprep.subr.mxu0 0.0
    %2283 = vmatpush1.msra.mxu0 0.0
    %2284 = vmatprep.subr.mxu0 0.0
    %2285 = vmatpush1.msra.mxu0 0.0
    %2286 = vmatprep.subr.mxu0 0.0
    %2287 = vmatpush1.msra.mxu0 0.0
    %2288 = vmatprep.subr.mxu0 0.0
    %2289 = vmatpush1.msra.mxu0 0.0
    %2290 = vmatprep.subr.mxu0 0.0
    %2291 = vmatpush1.msra.mxu0 0.0
    %2292 = vmatprep.subr.mxu0 0.0
    %2293 = vmatpush1.msra.mxu0 0.0
    %2294 = vmatprep.subr.mxu0 0.0
    %2295 = vmatpush1.msra.mxu0 0.0
    %2296 = vmatprep.subr.mxu0 0.0
    %2297 = vmatpush1.msra.mxu0 0.0
    %2298 = vmatprep.subr.mxu0 0.0
    %2299 = vmatpush1.msra.mxu0 0.0
    %2300 = vmatprep.subr.mxu0 0.0
    %2301 = vmatpush1.msra.mxu0 0.0
    %2302 = vmatprep.subr.mxu0 0.0
    %2303 = vmatpush1.msra.mxu0 0.0
    %2304 = vmatprep.subr.mxu0 0.0
    %2305 = vmatpush1.msra.mxu0 0.0
    %2306 = vmatprep.subr.mxu0 0.0
    %2307 = vmatpush1.msra.mxu0 0.0
    %2308 = vmatprep.subr.mxu0 0.0
    %2309 = vmatpush1.msra.mxu0 0.0
    %2310 = vmatprep.subr.mxu0 0.0
    %2311 = vmatpush1.msra.mxu0 0.0
    %2312 = vmatprep.subr.mxu0 0.0
    %2313 = vmatpush1.msra.mxu0 0.0
    %2314 = vmatprep.mubr.f32.mxu0 0.0
    %2315 = vmatmul.mubr.f32.gmra.mrb[0].mxu0 %v2245
    %v2316 = vpop.f32.mrb[0].mxu0
    %v2317 = vadd.f32 %v2243, %v2316
    %v2318 = vpop.f32.mrb[0].mxu0
    %2319 = vmatprep.mubr.f32.mxu0 0.0
    %2320 = vmatmul.mubr.f32.gmra.mrb[0].mxu0 %v2248
    %v2321 = vpop.f32.mrb[0].mxu0
    %v2322 = vadd.f32 %v2243, %v2321
    %v2323 = vpop.f32.mrb[0].mxu0
    %2324 = vdwg.mxu0
    %v2325 = vadd.f32 %v2137, %v2317
    %v2326 = vadd.f32 %v2138, %v2322
    %v2327 = vld [vmem:[#allocation6 + $0x75] sm:$0x1]
    %v2328 = vld [vmem:[#allocation6 + $0x76] sm:$0x1]
    %v2329 = vsel %vm199, %v2325, 0.0
    %2330 = vadd.xlane.f32.xlu0 %v2329
    %v2331 = vpop.xlane.xlu0 %2330
    %v2332 = vsel %vm199, %v2326, 0.0
    %2333 = vadd.xlane.f32.xlu0 %v2332
    %v2334 = vpop.xlane.xlu0 %2333
    %v2335 = vmul.f32 %v2331, %v1010
    %v2336 = vmul.f32 %v2334, %v1010
    %v2337 = vmul.f32 %v2325, %v2325
    %v2338 = vmul.f32 %v2326, %v2326
    %v2339 = vsel %vm199, %v2337, 0.0
    %2340 = vadd.xlane.f32.xlu0 %v2339
    %v2341 = vpop.xlane.xlu0 %2340
    %v2342 = vsel %vm199, %v2338, 0.0
    %2343 = vadd.xlane.f32.xlu0 %v2342
    %v2344 = vpop.xlane.xlu0 %2343
    %v2345 = vmul.f32 %v2341, %v1010
    %v2346 = vmul.f32 %v2344, %v1010
    %v2347 = vsub.f32 %v2325, %v2335
    %v2348 = vsub.f32 %v2326, %v2336
    %v2349 = vmul.f32 %v2335, %v2335
    %v2350 = vmul.f32 %v2336, %v2336
    %v2351 = vsub.f32 %v2345, %v2349
    %v2352 = vsub.f32 %v2346, %v2350
    %v2353 = vadd.f32 %v2351, 1e-05
    %v2354 = vadd.f32 %v2352, 1e-05
    %v2355 = vrsqrt.pop %v2353
    %v2356 = vrsqrt.pop %v2354
    %v2357 = vmul.f32 %v2347, %v2355
    %v2358 = vmul.f32 %v2348, %v2356
    %v2359 = vlaneseq
    %v2360 = vshrl.u32 %v2359, 7
    %v2361 = vsub.s32 0, %v2360
    %v2362 = vrot.slane %v2327, %v2361
    %v2363 = vmul.f32 %v2357, %v2362
    %v2364 = vmul.f32 %v2358, %v2362
    %v2365 = vlaneseq
    %v2366 = vshrl.u32 %v2365, 7
    %v2367 = vsub.s32 0, %v2366
    %v2368 = vrot.slane %v2328, %v2367
    %v2369 = vadd.f32 %v2363, %v2368
    %v2370 = vadd.f32 %v2364, %v2368
    %v2371 = vld [vmem:[#allocation4 + $0x148] sm:$0xff]
    %v2372 = vld [vmem:[#allocation4 + $0x150] sm:$0xff]
    %v2373 = vld [vmem:[#allocation4 + $0x158] sm:$0xff]
    %v2374 = vld [vmem:[#allocation4 + $0x160] sm:$0xff]
    %v2375 = vld [vmem:[#allocation6 + $0x66] sm:$0x1]
    %v2376 = vlaneseq
    %v2377 = vshrl.u32 %v2376, 7
    %v2378 = vsub.s32 0, %v2377
    %v2379 = vrot.slane %v2375, %v2378
    %v2381 = vsel %vm199, %v2369, 0
    %v2384 = vsel %vm199, %v2370, 0
    %2386 = vmatprep.subr.mxu0 0.0
    %2387 = vmatpush1.msra.mxu0 %v2371
    %2388 = vmatprep.subr.mxu0 0.0
    %2389 = vmatpush1.msra.mxu0 %v2372
    %2390 = vmatprep.subr.mxu0 0.0
    %2391 = vmatpush1.msra.mxu0 %v2373
    %2392 = vmatprep.subr.mxu0 0.0
    %2393 = vmatpush1.msra.mxu0 %v2374
    %2394 = vmatprep.subr.mxu0 0.0
    %2395 = vmatpush1.msra.mxu0 0.0
    %2396 = vmatprep.subr.mxu0 0.0
    %2397 = vmatpush1.msra.mxu0 0.0
    %2398 = vmatprep.subr.mxu0 0.0
    %2399 = vmatpush1.msra.mxu0 0.0
    %2400 = vmatprep.subr.mxu0 0.0
    %2401 = vmatpush1.msra.mxu0 0.0
    %2402 = vmatprep.subr.mxu0 0.0
    %2403 = vmatpush1.msra.mxu0 0.0
    %2404 = vmatprep.subr.mxu0 0.0
    %2405 = vmatpush1.msra.mxu0 0.0
    %2406 = vmatprep.subr.mxu0 0.0
    %2407 = vmatpush1.msra.mxu0 0.0
    %2408 = vmatprep.subr.mxu0 0.0
    %2409 = vmatpush1.msra.mxu0 0.0
    %2410 = vmatprep.subr.mxu0 0.0
    %2411 = vmatpush1.msra.mxu0 0.0
    %2412 = vmatprep.subr.mxu0 0.0
    %2413 = vmatpush1.msra.mxu0 0.0
    %2414 = vmatprep.subr.mxu0 0.0
    %2415 = vmatpush1.msra.mxu0 0.0
    %2416 = vmatprep.subr.mxu0 0.0
    %2417 = vmatpush1.msra.mxu0 0.0
    %2418 = vmatprep.subr.mxu0 0.0
    %2419 = vmatpush1.msra.mxu0 0.0
    %2420 = vmatprep.subr.mxu0 0.0
    %2421 = vmatpush1.msra.mxu0 0.0
    %2422 = vmatprep.subr.mxu0 0.0
    %2423 = vmatpush1.msra.mxu0 0.0
    %2424 = vmatprep.subr.mxu0 0.0
    %2425 = vmatpush1.msra.mxu0 0.0
    %2426 = vmatprep.subr.mxu0 0.0
    %2427 = vmatpush1.msra.mxu0 0.0
    %2428 = vmatprep.subr.mxu0 0.0
    %2429 = vmatpush1.msra.mxu0 0.0
    %2430 = vmatprep.subr.mxu0 0.0
    %2431 = vmatpush1.msra.mxu0 0.0
    %2432 = vmatprep.subr.mxu0 0.0
    %2433 = vmatpush1.msra.mxu0 0.0
    %2434 = vmatprep.subr.mxu0 0.0
    %2435 = vmatpush1.msra.mxu0 0.0
    %2436 = vmatprep.subr.mxu0 0.0
    %2437 = vmatpush1.msra.mxu0 0.0
    %2438 = vmatprep.subr.mxu0 0.0
    %2439 = vmatpush1.msra.mxu0 0.0
    %2440 = vmatprep.subr.mxu0 0.0
    %2441 = vmatpush1.msra.mxu0 0.0
    %2442 = vmatprep.subr.mxu0 0.0
    %2443 = vmatpush1.msra.mxu0 0.0
    %2444 = vmatprep.subr.mxu0 0.0
    %2445 = vmatpush1.msra.mxu0 0.0
    %2446 = vmatprep.subr.mxu0 0.0
    %2447 = vmatpush1.msra.mxu0 0.0
    %2448 = vmatprep.subr.mxu0 0.0
    %2449 = vmatpush1.msra.mxu0 0.0
    %2450 = vmatprep.mubr.f32.mxu0 0.0
    %2451 = vmatmul.mubr.f32.gmra.mrb[0].mxu0 %v2381
    %v2452 = vpop.f32.mrb[0].mxu0
    %v2453 = vadd.f32 %v2379, %v2452
    %v2454 = vpop.f32.mrb[0].mxu0
    %2455 = vmatprep.mubr.f32.mxu0 0.0
    %2456 = vmatmul.mubr.f32.gmra.mrb[0].mxu0 %v2384
    %v2457 = vpop.f32.mrb[0].mxu0
    %v2458 = vadd.f32 %v2379, %v2457
    %v2459 = vpop.f32.mrb[0].mxu0
    %2460 = vdwg.mxu0
    %v2461 = vld [vmem:[#allocation4 + $0x168] sm:$0xff]
    %v2462 = vld [vmem:[#allocation4 + $0x170] sm:$0xff]
    %v2463 = vld [vmem:[#allocation4 + $0x178] sm:$0xff]
    %v2464 = vld [vmem:[#allocation4 + $0x180] sm:$0xff]
    %v2465 = vld [vmem:[#allocation6 + $0x77] sm:$0x1]
    %v2466 = vld [vmem:[#allocation4 + $0x188] sm:$0xff]
    %v2467 = vld [vmem:[#allocation4 + $0x190] sm:$0xff]
    %v2468 = vld [vmem:[#allocation4 + $0x198] sm:$0xff]
    %v2469 = vld [vmem:[#allocation4 + $0x1a0] sm:$0xff]
    %v2470 = vld [vmem:[#allocation6 + $0x78] sm:$0x1]
    %v2471 = vlaneseq
    %v2472 = vshrl.u32 %v2471, 7
    %v2473 = vsub.s32 0, %v2472
    %v2474 = vrot.slane %v2465, %v2473
    %2475 = vmatprep.subr.mxu0 0.0
    %2476 = vmatpush1.msra.mxu0 %v2461
    %2477 = vmatprep.subr.mxu0 0.0
    %2478 = vmatpush1.msra.mxu0 %v2462
    %2479 = vmatprep.subr.mxu0 0.0
    %2480 = vmatpush1.msra.mxu0 %v2463
    %2481 = vmatprep.subr.mxu0 0.0
    %2482 = vmatpush1.msra.mxu0 %v2464
    %2483 = vmatprep.subr.mxu0 0.0
    %2484 = vmatpush1.msra.mxu0 0.0
    %2485 = vmatprep.subr.mxu0 0.0
    %2486 = vmatpush1.msra.mxu0 0.0
    %2487 = vmatprep.subr.mxu0 0.0
    %2488 = vmatpush1.msra.mxu0 0.0
    %2489 = vmatprep.subr.mxu0 0.0
    %2490 = vmatpush1.msra.mxu0 0.0
    %2491 = vmatprep.subr.mxu0 0.0
    %2492 = vmatpush1.msra.mxu0 0.0
    %2493 = vmatprep.subr.mxu0 0.0
    %2494 = vmatpush1.msra.mxu0 0.0
    %2495 = vmatprep.subr.mxu0 0.0
    %2496 = vmatpush1.msra.mxu0 0.0
    %2497 = vmatprep.subr.mxu0 0.0
    %2498 = vmatpush1.msra.mxu0 0.0
    %2499 = vmatprep.subr.mxu0 0.0
    %2500 = vmatpush1.msra.mxu0 0.0
    %2501 = vmatprep.subr.mxu0 0.0
    %2502 = vmatpush1.msra.mxu0 0.0
    %2503 = vmatprep.subr.mxu0 0.0
    %2504 = vmatpush1.msra.mxu0 0.0
    %2505 = vmatprep.subr.mxu0 0.0
    %2506 = vmatpush1.msra.mxu0 0.0
    %2507 = vmatprep.subr.mxu0 0.0
    %2508 = vmatpush1.msra.mxu0 0.0
    %2509 = vmatprep.subr.mxu0 0.0
    %2510 = vmatpush1.msra.mxu0 0.0
    %2511 = vmatprep.subr.mxu0 0.0
    %2512 = vmatpush1.msra.mxu0 0.0
    %2513 = vmatprep.subr.mxu0 0.0
    %2514 = vmatpush1.msra.mxu0 0.0
    %2515 = vmatprep.subr.mxu0 0.0
    %2516 = vmatpush1.msra.mxu0 0.0
    %2517 = vmatprep.subr.mxu0 0.0
    %2518 = vmatpush1.msra.mxu0 0.0
    %2519 = vmatprep.subr.mxu0 0.0
    %2520 = vmatpush1.msra.mxu0 0.0
    %2521 = vmatprep.subr.mxu0 0.0
    %2522 = vmatpush1.msra.mxu0 0.0
    %2523 = vmatprep.subr.mxu0 0.0
    %2524 = vmatpush1.msra.mxu0 0.0
    %2525 = vmatprep.subr.mxu0 0.0
    %2526 = vmatpush1.msra.mxu0 0.0
    %2527 = vmatprep.subr.mxu0 0.0
    %2528 = vmatpush1.msra.mxu0 0.0
    %2529 = vmatprep.subr.mxu0 0.0
    %2530 = vmatpush1.msra.mxu0 0.0
    %2531 = vmatprep.subr.mxu0 0.0
    %2532 = vmatpush1.msra.mxu0 0.0
    %2533 = vmatprep.subr.mxu0 0.0
    %2534 = vmatpush1.msra.mxu0 0.0
    %2535 = vmatprep.subr.mxu0 0.0
    %2536 = vmatpush1.msra.mxu0 0.0
    %2537 = vmatprep.subr.mxu0 0.0
    %2538 = vmatpush1.msra.mxu0 0.0
    %2539 = vmatprep.mubr.f32.mxu0 0.0
    %2540 = vmatmul.mubr.f32.gmra.mrb[0].mxu0 %v201
    %v2541 = vpop.f32.mrb[0].mxu0
    %v2542 = vadd.f32 %v2474, %v2541
    %v2543 = vpop.f32.mrb[0].mxu0
    %2544 = vmatprep.mubr.f32.mxu0 0.0
    %2545 = vmatmul.mubr.f32.gmra.mrb[0].mxu0 %v204
    %v2546 = vpop.f32.mrb[0].mxu0
    %v2547 = vadd.f32 %v2474, %v2546
    %v2548 = vpop.f32.mrb[0].mxu0
    %2549 = vdwg.mxu0
    %v2550 = vmul.f32 %v2542, 0.35355338
    %v2551 = vmul.f32 %v2547, 0.35355338
    %v2552 = vmul.f32 %v2550, %v86
    %v2553 = vmul.f32 %v2551, %v86
    %v2554 = vmul.f32 %v2550, %v90
    %v2555 = vmul.f32 %v2551, %v90
    %v2556 = vmul.f32 %v2550, %v94
    %v2557 = vmul.f32 %v2551, %v94
    %v2558 = vmul.f32 %v2550, %v98
    %v2559 = vmul.f32 %v2551, %v98
    %2562 = vrot.lane.b32.xlu0 %v2542, 96
    %v2563 = vpop.permute.xlu0 %2562
    %2564 = vrot.lane.b32.xlu0 %v2547, 96
    %v2565 = vpop.permute.xlu0 %2564
    %v2567 = vsel %vm199, %v2552, 0
    %v2570 = vsel %vm199, %v2553, 0
    %v2573 = vsel %vm199, %v2554, 0
    %v2576 = vsel %vm199, %v2555, 0
    %v2579 = vsel %vm199, %v2556, 0
    %v2582 = vsel %vm199, %v2557, 0
    %v2585 = vsel %vm199, %v2558, 0
    %v2588 = vsel %vm199, %v2559, 0
    %v2590 = vsel %vm199, %v2563, 0
    %v2592 = vsel %vm199, %v2565, 0
    %2594 = vmatprep.subr.mxu0 0.0
    %2595 = vmatpush1.xpose.msra.mxu0 %v2590
    %2596 = vmatprep.subr.mxu0 0.0
    %2597 = vmatpush1.xpose.msra.mxu0 %v2592
    %2598 = vmatprep.subr.mxu0 0.0
    %2599 = vmatpush1.xpose.msra.mxu0 0.0
    %2600 = vmatprep.subr.mxu0 0.0
    %2601 = vmatpush1.xpose.msra.mxu0 0.0
    %2602 = vmatprep.subr.mxu0 0.0
    %2603 = vmatpush1.xpose.msra.mxu0 0.0
    %2604 = vmatprep.subr.mxu0 0.0
    %2605 = vmatpush1.xpose.msra.mxu0 0.0
    %2606 = vmatprep.subr.mxu0 0.0
    %2607 = vmatpush1.xpose.msra.mxu0 0.0
    %2608 = vmatprep.subr.mxu0 0.0
    %2609 = vmatpush1.xpose.msra.mxu0 0.0
    %2610 = vmatprep.subr.mxu0 0.0
    %2611 = vmatpush1.xpose.msra.mxu0 0.0
    %2612 = vmatprep.subr.mxu0 0.0
    %2613 = vmatpush1.xpose.msra.mxu0 0.0
    %2614 = vmatprep.subr.mxu0 0.0
    %2615 = vmatpush1.xpose.msra.mxu0 0.0
    %2616 = vmatprep.subr.mxu0 0.0
    %2617 = vmatpush1.xpose.msra.mxu0 0.0
    %2618 = vmatprep.subr.mxu0 0.0
    %2619 = vmatpush1.xpose.msra.mxu0 0.0
    %2620 = vmatprep.subr.mxu0 0.0
    %2621 = vmatpush1.xpose.msra.mxu0 0.0
    %2622 = vmatprep.subr.mxu0 0.0
    %2623 = vmatpush1.xpose.msra.mxu0 0.0
    %2624 = vmatprep.subr.mxu0 0.0
    %2625 = vmatpush1.xpose.msra.mxu0 0.0
    %2626 = vmatprep.subr.mxu0 0.0
    %2627 = vmatpush1.xpose.msra.mxu0 0.0
    %2628 = vmatprep.subr.mxu0 0.0
    %2629 = vmatpush1.xpose.msra.mxu0 0.0
    %2630 = vmatprep.subr.mxu0 0.0
    %2631 = vmatpush1.xpose.msra.mxu0 0.0
    %2632 = vmatprep.subr.mxu0 0.0
    %2633 = vmatpush1.xpose.msra.mxu0 0.0
    %2634 = vmatprep.subr.mxu0 0.0
    %2635 = vmatpush1.xpose.msra.mxu0 0.0
    %2636 = vmatprep.subr.mxu0 0.0
    %2637 = vmatpush1.xpose.msra.mxu0 0.0
    %2638 = vmatprep.subr.mxu0 0.0
    %2639 = vmatpush1.xpose.msra.mxu0 0.0
    %2640 = vmatprep.subr.mxu0 0.0
    %2641 = vmatpush1.xpose.msra.mxu0 0.0
    %2642 = vmatprep.subr.mxu0 0.0
    %2643 = vmatpush1.xpose.msra.mxu0 0.0
    %2644 = vmatprep.subr.mxu0 0.0
    %2645 = vmatpush1.xpose.msra.mxu0 0.0
    %2646 = vmatprep.subr.mxu0 0.0
    %2647 = vmatpush1.xpose.msra.mxu0 0.0
    %2648 = vmatprep.subr.mxu0 0.0
    %2649 = vmatpush1.xpose.msra.mxu0 0.0
    %2650 = vmatprep.subr.mxu0 0.0
    %2651 = vmatpush1.xpose.msra.mxu0 0.0
    %2652 = vmatprep.subr.mxu0 0.0
    %2653 = vmatpush1.xpose.msra.mxu0 0.0
    %2654 = vmatprep.subr.mxu0 0.0
    %2655 = vmatpush1.xpose.msra.mxu0 0.0
    %2656 = vmatprep.subr.mxu0 0.0
    %2657 = vmatpush1.xpose.msra.mxu0 0.0
    %2658 = vmatprep.mubr.f32.mxu0 0.0
    %2659 = vmatmul.mubr.f32.gmra.mrb[0].mxu0 %v2567
    %v2660 = vpop.f32.mrb[0].mxu0
    %v2661 = vadd.f32 %v72, %v2660
    %v2662 = vpop.f32.mrb[0].mxu0
    %2663 = vmatprep.mubr.f32.mxu0 0.0
    %2664 = vmatmul.mubr.f32.gmra.mrb[0].mxu0 %v2570
    %v2665 = vpop.f32.mrb[0].mxu0
    %v2666 = vadd.f32 %v73, %v2665
    %v2667 = vpop.f32.mrb[0].mxu0
    %2668 = vmatprep.mubr.f32.mxu0 0.0
    %2669 = vmatmul.mubr.f32.gmra.mrb[0].mxu0 %v2573
    %v2670 = vpop.f32.mrb[0].mxu0
    %v2671 = vadd.f32 %v74, %v2670
    %v2672 = vpop.f32.mrb[0].mxu0
    %2673 = vmatprep.mubr.f32.mxu0 0.0
    %2674 = vmatmul.mubr.f32.gmra.mrb[0].mxu0 %v2576
    %v2675 = vpop.f32.mrb[0].mxu0
    %v2676 = vadd.f32 %v75, %v2675
    %v2677 = vpop.f32.mrb[0].mxu0
    %2678 = vmatprep.mubr.f32.mxu0 0.0
    %2679 = vmatmul.mubr.f32.gmra.mrb[0].mxu0 %v2579
    %v2680 = vpop.f32.mrb[0].mxu0
    %v2681 = vadd.f32 %v76, %v2680
    %v2682 = vpop.f32.mrb[0].mxu0
    %2683 = vmatprep.mubr.f32.mxu0 0.0
    %2684 = vmatmul.mubr.f32.gmra.mrb[0].mxu0 %v2582
    %v2685 = vpop.f32.mrb[0].mxu0
    %v2686 = vadd.f32 %v77, %v2685
    %v2687 = vpop.f32.mrb[0].mxu0
    %2688 = vmatprep.mubr.f32.mxu0 0.0
    %2689 = vmatmul.mubr.f32.gmra.mrb[0].mxu0 %v2585
    %v2690 = vpop.f32.mrb[0].mxu0
    %v2691 = vadd.f32 %v78, %v2690
    %v2692 = vpop.f32.mrb[0].mxu0
    %2693 = vmatprep.mubr.f32.mxu0 0.0
    %2694 = vmatmul.mubr.f32.gmra.mrb[0].mxu0 %v2588
    %v2695 = vpop.f32.mrb[0].mxu0
    %v2696 = vadd.f32 %v79, %v2695
    %v2697 = vpop.f32.mrb[0].mxu0
    %2698 = vdwg.mxu0
    %v2699 = vsel %vm430, %v2661, -inf
    %2700 = vmax.xlane.f32.xlu0 %v2699
    %v2701 = vpop.xlane.xlu0 %2700
    %v2702 = vsel %vm430, %v2666, -inf
    %2703 = vmax.xlane.f32.xlu0 %v2702
    %v2704 = vpop.xlane.xlu0 %2703
    %v2705 = vsel %vm430, %v2671, -inf
    %2706 = vmax.xlane.f32.xlu0 %v2705
    %v2707 = vpop.xlane.xlu0 %2706
    %v2708 = vsel %vm430, %v2676, -inf
    %2709 = vmax.xlane.f32.xlu0 %v2708
    %v2710 = vpop.xlane.xlu0 %2709
    %v2711 = vsel %vm430, %v2681, -inf
    %2712 = vmax.xlane.f32.xlu0 %v2711
    %v2713 = vpop.xlane.xlu0 %2712
    %v2714 = vsel %vm430, %v2686, -inf
    %2715 = vmax.xlane.f32.xlu0 %v2714
    %v2716 = vpop.xlane.xlu0 %2715
    %v2717 = vsel %vm430, %v2691, -inf
    %2718 = vmax.xlane.f32.xlu0 %v2717
    %v2719 = vpop.xlane.xlu0 %2718
    %v2720 = vsel %vm430, %v2696, -inf
    %2721 = vmax.xlane.f32.xlu0 %v2720
    %v2722 = vpop.xlane.xlu0 %2721
    %v2723 = vsub.f32 %v2661, %v2701
    %v2724 = vsub.f32 %v2666, %v2704
    %v2725 = vsub.f32 %v2671, %v2707
    %v2726 = vsub.f32 %v2676, %v2710
    %v2727 = vsub.f32 %v2681, %v2713
    %v2728 = vsub.f32 %v2686, %v2716
    %v2729 = vsub.f32 %v2691, %v2719
    %v2730 = vsub.f32 %v2696, %v2722
    %v2731 = vmul.f32 %v2723, 1.442695
    %v2732 = vpow.pop %v2731
    %v2733 = vmul.f32 %v2724, 1.442695
    %v2734 = vpow.pop %v2733
    %v2735 = vmul.f32 %v2725, 1.442695
    %v2736 = vpow.pop %v2735
    %v2737 = vmul.f32 %v2726, 1.442695
    %v2738 = vpow.pop %v2737
    %v2739 = vmul.f32 %v2727, 1.442695
    %v2740 = vpow.pop %v2739
    %v2741 = vmul.f32 %v2728, 1.442695
    %v2742 = vpow.pop %v2741
    %v2743 = vmul.f32 %v2729, 1.442695
    %v2744 = vpow.pop %v2743
    %v2745 = vmul.f32 %v2730, 1.442695
    %v2746 = vpow.pop %v2745
    %v2747 = vsel %vm430, %v2732, 0.0
    %2748 = vadd.xlane.f32.xlu0 %v2747
    %v2749 = vpop.xlane.xlu0 %2748
    %v2750 = vsel %vm430, %v2734, 0.0
    %2751 = vadd.xlane.f32.xlu0 %v2750
    %v2752 = vpop.xlane.xlu0 %2751
    %v2753 = vsel %vm430, %v2736, 0.0
    %2754 = vadd.xlane.f32.xlu0 %v2753
    %v2755 = vpop.xlane.xlu0 %2754
    %v2756 = vsel %vm430, %v2738, 0.0
    %2757 = vadd.xlane.f32.xlu0 %v2756
    %v2758 = vpop.xlane.xlu0 %2757
    %v2759 = vsel %vm430, %v2740, 0.0
    %2760 = vadd.xlane.f32.xlu0 %v2759
    %v2761 = vpop.xlane.xlu0 %2760
    %v2762 = vsel %vm430, %v2742, 0.0
    %2763 = vadd.xlane.f32.xlu0 %v2762
    %v2764 = vpop.xlane.xlu0 %2763
    %v2765 = vsel %vm430, %v2744, 0.0
    %2766 = vadd.xlane.f32.xlu0 %v2765
    %v2767 = vpop.xlane.xlu0 %2766
    %v2768 = vsel %vm430, %v2746, 0.0
    %2769 = vadd.xlane.f32.xlu0 %v2768
    %v2770 = vpop.xlane.xlu0 %2769
    %v2771 = vrcp.pop %v2749
    %v2772 = vrcp.pop %v2752
    %v2773 = vrcp.pop %v2755
    %v2774 = vrcp.pop %v2758
    %v2775 = vrcp.pop %v2761
    %v2776 = vrcp.pop %v2764
    %v2777 = vrcp.pop %v2767
    %v2778 = vrcp.pop %v2770
    %v2779 = vmul.f32 %v2732, %v2771
    %v2780 = vmul.f32 %v2734, %v2772
    %v2781 = vmul.f32 %v2736, %v2773
    %v2782 = vmul.f32 %v2738, %v2774
    %v2783 = vmul.f32 %v2740, %v2775
    %v2784 = vmul.f32 %v2742, %v2776
    %v2785 = vmul.f32 %v2744, %v2777
    %v2786 = vmul.f32 %v2746, %v2778
    %2787 = vrot.lane.b32.xlu0 %v2542, 64
    %v2788 = vpop.permute.xlu0 %2787
    %2789 = vrot.lane.b32.xlu0 %v2547, 64
    %v2790 = vpop.permute.xlu0 %2789
    %v2794 = vsel %vm430, %v2779, 0
    %v2797 = vsel %vm430, %v2780, 0
    %v2800 = vsel %vm430, %v2781, 0
    %v2803 = vsel %vm430, %v2782, 0
    %v2806 = vsel %vm430, %v2783, 0
    %v2809 = vsel %vm430, %v2784, 0
    %v2812 = vsel %vm430, %v2785, 0
    %v2815 = vsel %vm430, %v2786, 0
    %2817 = vmatprep.subr.mxu0 0.0
    %2818 = vmatpush1.msra.mxu0 %v2788
    %2819 = vmatprep.subr.mxu0 0.0
    %2820 = vmatpush1.msra.mxu0 %v2790
    %2821 = vmatprep.subr.mxu0 0.0
    %2822 = vmatpush1.msra.mxu0 0.0
    %2823 = vmatprep.subr.mxu0 0.0
    %2824 = vmatpush1.msra.mxu0 0.0
    %2825 = vmatprep.subr.mxu0 0.0
    %2826 = vmatpush1.msra.mxu0 0.0
    %2827 = vmatprep.subr.mxu0 0.0
    %2828 = vmatpush1.msra.mxu0 0.0
    %2829 = vmatprep.subr.mxu0 0.0
    %2830 = vmatpush1.msra.mxu0 0.0
    %2831 = vmatprep.subr.mxu0 0.0
    %2832 = vmatpush1.msra.mxu0 0.0
    %2833 = vmatprep.subr.mxu0 0.0
    %2834 = vmatpush1.msra.mxu0 0.0
    %2835 = vmatprep.subr.mxu0 0.0
    %2836 = vmatpush1.msra.mxu0 0.0
    %2837 = vmatprep.subr.mxu0 0.0
    %2838 = vmatpush1.msra.mxu0 0.0
    %2839 = vmatprep.subr.mxu0 0.0
    %2840 = vmatpush1.msra.mxu0 0.0
    %2841 = vmatprep.subr.mxu0 0.0
    %2842 = vmatpush1.msra.mxu0 0.0
    %2843 = vmatprep.subr.mxu0 0.0
    %2844 = vmatpush1.msra.mxu0 0.0
    %2845 = vmatprep.subr.mxu0 0.0
    %2846 = vmatpush1.msra.mxu0 0.0
    %2847 = vmatprep.subr.mxu0 0.0
    %2848 = vmatpush1.msra.mxu0 0.0
    %2849 = vmatprep.subr.mxu0 0.0
    %2850 = vmatpush1.msra.mxu0 0.0
    %2851 = vmatprep.subr.mxu0 0.0
    %2852 = vmatpush1.msra.mxu0 0.0
    %2853 = vmatprep.subr.mxu0 0.0
    %2854 = vmatpush1.msra.mxu0 0.0
    %2855 = vmatprep.subr.mxu0 0.0
    %2856 = vmatpush1.msra.mxu0 0.0
    %2857 = vmatprep.subr.mxu0 0.0
    %2858 = vmatpush1.msra.mxu0 0.0
    %2859 = vmatprep.subr.mxu0 0.0
    %2860 = vmatpush1.msra.mxu0 0.0
    %2861 = vmatprep.subr.mxu0 0.0
    %2862 = vmatpush1.msra.mxu0 0.0
    %2863 = vmatprep.subr.mxu0 0.0
    %2864 = vmatpush1.msra.mxu0 0.0
    %2865 = vmatprep.subr.mxu0 0.0
    %2866 = vmatpush1.msra.mxu0 0.0
    %2867 = vmatprep.subr.mxu0 0.0
    %2868 = vmatpush1.msra.mxu0 0.0
    %2869 = vmatprep.subr.mxu0 0.0
    %2870 = vmatpush1.msra.mxu0 0.0
    %2871 = vmatprep.subr.mxu0 0.0
    %2872 = vmatpush1.msra.mxu0 0.0
    %2873 = vmatprep.subr.mxu0 0.0
    %2874 = vmatpush1.msra.mxu0 0.0
    %2875 = vmatprep.subr.mxu0 0.0
    %2876 = vmatpush1.msra.mxu0 0.0
    %2877 = vmatprep.subr.mxu0 0.0
    %2878 = vmatpush1.msra.mxu0 0.0
    %2879 = vmatprep.subr.mxu0 0.0
    %2880 = vmatpush1.msra.mxu0 0.0
    %2881 = vmatprep.mubr.f32.mxu0 0.0
    %2882 = vmatmul.mubr.f32.gmra.mrb[0].mxu0 %v2794
    %v2883 = vpop.f32.mrb[0].mxu0
    %v2884 = vadd.f32 0.0, %v2883
    %v2885 = vpop.f32.mrb[0].mxu0
    %2886 = vmatprep.mubr.f32.mxu0 0.0
    %2887 = vmatmul.mubr.f32.gmra.mrb[0].mxu0 %v2797
    %v2888 = vpop.f32.mrb[0].mxu0
    %v2889 = vadd.f32 0.0, %v2888
    %v2890 = vpop.f32.mrb[0].mxu0
    %2891 = vmatprep.mubr.f32.mxu0 0.0
    %2892 = vmatmul.mubr.f32.gmra.mrb[0].mxu0 %v2800
    %v2893 = vpop.f32.mrb[0].mxu0
    %v2894 = vadd.f32 0.0, %v2893
    %v2895 = vpop.f32.mrb[0].mxu0
    %2896 = vmatprep.mubr.f32.mxu0 0.0
    %2897 = vmatmul.mubr.f32.gmra.mrb[0].mxu0 %v2803
    %v2898 = vpop.f32.mrb[0].mxu0
    %v2899 = vadd.f32 0.0, %v2898
    %v2900 = vpop.f32.mrb[0].mxu0
    %2901 = vmatprep.mubr.f32.mxu0 0.0
    %2902 = vmatmul.mubr.f32.gmra.mrb[0].mxu0 %v2806
    %v2903 = vpop.f32.mrb[0].mxu0
    %v2904 = vadd.f32 0.0, %v2903
    %v2905 = vpop.f32.mrb[0].mxu0
    %2906 = vmatprep.mubr.f32.mxu0 0.0
    %2907 = vmatmul.mubr.f32.gmra.mrb[0].mxu0 %v2809
    %v2908 = vpop.f32.mrb[0].mxu0
    %v2909 = vadd.f32 0.0, %v2908
    %v2910 = vpop.f32.mrb[0].mxu0
    %2911 = vmatprep.mubr.f32.mxu0 0.0
    %2912 = vmatmul.mubr.f32.gmra.mrb[0].mxu0 %v2812
    %v2913 = vpop.f32.mrb[0].mxu0
    %v2914 = vadd.f32 0.0, %v2913
    %v2915 = vpop.f32.mrb[0].mxu0
    %2916 = vmatprep.mubr.f32.mxu0 0.0
    %2917 = vmatmul.mubr.f32.gmra.mrb[0].mxu0 %v2815
    %v2918 = vpop.f32.mrb[0].mxu0
    %v2919 = vadd.f32 0.0, %v2918
    %v2920 = vpop.f32.mrb[0].mxu0
    %2921 = vdwg.mxu0
    %2924 = vrot.lane.b32.xlu0 %v2894, 120
    %v2925 = vpop.permute.xlu0 %2924
    %2926 = vrot.lane.b32.xlu0 %v2899, 120
    %v2927 = vpop.permute.xlu0 %2926
    %v2928 = vsel %vm103, %v2925, 0
    %v2930 = vsel %vm103, %v2927, 0
    %2932 = vmatprep.subr.mxu0 0.0
    %2933 = vmatpush1.msra.mxu0 %v2467
    %2934 = vmatprep.subr.mxu0 0.0
    %2935 = vmatpush1.msra.mxu0 0.0
    %2936 = vmatprep.subr.mxu0 0.0
    %2937 = vmatpush1.msra.mxu0 0.0
    %2938 = vmatprep.subr.mxu0 0.0
    %2939 = vmatpush1.msra.mxu0 0.0
    %2940 = vmatprep.subr.mxu0 0.0
    %2941 = vmatpush1.msra.mxu0 0.0
    %2942 = vmatprep.subr.mxu0 0.0
    %2943 = vmatpush1.msra.mxu0 0.0
    %2944 = vmatprep.subr.mxu0 0.0
    %2945 = vmatpush1.msra.mxu0 0.0
    %2946 = vmatprep.subr.mxu0 0.0
    %2947 = vmatpush1.msra.mxu0 0.0
    %2948 = vmatprep.subr.mxu0 0.0
    %2949 = vmatpush1.msra.mxu0 0.0
    %2950 = vmatprep.subr.mxu0 0.0
    %2951 = vmatpush1.msra.mxu0 0.0
    %2952 = vmatprep.subr.mxu0 0.0
    %2953 = vmatpush1.msra.mxu0 0.0
    %2954 = vmatprep.subr.mxu0 0.0
    %2955 = vmatpush1.msra.mxu0 0.0
    %2956 = vmatprep.subr.mxu0 0.0
    %2957 = vmatpush1.msra.mxu0 0.0
    %2958 = vmatprep.subr.mxu0 0.0
    %2959 = vmatpush1.msra.mxu0 0.0
    %2960 = vmatprep.subr.mxu0 0.0
    %2961 = vmatpush1.msra.mxu0 0.0
    %2962 = vmatprep.subr.mxu0 0.0
    %2963 = vmatpush1.msra.mxu0 0.0
    %2964 = vmatprep.subr.mxu0 0.0
    %2965 = vmatpush1.msra.mxu0 0.0
    %2966 = vmatprep.subr.mxu0 0.0
    %2967 = vmatpush1.msra.mxu0 0.0
    %2968 = vmatprep.subr.mxu0 0.0
    %2969 = vmatpush1.msra.mxu0 0.0
    %2970 = vmatprep.subr.mxu0 0.0
    %2971 = vmatpush1.msra.mxu0 0.0
    %2972 = vmatprep.subr.mxu0 0.0
    %2973 = vmatpush1.msra.mxu0 0.0
    %2974 = vmatprep.subr.mxu0 0.0
    %2975 = vmatpush1.msra.mxu0 0.0
    %2976 = vmatprep.subr.mxu0 0.0
    %2977 = vmatpush1.msra.mxu0 0.0
    %2978 = vmatprep.subr.mxu0 0.0
    %2979 = vmatpush1.msra.mxu0 0.0
    %2980 = vmatprep.subr.mxu0 0.0
    %2981 = vmatpush1.msra.mxu0 0.0
    %2982 = vmatprep.subr.mxu0 0.0
    %2983 = vmatpush1.msra.mxu0 0.0
    %2984 = vmatprep.subr.mxu0 0.0
    %2985 = vmatpush1.msra.mxu0 0.0
    %2986 = vmatprep.subr.mxu0 0.0
    %2987 = vmatpush1.msra.mxu0 0.0
    %2988 = vmatprep.subr.mxu0 0.0
    %2989 = vmatpush1.msra.mxu0 0.0
    %2990 = vmatprep.subr.mxu0 0.0
    %2991 = vmatpush1.msra.mxu0 0.0
    %2992 = vmatprep.subr.mxu0 0.0
    %2993 = vmatpush1.msra.mxu0 0.0
    %2994 = vmatprep.subr.mxu0 0.0
    %2995 = vmatpush1.msra.mxu0 0.0
    %2996 = vmatprep.mubr.f32.mxu0 0.0
    %2997 = vmatmul.mubr.f32.gmra.mrb[0].mxu0 %v2928
    %v2998 = vpop.f32.mrb[0].mxu0
    %v2999 = vadd.f32 0.0, %v2998
    %v3000 = vpop.f32.mrb[0].mxu0
    %3001 = vmatprep.mubr.f32.mxu0 0.0
    %3002 = vmatmul.mubr.f32.gmra.mrb[0].mxu0 %v2930
    %v3003 = vpop.f32.mrb[0].mxu0
    %v3004 = vadd.f32 0.0, %v3003
    %v3005 = vpop.f32.mrb[0].mxu0
    %3006 = vdwg.mxu0
    %v3008 = vsel %vm103, %v2884, 0
    %v3011 = vsel %vm103, %v2889, 0
    %3013 = vmatprep.subr.mxu0 0.0
    %3014 = vmatpush1.msra.mxu0 %v2466
    %3015 = vmatprep.subr.mxu0 0.0
    %3016 = vmatpush1.msra.mxu0 0.0
    %3017 = vmatprep.subr.mxu0 0.0
    %3018 = vmatpush1.msra.mxu0 0.0
    %3019 = vmatprep.subr.mxu0 0.0
    %3020 = vmatpush1.msra.mxu0 0.0
    %3021 = vmatprep.subr.mxu0 0.0
    %3022 = vmatpush1.msra.mxu0 0.0
    %3023 = vmatprep.subr.mxu0 0.0
    %3024 = vmatpush1.msra.mxu0 0.0
    %3025 = vmatprep.subr.mxu0 0.0
    %3026 = vmatpush1.msra.mxu0 0.0
    %3027 = vmatprep.subr.mxu0 0.0
    %3028 = vmatpush1.msra.mxu0 0.0
    %3029 = vmatprep.subr.mxu0 0.0
    %3030 = vmatpush1.msra.mxu0 0.0
    %3031 = vmatprep.subr.mxu0 0.0
    %3032 = vmatpush1.msra.mxu0 0.0
    %3033 = vmatprep.subr.mxu0 0.0
    %3034 = vmatpush1.msra.mxu0 0.0
    %3035 = vmatprep.subr.mxu0 0.0
    %3036 = vmatpush1.msra.mxu0 0.0
    %3037 = vmatprep.subr.mxu0 0.0
    %3038 = vmatpush1.msra.mxu0 0.0
    %3039 = vmatprep.subr.mxu0 0.0
    %3040 = vmatpush1.msra.mxu0 0.0
    %3041 = vmatprep.subr.mxu0 0.0
    %3042 = vmatpush1.msra.mxu0 0.0
    %3043 = vmatprep.subr.mxu0 0.0
    %3044 = vmatpush1.msra.mxu0 0.0
    %3045 = vmatprep.subr.mxu0 0.0
    %3046 = vmatpush1.msra.mxu0 0.0
    %3047 = vmatprep.subr.mxu0 0.0
    %3048 = vmatpush1.msra.mxu0 0.0
    %3049 = vmatprep.subr.mxu0 0.0
    %3050 = vmatpush1.msra.mxu0 0.0
    %3051 = vmatprep.subr.mxu0 0.0
    %3052 = vmatpush1.msra.mxu0 0.0
    %3053 = vmatprep.subr.mxu0 0.0
    %3054 = vmatpush1.msra.mxu0 0.0
    %3055 = vmatprep.subr.mxu0 0.0
    %3056 = vmatpush1.msra.mxu0 0.0
    %3057 = vmatprep.subr.mxu0 0.0
    %3058 = vmatpush1.msra.mxu0 0.0
    %3059 = vmatprep.subr.mxu0 0.0
    %3060 = vmatpush1.msra.mxu0 0.0
    %3061 = vmatprep.subr.mxu0 0.0
    %3062 = vmatpush1.msra.mxu0 0.0
    %3063 = vmatprep.subr.mxu0 0.0
    %3064 = vmatpush1.msra.mxu0 0.0
    %3065 = vmatprep.subr.mxu0 0.0
    %3066 = vmatpush1.msra.mxu0 0.0
    %3067 = vmatprep.subr.mxu0 0.0
    %3068 = vmatpush1.msra.mxu0 0.0
    %3069 = vmatprep.subr.mxu0 0.0
    %3070 = vmatpush1.msra.mxu0 0.0
    %3071 = vmatprep.subr.mxu0 0.0
    %3072 = vmatpush1.msra.mxu0 0.0
    %3073 = vmatprep.subr.mxu0 0.0
    %3074 = vmatpush1.msra.mxu0 0.0
    %3075 = vmatprep.subr.mxu0 0.0
    %3076 = vmatpush1.msra.mxu0 0.0
    %3077 = vmatprep.mubr.f32.mxu0 0.0
    %3078 = vmatmul.mubr.f32.gmra.mrb[0].mxu0 %v3008
    %v3079 = vpop.f32.mrb[0].mxu0
    %v3080 = vadd.f32 %v2999, %v3079
    %v3081 = vpop.f32.mrb[0].mxu0
    %3082 = vmatprep.mubr.f32.mxu0 0.0
    %3083 = vmatmul.mubr.f32.gmra.mrb[0].mxu0 %v3011
    %v3084 = vpop.f32.mrb[0].mxu0
    %v3085 = vadd.f32 %v3004, %v3084
    %v3086 = vpop.f32.mrb[0].mxu0
    %3087 = vdwg.mxu0
    %3090 = vrot.lane.b32.xlu0 %v2904, 112
    %v3091 = vpop.permute.xlu0 %3090
    %3092 = vrot.lane.b32.xlu0 %v2909, 112
    %v3093 = vpop.permute.xlu0 %3092
    %v3094 = vsel %vm103, %v3091, 0
    %v3096 = vsel %vm103, %v3093, 0
    %3098 = vmatprep.subr.mxu0 0.0
    %3099 = vmatpush1.msra.mxu0 %v2468
    %3100 = vmatprep.subr.mxu0 0.0
    %3101 = vmatpush1.msra.mxu0 0.0
    %3102 = vmatprep.subr.mxu0 0.0
    %3103 = vmatpush1.msra.mxu0 0.0
    %3104 = vmatprep.subr.mxu0 0.0
    %3105 = vmatpush1.msra.mxu0 0.0
    %3106 = vmatprep.subr.mxu0 0.0
    %3107 = vmatpush1.msra.mxu0 0.0
    %3108 = vmatprep.subr.mxu0 0.0
    %3109 = vmatpush1.msra.mxu0 0.0
    %3110 = vmatprep.subr.mxu0 0.0
    %3111 = vmatpush1.msra.mxu0 0.0
    %3112 = vmatprep.subr.mxu0 0.0
    %3113 = vmatpush1.msra.mxu0 0.0
    %3114 = vmatprep.subr.mxu0 0.0
    %3115 = vmatpush1.msra.mxu0 0.0
    %3116 = vmatprep.subr.mxu0 0.0
    %3117 = vmatpush1.msra.mxu0 0.0
    %3118 = vmatprep.subr.mxu0 0.0
    %3119 = vmatpush1.msra.mxu0 0.0
    %3120 = vmatprep.subr.mxu0 0.0
    %3121 = vmatpush1.msra.mxu0 0.0
    %3122 = vmatprep.subr.mxu0 0.0
    %3123 = vmatpush1.msra.mxu0 0.0
    %3124 = vmatprep.subr.mxu0 0.0
    %3125 = vmatpush1.msra.mxu0 0.0
    %3126 = vmatprep.subr.mxu0 0.0
    %3127 = vmatpush1.msra.mxu0 0.0
    %3128 = vmatprep.subr.mxu0 0.0
    %3129 = vmatpush1.msra.mxu0 0.0
    %3130 = vmatprep.subr.mxu0 0.0
    %3131 = vmatpush1.msra.mxu0 0.0
    %3132 = vmatprep.subr.mxu0 0.0
    %3133 = vmatpush1.msra.mxu0 0.0
    %3134 = vmatprep.subr.mxu0 0.0
    %3135 = vmatpush1.msra.mxu0 0.0
    %3136 = vmatprep.subr.mxu0 0.0
    %3137 = vmatpush1.msra.mxu0 0.0
    %3138 = vmatprep.subr.mxu0 0.0
    %3139 = vmatpush1.msra.mxu0 0.0
    %3140 = vmatprep.subr.mxu0 0.0
    %3141 = vmatpush1.msra.mxu0 0.0
    %3142 = vmatprep.subr.mxu0 0.0
    %3143 = vmatpush1.msra.mxu0 0.0
    %3144 = vmatprep.subr.mxu0 0.0
    %3145 = vmatpush1.msra.mxu0 0.0
    %3146 = vmatprep.subr.mxu0 0.0
    %3147 = vmatpush1.msra.mxu0 0.0
    %3148 = vmatprep.subr.mxu0 0.0
    %3149 = vmatpush1.msra.mxu0 0.0
    %3150 = vmatprep.subr.mxu0 0.0
    %3151 = vmatpush1.msra.mxu0 0.0
    %3152 = vmatprep.subr.mxu0 0.0
    %3153 = vmatpush1.msra.mxu0 0.0
    %3154 = vmatprep.subr.mxu0 0.0
    %3155 = vmatpush1.msra.mxu0 0.0
    %3156 = vmatprep.subr.mxu0 0.0
    %3157 = vmatpush1.msra.mxu0 0.0
    %3158 = vmatprep.subr.mxu0 0.0
    %3159 = vmatpush1.msra.mxu0 0.0
    %3160 = vmatprep.subr.mxu0 0.0
    %3161 = vmatpush1.msra.mxu0 0.0
    %3162 = vmatprep.mubr.f32.mxu0 0.0
    %3163 = vmatmul.mubr.f32.gmra.mrb[0].mxu0 %v3094
    %v3164 = vpop.f32.mrb[0].mxu0
    %v3165 = vadd.f32 0.0, %v3164
    %v3166 = vpop.f32.mrb[0].mxu0
    %3167 = vmatprep.mubr.f32.mxu0 0.0
    %3168 = vmatmul.mubr.f32.gmra.mrb[0].mxu0 %v3096
    %v3169 = vpop.f32.mrb[0].mxu0
    %v3170 = vadd.f32 0.0, %v3169
    %v3171 = vpop.f32.mrb[0].mxu0
    %3172 = vdwg.mxu0
    %v3173 = vadd.f32 %v3080, %v3165
    %v3174 = vadd.f32 %v3085, %v3170
    %3177 = vrot.lane.b32.xlu0 %v2914, 104
    %v3178 = vpop.permute.xlu0 %3177
    %3179 = vrot.lane.b32.xlu0 %v2919, 104
    %v3180 = vpop.permute.xlu0 %3179
    %v3181 = vsel %vm103, %v3178, 0
    %v3183 = vsel %vm103, %v3180, 0
    %3185 = vmatprep.subr.mxu0 0.0
    %3186 = vmatpush1.msra.mxu0 %v2469
    %3187 = vmatprep.subr.mxu0 0.0
    %3188 = vmatpush1.msra.mxu0 0.0
    %3189 = vmatprep.subr.mxu0 0.0
    %3190 = vmatpush1.msra.mxu0 0.0
    %3191 = vmatprep.subr.mxu0 0.0
    %3192 = vmatpush1.msra.mxu0 0.0
    %3193 = vmatprep.subr.mxu0 0.0
    %3194 = vmatpush1.msra.mxu0 0.0
    %3195 = vmatprep.subr.mxu0 0.0
    %3196 = vmatpush1.msra.mxu0 0.0
    %3197 = vmatprep.subr.mxu0 0.0
    %3198 = vmatpush1.msra.mxu0 0.0
    %3199 = vmatprep.subr.mxu0 0.0
    %3200 = vmatpush1.msra.mxu0 0.0
    %3201 = vmatprep.subr.mxu0 0.0
    %3202 = vmatpush1.msra.mxu0 0.0
    %3203 = vmatprep.subr.mxu0 0.0
    %3204 = vmatpush1.msra.mxu0 0.0
    %3205 = vmatprep.subr.mxu0 0.0
    %3206 = vmatpush1.msra.mxu0 0.0
    %3207 = vmatprep.subr.mxu0 0.0
    %3208 = vmatpush1.msra.mxu0 0.0
    %3209 = vmatprep.subr.mxu0 0.0
    %3210 = vmatpush1.msra.mxu0 0.0
    %3211 = vmatprep.subr.mxu0 0.0
    %3212 = vmatpush1.msra.mxu0 0.0
    %3213 = vmatprep.subr.mxu0 0.0
    %3214 = vmatpush1.msra.mxu0 0.0
    %3215 = vmatprep.subr.mxu0 0.0
    %3216 = vmatpush1.msra.mxu0 0.0
    %3217 = vmatprep.subr.mxu0 0.0
    %3218 = vmatpush1.msra.mxu0 0.0
    %3219 = vmatprep.subr.mxu0 0.0
    %3220 = vmatpush1.msra.mxu0 0.0
    %3221 = vmatprep.subr.mxu0 0.0
    %3222 = vmatpush1.msra.mxu0 0.0
    %3223 = vmatprep.subr.mxu0 0.0
    %3224 = vmatpush1.msra.mxu0 0.0
    %3225 = vmatprep.subr.mxu0 0.0
    %3226 = vmatpush1.msra.mxu0 0.0
    %3227 = vmatprep.subr.mxu0 0.0
    %3228 = vmatpush1.msra.mxu0 0.0
    %3229 = vmatprep.subr.mxu0 0.0
    %3230 = vmatpush1.msra.mxu0 0.0
    %3231 = vmatprep.subr.mxu0 0.0
    %3232 = vmatpush1.msra.mxu0 0.0
    %3233 = vmatprep.subr.mxu0 0.0
    %3234 = vmatpush1.msra.mxu0 0.0
    %3235 = vmatprep.subr.mxu0 0.0
    %3236 = vmatpush1.msra.mxu0 0.0
    %3237 = vmatprep.subr.mxu0 0.0
    %3238 = vmatpush1.msra.mxu0 0.0
    %3239 = vmatprep.subr.mxu0 0.0
    %3240 = vmatpush1.msra.mxu0 0.0
    %3241 = vmatprep.subr.mxu0 0.0
    %3242 = vmatpush1.msra.mxu0 0.0
    %3243 = vmatprep.subr.mxu0 0.0
    %3244 = vmatpush1.msra.mxu0 0.0
    %3245 = vmatprep.subr.mxu0 0.0
    %3246 = vmatpush1.msra.mxu0 0.0
    %3247 = vmatprep.subr.mxu0 0.0
    %3248 = vmatpush1.msra.mxu0 0.0
    %3249 = vmatprep.mubr.f32.mxu0 0.0
    %3250 = vmatmul.mubr.f32.gmra.mrb[0].mxu0 %v3181
    %v3251 = vpop.f32.mrb[0].mxu0
    %v3252 = vadd.f32 0.0, %v3251
    %v3253 = vpop.f32.mrb[0].mxu0
    %3254 = vmatprep.mubr.f32.mxu0 0.0
    %3255 = vmatmul.mubr.f32.gmra.mrb[0].mxu0 %v3183
    %v3256 = vpop.f32.mrb[0].mxu0
    %v3257 = vadd.f32 0.0, %v3256
    %v3258 = vpop.f32.mrb[0].mxu0
    %3259 = vdwg.mxu0
    %v3260 = vadd.f32 %v3173, %v3252
    %v3261 = vadd.f32 %v3174, %v3257
    %v3262 = vlaneseq
    %v3263 = vshrl.u32 %v3262, 7
    %v3264 = vsub.s32 0, %v3263
    %v3265 = vrot.slane %v2470, %v3264
    %v3266 = vadd.f32 %v3260, %v3265
    %v3267 = vadd.f32 %v3261, %v3265
    %v3268 = vadd.f32 %v177, %v3266
    %v3269 = vadd.f32 %v182, %v3267
    %v3270 = vld [vmem:[#allocation6 + $0x7d] sm:$0x1]
    %v3271 = vld [vmem:[#allocation6 + $0x7e] sm:$0x1]
    %v3272 = vsel %vm199, %v3268, 0.0
    %3273 = vadd.xlane.f32.xlu0 %v3272
    %v3274 = vpop.xlane.xlu0 %3273
    %v3275 = vsel %vm199, %v3269, 0.0
    %3276 = vadd.xlane.f32.xlu0 %v3275
    %v3277 = vpop.xlane.xlu0 %3276
    %v3278 = vmul.f32 %v3274, %v1010
    %v3279 = vmul.f32 %v3277, %v1010
    %v3280 = vmul.f32 %v3268, %v3268
    %v3281 = vmul.f32 %v3269, %v3269
    %v3282 = vsel %vm199, %v3280, 0.0
    %3283 = vadd.xlane.f32.xlu0 %v3282
    %v3284 = vpop.xlane.xlu0 %3283
    %v3285 = vsel %vm199, %v3281, 0.0
    %3286 = vadd.xlane.f32.xlu0 %v3285
    %v3287 = vpop.xlane.xlu0 %3286
    %v3288 = vmul.f32 %v3284, %v1010
    %v3289 = vmul.f32 %v3287, %v1010
    %v3290 = vsub.f32 %v3268, %v3278
    %v3291 = vsub.f32 %v3269, %v3279
    %v3292 = vmul.f32 %v3278, %v3278
    %v3293 = vmul.f32 %v3279, %v3279
    %v3294 = vsub.f32 %v3288, %v3292
    %v3295 = vsub.f32 %v3289, %v3293
    %v3296 = vadd.f32 %v3294, 1e-05
    %v3297 = vadd.f32 %v3295, 1e-05
    %v3298 = vrsqrt.pop %v3296
    %v3299 = vrsqrt.pop %v3297
    %v3300 = vmul.f32 %v3290, %v3298
    %v3301 = vmul.f32 %v3291, %v3299
    %v3302 = vlaneseq
    %v3303 = vshrl.u32 %v3302, 7
    %v3304 = vsub.s32 0, %v3303
    %v3305 = vrot.slane %v3270, %v3304
    %v3306 = vmul.f32 %v3300, %v3305
    %v3307 = vmul.f32 %v3301, %v3305
    %v3308 = vlaneseq
    %v3309 = vshrl.u32 %v3308, 7
    %v3310 = vsub.s32 0, %v3309
    %v3311 = vrot.slane %v3271, %v3310
    %v3312 = vadd.f32 %v3306, %v3311
    %v3313 = vadd.f32 %v3307, %v3311
    %v3314 = vld [vmem:[#allocation4 + $0x1a8] sm:$0xff]
    %v3315 = vld [vmem:[#allocation4 + $0x1b0] sm:$0xff]
    %v3316 = vld [vmem:[#allocation4 + $0x1b8] sm:$0xff]
    %v3317 = vld [vmem:[#allocation4 + $0x1c0] sm:$0xff]
    %v3318 = vld [vmem:[#allocation6 + $0x79] sm:$0x1]
    %v3319 = vlaneseq
    %v3320 = vshrl.u32 %v3319, 7
    %v3321 = vsub.s32 0, %v3320
    %v3322 = vrot.slane %v3318, %v3321
    %v3324 = vsel %vm199, %v3312, 0
    %v3327 = vsel %vm199, %v3313, 0
    %3329 = vmatprep.subr.mxu0 0.0
    %3330 = vmatpush1.msra.mxu0 %v3314
    %3331 = vmatprep.subr.mxu0 0.0
    %3332 = vmatpush1.msra.mxu0 %v3315
    %3333 = vmatprep.subr.mxu0 0.0
    %3334 = vmatpush1.msra.mxu0 %v3316
    %3335 = vmatprep.subr.mxu0 0.0
    %3336 = vmatpush1.msra.mxu0 %v3317
    %3337 = vmatprep.subr.mxu0 0.0
    %3338 = vmatpush1.msra.mxu0 0.0
    %3339 = vmatprep.subr.mxu0 0.0
    %3340 = vmatpush1.msra.mxu0 0.0
    %3341 = vmatprep.subr.mxu0 0.0
    %3342 = vmatpush1.msra.mxu0 0.0
    %3343 = vmatprep.subr.mxu0 0.0
    %3344 = vmatpush1.msra.mxu0 0.0
    %3345 = vmatprep.subr.mxu0 0.0
    %3346 = vmatpush1.msra.mxu0 0.0
    %3347 = vmatprep.subr.mxu0 0.0
    %3348 = vmatpush1.msra.mxu0 0.0
    %3349 = vmatprep.subr.mxu0 0.0
    %3350 = vmatpush1.msra.mxu0 0.0
    %3351 = vmatprep.subr.mxu0 0.0
    %3352 = vmatpush1.msra.mxu0 0.0
    %3353 = vmatprep.subr.mxu0 0.0
    %3354 = vmatpush1.msra.mxu0 0.0
    %3355 = vmatprep.subr.mxu0 0.0
    %3356 = vmatpush1.msra.mxu0 0.0
    %3357 = vmatprep.subr.mxu0 0.0
    %3358 = vmatpush1.msra.mxu0 0.0
    %3359 = vmatprep.subr.mxu0 0.0
    %3360 = vmatpush1.msra.mxu0 0.0
    %3361 = vmatprep.subr.mxu0 0.0
    %3362 = vmatpush1.msra.mxu0 0.0
    %3363 = vmatprep.subr.mxu0 0.0
    %3364 = vmatpush1.msra.mxu0 0.0
    %3365 = vmatprep.subr.mxu0 0.0
    %3366 = vmatpush1.msra.mxu0 0.0
    %3367 = vmatprep.subr.mxu0 0.0
    %3368 = vmatpush1.msra.mxu0 0.0
    %3369 = vmatprep.subr.mxu0 0.0
    %3370 = vmatpush1.msra.mxu0 0.0
    %3371 = vmatprep.subr.mxu0 0.0
    %3372 = vmatpush1.msra.mxu0 0.0
    %3373 = vmatprep.subr.mxu0 0.0
    %3374 = vmatpush1.msra.mxu0 0.0
    %3375 = vmatprep.subr.mxu0 0.0
    %3376 = vmatpush1.msra.mxu0 0.0
    %3377 = vmatprep.subr.mxu0 0.0
    %3378 = vmatpush1.msra.mxu0 0.0
    %3379 = vmatprep.subr.mxu0 0.0
    %3380 = vmatpush1.msra.mxu0 0.0
    %3381 = vmatprep.subr.mxu0 0.0
    %3382 = vmatpush1.msra.mxu0 0.0
    %3383 = vmatprep.subr.mxu0 0.0
    %3384 = vmatpush1.msra.mxu0 0.0
    %3385 = vmatprep.subr.mxu0 0.0
    %3386 = vmatpush1.msra.mxu0 0.0
    %3387 = vmatprep.subr.mxu0 0.0
    %3388 = vmatpush1.msra.mxu0 0.0
    %3389 = vmatprep.subr.mxu0 0.0
    %3390 = vmatpush1.msra.mxu0 0.0
    %3391 = vmatprep.subr.mxu0 0.0
    %3392 = vmatpush1.msra.mxu0 0.0
    %3393 = vmatprep.mubr.f32.mxu0 0.0
    %3394 = vmatmul.mubr.f32.gmra.mrb[0].mxu0 %v3324
    %v3395 = vpop.f32.mrb[0].mxu0
    %v3396 = vadd.f32 %v3322, %v3395
    %v3397 = vpop.f32.mrb[0].mxu0
    %3398 = vmatprep.mubr.f32.mxu0 0.0
    %3399 = vmatmul.mubr.f32.gmra.mrb[0].mxu0 %v3327
    %v3400 = vpop.f32.mrb[0].mxu0
    %v3401 = vadd.f32 %v3322, %v3400
    %v3402 = vpop.f32.mrb[0].mxu0
    %3403 = vdwg.mxu0
    %v3404 = vld [vmem:[#allocation4 + $0x1c8] sm:$0xff]
    %v3405 = vld [vmem:[#allocation4 + $0x1d0] sm:$0xff]
    %v3406 = vld [vmem:[#allocation4 + $0x1d8] sm:$0xff]
    %v3407 = vld [vmem:[#allocation4 + $0x1e0] sm:$0xff]
    %v3408 = vld [vmem:[#allocation6 + $0x7a] sm:$0x1]
    %v3409 = vmul.f32 %v3396, 0.35355338
    %v3410 = vmul.f32 %v3401, 0.35355338
    %v3411 = vmul.f32 %v3409, %v86
    %v3412 = vmul.f32 %v3410, %v86
    %v3413 = vmul.f32 %v3409, %v90
    %v3414 = vmul.f32 %v3410, %v90
    %v3415 = vmul.f32 %v3409, %v94
    %v3416 = vmul.f32 %v3410, %v94
    %v3417 = vmul.f32 %v3409, %v98
    %v3418 = vmul.f32 %v3410, %v98
    %v3420 = vsel %vm199, %v3411, 0
    %v3423 = vsel %vm199, %v3412, 0
    %v3426 = vsel %vm199, %v3413, 0
    %v3429 = vsel %vm199, %v3414, 0
    %v3432 = vsel %vm199, %v3415, 0
    %v3435 = vsel %vm199, %v3416, 0
    %v3438 = vsel %vm199, %v3417, 0
    %v3441 = vsel %vm199, %v3418, 0
    %v3444 = vsel %vm199, %v2453, 0
    %v3447 = vsel %vm199, %v2458, 0
    %3449 = vmatprep.subr.mxu0 0.0
    %3450 = vmatpush1.xpose.msra.mxu0 %v3444
    %3451 = vmatprep.subr.mxu0 0.0
    %3452 = vmatpush1.xpose.msra.mxu0 %v3447
    %3453 = vmatprep.subr.mxu0 0.0
    %3454 = vmatpush1.xpose.msra.mxu0 0.0
    %3455 = vmatprep.subr.mxu0 0.0
    %3456 = vmatpush1.xpose.msra.mxu0 0.0
    %3457 = vmatprep.subr.mxu0 0.0
    %3458 = vmatpush1.xpose.msra.mxu0 0.0
    %3459 = vmatprep.subr.mxu0 0.0
    %3460 = vmatpush1.xpose.msra.mxu0 0.0
    %3461 = vmatprep.subr.mxu0 0.0
    %3462 = vmatpush1.xpose.msra.mxu0 0.0
    %3463 = vmatprep.subr.mxu0 0.0
    %3464 = vmatpush1.xpose.msra.mxu0 0.0
    %3465 = vmatprep.subr.mxu0 0.0
    %3466 = vmatpush1.xpose.msra.mxu0 0.0
    %3467 = vmatprep.subr.mxu0 0.0
    %3468 = vmatpush1.xpose.msra.mxu0 0.0
    %3469 = vmatprep.subr.mxu0 0.0
    %3470 = vmatpush1.xpose.msra.mxu0 0.0
    %3471 = vmatprep.subr.mxu0 0.0
    %3472 = vmatpush1.xpose.msra.mxu0 0.0
    %3473 = vmatprep.subr.mxu0 0.0
    %3474 = vmatpush1.xpose.msra.mxu0 0.0
    %3475 = vmatprep.subr.mxu0 0.0
    %3476 = vmatpush1.xpose.msra.mxu0 0.0
    %3477 = vmatprep.subr.mxu0 0.0
    %3478 = vmatpush1.xpose.msra.mxu0 0.0
    %3479 = vmatprep.subr.mxu0 0.0
    %3480 = vmatpush1.xpose.msra.mxu0 0.0
    %3481 = vmatprep.subr.mxu0 0.0
    %3482 = vmatpush1.xpose.msra.mxu0 0.0
    %3483 = vmatprep.subr.mxu0 0.0
    %3484 = vmatpush1.xpose.msra.mxu0 0.0
    %3485 = vmatprep.subr.mxu0 0.0
    %3486 = vmatpush1.xpose.msra.mxu0 0.0
    %3487 = vmatprep.subr.mxu0 0.0
    %3488 = vmatpush1.xpose.msra.mxu0 0.0
    %3489 = vmatprep.subr.mxu0 0.0
    %3490 = vmatpush1.xpose.msra.mxu0 0.0
    %3491 = vmatprep.subr.mxu0 0.0
    %3492 = vmatpush1.xpose.msra.mxu0 0.0
    %3493 = vmatprep.subr.mxu0 0.0
    %3494 = vmatpush1.xpose.msra.mxu0 0.0
    %3495 = vmatprep.subr.mxu0 0.0
    %3496 = vmatpush1.xpose.msra.mxu0 0.0
    %3497 = vmatprep.subr.mxu0 0.0
    %3498 = vmatpush1.xpose.msra.mxu0 0.0
    %3499 = vmatprep.subr.mxu0 0.0
    %3500 = vmatpush1.xpose.msra.mxu0 0.0
    %3501 = vmatprep.subr.mxu0 0.0
    %3502 = vmatpush1.xpose.msra.mxu0 0.0
    %3503 = vmatprep.subr.mxu0 0.0
    %3504 = vmatpush1.xpose.msra.mxu0 0.0
    %3505 = vmatprep.subr.mxu0 0.0
    %3506 = vmatpush1.xpose.msra.mxu0 0.0
    %3507 = vmatprep.subr.mxu0 0.0
    %3508 = vmatpush1.xpose.msra.mxu0 0.0
    %3509 = vmatprep.subr.mxu0 0.0
    %3510 = vmatpush1.xpose.msra.mxu0 0.0
    %3511 = vmatprep.subr.mxu0 0.0
    %3512 = vmatpush1.xpose.msra.mxu0 0.0
    %3513 = vmatprep.mubr.f32.mxu0 0.0
    %3514 = vmatmul.mubr.f32.gmra.mrb[0].mxu0 %v3420
    %v3515 = vpop.f32.mrb[0].mxu0
    %v3516 = vadd.f32 %v72, %v3515
    %v3517 = vpop.f32.mrb[0].mxu0
    %3518 = vmatprep.mubr.f32.mxu0 0.0
    %3519 = vmatmul.mubr.f32.gmra.mrb[0].mxu0 %v3423
    %v3520 = vpop.f32.mrb[0].mxu0
    %v3521 = vadd.f32 %v73, %v3520
    %v3522 = vpop.f32.mrb[0].mxu0
    %3523 = vmatprep.mubr.f32.mxu0 0.0
    %3524 = vmatmul.mubr.f32.gmra.mrb[0].mxu0 %v3426
    %v3525 = vpop.f32.mrb[0].mxu0
    %v3526 = vadd.f32 %v74, %v3525
    %v3527 = vpop.f32.mrb[0].mxu0
    %3528 = vmatprep.mubr.f32.mxu0 0.0
    %3529 = vmatmul.mubr.f32.gmra.mrb[0].mxu0 %v3429
    %v3530 = vpop.f32.mrb[0].mxu0
    %v3531 = vadd.f32 %v75, %v3530
    %v3532 = vpop.f32.mrb[0].mxu0
    %3533 = vmatprep.mubr.f32.mxu0 0.0
    %3534 = vmatmul.mubr.f32.gmra.mrb[0].mxu0 %v3432
    %v3535 = vpop.f32.mrb[0].mxu0
    %v3536 = vadd.f32 %v76, %v3535
    %v3537 = vpop.f32.mrb[0].mxu0
    %3538 = vmatprep.mubr.f32.mxu0 0.0
    %3539 = vmatmul.mubr.f32.gmra.mrb[0].mxu0 %v3435
    %v3540 = vpop.f32.mrb[0].mxu0
    %v3541 = vadd.f32 %v77, %v3540
    %v3542 = vpop.f32.mrb[0].mxu0
    %3543 = vmatprep.mubr.f32.mxu0 0.0
    %3544 = vmatmul.mubr.f32.gmra.mrb[0].mxu0 %v3438
    %v3545 = vpop.f32.mrb[0].mxu0
    %v3546 = vadd.f32 %v78, %v3545
    %v3547 = vpop.f32.mrb[0].mxu0
    %3548 = vmatprep.mubr.f32.mxu0 0.0
    %3549 = vmatmul.mubr.f32.gmra.mrb[0].mxu0 %v3441
    %v3550 = vpop.f32.mrb[0].mxu0
    %v3551 = vadd.f32 %v79, %v3550
    %v3552 = vpop.f32.mrb[0].mxu0
    %3553 = vdwg.mxu0
    %v3554 = vsel %vm430, %v3516, -inf
    %3555 = vmax.xlane.f32.xlu0 %v3554
    %v3556 = vpop.xlane.xlu0 %3555
    %v3557 = vsel %vm430, %v3521, -inf
    %3558 = vmax.xlane.f32.xlu0 %v3557
    %v3559 = vpop.xlane.xlu0 %3558
    %v3560 = vsel %vm430, %v3526, -inf
    %3561 = vmax.xlane.f32.xlu0 %v3560
    %v3562 = vpop.xlane.xlu0 %3561
    %v3563 = vsel %vm430, %v3531, -inf
    %3564 = vmax.xlane.f32.xlu0 %v3563
    %v3565 = vpop.xlane.xlu0 %3564
    %v3566 = vsel %vm430, %v3536, -inf
    %3567 = vmax.xlane.f32.xlu0 %v3566
    %v3568 = vpop.xlane.xlu0 %3567
    %v3569 = vsel %vm430, %v3541, -inf
    %3570 = vmax.xlane.f32.xlu0 %v3569
    %v3571 = vpop.xlane.xlu0 %3570
    %v3572 = vsel %vm430, %v3546, -inf
    %3573 = vmax.xlane.f32.xlu0 %v3572
    %v3574 = vpop.xlane.xlu0 %3573
    %v3575 = vsel %vm430, %v3551, -inf
    %3576 = vmax.xlane.f32.xlu0 %v3575
    %v3577 = vpop.xlane.xlu0 %3576
    %v3578 = vsub.f32 %v3516, %v3556
    %v3579 = vsub.f32 %v3521, %v3559
    %v3580 = vsub.f32 %v3526, %v3562
    %v3581 = vsub.f32 %v3531, %v3565
    %v3582 = vsub.f32 %v3536, %v3568
    %v3583 = vsub.f32 %v3541, %v3571
    %v3584 = vsub.f32 %v3546, %v3574
    %v3585 = vsub.f32 %v3551, %v3577
    %v3586 = vmul.f32 %v3578, 1.442695
    %v3587 = vpow.pop %v3586
    %v3588 = vmul.f32 %v3579, 1.442695
    %v3589 = vpow.pop %v3588
    %v3590 = vmul.f32 %v3580, 1.442695
    %v3591 = vpow.pop %v3590
    %v3592 = vmul.f32 %v3581, 1.442695
    %v3593 = vpow.pop %v3592
    %v3594 = vmul.f32 %v3582, 1.442695
    %v3595 = vpow.pop %v3594
    %v3596 = vmul.f32 %v3583, 1.442695
    %v3597 = vpow.pop %v3596
    %v3598 = vmul.f32 %v3584, 1.442695
    %v3599 = vpow.pop %v3598
    %v3600 = vmul.f32 %v3585, 1.442695
    %v3601 = vpow.pop %v3600
    %v3602 = vsel %vm430, %v3587, 0.0
    %3603 = vadd.xlane.f32.xlu0 %v3602
    %v3604 = vpop.xlane.xlu0 %3603
    %v3605 = vsel %vm430, %v3589, 0.0
    %3606 = vadd.xlane.f32.xlu0 %v3605
    %v3607 = vpop.xlane.xlu0 %3606
    %v3608 = vsel %vm430, %v3591, 0.0
    %3609 = vadd.xlane.f32.xlu0 %v3608
    %v3610 = vpop.xlane.xlu0 %3609
    %v3611 = vsel %vm430, %v3593, 0.0
    %3612 = vadd.xlane.f32.xlu0 %v3611
    %v3613 = vpop.xlane.xlu0 %3612
    %v3614 = vsel %vm430, %v3595, 0.0
    %3615 = vadd.xlane.f32.xlu0 %v3614
    %v3616 = vpop.xlane.xlu0 %3615
    %v3617 = vsel %vm430, %v3597, 0.0
    %3618 = vadd.xlane.f32.xlu0 %v3617
    %v3619 = vpop.xlane.xlu0 %3618
    %v3620 = vsel %vm430, %v3599, 0.0
    %3621 = vadd.xlane.f32.xlu0 %v3620
    %v3622 = vpop.xlane.xlu0 %3621
    %v3623 = vsel %vm430, %v3601, 0.0
    %3624 = vadd.xlane.f32.xlu0 %v3623
    %v3625 = vpop.xlane.xlu0 %3624
    %v3626 = vrcp.pop %v3604
    %v3627 = vrcp.pop %v3607
    %v3628 = vrcp.pop %v3610
    %v3629 = vrcp.pop %v3613
    %v3630 = vrcp.pop %v3616
    %v3631 = vrcp.pop %v3619
    %v3632 = vrcp.pop %v3622
    %v3633 = vrcp.pop %v3625
    %v3634 = vmul.f32 %v3587, %v3626
    %v3635 = vmul.f32 %v3589, %v3627
    %v3636 = vmul.f32 %v3591, %v3628
    %v3637 = vmul.f32 %v3593, %v3629
    %v3638 = vmul.f32 %v3595, %v3630
    %v3639 = vmul.f32 %v3597, %v3631
    %v3640 = vmul.f32 %v3599, %v3632
    %v3641 = vmul.f32 %v3601, %v3633
    %3642 = vrot.lane.b32.xlu0 %v2453, 96
    %v3643 = vpop.permute.xlu0 %3642
    %3644 = vrot.lane.b32.xlu0 %v2458, 96
    %v3645 = vpop.permute.xlu0 %3644
    %v3649 = vsel %vm430, %v3634, 0
    %v3652 = vsel %vm430, %v3635, 0
    %v3655 = vsel %vm430, %v3636, 0
    %v3658 = vsel %vm430, %v3637, 0
    %v3661 = vsel %vm430, %v3638, 0
    %v3664 = vsel %vm430, %v3639, 0
    %v3667 = vsel %vm430, %v3640, 0
    %v3670 = vsel %vm430, %v3641, 0
    %3672 = vmatprep.subr.mxu0 0.0
    %3673 = vmatpush1.msra.mxu0 %v3643
    %3674 = vmatprep.subr.mxu0 0.0
    %3675 = vmatpush1.msra.mxu0 %v3645
    %3676 = vmatprep.subr.mxu0 0.0
    %3677 = vmatpush1.msra.mxu0 0.0
    %3678 = vmatprep.subr.mxu0 0.0
    %3679 = vmatpush1.msra.mxu0 0.0
    %3680 = vmatprep.subr.mxu0 0.0
    %3681 = vmatpush1.msra.mxu0 0.0
    %3682 = vmatprep.subr.mxu0 0.0
    %3683 = vmatpush1.msra.mxu0 0.0
    %3684 = vmatprep.subr.mxu0 0.0
    %3685 = vmatpush1.msra.mxu0 0.0
    %3686 = vmatprep.subr.mxu0 0.0
    %3687 = vmatpush1.msra.mxu0 0.0
    %3688 = vmatprep.subr.mxu0 0.0
    %3689 = vmatpush1.msra.mxu0 0.0
    %3690 = vmatprep.subr.mxu0 0.0
    %3691 = vmatpush1.msra.mxu0 0.0
    %3692 = vmatprep.subr.mxu0 0.0
    %3693 = vmatpush1.msra.mxu0 0.0
    %3694 = vmatprep.subr.mxu0 0.0
    %3695 = vmatpush1.msra.mxu0 0.0
    %3696 = vmatprep.subr.mxu0 0.0
    %3697 = vmatpush1.msra.mxu0 0.0
    %3698 = vmatprep.subr.mxu0 0.0
    %3699 = vmatpush1.msra.mxu0 0.0
    %3700 = vmatprep.subr.mxu0 0.0
    %3701 = vmatpush1.msra.mxu0 0.0
    %3702 = vmatprep.subr.mxu0 0.0
    %3703 = vmatpush1.msra.mxu0 0.0
    %3704 = vmatprep.subr.mxu0 0.0
    %3705 = vmatpush1.msra.mxu0 0.0
    %3706 = vmatprep.subr.mxu0 0.0
    %3707 = vmatpush1.msra.mxu0 0.0
    %3708 = vmatprep.subr.mxu0 0.0
    %3709 = vmatpush1.msra.mxu0 0.0
    %3710 = vmatprep.subr.mxu0 0.0
    %3711 = vmatpush1.msra.mxu0 0.0
    %3712 = vmatprep.subr.mxu0 0.0
    %3713 = vmatpush1.msra.mxu0 0.0
    %3714 = vmatprep.subr.mxu0 0.0
    %3715 = vmatpush1.msra.mxu0 0.0
    %3716 = vmatprep.subr.mxu0 0.0
    %3717 = vmatpush1.msra.mxu0 0.0
    %3718 = vmatprep.subr.mxu0 0.0
    %3719 = vmatpush1.msra.mxu0 0.0
    %3720 = vmatprep.subr.mxu0 0.0
    %3721 = vmatpush1.msra.mxu0 0.0
    %3722 = vmatprep.subr.mxu0 0.0
    %3723 = vmatpush1.msra.mxu0 0.0
    %3724 = vmatprep.subr.mxu0 0.0
    %3725 = vmatpush1.msra.mxu0 0.0
    %3726 = vmatprep.subr.mxu0 0.0
    %3727 = vmatpush1.msra.mxu0 0.0
    %3728 = vmatprep.subr.mxu0 0.0
    %3729 = vmatpush1.msra.mxu0 0.0
    %3730 = vmatprep.subr.mxu0 0.0
    %3731 = vmatpush1.msra.mxu0 0.0
    %3732 = vmatprep.subr.mxu0 0.0
    %3733 = vmatpush1.msra.mxu0 0.0
    %3734 = vmatprep.subr.mxu0 0.0
    %3735 = vmatpush1.msra.mxu0 0.0
    %3736 = vmatprep.mubr.f32.mxu0 0.0
    %3737 = vmatmul.mubr.f32.gmra.mrb[0].mxu0 %v3649
    %v3738 = vpop.f32.mrb[0].mxu0
    %v3739 = vadd.f32 0.0, %v3738
    %v3740 = vpop.f32.mrb[0].mxu0
    %3741 = vmatprep.mubr.f32.mxu0 0.0
    %3742 = vmatmul.mubr.f32.gmra.mrb[0].mxu0 %v3652
    %v3743 = vpop.f32.mrb[0].mxu0
    %v3744 = vadd.f32 0.0, %v3743
    %v3745 = vpop.f32.mrb[0].mxu0
    %3746 = vmatprep.mubr.f32.mxu0 0.0
    %3747 = vmatmul.mubr.f32.gmra.mrb[0].mxu0 %v3655
    %v3748 = vpop.f32.mrb[0].mxu0
    %v3749 = vadd.f32 0.0, %v3748
    %v3750 = vpop.f32.mrb[0].mxu0
    %3751 = vmatprep.mubr.f32.mxu0 0.0
    %3752 = vmatmul.mubr.f32.gmra.mrb[0].mxu0 %v3658
    %v3753 = vpop.f32.mrb[0].mxu0
    %v3754 = vadd.f32 0.0, %v3753
    %v3755 = vpop.f32.mrb[0].mxu0
    %3756 = vmatprep.mubr.f32.mxu0 0.0
    %3757 = vmatmul.mubr.f32.gmra.mrb[0].mxu0 %v3661
    %v3758 = vpop.f32.mrb[0].mxu0
    %v3759 = vadd.f32 0.0, %v3758
    %v3760 = vpop.f32.mrb[0].mxu0
    %3761 = vmatprep.mubr.f32.mxu0 0.0
    %3762 = vmatmul.mubr.f32.gmra.mrb[0].mxu0 %v3664
    %v3763 = vpop.f32.mrb[0].mxu0
    %v3764 = vadd.f32 0.0, %v3763
    %v3765 = vpop.f32.mrb[0].mxu0
    %3766 = vmatprep.mubr.f32.mxu0 0.0
    %3767 = vmatmul.mubr.f32.gmra.mrb[0].mxu0 %v3667
    %v3768 = vpop.f32.mrb[0].mxu0
    %v3769 = vadd.f32 0.0, %v3768
    %v3770 = vpop.f32.mrb[0].mxu0
    %3771 = vmatprep.mubr.f32.mxu0 0.0
    %3772 = vmatmul.mubr.f32.gmra.mrb[0].mxu0 %v3670
    %v3773 = vpop.f32.mrb[0].mxu0
    %v3774 = vadd.f32 0.0, %v3773
    %v3775 = vpop.f32.mrb[0].mxu0
    %3776 = vdwg.mxu0
    %3779 = vrot.lane.b32.xlu0 %v3749, 120
    %v3780 = vpop.permute.xlu0 %3779
    %3781 = vrot.lane.b32.xlu0 %v3754, 120
    %v3782 = vpop.permute.xlu0 %3781
    %v3783 = vsel %vm103, %v3780, 0
    %v3785 = vsel %vm103, %v3782, 0
    %3787 = vmatprep.subr.mxu0 0.0
    %3788 = vmatpush1.msra.mxu0 %v3405
    %3789 = vmatprep.subr.mxu0 0.0
    %3790 = vmatpush1.msra.mxu0 0.0
    %3791 = vmatprep.subr.mxu0 0.0
    %3792 = vmatpush1.msra.mxu0 0.0
    %3793 = vmatprep.subr.mxu0 0.0
    %3794 = vmatpush1.msra.mxu0 0.0
    %3795 = vmatprep.subr.mxu0 0.0
    %3796 = vmatpush1.msra.mxu0 0.0
    %3797 = vmatprep.subr.mxu0 0.0
    %3798 = vmatpush1.msra.mxu0 0.0
    %3799 = vmatprep.subr.mxu0 0.0
    %3800 = vmatpush1.msra.mxu0 0.0
    %3801 = vmatprep.subr.mxu0 0.0
    %3802 = vmatpush1.msra.mxu0 0.0
    %3803 = vmatprep.subr.mxu0 0.0
    %3804 = vmatpush1.msra.mxu0 0.0
    %3805 = vmatprep.subr.mxu0 0.0
    %3806 = vmatpush1.msra.mxu0 0.0
    %3807 = vmatprep.subr.mxu0 0.0
    %3808 = vmatpush1.msra.mxu0 0.0
    %3809 = vmatprep.subr.mxu0 0.0
    %3810 = vmatpush1.msra.mxu0 0.0
    %3811 = vmatprep.subr.mxu0 0.0
    %3812 = vmatpush1.msra.mxu0 0.0
    %3813 = vmatprep.subr.mxu0 0.0
    %3814 = vmatpush1.msra.mxu0 0.0
    %3815 = vmatprep.subr.mxu0 0.0
    %3816 = vmatpush1.msra.mxu0 0.0
    %3817 = vmatprep.subr.mxu0 0.0
    %3818 = vmatpush1.msra.mxu0 0.0
    %3819 = vmatprep.subr.mxu0 0.0
    %3820 = vmatpush1.msra.mxu0 0.0
    %3821 = vmatprep.subr.mxu0 0.0
    %3822 = vmatpush1.msra.mxu0 0.0
    %3823 = vmatprep.subr.mxu0 0.0
    %3824 = vmatpush1.msra.mxu0 0.0
    %3825 = vmatprep.subr.mxu0 0.0
    %3826 = vmatpush1.msra.mxu0 0.0
    %3827 = vmatprep.subr.mxu0 0.0
    %3828 = vmatpush1.msra.mxu0 0.0
    %3829 = vmatprep.subr.mxu0 0.0
    %3830 = vmatpush1.msra.mxu0 0.0
    %3831 = vmatprep.subr.mxu0 0.0
    %3832 = vmatpush1.msra.mxu0 0.0
    %3833 = vmatprep.subr.mxu0 0.0
    %3834 = vmatpush1.msra.mxu0 0.0
    %3835 = vmatprep.subr.mxu0 0.0
    %3836 = vmatpush1.msra.mxu0 0.0
    %3837 = vmatprep.subr.mxu0 0.0
    %3838 = vmatpush1.msra.mxu0 0.0
    %3839 = vmatprep.subr.mxu0 0.0
    %3840 = vmatpush1.msra.mxu0 0.0
    %3841 = vmatprep.subr.mxu0 0.0
    %3842 = vmatpush1.msra.mxu0 0.0
    %3843 = vmatprep.subr.mxu0 0.0
    %3844 = vmatpush1.msra.mxu0 0.0
    %3845 = vmatprep.subr.mxu0 0.0
    %3846 = vmatpush1.msra.mxu0 0.0
    %3847 = vmatprep.subr.mxu0 0.0
    %3848 = vmatpush1.msra.mxu0 0.0
    %3849 = vmatprep.subr.mxu0 0.0
    %3850 = vmatpush1.msra.mxu0 0.0
    %3851 = vmatprep.mubr.f32.mxu0 0.0
    %3852 = vmatmul.mubr.f32.gmra.mrb[0].mxu0 %v3783
    %v3853 = vpop.f32.mrb[0].mxu0
    %v3854 = vadd.f32 0.0, %v3853
    %v3855 = vpop.f32.mrb[0].mxu0
    %3856 = vmatprep.mubr.f32.mxu0 0.0
    %3857 = vmatmul.mubr.f32.gmra.mrb[0].mxu0 %v3785
    %v3858 = vpop.f32.mrb[0].mxu0
    %v3859 = vadd.f32 0.0, %v3858
    %v3860 = vpop.f32.mrb[0].mxu0
    %3861 = vdwg.mxu0
    %v3863 = vsel %vm103, %v3739, 0
    %v3866 = vsel %vm103, %v3744, 0
    %3868 = vmatprep.subr.mxu0 0.0
    %3869 = vmatpush1.msra.mxu0 %v3404
    %3870 = vmatprep.subr.mxu0 0.0
    %3871 = vmatpush1.msra.mxu0 0.0
    %3872 = vmatprep.subr.mxu0 0.0
    %3873 = vmatpush1.msra.mxu0 0.0
    %3874 = vmatprep.subr.mxu0 0.0
    %3875 = vmatpush1.msra.mxu0 0.0
    %3876 = vmatprep.subr.mxu0 0.0
    %3877 = vmatpush1.msra.mxu0 0.0
    %3878 = vmatprep.subr.mxu0 0.0
    %3879 = vmatpush1.msra.mxu0 0.0
    %3880 = vmatprep.subr.mxu0 0.0
    %3881 = vmatpush1.msra.mxu0 0.0
    %3882 = vmatprep.subr.mxu0 0.0
    %3883 = vmatpush1.msra.mxu0 0.0
    %3884 = vmatprep.subr.mxu0 0.0
    %3885 = vmatpush1.msra.mxu0 0.0
    %3886 = vmatprep.subr.mxu0 0.0
    %3887 = vmatpush1.msra.mxu0 0.0
    %3888 = vmatprep.subr.mxu0 0.0
    %3889 = vmatpush1.msra.mxu0 0.0
    %3890 = vmatprep.subr.mxu0 0.0
    %3891 = vmatpush1.msra.mxu0 0.0
    %3892 = vmatprep.subr.mxu0 0.0
    %3893 = vmatpush1.msra.mxu0 0.0
    %3894 = vmatprep.subr.mxu0 0.0
    %3895 = vmatpush1.msra.mxu0 0.0
    %3896 = vmatprep.subr.mxu0 0.0
    %3897 = vmatpush1.msra.mxu0 0.0
    %3898 = vmatprep.subr.mxu0 0.0
    %3899 = vmatpush1.msra.mxu0 0.0
    %3900 = vmatprep.subr.mxu0 0.0
    %3901 = vmatpush1.msra.mxu0 0.0
    %3902 = vmatprep.subr.mxu0 0.0
    %3903 = vmatpush1.msra.mxu0 0.0
    %3904 = vmatprep.subr.mxu0 0.0
    %3905 = vmatpush1.msra.mxu0 0.0
    %3906 = vmatprep.subr.mxu0 0.0
    %3907 = vmatpush1.msra.mxu0 0.0
    %3908 = vmatprep.subr.mxu0 0.0
    %3909 = vmatpush1.msra.mxu0 0.0
    %3910 = vmatprep.subr.mxu0 0.0
    %3911 = vmatpush1.msra.mxu0 0.0
    %3912 = vmatprep.subr.mxu0 0.0
    %3913 = vmatpush1.msra.mxu0 0.0
    %3914 = vmatprep.subr.mxu0 0.0
    %3915 = vmatpush1.msra.mxu0 0.0
    %3916 = vmatprep.subr.mxu0 0.0
    %3917 = vmatpush1.msra.mxu0 0.0
    %3918 = vmatprep.subr.mxu0 0.0
    %3919 = vmatpush1.msra.mxu0 0.0
    %3920 = vmatprep.subr.mxu0 0.0
    %3921 = vmatpush1.msra.mxu0 0.0
    %3922 = vmatprep.subr.mxu0 0.0
    %3923 = vmatpush1.msra.mxu0 0.0
    %3924 = vmatprep.subr.mxu0 0.0
    %3925 = vmatpush1.msra.mxu0 0.0
    %3926 = vmatprep.subr.mxu0 0.0
    %3927 = vmatpush1.msra.mxu0 0.0
    %3928 = vmatprep.subr.mxu0 0.0
    %3929 = vmatpush1.msra.mxu0 0.0
    %3930 = vmatprep.subr.mxu0 0.0
    %3931 = vmatpush1.msra.mxu0 0.0
    %3932 = vmatprep.mubr.f32.mxu0 0.0
    %3933 = vmatmul.mubr.f32.gmra.mrb[0].mxu0 %v3863
    %v3934 = vpop.f32.mrb[0].mxu0
    %v3935 = vadd.f32 %v3854, %v3934
    %v3936 = vpop.f32.mrb[0].mxu0
    %3937 = vmatprep.mubr.f32.mxu0 0.0
    %3938 = vmatmul.mubr.f32.gmra.mrb[0].mxu0 %v3866
    %v3939 = vpop.f32.mrb[0].mxu0
    %v3940 = vadd.f32 %v3859, %v3939
    %v3941 = vpop.f32.mrb[0].mxu0
    %3942 = vdwg.mxu0
    %3945 = vrot.lane.b32.xlu0 %v3759, 112
    %v3946 = vpop.permute.xlu0 %3945
    %3947 = vrot.lane.b32.xlu0 %v3764, 112
    %v3948 = vpop.permute.xlu0 %3947
    %v3949 = vsel %vm103, %v3946, 0
    %v3951 = vsel %vm103, %v3948, 0
    %3953 = vmatprep.subr.mxu0 0.0
    %3954 = vmatpush1.msra.mxu0 %v3406
    %3955 = vmatprep.subr.mxu0 0.0
    %3956 = vmatpush1.msra.mxu0 0.0
    %3957 = vmatprep.subr.mxu0 0.0
    %3958 = vmatpush1.msra.mxu0 0.0
    %3959 = vmatprep.subr.mxu0 0.0
    %3960 = vmatpush1.msra.mxu0 0.0
    %3961 = vmatprep.subr.mxu0 0.0
    %3962 = vmatpush1.msra.mxu0 0.0
    %3963 = vmatprep.subr.mxu0 0.0
    %3964 = vmatpush1.msra.mxu0 0.0
    %3965 = vmatprep.subr.mxu0 0.0
    %3966 = vmatpush1.msra.mxu0 0.0
    %3967 = vmatprep.subr.mxu0 0.0
    %3968 = vmatpush1.msra.mxu0 0.0
    %3969 = vmatprep.subr.mxu0 0.0
    %3970 = vmatpush1.msra.mxu0 0.0
    %3971 = vmatprep.subr.mxu0 0.0
    %3972 = vmatpush1.msra.mxu0 0.0
    %3973 = vmatprep.subr.mxu0 0.0
    %3974 = vmatpush1.msra.mxu0 0.0
    %3975 = vmatprep.subr.mxu0 0.0
    %3976 = vmatpush1.msra.mxu0 0.0
    %3977 = vmatprep.subr.mxu0 0.0
    %3978 = vmatpush1.msra.mxu0 0.0
    %3979 = vmatprep.subr.mxu0 0.0
    %3980 = vmatpush1.msra.mxu0 0.0
    %3981 = vmatprep.subr.mxu0 0.0
    %3982 = vmatpush1.msra.mxu0 0.0
    %3983 = vmatprep.subr.mxu0 0.0
    %3984 = vmatpush1.msra.mxu0 0.0
    %3985 = vmatprep.subr.mxu0 0.0
    %3986 = vmatpush1.msra.mxu0 0.0
    %3987 = vmatprep.subr.mxu0 0.0
    %3988 = vmatpush1.msra.mxu0 0.0
    %3989 = vmatprep.subr.mxu0 0.0
    %3990 = vmatpush1.msra.mxu0 0.0
    %3991 = vmatprep.subr.mxu0 0.0
    %3992 = vmatpush1.msra.mxu0 0.0
    %3993 = vmatprep.subr.mxu0 0.0
    %3994 = vmatpush1.msra.mxu0 0.0
    %3995 = vmatprep.subr.mxu0 0.0
    %3996 = vmatpush1.msra.mxu0 0.0
    %3997 = vmatprep.subr.mxu0 0.0
    %3998 = vmatpush1.msra.mxu0 0.0
    %3999 = vmatprep.subr.mxu0 0.0
    %4000 = vmatpush1.msra.mxu0 0.0
    %4001 = vmatprep.subr.mxu0 0.0
    %4002 = vmatpush1.msra.mxu0 0.0
    %4003 = vmatprep.subr.mxu0 0.0
    %4004 = vmatpush1.msra.mxu0 0.0
    %4005 = vmatprep.subr.mxu0 0.0
    %4006 = vmatpush1.msra.mxu0 0.0
    %4007 = vmatprep.subr.mxu0 0.0
    %4008 = vmatpush1.msra.mxu0 0.0
    %4009 = vmatprep.subr.mxu0 0.0
    %4010 = vmatpush1.msra.mxu0 0.0
    %4011 = vmatprep.subr.mxu0 0.0
    %4012 = vmatpush1.msra.mxu0 0.0
    %4013 = vmatprep.subr.mxu0 0.0
    %4014 = vmatpush1.msra.mxu0 0.0
    %4015 = vmatprep.subr.mxu0 0.0
    %4016 = vmatpush1.msra.mxu0 0.0
    %4017 = vmatprep.mubr.f32.mxu0 0.0
    %4018 = vmatmul.mubr.f32.gmra.mrb[0].mxu0 %v3949
    %v4019 = vpop.f32.mrb[0].mxu0
    %v4020 = vadd.f32 0.0, %v4019
    %v4021 = vpop.f32.mrb[0].mxu0
    %4022 = vmatprep.mubr.f32.mxu0 0.0
    %4023 = vmatmul.mubr.f32.gmra.mrb[0].mxu0 %v3951
    %v4024 = vpop.f32.mrb[0].mxu0
    %v4025 = vadd.f32 0.0, %v4024
    %v4026 = vpop.f32.mrb[0].mxu0
    %4027 = vdwg.mxu0
    %v4028 = vadd.f32 %v3935, %v4020
    %v4029 = vadd.f32 %v3940, %v4025
    %4032 = vrot.lane.b32.xlu0 %v3769, 104
    %v4033 = vpop.permute.xlu0 %4032
    %4034 = vrot.lane.b32.xlu0 %v3774, 104
    %v4035 = vpop.permute.xlu0 %4034
    %v4036 = vsel %vm103, %v4033, 0
    %v4038 = vsel %vm103, %v4035, 0
    %4040 = vmatprep.subr.mxu0 0.0
    %4041 = vmatpush1.msra.mxu0 %v3407
    %4042 = vmatprep.subr.mxu0 0.0
    %4043 = vmatpush1.msra.mxu0 0.0
    %4044 = vmatprep.subr.mxu0 0.0
    %4045 = vmatpush1.msra.mxu0 0.0
    %4046 = vmatprep.subr.mxu0 0.0
    %4047 = vmatpush1.msra.mxu0 0.0
    %4048 = vmatprep.subr.mxu0 0.0
    %4049 = vmatpush1.msra.mxu0 0.0
    %4050 = vmatprep.subr.mxu0 0.0
    %4051 = vmatpush1.msra.mxu0 0.0
    %4052 = vmatprep.subr.mxu0 0.0
    %4053 = vmatpush1.msra.mxu0 0.0
    %4054 = vmatprep.subr.mxu0 0.0
    %4055 = vmatpush1.msra.mxu0 0.0
    %4056 = vmatprep.subr.mxu0 0.0
    %4057 = vmatpush1.msra.mxu0 0.0
    %4058 = vmatprep.subr.mxu0 0.0
    %4059 = vmatpush1.msra.mxu0 0.0
    %4060 = vmatprep.subr.mxu0 0.0
    %4061 = vmatpush1.msra.mxu0 0.0
    %4062 = vmatprep.subr.mxu0 0.0
    %4063 = vmatpush1.msra.mxu0 0.0
    %4064 = vmatprep.subr.mxu0 0.0
    %4065 = vmatpush1.msra.mxu0 0.0
    %4066 = vmatprep.subr.mxu0 0.0
    %4067 = vmatpush1.msra.mxu0 0.0
    %4068 = vmatprep.subr.mxu0 0.0
    %4069 = vmatpush1.msra.mxu0 0.0
    %4070 = vmatprep.subr.mxu0 0.0
    %4071 = vmatpush1.msra.mxu0 0.0
    %4072 = vmatprep.subr.mxu0 0.0
    %4073 = vmatpush1.msra.mxu0 0.0
    %4074 = vmatprep.subr.mxu0 0.0
    %4075 = vmatpush1.msra.mxu0 0.0
    %4076 = vmatprep.subr.mxu0 0.0
    %4077 = vmatpush1.msra.mxu0 0.0
    %4078 = vmatprep.subr.mxu0 0.0
    %4079 = vmatpush1.msra.mxu0 0.0
    %4080 = vmatprep.subr.mxu0 0.0
    %4081 = vmatpush1.msra.mxu0 0.0
    %4082 = vmatprep.subr.mxu0 0.0
    %4083 = vmatpush1.msra.mxu0 0.0
    %4084 = vmatprep.subr.mxu0 0.0
    %4085 = vmatpush1.msra.mxu0 0.0
    %4086 = vmatprep.subr.mxu0 0.0
    %4087 = vmatpush1.msra.mxu0 0.0
    %4088 = vmatprep.subr.mxu0 0.0
    %4089 = vmatpush1.msra.mxu0 0.0
    %4090 = vmatprep.subr.mxu0 0.0
    %4091 = vmatpush1.msra.mxu0 0.0
    %4092 = vmatprep.subr.mxu0 0.0
    %4093 = vmatpush1.msra.mxu0 0.0
    %4094 = vmatprep.subr.mxu0 0.0
    %4095 = vmatpush1.msra.mxu0 0.0
    %4096 = vmatprep.subr.mxu0 0.0
    %4097 = vmatpush1.msra.mxu0 0.0
    %4098 = vmatprep.subr.mxu0 0.0
    %4099 = vmatpush1.msra.mxu0 0.0
    %4100 = vmatprep.subr.mxu0 0.0
    %4101 = vmatpush1.msra.mxu0 0.0
    %4102 = vmatprep.subr.mxu0 0.0
    %4103 = vmatpush1.msra.mxu0 0.0
    %4104 = vmatprep.mubr.f32.mxu0 0.0
    %4105 = vmatmul.mubr.f32.gmra.mrb[0].mxu0 %v4036
    %v4106 = vpop.f32.mrb[0].mxu0
    %v4107 = vadd.f32 0.0, %v4106
    %v4108 = vpop.f32.mrb[0].mxu0
    %4109 = vmatprep.mubr.f32.mxu0 0.0
    %4110 = vmatmul.mubr.f32.gmra.mrb[0].mxu0 %v4038
    %v4111 = vpop.f32.mrb[0].mxu0
    %v4112 = vadd.f32 0.0, %v4111
    %v4113 = vpop.f32.mrb[0].mxu0
    %4114 = vdwg.mxu0
    %v4115 = vadd.f32 %v4028, %v4107
    %v4116 = vadd.f32 %v4029, %v4112
    %v4117 = vlaneseq
    %v4118 = vshrl.u32 %v4117, 7
    %v4119 = vsub.s32 0, %v4118
    %v4120 = vrot.slane %v3408, %v4119
    %v4121 = vadd.f32 %v4115, %v4120
    %v4122 = vadd.f32 %v4116, %v4120
    %v4123 = vadd.f32 %v3312, %v4121
    %v4124 = vadd.f32 %v3313, %v4122
    %v4125 = vld [vmem:[#allocation6 + $0x7f] sm:$0x1]
    %v4126 = vld [vmem:[#allocation6 + $0x80] sm:$0x1]
    %v4127 = vsel %vm199, %v4123, 0.0
    %4128 = vadd.xlane.f32.xlu0 %v4127
    %v4129 = vpop.xlane.xlu0 %4128
    %v4130 = vsel %vm199, %v4124, 0.0
    %4131 = vadd.xlane.f32.xlu0 %v4130
    %v4132 = vpop.xlane.xlu0 %4131
    %v4133 = vmul.f32 %v4129, %v1010
    %v4134 = vmul.f32 %v4132, %v1010
    %v4135 = vmul.f32 %v4123, %v4123
    %v4136 = vmul.f32 %v4124, %v4124
    %v4137 = vsel %vm199, %v4135, 0.0
    %4138 = vadd.xlane.f32.xlu0 %v4137
    %v4139 = vpop.xlane.xlu0 %4138
    %v4140 = vsel %vm199, %v4136, 0.0
    %4141 = vadd.xlane.f32.xlu0 %v4140
    %v4142 = vpop.xlane.xlu0 %4141
    %v4143 = vmul.f32 %v4139, %v1010
    %v4144 = vmul.f32 %v4142, %v1010
    %v4145 = vsub.f32 %v4123, %v4133
    %v4146 = vsub.f32 %v4124, %v4134
    %v4147 = vmul.f32 %v4133, %v4133
    %v4148 = vmul.f32 %v4134, %v4134
    %v4149 = vsub.f32 %v4143, %v4147
    %v4150 = vsub.f32 %v4144, %v4148
    %v4151 = vadd.f32 %v4149, 1e-05
    %v4152 = vadd.f32 %v4150, 1e-05
    %v4153 = vrsqrt.pop %v4151
    %v4154 = vrsqrt.pop %v4152
    %v4155 = vmul.f32 %v4145, %v4153
    %v4156 = vmul.f32 %v4146, %v4154
    %v4157 = vlaneseq
    %v4158 = vshrl.u32 %v4157, 7
    %v4159 = vsub.s32 0, %v4158
    %v4160 = vrot.slane %v4125, %v4159
    %v4161 = vmul.f32 %v4155, %v4160
    %v4162 = vmul.f32 %v4156, %v4160
    %v4163 = vlaneseq
    %v4164 = vshrl.u32 %v4163, 7
    %v4165 = vsub.s32 0, %v4164
    %v4166 = vrot.slane %v4126, %v4165
    %v4167 = vadd.f32 %v4161, %v4166
    %v4168 = vadd.f32 %v4162, %v4166
    %v4169 = vld [vmem:[#allocation4 + $0x1e8] sm:$0xff]
    %v4170 = vld [vmem:[#allocation4 + $0x1f0] sm:$0xff]
    %v4171 = vld [vmem:[#allocation4 + $0x1f8] sm:$0xff]
    %v4172 = vld [vmem:[#allocation4 + $0x200] sm:$0xff]
    %v4173 = vld [vmem:[#allocation6 + $0x7b] sm:$0x1]
    %v4174 = vld [vmem:[#allocation4 + $0x208] sm:$0xff]
    %v4175 = vld [vmem:[#allocation4 + $0x210] sm:$0xff]
    %v4176 = vld [vmem:[#allocation4 + $0x218] sm:$0xff]
    %v4177 = vld [vmem:[#allocation4 + $0x220] sm:$0xff]
    %v4178 = vld [vmem:[#allocation4 + $0x228] sm:$0xff]
    %v4179 = vld [vmem:[#allocation4 + $0x230] sm:$0xff]
    %v4180 = vld [vmem:[#allocation4 + $0x238] sm:$0xff]
    %v4181 = vld [vmem:[#allocation4 + $0x240] sm:$0xff]
    %v4182 = vld [vmem:[#allocation6 + $0x7c] sm:$0x1]
    %v4183 = vlaneseq
    %v4184 = vshrl.u32 %v4183, 7
    %v4185 = vsub.s32 0, %v4184
    %v4186 = vrot.slane %v4173, %v4185
    %v4188 = vsel %vm199, %v4167, 0
    %v4191 = vsel %vm199, %v4168, 0
    %4193 = vmatprep.subr.mxu0 0.0
    %4194 = vmatpush1.msra.mxu0 %v4169
    %4195 = vmatprep.subr.mxu0 0.0
    %4196 = vmatpush1.msra.mxu0 %v4170
    %4197 = vmatprep.subr.mxu0 0.0
    %4198 = vmatpush1.msra.mxu0 %v4171
    %4199 = vmatprep.subr.mxu0 0.0
    %4200 = vmatpush1.msra.mxu0 %v4172
    %4201 = vmatprep.subr.mxu0 0.0
    %4202 = vmatpush1.msra.mxu0 0.0
    %4203 = vmatprep.subr.mxu0 0.0
    %4204 = vmatpush1.msra.mxu0 0.0
    %4205 = vmatprep.subr.mxu0 0.0
    %4206 = vmatpush1.msra.mxu0 0.0
    %4207 = vmatprep.subr.mxu0 0.0
    %4208 = vmatpush1.msra.mxu0 0.0
    %4209 = vmatprep.subr.mxu0 0.0
    %4210 = vmatpush1.msra.mxu0 0.0
    %4211 = vmatprep.subr.mxu0 0.0
    %4212 = vmatpush1.msra.mxu0 0.0
    %4213 = vmatprep.subr.mxu0 0.0
    %4214 = vmatpush1.msra.mxu0 0.0
    %4215 = vmatprep.subr.mxu0 0.0
    %4216 = vmatpush1.msra.mxu0 0.0
    %4217 = vmatprep.subr.mxu0 0.0
    %4218 = vmatpush1.msra.mxu0 0.0
    %4219 = vmatprep.subr.mxu0 0.0
    %4220 = vmatpush1.msra.mxu0 0.0
    %4221 = vmatprep.subr.mxu0 0.0
    %4222 = vmatpush1.msra.mxu0 0.0
    %4223 = vmatprep.subr.mxu0 0.0
    %4224 = vmatpush1.msra.mxu0 0.0
    %4225 = vmatprep.subr.mxu0 0.0
    %4226 = vmatpush1.msra.mxu0 0.0
    %4227 = vmatprep.subr.mxu0 0.0
    %4228 = vmatpush1.msra.mxu0 0.0
    %4229 = vmatprep.subr.mxu0 0.0
    %4230 = vmatpush1.msra.mxu0 0.0
    %4231 = vmatprep.subr.mxu0 0.0
    %4232 = vmatpush1.msra.mxu0 0.0
    %4233 = vmatprep.subr.mxu0 0.0
    %4234 = vmatpush1.msra.mxu0 0.0
    %4235 = vmatprep.subr.mxu0 0.0
    %4236 = vmatpush1.msra.mxu0 0.0
    %4237 = vmatprep.subr.mxu0 0.0
    %4238 = vmatpush1.msra.mxu0 0.0
    %4239 = vmatprep.subr.mxu0 0.0
    %4240 = vmatpush1.msra.mxu0 0.0
    %4241 = vmatprep.subr.mxu0 0.0
    %4242 = vmatpush1.msra.mxu0 0.0
    %4243 = vmatprep.subr.mxu0 0.0
    %4244 = vmatpush1.msra.mxu0 0.0
    %4245 = vmatprep.subr.mxu0 0.0
    %4246 = vmatpush1.msra.mxu0 0.0
    %4247 = vmatprep.subr.mxu0 0.0
    %4248 = vmatpush1.msra.mxu0 0.0
    %4249 = vmatprep.subr.mxu0 0.0
    %4250 = vmatpush1.msra.mxu0 0.0
    %4251 = vmatprep.subr.mxu0 0.0
    %4252 = vmatpush1.msra.mxu0 0.0
    %4253 = vmatprep.subr.mxu0 0.0
    %4254 = vmatpush1.msra.mxu0 0.0
    %4255 = vmatprep.subr.mxu0 0.0
    %4256 = vmatpush1.msra.mxu0 0.0
    %4257 = vmatprep.mubr.f32.mxu0 0.0
    %4258 = vmatmul.mubr.f32.gmra.mrb[0].mxu0 %v4188
    %v4259 = vpop.f32.mrb[0].mxu0
    %v4260 = vadd.f32 %v4186, %v4259
    %v4261 = vpop.f32.mrb[0].mxu0
    %4262 = vmatprep.mubr.f32.mxu0 0.0
    %4263 = vmatmul.mubr.f32.gmra.mrb[0].mxu0 %v4191
    %v4264 = vpop.f32.mrb[0].mxu0
    %v4265 = vadd.f32 %v4186, %v4264
    %v4266 = vpop.f32.mrb[0].mxu0
    %4267 = vdwg.mxu0
    %v4268 = vmax.f32 %v4260, 0.0
    %v4269 = vmax.f32 %v4265, 0.0
    %v4270 = vlaneseq
    %v4271 = vshrl.u32 %v4270, 7
    %v4272 = vsub.s32 0, %v4271
    %v4273 = vrot.slane %v4182, %v4272
    %v4275 = vsel %vm1152, %v4268, 0
    %v4278 = vsel %vm1152, %v4269, 0
    %4280 = vmatprep.subr.mxu0 0.0
    %4281 = vmatpush1.msra.mxu0 %v4174
    %4282 = vmatprep.subr.mxu0 0.0
    %4283 = vmatpush1.msra.mxu0 %v4175
    %4284 = vmatprep.subr.mxu0 0.0
    %4285 = vmatpush1.msra.mxu0 %v4176
    %4286 = vmatprep.subr.mxu0 0.0
    %4287 = vmatpush1.msra.mxu0 %v4177
    %4288 = vmatprep.subr.mxu0 0.0
    %4289 = vmatpush1.msra.mxu0 %v4178
    %4290 = vmatprep.subr.mxu0 0.0
    %4291 = vmatpush1.msra.mxu0 %v4179
    %4292 = vmatprep.subr.mxu0 0.0
    %4293 = vmatpush1.msra.mxu0 %v4180
    %4294 = vmatprep.subr.mxu0 0.0
    %4295 = vmatpush1.msra.mxu0 %v4181
    %4296 = vmatprep.subr.mxu0 0.0
    %4297 = vmatpush1.msra.mxu0 0.0
    %4298 = vmatprep.subr.mxu0 0.0
    %4299 = vmatpush1.msra.mxu0 0.0
    %4300 = vmatprep.subr.mxu0 0.0
    %4301 = vmatpush1.msra.mxu0 0.0
    %4302 = vmatprep.subr.mxu0 0.0
    %4303 = vmatpush1.msra.mxu0 0.0
    %4304 = vmatprep.subr.mxu0 0.0
    %4305 = vmatpush1.msra.mxu0 0.0
    %4306 = vmatprep.subr.mxu0 0.0
    %4307 = vmatpush1.msra.mxu0 0.0
    %4308 = vmatprep.subr.mxu0 0.0
    %4309 = vmatpush1.msra.mxu0 0.0
    %4310 = vmatprep.subr.mxu0 0.0
    %4311 = vmatpush1.msra.mxu0 0.0
    %4312 = vmatprep.subr.mxu0 0.0
    %4313 = vmatpush1.msra.mxu0 0.0
    %4314 = vmatprep.subr.mxu0 0.0
    %4315 = vmatpush1.msra.mxu0 0.0
    %4316 = vmatprep.subr.mxu0 0.0
    %4317 = vmatpush1.msra.mxu0 0.0
    %4318 = vmatprep.subr.mxu0 0.0
    %4319 = vmatpush1.msra.mxu0 0.0
    %4320 = vmatprep.subr.mxu0 0.0
    %4321 = vmatpush1.msra.mxu0 0.0
    %4322 = vmatprep.subr.mxu0 0.0
    %4323 = vmatpush1.msra.mxu0 0.0
    %4324 = vmatprep.subr.mxu0 0.0
    %4325 = vmatpush1.msra.mxu0 0.0
    %4326 = vmatprep.subr.mxu0 0.0
    %4327 = vmatpush1.msra.mxu0 0.0
    %4328 = vmatprep.subr.mxu0 0.0
    %4329 = vmatpush1.msra.mxu0 0.0
    %4330 = vmatprep.subr.mxu0 0.0
    %4331 = vmatpush1.msra.mxu0 0.0
    %4332 = vmatprep.subr.mxu0 0.0
    %4333 = vmatpush1.msra.mxu0 0.0
    %4334 = vmatprep.subr.mxu0 0.0
    %4335 = vmatpush1.msra.mxu0 0.0
    %4336 = vmatprep.subr.mxu0 0.0
    %4337 = vmatpush1.msra.mxu0 0.0
    %4338 = vmatprep.subr.mxu0 0.0
    %4339 = vmatpush1.msra.mxu0 0.0
    %4340 = vmatprep.subr.mxu0 0.0
    %4341 = vmatpush1.msra.mxu0 0.0
    %4342 = vmatprep.subr.mxu0 0.0
    %4343 = vmatpush1.msra.mxu0 0.0
    %4344 = vmatprep.mubr.f32.mxu0 0.0
    %4345 = vmatmul.mubr.f32.gmra.mrb[0].mxu0 %v4275
    %v4346 = vpop.f32.mrb[0].mxu0
    %v4347 = vadd.f32 %v4273, %v4346
    %v4348 = vpop.f32.mrb[0].mxu0
    %4349 = vmatprep.mubr.f32.mxu0 0.0
    %4350 = vmatmul.mubr.f32.gmra.mrb[0].mxu0 %v4278
    %v4351 = vpop.f32.mrb[0].mxu0
    %v4352 = vadd.f32 %v4273, %v4351
    %v4353 = vpop.f32.mrb[0].mxu0
    %4354 = vdwg.mxu0
    %v4355 = vadd.f32 %v4167, %v4347
    %v4356 = vadd.f32 %v4168, %v4352
    %v4357 = vld [vmem:[#allocation6 + $0x81] sm:$0x1]
    %v4358 = vld [vmem:[#allocation6 + $0x82] sm:$0x1]
    %v4359 = vsel %vm199, %v4355, 0.0
    %4360 = vadd.xlane.f32.xlu0 %v4359
    %v4361 = vpop.xlane.xlu0 %4360
    %v4362 = vsel %vm199, %v4356, 0.0
    %4363 = vadd.xlane.f32.xlu0 %v4362
    %v4364 = vpop.xlane.xlu0 %4363
    %v4365 = vmul.f32 %v4361, %v1010
    %v4366 = vmul.f32 %v4364, %v1010
    %v4367 = vmul.f32 %v4355, %v4355
    %v4368 = vmul.f32 %v4356, %v4356
    %v4369 = vsel %vm199, %v4367, 0.0
    %4370 = vadd.xlane.f32.xlu0 %v4369
    %v4371 = vpop.xlane.xlu0 %4370
    %v4372 = vsel %vm199, %v4368, 0.0
    %4373 = vadd.xlane.f32.xlu0 %v4372
    %v4374 = vpop.xlane.xlu0 %4373
    %v4375 = vmul.f32 %v4371, %v1010
    %v4376 = vmul.f32 %v4374, %v1010
    %v4377 = vsub.f32 %v4355, %v4365
    %v4378 = vsub.f32 %v4356, %v4366
    %v4379 = vmul.f32 %v4365, %v4365
    %v4380 = vmul.f32 %v4366, %v4366
    %v4381 = vsub.f32 %v4375, %v4379
    %v4382 = vsub.f32 %v4376, %v4380
    %v4383 = vadd.f32 %v4381, 1e-05
    %v4384 = vadd.f32 %v4382, 1e-05
    %v4385 = vrsqrt.pop %v4383
    %v4386 = vrsqrt.pop %v4384
    %v4387 = vmul.f32 %v4377, %v4385
    %v4388 = vmul.f32 %v4378, %v4386
    %v4389 = vlaneseq
    %v4390 = vshrl.u32 %v4389, 7
    %v4391 = vsub.s32 0, %v4390
    %v4392 = vrot.slane %v4357, %v4391
    %v4393 = vmul.f32 %v4387, %v4392
    %v4394 = vmul.f32 %v4388, %v4392
    %v4395 = vlaneseq
    %v4396 = vshrl.u32 %v4395, 7
    %v4397 = vsub.s32 0, %v4396
    %v4398 = vrot.slane %v4358, %v4397
    %v4399 = vadd.f32 %v4393, %v4398
    %v4400 = vadd.f32 %v4394, %v4398
    %v4401 = vld [vmem:[#allocation4 + $0x248] sm:$0xff]
    %v4402 = vld [vmem:[#allocation4 + $0x250] sm:$0xff]
    %v4403 = vld [vmem:[#allocation4 + $0x258] sm:$0xff]
    %v4404 = vld [vmem:[#allocation4 + $0x260] sm:$0xff]
    %v4405 = vld [vmem:[#allocation6 + $0x83] sm:$0x1]
    %v4406 = vld [vmem:[#allocation4 + $0x268] sm:$0xff]
    %v4407 = vld [vmem:[#allocation4 + $0x270] sm:$0xff]
    %v4408 = vld [vmem:[#allocation4 + $0x278] sm:$0xff]
    %v4409 = vld [vmem:[#allocation4 + $0x280] sm:$0xff]
    %v4410 = vld [vmem:[#allocation6 + $0x84] sm:$0x1]
    %v4411 = vlaneseq
    %v4412 = vshrl.u32 %v4411, 7
    %v4413 = vsub.s32 0, %v4412
    %v4414 = vrot.slane %v4405, %v4413
    %v4416 = vsel %vm199, %v4399, 0
    %v4419 = vsel %vm199, %v4400, 0
    %4421 = vmatprep.subr.mxu0 0.0
    %4422 = vmatpush1.msra.mxu0 %v4401
    %4423 = vmatprep.subr.mxu0 0.0
    %4424 = vmatpush1.msra.mxu0 %v4402
    %4425 = vmatprep.subr.mxu0 0.0
    %4426 = vmatpush1.msra.mxu0 %v4403
    %4427 = vmatprep.subr.mxu0 0.0
    %4428 = vmatpush1.msra.mxu0 %v4404
    %4429 = vmatprep.subr.mxu0 0.0
    %4430 = vmatpush1.msra.mxu0 0.0
    %4431 = vmatprep.subr.mxu0 0.0
    %4432 = vmatpush1.msra.mxu0 0.0
    %4433 = vmatprep.subr.mxu0 0.0
    %4434 = vmatpush1.msra.mxu0 0.0
    %4435 = vmatprep.subr.mxu0 0.0
    %4436 = vmatpush1.msra.mxu0 0.0
    %4437 = vmatprep.subr.mxu0 0.0
    %4438 = vmatpush1.msra.mxu0 0.0
    %4439 = vmatprep.subr.mxu0 0.0
    %4440 = vmatpush1.msra.mxu0 0.0
    %4441 = vmatprep.subr.mxu0 0.0
    %4442 = vmatpush1.msra.mxu0 0.0
    %4443 = vmatprep.subr.mxu0 0.0
    %4444 = vmatpush1.msra.mxu0 0.0
    %4445 = vmatprep.subr.mxu0 0.0
    %4446 = vmatpush1.msra.mxu0 0.0
    %4447 = vmatprep.subr.mxu0 0.0
    %4448 = vmatpush1.msra.mxu0 0.0
    %4449 = vmatprep.subr.mxu0 0.0
    %4450 = vmatpush1.msra.mxu0 0.0
    %4451 = vmatprep.subr.mxu0 0.0
    %4452 = vmatpush1.msra.mxu0 0.0
    %4453 = vmatprep.subr.mxu0 0.0
    %4454 = vmatpush1.msra.mxu0 0.0
    %4455 = vmatprep.subr.mxu0 0.0
    %4456 = vmatpush1.msra.mxu0 0.0
    %4457 = vmatprep.subr.mxu0 0.0
    %4458 = vmatpush1.msra.mxu0 0.0
    %4459 = vmatprep.subr.mxu0 0.0
    %4460 = vmatpush1.msra.mxu0 0.0
    %4461 = vmatprep.subr.mxu0 0.0
    %4462 = vmatpush1.msra.mxu0 0.0
    %4463 = vmatprep.subr.mxu0 0.0
    %4464 = vmatpush1.msra.mxu0 0.0
    %4465 = vmatprep.subr.mxu0 0.0
    %4466 = vmatpush1.msra.mxu0 0.0
    %4467 = vmatprep.subr.mxu0 0.0
    %4468 = vmatpush1.msra.mxu0 0.0
    %4469 = vmatprep.subr.mxu0 0.0
    %4470 = vmatpush1.msra.mxu0 0.0
    %4471 = vmatprep.subr.mxu0 0.0
    %4472 = vmatpush1.msra.mxu0 0.0
    %4473 = vmatprep.subr.mxu0 0.0
    %4474 = vmatpush1.msra.mxu0 0.0
    %4475 = vmatprep.subr.mxu0 0.0
    %4476 = vmatpush1.msra.mxu0 0.0
    %4477 = vmatprep.subr.mxu0 0.0
    %4478 = vmatpush1.msra.mxu0 0.0
    %4479 = vmatprep.subr.mxu0 0.0
    %4480 = vmatpush1.msra.mxu0 0.0
    %4481 = vmatprep.subr.mxu0 0.0
    %4482 = vmatpush1.msra.mxu0 0.0
    %4483 = vmatprep.subr.mxu0 0.0
    %4484 = vmatpush1.msra.mxu0 0.0
    %4485 = vmatprep.mubr.f32.mxu0 0.0
    %4486 = vmatmul.mubr.f32.gmra.mrb[0].mxu0 %v4416
    %v4487 = vpop.f32.mrb[0].mxu0
    %v4488 = vadd.f32 %v4414, %v4487
    %v4489 = vpop.f32.mrb[0].mxu0
    %4490 = vmatprep.mubr.f32.mxu0 0.0
    %4491 = vmatmul.mubr.f32.gmra.mrb[0].mxu0 %v4419
    %v4492 = vpop.f32.mrb[0].mxu0
    %v4493 = vadd.f32 %v4414, %v4492
    %v4494 = vpop.f32.mrb[0].mxu0
    %4495 = vdwg.mxu0
    %v4496 = vmul.f32 %v4488, 0.35355338
    %v4497 = vmul.f32 %v4493, 0.35355338
    %v4498 = vmul.f32 %v4496, %v86
    %v4499 = vmul.f32 %v4497, %v86
    %v4500 = vmul.f32 %v4496, %v90
    %v4501 = vmul.f32 %v4497, %v90
    %v4502 = vmul.f32 %v4496, %v94
    %v4503 = vmul.f32 %v4497, %v94
    %v4504 = vmul.f32 %v4496, %v98
    %v4505 = vmul.f32 %v4497, %v98
    %4508 = vrot.lane.b32.xlu0 %v4488, 96
    %v4509 = vpop.permute.xlu0 %4508
    %4510 = vrot.lane.b32.xlu0 %v4493, 96
    %v4511 = vpop.permute.xlu0 %4510
    %v4513 = vsel %vm199, %v4498, 0
    %v4516 = vsel %vm199, %v4499, 0
    %v4519 = vsel %vm199, %v4500, 0
    %v4522 = vsel %vm199, %v4501, 0
    %v4525 = vsel %vm199, %v4502, 0
    %v4528 = vsel %vm199, %v4503, 0
    %v4531 = vsel %vm199, %v4504, 0
    %v4534 = vsel %vm199, %v4505, 0
    %v4536 = vsel %vm199, %v4509, 0
    %v4538 = vsel %vm199, %v4511, 0
    %4540 = vmatprep.subr.mxu0 0.0
    %4541 = vmatpush1.xpose.msra.mxu0 %v4536
    %4542 = vmatprep.subr.mxu0 0.0
    %4543 = vmatpush1.xpose.msra.mxu0 %v4538
    %4544 = vmatprep.subr.mxu0 0.0
    %4545 = vmatpush1.xpose.msra.mxu0 0.0
    %4546 = vmatprep.subr.mxu0 0.0
    %4547 = vmatpush1.xpose.msra.mxu0 0.0
    %4548 = vmatprep.subr.mxu0 0.0
    %4549 = vmatpush1.xpose.msra.mxu0 0.0
    %4550 = vmatprep.subr.mxu0 0.0
    %4551 = vmatpush1.xpose.msra.mxu0 0.0
    %4552 = vmatprep.subr.mxu0 0.0
    %4553 = vmatpush1.xpose.msra.mxu0 0.0
    %4554 = vmatprep.subr.mxu0 0.0
    %4555 = vmatpush1.xpose.msra.mxu0 0.0
    %4556 = vmatprep.subr.mxu0 0.0
    %4557 = vmatpush1.xpose.msra.mxu0 0.0
    %4558 = vmatprep.subr.mxu0 0.0
    %4559 = vmatpush1.xpose.msra.mxu0 0.0
    %4560 = vmatprep.subr.mxu0 0.0
    %4561 = vmatpush1.xpose.msra.mxu0 0.0
    %4562 = vmatprep.subr.mxu0 0.0
    %4563 = vmatpush1.xpose.msra.mxu0 0.0
    %4564 = vmatprep.subr.mxu0 0.0
    %4565 = vmatpush1.xpose.msra.mxu0 0.0
    %4566 = vmatprep.subr.mxu0 0.0
    %4567 = vmatpush1.xpose.msra.mxu0 0.0
    %4568 = vmatprep.subr.mxu0 0.0
    %4569 = vmatpush1.xpose.msra.mxu0 0.0
    %4570 = vmatprep.subr.mxu0 0.0
    %4571 = vmatpush1.xpose.msra.mxu0 0.0
    %4572 = vmatprep.subr.mxu0 0.0
    %4573 = vmatpush1.xpose.msra.mxu0 0.0
    %4574 = vmatprep.subr.mxu0 0.0
    %4575 = vmatpush1.xpose.msra.mxu0 0.0
    %4576 = vmatprep.subr.mxu0 0.0
    %4577 = vmatpush1.xpose.msra.mxu0 0.0
    %4578 = vmatprep.subr.mxu0 0.0
    %4579 = vmatpush1.xpose.msra.mxu0 0.0
    %4580 = vmatprep.subr.mxu0 0.0
    %4581 = vmatpush1.xpose.msra.mxu0 0.0
    %4582 = vmatprep.subr.mxu0 0.0
    %4583 = vmatpush1.xpose.msra.mxu0 0.0
    %4584 = vmatprep.subr.mxu0 0.0
    %4585 = vmatpush1.xpose.msra.mxu0 0.0
    %4586 = vmatprep.subr.mxu0 0.0
    %4587 = vmatpush1.xpose.msra.mxu0 0.0
    %4588 = vmatprep.subr.mxu0 0.0
    %4589 = vmatpush1.xpose.msra.mxu0 0.0
    %4590 = vmatprep.subr.mxu0 0.0
    %4591 = vmatpush1.xpose.msra.mxu0 0.0
    %4592 = vmatprep.subr.mxu0 0.0
    %4593 = vmatpush1.xpose.msra.mxu0 0.0
    %4594 = vmatprep.subr.mxu0 0.0
    %4595 = vmatpush1.xpose.msra.mxu0 0.0
    %4596 = vmatprep.subr.mxu0 0.0
    %4597 = vmatpush1.xpose.msra.mxu0 0.0
    %4598 = vmatprep.subr.mxu0 0.0
    %4599 = vmatpush1.xpose.msra.mxu0 0.0
    %4600 = vmatprep.subr.mxu0 0.0
    %4601 = vmatpush1.xpose.msra.mxu0 0.0
    %4602 = vmatprep.subr.mxu0 0.0
    %4603 = vmatpush1.xpose.msra.mxu0 0.0
    %4604 = vmatprep.mubr.f32.mxu0 0.0
    %4605 = vmatmul.mubr.f32.gmra.mrb[0].mxu0 %v4513
    %v4606 = vpop.f32.mrb[0].mxu0
    %v4607 = vadd.f32 %v72, %v4606
    %v4608 = vpop.f32.mrb[0].mxu0
    %4609 = vmatprep.mubr.f32.mxu0 0.0
    %4610 = vmatmul.mubr.f32.gmra.mrb[0].mxu0 %v4516
    %v4611 = vpop.f32.mrb[0].mxu0
    %v4612 = vadd.f32 %v73, %v4611
    %v4613 = vpop.f32.mrb[0].mxu0
    %4614 = vmatprep.mubr.f32.mxu0 0.0
    %4615 = vmatmul.mubr.f32.gmra.mrb[0].mxu0 %v4519
    %v4616 = vpop.f32.mrb[0].mxu0
    %v4617 = vadd.f32 %v74, %v4616
    %v4618 = vpop.f32.mrb[0].mxu0
    %4619 = vmatprep.mubr.f32.mxu0 0.0
    %4620 = vmatmul.mubr.f32.gmra.mrb[0].mxu0 %v4522
    %v4621 = vpop.f32.mrb[0].mxu0
    %v4622 = vadd.f32 %v75, %v4621
    %v4623 = vpop.f32.mrb[0].mxu0
    %4624 = vmatprep.mubr.f32.mxu0 0.0
    %4625 = vmatmul.mubr.f32.gmra.mrb[0].mxu0 %v4525
    %v4626 = vpop.f32.mrb[0].mxu0
    %v4627 = vadd.f32 %v76, %v4626
    %v4628 = vpop.f32.mrb[0].mxu0
    %4629 = vmatprep.mubr.f32.mxu0 0.0
    %4630 = vmatmul.mubr.f32.gmra.mrb[0].mxu0 %v4528
    %v4631 = vpop.f32.mrb[0].mxu0
    %v4632 = vadd.f32 %v77, %v4631
    %v4633 = vpop.f32.mrb[0].mxu0
    %4634 = vmatprep.mubr.f32.mxu0 0.0
    %4635 = vmatmul.mubr.f32.gmra.mrb[0].mxu0 %v4531
    %v4636 = vpop.f32.mrb[0].mxu0
    %v4637 = vadd.f32 %v78, %v4636
    %v4638 = vpop.f32.mrb[0].mxu0
    %4639 = vmatprep.mubr.f32.mxu0 0.0
    %4640 = vmatmul.mubr.f32.gmra.mrb[0].mxu0 %v4534
    %v4641 = vpop.f32.mrb[0].mxu0
    %v4642 = vadd.f32 %v79, %v4641
    %v4643 = vpop.f32.mrb[0].mxu0
    %4644 = vdwg.mxu0
    %v4645 = vsel %vm430, %v4607, -inf
    %4646 = vmax.xlane.f32.xlu0 %v4645
    %v4647 = vpop.xlane.xlu0 %4646
    %v4648 = vsel %vm430, %v4612, -inf
    %4649 = vmax.xlane.f32.xlu0 %v4648
    %v4650 = vpop.xlane.xlu0 %4649
    %v4651 = vsel %vm430, %v4617, -inf
    %4652 = vmax.xlane.f32.xlu0 %v4651
    %v4653 = vpop.xlane.xlu0 %4652
    %v4654 = vsel %vm430, %v4622, -inf
    %4655 = vmax.xlane.f32.xlu0 %v4654
    %v4656 = vpop.xlane.xlu0 %4655
    %v4657 = vsel %vm430, %v4627, -inf
    %4658 = vmax.xlane.f32.xlu0 %v4657
    %v4659 = vpop.xlane.xlu0 %4658
    %v4660 = vsel %vm430, %v4632, -inf
    %4661 = vmax.xlane.f32.xlu0 %v4660
    %v4662 = vpop.xlane.xlu0 %4661
    %v4663 = vsel %vm430, %v4637, -inf
    %4664 = vmax.xlane.f32.xlu0 %v4663
    %v4665 = vpop.xlane.xlu0 %4664
    %v4666 = vsel %vm430, %v4642, -inf
    %4667 = vmax.xlane.f32.xlu0 %v4666
    %v4668 = vpop.xlane.xlu0 %4667
    %v4669 = vsub.f32 %v4607, %v4647
    %v4670 = vsub.f32 %v4612, %v4650
    %v4671 = vsub.f32 %v4617, %v4653
    %v4672 = vsub.f32 %v4622, %v4656
    %v4673 = vsub.f32 %v4627, %v4659
    %v4674 = vsub.f32 %v4632, %v4662
    %v4675 = vsub.f32 %v4637, %v4665
    %v4676 = vsub.f32 %v4642, %v4668
    %v4677 = vmul.f32 %v4669, 1.442695
    %v4678 = vpow.pop %v4677
    %v4679 = vmul.f32 %v4670, 1.442695
    %v4680 = vpow.pop %v4679
    %v4681 = vmul.f32 %v4671, 1.442695
    %v4682 = vpow.pop %v4681
    %v4683 = vmul.f32 %v4672, 1.442695
    %v4684 = vpow.pop %v4683
    %v4685 = vmul.f32 %v4673, 1.442695
    %v4686 = vpow.pop %v4685
    %v4687 = vmul.f32 %v4674, 1.442695
    %v4688 = vpow.pop %v4687
    %v4689 = vmul.f32 %v4675, 1.442695
    %v4690 = vpow.pop %v4689
    %v4691 = vmul.f32 %v4676, 1.442695
    %v4692 = vpow.pop %v4691
    %v4693 = vsel %vm430, %v4678, 0.0
    %4694 = vadd.xlane.f32.xlu0 %v4693
    %v4695 = vpop.xlane.xlu0 %4694
    %v4696 = vsel %vm430, %v4680, 0.0
    %4697 = vadd.xlane.f32.xlu0 %v4696
    %v4698 = vpop.xlane.xlu0 %4697
    %v4699 = vsel %vm430, %v4682, 0.0
    %4700 = vadd.xlane.f32.xlu0 %v4699
    %v4701 = vpop.xlane.xlu0 %4700
    %v4702 = vsel %vm430, %v4684, 0.0
    %4703 = vadd.xlane.f32.xlu0 %v4702
    %v4704 = vpop.xlane.xlu0 %4703
    %v4705 = vsel %vm430, %v4686, 0.0
    %4706 = vadd.xlane.f32.xlu0 %v4705
    %v4707 = vpop.xlane.xlu0 %4706
    %v4708 = vsel %vm430, %v4688, 0.0
    %4709 = vadd.xlane.f32.xlu0 %v4708
    %v4710 = vpop.xlane.xlu0 %4709
    %v4711 = vsel %vm430, %v4690, 0.0
    %4712 = vadd.xlane.f32.xlu0 %v4711
    %v4713 = vpop.xlane.xlu0 %4712
    %v4714 = vsel %vm430, %v4692, 0.0
    %4715 = vadd.xlane.f32.xlu0 %v4714
    %v4716 = vpop.xlane.xlu0 %4715
    %v4717 = vrcp.pop %v4695
    %v4718 = vrcp.pop %v4698
    %v4719 = vrcp.pop %v4701
    %v4720 = vrcp.pop %v4704
    %v4721 = vrcp.pop %v4707
    %v4722 = vrcp.pop %v4710
    %v4723 = vrcp.pop %v4713
    %v4724 = vrcp.pop %v4716
    %v4725 = vmul.f32 %v4678, %v4717
    %v4726 = vmul.f32 %v4680, %v4718
    %v4727 = vmul.f32 %v4682, %v4719
    %v4728 = vmul.f32 %v4684, %v4720
    %v4729 = vmul.f32 %v4686, %v4721
    %v4730 = vmul.f32 %v4688, %v4722
    %v4731 = vmul.f32 %v4690, %v4723
    %v4732 = vmul.f32 %v4692, %v4724
    %4733 = vrot.lane.b32.xlu0 %v4488, 64
    %v4734 = vpop.permute.xlu0 %4733
    %4735 = vrot.lane.b32.xlu0 %v4493, 64
    %v4736 = vpop.permute.xlu0 %4735
    %v4740 = vsel %vm430, %v4725, 0
    %v4743 = vsel %vm430, %v4726, 0
    %v4746 = vsel %vm430, %v4727, 0
    %v4749 = vsel %vm430, %v4728, 0
    %v4752 = vsel %vm430, %v4729, 0
    %v4755 = vsel %vm430, %v4730, 0
    %v4758 = vsel %vm430, %v4731, 0
    %v4761 = vsel %vm430, %v4732, 0
    %4763 = vmatprep.subr.mxu0 0.0
    %4764 = vmatpush1.msra.mxu0 %v4734
    %4765 = vmatprep.subr.mxu0 0.0
    %4766 = vmatpush1.msra.mxu0 %v4736
    %4767 = vmatprep.subr.mxu0 0.0
    %4768 = vmatpush1.msra.mxu0 0.0
    %4769 = vmatprep.subr.mxu0 0.0
    %4770 = vmatpush1.msra.mxu0 0.0
    %4771 = vmatprep.subr.mxu0 0.0
    %4772 = vmatpush1.msra.mxu0 0.0
    %4773 = vmatprep.subr.mxu0 0.0
    %4774 = vmatpush1.msra.mxu0 0.0
    %4775 = vmatprep.subr.mxu0 0.0
    %4776 = vmatpush1.msra.mxu0 0.0
    %4777 = vmatprep.subr.mxu0 0.0
    %4778 = vmatpush1.msra.mxu0 0.0
    %4779 = vmatprep.subr.mxu0 0.0
    %4780 = vmatpush1.msra.mxu0 0.0
    %4781 = vmatprep.subr.mxu0 0.0
    %4782 = vmatpush1.msra.mxu0 0.0
    %4783 = vmatprep.subr.mxu0 0.0
    %4784 = vmatpush1.msra.mxu0 0.0
    %4785 = vmatprep.subr.mxu0 0.0
    %4786 = vmatpush1.msra.mxu0 0.0
    %4787 = vmatprep.subr.mxu0 0.0
    %4788 = vmatpush1.msra.mxu0 0.0
    %4789 = vmatprep.subr.mxu0 0.0
    %4790 = vmatpush1.msra.mxu0 0.0
    %4791 = vmatprep.subr.mxu0 0.0
    %4792 = vmatpush1.msra.mxu0 0.0
    %4793 = vmatprep.subr.mxu0 0.0
    %4794 = vmatpush1.msra.mxu0 0.0
    %4795 = vmatprep.subr.mxu0 0.0
    %4796 = vmatpush1.msra.mxu0 0.0
    %4797 = vmatprep.subr.mxu0 0.0
    %4798 = vmatpush1.msra.mxu0 0.0
    %4799 = vmatprep.subr.mxu0 0.0
    %4800 = vmatpush1.msra.mxu0 0.0
    %4801 = vmatprep.subr.mxu0 0.0
    %4802 = vmatpush1.msra.mxu0 0.0
    %4803 = vmatprep.subr.mxu0 0.0
    %4804 = vmatpush1.msra.mxu0 0.0
    %4805 = vmatprep.subr.mxu0 0.0
    %4806 = vmatpush1.msra.mxu0 0.0
    %4807 = vmatprep.subr.mxu0 0.0
    %4808 = vmatpush1.msra.mxu0 0.0
    %4809 = vmatprep.subr.mxu0 0.0
    %4810 = vmatpush1.msra.mxu0 0.0
    %4811 = vmatprep.subr.mxu0 0.0
    %4812 = vmatpush1.msra.mxu0 0.0
    %4813 = vmatprep.subr.mxu0 0.0
    %4814 = vmatpush1.msra.mxu0 0.0
    %4815 = vmatprep.subr.mxu0 0.0
    %4816 = vmatpush1.msra.mxu0 0.0
    %4817 = vmatprep.subr.mxu0 0.0
    %4818 = vmatpush1.msra.mxu0 0.0
    %4819 = vmatprep.subr.mxu0 0.0
    %4820 = vmatpush1.msra.mxu0 0.0
    %4821 = vmatprep.subr.mxu0 0.0
    %4822 = vmatpush1.msra.mxu0 0.0
    %4823 = vmatprep.subr.mxu0 0.0
    %4824 = vmatpush1.msra.mxu0 0.0
    %4825 = vmatprep.subr.mxu0 0.0
    %4826 = vmatpush1.msra.mxu0 0.0
    %4827 = vmatprep.mubr.f32.mxu0 0.0
    %4828 = vmatmul.mubr.f32.gmra.mrb[0].mxu0 %v4740
    %v4829 = vpop.f32.mrb[0].mxu0
    %v4830 = vadd.f32 0.0, %v4829
    %v4831 = vpop.f32.mrb[0].mxu0
    %4832 = vmatprep.mubr.f32.mxu0 0.0
    %4833 = vmatmul.mubr.f32.gmra.mrb[0].mxu0 %v4743
    %v4834 = vpop.f32.mrb[0].mxu0
    %v4835 = vadd.f32 0.0, %v4834
    %v4836 = vpop.f32.mrb[0].mxu0
    %4837 = vmatprep.mubr.f32.mxu0 0.0
    %4838 = vmatmul.mubr.f32.gmra.mrb[0].mxu0 %v4746
    %v4839 = vpop.f32.mrb[0].mxu0
    %v4840 = vadd.f32 0.0, %v4839
    %v4841 = vpop.f32.mrb[0].mxu0
    %4842 = vmatprep.mubr.f32.mxu0 0.0
    %4843 = vmatmul.mubr.f32.gmra.mrb[0].mxu0 %v4749
    %v4844 = vpop.f32.mrb[0].mxu0
    %v4845 = vadd.f32 0.0, %v4844
    %v4846 = vpop.f32.mrb[0].mxu0
    %4847 = vmatprep.mubr.f32.mxu0 0.0
    %4848 = vmatmul.mubr.f32.gmra.mrb[0].mxu0 %v4752
    %v4849 = vpop.f32.mrb[0].mxu0
    %v4850 = vadd.f32 0.0, %v4849
    %v4851 = vpop.f32.mrb[0].mxu0
    %4852 = vmatprep.mubr.f32.mxu0 0.0
    %4853 = vmatmul.mubr.f32.gmra.mrb[0].mxu0 %v4755
    %v4854 = vpop.f32.mrb[0].mxu0
    %v4855 = vadd.f32 0.0, %v4854
    %v4856 = vpop.f32.mrb[0].mxu0
    %4857 = vmatprep.mubr.f32.mxu0 0.0
    %4858 = vmatmul.mubr.f32.gmra.mrb[0].mxu0 %v4758
    %v4859 = vpop.f32.mrb[0].mxu0
    %v4860 = vadd.f32 0.0, %v4859
    %v4861 = vpop.f32.mrb[0].mxu0
    %4862 = vmatprep.mubr.f32.mxu0 0.0
    %4863 = vmatmul.mubr.f32.gmra.mrb[0].mxu0 %v4761
    %v4864 = vpop.f32.mrb[0].mxu0
    %v4865 = vadd.f32 0.0, %v4864
    %v4866 = vpop.f32.mrb[0].mxu0
    %4867 = vdwg.mxu0
    %4870 = vrot.lane.b32.xlu0 %v4840, 120
    %v4871 = vpop.permute.xlu0 %4870
    %4872 = vrot.lane.b32.xlu0 %v4845, 120
    %v4873 = vpop.permute.xlu0 %4872
    %v4874 = vsel %vm103, %v4871, 0
    %v4876 = vsel %vm103, %v4873, 0
    %4878 = vmatprep.subr.mxu0 0.0
    %4879 = vmatpush1.msra.mxu0 %v4407
    %4880 = vmatprep.subr.mxu0 0.0
    %4881 = vmatpush1.msra.mxu0 0.0
    %4882 = vmatprep.subr.mxu0 0.0
    %4883 = vmatpush1.msra.mxu0 0.0
    %4884 = vmatprep.subr.mxu0 0.0
    %4885 = vmatpush1.msra.mxu0 0.0
    %4886 = vmatprep.subr.mxu0 0.0
    %4887 = vmatpush1.msra.mxu0 0.0
    %4888 = vmatprep.subr.mxu0 0.0
    %4889 = vmatpush1.msra.mxu0 0.0
    %4890 = vmatprep.subr.mxu0 0.0
    %4891 = vmatpush1.msra.mxu0 0.0
    %4892 = vmatprep.subr.mxu0 0.0
    %4893 = vmatpush1.msra.mxu0 0.0
    %4894 = vmatprep.subr.mxu0 0.0
    %4895 = vmatpush1.msra.mxu0 0.0
    %4896 = vmatprep.subr.mxu0 0.0
    %4897 = vmatpush1.msra.mxu0 0.0
    %4898 = vmatprep.subr.mxu0 0.0
    %4899 = vmatpush1.msra.mxu0 0.0
    %4900 = vmatprep.subr.mxu0 0.0
    %4901 = vmatpush1.msra.mxu0 0.0
    %4902 = vmatprep.subr.mxu0 0.0
    %4903 = vmatpush1.msra.mxu0 0.0
    %4904 = vmatprep.subr.mxu0 0.0
    %4905 = vmatpush1.msra.mxu0 0.0
    %4906 = vmatprep.subr.mxu0 0.0
    %4907 = vmatpush1.msra.mxu0 0.0
    %4908 = vmatprep.subr.mxu0 0.0
    %4909 = vmatpush1.msra.mxu0 0.0
    %4910 = vmatprep.subr.mxu0 0.0
    %4911 = vmatpush1.msra.mxu0 0.0
    %4912 = vmatprep.subr.mxu0 0.0
    %4913 = vmatpush1.msra.mxu0 0.0
    %4914 = vmatprep.subr.mxu0 0.0
    %4915 = vmatpush1.msra.mxu0 0.0
    %4916 = vmatprep.subr.mxu0 0.0
    %4917 = vmatpush1.msra.mxu0 0.0
    %4918 = vmatprep.subr.mxu0 0.0
    %4919 = vmatpush1.msra.mxu0 0.0
    %4920 = vmatprep.subr.mxu0 0.0
    %4921 = vmatpush1.msra.mxu0 0.0
    %4922 = vmatprep.subr.mxu0 0.0
    %4923 = vmatpush1.msra.mxu0 0.0
    %4924 = vmatprep.subr.mxu0 0.0
    %4925 = vmatpush1.msra.mxu0 0.0
    %4926 = vmatprep.subr.mxu0 0.0
    %4927 = vmatpush1.msra.mxu0 0.0
    %4928 = vmatprep.subr.mxu0 0.0
    %4929 = vmatpush1.msra.mxu0 0.0
    %4930 = vmatprep.subr.mxu0 0.0
    %4931 = vmatpush1.msra.mxu0 0.0
    %4932 = vmatprep.subr.mxu0 0.0
    %4933 = vmatpush1.msra.mxu0 0.0
    %4934 = vmatprep.subr.mxu0 0.0
    %4935 = vmatpush1.msra.mxu0 0.0
    %4936 = vmatprep.subr.mxu0 0.0
    %4937 = vmatpush1.msra.mxu0 0.0
    %4938 = vmatprep.subr.mxu0 0.0
    %4939 = vmatpush1.msra.mxu0 0.0
    %4940 = vmatprep.subr.mxu0 0.0
    %4941 = vmatpush1.msra.mxu0 0.0
    %4942 = vmatprep.mubr.f32.mxu0 0.0
    %4943 = vmatmul.mubr.f32.gmra.mrb[0].mxu0 %v4874
    %v4944 = vpop.f32.mrb[0].mxu0
    %v4945 = vadd.f32 0.0, %v4944
    %v4946 = vpop.f32.mrb[0].mxu0
    %4947 = vmatprep.mubr.f32.mxu0 0.0
    %4948 = vmatmul.mubr.f32.gmra.mrb[0].mxu0 %v4876
    %v4949 = vpop.f32.mrb[0].mxu0
    %v4950 = vadd.f32 0.0, %v4949
    %v4951 = vpop.f32.mrb[0].mxu0
    %4952 = vdwg.mxu0
    %v4954 = vsel %vm103, %v4830, 0
    %v4957 = vsel %vm103, %v4835, 0
    %4959 = vmatprep.subr.mxu0 0.0
    %4960 = vmatpush1.msra.mxu0 %v4406
    %4961 = vmatprep.subr.mxu0 0.0
    %4962 = vmatpush1.msra.mxu0 0.0
    %4963 = vmatprep.subr.mxu0 0.0
    %4964 = vmatpush1.msra.mxu0 0.0
    %4965 = vmatprep.subr.mxu0 0.0
    %4966 = vmatpush1.msra.mxu0 0.0
    %4967 = vmatprep.subr.mxu0 0.0
    %4968 = vmatpush1.msra.mxu0 0.0
    %4969 = vmatprep.subr.mxu0 0.0
    %4970 = vmatpush1.msra.mxu0 0.0
    %4971 = vmatprep.subr.mxu0 0.0
    %4972 = vmatpush1.msra.mxu0 0.0
    %4973 = vmatprep.subr.mxu0 0.0
    %4974 = vmatpush1.msra.mxu0 0.0
    %4975 = vmatprep.subr.mxu0 0.0
    %4976 = vmatpush1.msra.mxu0 0.0
    %4977 = vmatprep.subr.mxu0 0.0
    %4978 = vmatpush1.msra.mxu0 0.0
    %4979 = vmatprep.subr.mxu0 0.0
    %4980 = vmatpush1.msra.mxu0 0.0
    %4981 = vmatprep.subr.mxu0 0.0
    %4982 = vmatpush1.msra.mxu0 0.0
    %4983 = vmatprep.subr.mxu0 0.0
    %4984 = vmatpush1.msra.mxu0 0.0
    %4985 = vmatprep.subr.mxu0 0.0
    %4986 = vmatpush1.msra.mxu0 0.0
    %4987 = vmatprep.subr.mxu0 0.0
    %4988 = vmatpush1.msra.mxu0 0.0
    %4989 = vmatprep.subr.mxu0 0.0
    %4990 = vmatpush1.msra.mxu0 0.0
    %4991 = vmatprep.subr.mxu0 0.0
    %4992 = vmatpush1.msra.mxu0 0.0
    %4993 = vmatprep.subr.mxu0 0.0
    %4994 = vmatpush1.msra.mxu0 0.0
    %4995 = vmatprep.subr.mxu0 0.0
    %4996 = vmatpush1.msra.mxu0 0.0
    %4997 = vmatprep.subr.mxu0 0.0
    %4998 = vmatpush1.msra.mxu0 0.0
    %4999 = vmatprep.subr.mxu0 0.0
    %5000 = vmatpush1.msra.mxu0 0.0
    %5001 = vmatprep.subr.mxu0 0.0
    %5002 = vmatpush1.msra.mxu0 0.0
    %5003 = vmatprep.subr.mxu0 0.0
    %5004 = vmatpush1.msra.mxu0 0.0
    %5005 = vmatprep.subr.mxu0 0.0
    %5006 = vmatpush1.msra.mxu0 0.0
    %5007 = vmatprep.subr.mxu0 0.0
    %5008 = vmatpush1.msra.mxu0 0.0
    %5009 = vmatprep.subr.mxu0 0.0
    %5010 = vmatpush1.msra.mxu0 0.0
    %5011 = vmatprep.subr.mxu0 0.0
    %5012 = vmatpush1.msra.mxu0 0.0
    %5013 = vmatprep.subr.mxu0 0.0
    %5014 = vmatpush1.msra.mxu0 0.0
    %5015 = vmatprep.subr.mxu0 0.0
    %5016 = vmatpush1.msra.mxu0 0.0
    %5017 = vmatprep.subr.mxu0 0.0
    %5018 = vmatpush1.msra.mxu0 0.0
    %5019 = vmatprep.subr.mxu0 0.0
    %5020 = vmatpush1.msra.mxu0 0.0
    %5021 = vmatprep.subr.mxu0 0.0
    %5022 = vmatpush1.msra.mxu0 0.0
    %5023 = vmatprep.mubr.f32.mxu0 0.0
    %5024 = vmatmul.mubr.f32.gmra.mrb[0].mxu0 %v4954
    %v5025 = vpop.f32.mrb[0].mxu0
    %v5026 = vadd.f32 %v4945, %v5025
    %v5027 = vpop.f32.mrb[0].mxu0
    %5028 = vmatprep.mubr.f32.mxu0 0.0
    %5029 = vmatmul.mubr.f32.gmra.mrb[0].mxu0 %v4957
    %v5030 = vpop.f32.mrb[0].mxu0
    %v5031 = vadd.f32 %v4950, %v5030
    %v5032 = vpop.f32.mrb[0].mxu0
    %5033 = vdwg.mxu0
    %5036 = vrot.lane.b32.xlu0 %v4850, 112
    %v5037 = vpop.permute.xlu0 %5036
    %5038 = vrot.lane.b32.xlu0 %v4855, 112
    %v5039 = vpop.permute.xlu0 %5038
    %v5040 = vsel %vm103, %v5037, 0
    %v5042 = vsel %vm103, %v5039, 0
    %5044 = vmatprep.subr.mxu0 0.0
    %5045 = vmatpush1.msra.mxu0 %v4408
    %5046 = vmatprep.subr.mxu0 0.0
    %5047 = vmatpush1.msra.mxu0 0.0
    %5048 = vmatprep.subr.mxu0 0.0
    %5049 = vmatpush1.msra.mxu0 0.0
    %5050 = vmatprep.subr.mxu0 0.0
    %5051 = vmatpush1.msra.mxu0 0.0
    %5052 = vmatprep.subr.mxu0 0.0
    %5053 = vmatpush1.msra.mxu0 0.0
    %5054 = vmatprep.subr.mxu0 0.0
    %5055 = vmatpush1.msra.mxu0 0.0
    %5056 = vmatprep.subr.mxu0 0.0
    %5057 = vmatpush1.msra.mxu0 0.0
    %5058 = vmatprep.subr.mxu0 0.0
    %5059 = vmatpush1.msra.mxu0 0.0
    %5060 = vmatprep.subr.mxu0 0.0
    %5061 = vmatpush1.msra.mxu0 0.0
    %5062 = vmatprep.subr.mxu0 0.0
    %5063 = vmatpush1.msra.mxu0 0.0
    %5064 = vmatprep.subr.mxu0 0.0
    %5065 = vmatpush1.msra.mxu0 0.0
    %5066 = vmatprep.subr.mxu0 0.0
    %5067 = vmatpush1.msra.mxu0 0.0
    %5068 = vmatprep.subr.mxu0 0.0
    %5069 = vmatpush1.msra.mxu0 0.0
    %5070 = vmatprep.subr.mxu0 0.0
    %5071 = vmatpush1.msra.mxu0 0.0
    %5072 = vmatprep.subr.mxu0 0.0
    %5073 = vmatpush1.msra.mxu0 0.0
    %5074 = vmatprep.subr.mxu0 0.0
    %5075 = vmatpush1.msra.mxu0 0.0
    %5076 = vmatprep.subr.mxu0 0.0
    %5077 = vmatpush1.msra.mxu0 0.0
    %5078 = vmatprep.subr.mxu0 0.0
    %5079 = vmatpush1.msra.mxu0 0.0
    %5080 = vmatprep.subr.mxu0 0.0
    %5081 = vmatpush1.msra.mxu0 0.0
    %5082 = vmatprep.subr.mxu0 0.0
    %5083 = vmatpush1.msra.mxu0 0.0
    %5084 = vmatprep.subr.mxu0 0.0
    %5085 = vmatpush1.msra.mxu0 0.0
    %5086 = vmatprep.subr.mxu0 0.0
    %5087 = vmatpush1.msra.mxu0 0.0
    %5088 = vmatprep.subr.mxu0 0.0
    %5089 = vmatpush1.msra.mxu0 0.0
    %5090 = vmatprep.subr.mxu0 0.0
    %5091 = vmatpush1.msra.mxu0 0.0
    %5092 = vmatprep.subr.mxu0 0.0
    %5093 = vmatpush1.msra.mxu0 0.0
    %5094 = vmatprep.subr.mxu0 0.0
    %5095 = vmatpush1.msra.mxu0 0.0
    %5096 = vmatprep.subr.mxu0 0.0
    %5097 = vmatpush1.msra.mxu0 0.0
    %5098 = vmatprep.subr.mxu0 0.0
    %5099 = vmatpush1.msra.mxu0 0.0
    %5100 = vmatprep.subr.mxu0 0.0
    %5101 = vmatpush1.msra.mxu0 0.0
    %5102 = vmatprep.subr.mxu0 0.0
    %5103 = vmatpush1.msra.mxu0 0.0
    %5104 = vmatprep.subr.mxu0 0.0
    %5105 = vmatpush1.msra.mxu0 0.0
    %5106 = vmatprep.subr.mxu0 0.0
    %5107 = vmatpush1.msra.mxu0 0.0
    %5108 = vmatprep.mubr.f32.mxu0 0.0
    %5109 = vmatmul.mubr.f32.gmra.mrb[0].mxu0 %v5040
    %v5110 = vpop.f32.mrb[0].mxu0
    %v5111 = vadd.f32 0.0, %v5110
    %v5112 = vpop.f32.mrb[0].mxu0
    %5113 = vmatprep.mubr.f32.mxu0 0.0
    %5114 = vmatmul.mubr.f32.gmra.mrb[0].mxu0 %v5042
    %v5115 = vpop.f32.mrb[0].mxu0
    %v5116 = vadd.f32 0.0, %v5115
    %v5117 = vpop.f32.mrb[0].mxu0
    %5118 = vdwg.mxu0
    %v5119 = vadd.f32 %v5026, %v5111
    %v5120 = vadd.f32 %v5031, %v5116
    %5123 = vrot.lane.b32.xlu0 %v4860, 104
    %v5124 = vpop.permute.xlu0 %5123
    %5125 = vrot.lane.b32.xlu0 %v4865, 104
    %v5126 = vpop.permute.xlu0 %5125
    %v5127 = vsel %vm103, %v5124, 0
    %v5129 = vsel %vm103, %v5126, 0
    %5131 = vmatprep.subr.mxu0 0.0
    %5132 = vmatpush1.msra.mxu0 %v4409
    %5133 = vmatprep.subr.mxu0 0.0
    %5134 = vmatpush1.msra.mxu0 0.0
    %5135 = vmatprep.subr.mxu0 0.0
    %5136 = vmatpush1.msra.mxu0 0.0
    %5137 = vmatprep.subr.mxu0 0.0
    %5138 = vmatpush1.msra.mxu0 0.0
    %5139 = vmatprep.subr.mxu0 0.0
    %5140 = vmatpush1.msra.mxu0 0.0
    %5141 = vmatprep.subr.mxu0 0.0
    %5142 = vmatpush1.msra.mxu0 0.0
    %5143 = vmatprep.subr.mxu0 0.0
    %5144 = vmatpush1.msra.mxu0 0.0
    %5145 = vmatprep.subr.mxu0 0.0
    %5146 = vmatpush1.msra.mxu0 0.0
    %5147 = vmatprep.subr.mxu0 0.0
    %5148 = vmatpush1.msra.mxu0 0.0
    %5149 = vmatprep.subr.mxu0 0.0
    %5150 = vmatpush1.msra.mxu0 0.0
    %5151 = vmatprep.subr.mxu0 0.0
    %5152 = vmatpush1.msra.mxu0 0.0
    %5153 = vmatprep.subr.mxu0 0.0
    %5154 = vmatpush1.msra.mxu0 0.0
    %5155 = vmatprep.subr.mxu0 0.0
    %5156 = vmatpush1.msra.mxu0 0.0
    %5157 = vmatprep.subr.mxu0 0.0
    %5158 = vmatpush1.msra.mxu0 0.0
    %5159 = vmatprep.subr.mxu0 0.0
    %5160 = vmatpush1.msra.mxu0 0.0
    %5161 = vmatprep.subr.mxu0 0.0
    %5162 = vmatpush1.msra.mxu0 0.0
    %5163 = vmatprep.subr.mxu0 0.0
    %5164 = vmatpush1.msra.mxu0 0.0
    %5165 = vmatprep.subr.mxu0 0.0
    %5166 = vmatpush1.msra.mxu0 0.0
    %5167 = vmatprep.subr.mxu0 0.0
    %5168 = vmatpush1.msra.mxu0 0.0
    %5169 = vmatprep.subr.mxu0 0.0
    %5170 = vmatpush1.msra.mxu0 0.0
    %5171 = vmatprep.subr.mxu0 0.0
    %5172 = vmatpush1.msra.mxu0 0.0
    %5173 = vmatprep.subr.mxu0 0.0
    %5174 = vmatpush1.msra.mxu0 0.0
    %5175 = vmatprep.subr.mxu0 0.0
    %5176 = vmatpush1.msra.mxu0 0.0
    %5177 = vmatprep.subr.mxu0 0.0
    %5178 = vmatpush1.msra.mxu0 0.0
    %5179 = vmatprep.subr.mxu0 0.0
    %5180 = vmatpush1.msra.mxu0 0.0
    %5181 = vmatprep.subr.mxu0 0.0
    %5182 = vmatpush1.msra.mxu0 0.0
    %5183 = vmatprep.subr.mxu0 0.0
    %5184 = vmatpush1.msra.mxu0 0.0
    %5185 = vmatprep.subr.mxu0 0.0
    %5186 = vmatpush1.msra.mxu0 0.0
    %5187 = vmatprep.subr.mxu0 0.0
    %5188 = vmatpush1.msra.mxu0 0.0
    %5189 = vmatprep.subr.mxu0 0.0
    %5190 = vmatpush1.msra.mxu0 0.0
    %5191 = vmatprep.subr.mxu0 0.0
    %5192 = vmatpush1.msra.mxu0 0.0
    %5193 = vmatprep.subr.mxu0 0.0
    %5194 = vmatpush1.msra.mxu0 0.0
    %5195 = vmatprep.mubr.f32.mxu0 0.0
    %5196 = vmatmul.mubr.f32.gmra.mrb[0].mxu0 %v5127
    %v5197 = vpop.f32.mrb[0].mxu0
    %v5198 = vadd.f32 0.0, %v5197
    %v5199 = vpop.f32.mrb[0].mxu0
    %5200 = vmatprep.mubr.f32.mxu0 0.0
    %5201 = vmatmul.mubr.f32.gmra.mrb[0].mxu0 %v5129
    %v5202 = vpop.f32.mrb[0].mxu0
    %v5203 = vadd.f32 0.0, %v5202
    %v5204 = vpop.f32.mrb[0].mxu0
    %5205 = vdwg.mxu0
    %v5206 = vadd.f32 %v5119, %v5198
    %v5207 = vadd.f32 %v5120, %v5203
    %v5208 = vlaneseq
    %v5209 = vshrl.u32 %v5208, 7
    %v5210 = vsub.s32 0, %v5209
    %v5211 = vrot.slane %v4410, %v5210
    %v5212 = vadd.f32 %v5206, %v5211
    %v5213 = vadd.f32 %v5207, %v5211
    %v5214 = vadd.f32 %v4399, %v5212
    %v5215 = vadd.f32 %v4400, %v5213
    %v5216 = vld [vmem:[#allocation6 + $0x89] sm:$0x1]
    %v5217 = vld [vmem:[#allocation6 + $0x8a] sm:$0x1]
    %v5218 = vsel %vm199, %v5214, 0.0
    %5219 = vadd.xlane.f32.xlu0 %v5218
    %v5220 = vpop.xlane.xlu0 %5219
    %v5221 = vsel %vm199, %v5215, 0.0
    %5222 = vadd.xlane.f32.xlu0 %v5221
    %v5223 = vpop.xlane.xlu0 %5222
    %v5224 = vmul.f32 %v5220, %v1010
    %v5225 = vmul.f32 %v5223, %v1010
    %v5226 = vmul.f32 %v5214, %v5214
    %v5227 = vmul.f32 %v5215, %v5215
    %v5228 = vsel %vm199, %v5226, 0.0
    %5229 = vadd.xlane.f32.xlu0 %v5228
    %v5230 = vpop.xlane.xlu0 %5229
    %v5231 = vsel %vm199, %v5227, 0.0
    %5232 = vadd.xlane.f32.xlu0 %v5231
    %v5233 = vpop.xlane.xlu0 %5232
    %v5234 = vmul.f32 %v5230, %v1010
    %v5235 = vmul.f32 %v5233, %v1010
    %v5236 = vsub.f32 %v5214, %v5224
    %v5237 = vsub.f32 %v5215, %v5225
    %v5238 = vmul.f32 %v5224, %v5224
    %v5239 = vmul.f32 %v5225, %v5225
    %v5240 = vsub.f32 %v5234, %v5238
    %v5241 = vsub.f32 %v5235, %v5239
    %v5242 = vadd.f32 %v5240, 1e-05
    %v5243 = vadd.f32 %v5241, 1e-05
    %v5244 = vrsqrt.pop %v5242
    %v5245 = vrsqrt.pop %v5243
    %v5246 = vmul.f32 %v5236, %v5244
    %v5247 = vmul.f32 %v5237, %v5245
    %v5248 = vlaneseq
    %v5249 = vshrl.u32 %v5248, 7
    %v5250 = vsub.s32 0, %v5249
    %v5251 = vrot.slane %v5216, %v5250
    %v5252 = vmul.f32 %v5246, %v5251
    %v5253 = vmul.f32 %v5247, %v5251
    %v5254 = vlaneseq
    %v5255 = vshrl.u32 %v5254, 7
    %v5256 = vsub.s32 0, %v5255
    %v5257 = vrot.slane %v5217, %v5256
    %v5258 = vadd.f32 %v5252, %v5257
    %v5259 = vadd.f32 %v5253, %v5257
    %v5260 = vld [vmem:[#allocation4 + $0x288] sm:$0xff]
    %v5261 = vld [vmem:[#allocation4 + $0x290] sm:$0xff]
    %v5262 = vld [vmem:[#allocation4 + $0x298] sm:$0xff]
    %v5263 = vld [vmem:[#allocation4 + $0x2a0] sm:$0xff]
    %v5264 = vld [vmem:[#allocation6 + $0x85] sm:$0x1]
    %v5265 = vlaneseq
    %v5266 = vshrl.u32 %v5265, 7
    %v5267 = vsub.s32 0, %v5266
    %v5268 = vrot.slane %v5264, %v5267
    %v5270 = vsel %vm199, %v5258, 0
    %v5273 = vsel %vm199, %v5259, 0
    %5275 = vmatprep.subr.mxu0 0.0
    %5276 = vmatpush1.msra.mxu0 %v5260
    %5277 = vmatprep.subr.mxu0 0.0
    %5278 = vmatpush1.msra.mxu0 %v5261
    %5279 = vmatprep.subr.mxu0 0.0
    %5280 = vmatpush1.msra.mxu0 %v5262
    %5281 = vmatprep.subr.mxu0 0.0
    %5282 = vmatpush1.msra.mxu0 %v5263
    %5283 = vmatprep.subr.mxu0 0.0
    %5284 = vmatpush1.msra.mxu0 0.0
    %5285 = vmatprep.subr.mxu0 0.0
    %5286 = vmatpush1.msra.mxu0 0.0
    %5287 = vmatprep.subr.mxu0 0.0
    %5288 = vmatpush1.msra.mxu0 0.0
    %5289 = vmatprep.subr.mxu0 0.0
    %5290 = vmatpush1.msra.mxu0 0.0
    %5291 = vmatprep.subr.mxu0 0.0
    %5292 = vmatpush1.msra.mxu0 0.0
    %5293 = vmatprep.subr.mxu0 0.0
    %5294 = vmatpush1.msra.mxu0 0.0
    %5295 = vmatprep.subr.mxu0 0.0
    %5296 = vmatpush1.msra.mxu0 0.0
    %5297 = vmatprep.subr.mxu0 0.0
    %5298 = vmatpush1.msra.mxu0 0.0
    %5299 = vmatprep.subr.mxu0 0.0
    %5300 = vmatpush1.msra.mxu0 0.0
    %5301 = vmatprep.subr.mxu0 0.0
    %5302 = vmatpush1.msra.mxu0 0.0
    %5303 = vmatprep.subr.mxu0 0.0
    %5304 = vmatpush1.msra.mxu0 0.0
    %5305 = vmatprep.subr.mxu0 0.0
    %5306 = vmatpush1.msra.mxu0 0.0
    %5307 = vmatprep.subr.mxu0 0.0
    %5308 = vmatpush1.msra.mxu0 0.0
    %5309 = vmatprep.subr.mxu0 0.0
    %5310 = vmatpush1.msra.mxu0 0.0
    %5311 = vmatprep.subr.mxu0 0.0
    %5312 = vmatpush1.msra.mxu0 0.0
    %5313 = vmatprep.subr.mxu0 0.0
    %5314 = vmatpush1.msra.mxu0 0.0
    %5315 = vmatprep.subr.mxu0 0.0
    %5316 = vmatpush1.msra.mxu0 0.0
    %5317 = vmatprep.subr.mxu0 0.0
    %5318 = vmatpush1.msra.mxu0 0.0
    %5319 = vmatprep.subr.mxu0 0.0
    %5320 = vmatpush1.msra.mxu0 0.0
    %5321 = vmatprep.subr.mxu0 0.0
    %5322 = vmatpush1.msra.mxu0 0.0
    %5323 = vmatprep.subr.mxu0 0.0
    %5324 = vmatpush1.msra.mxu0 0.0
    %5325 = vmatprep.subr.mxu0 0.0
    %5326 = vmatpush1.msra.mxu0 0.0
    %5327 = vmatprep.subr.mxu0 0.0
    %5328 = vmatpush1.msra.mxu0 0.0
    %5329 = vmatprep.subr.mxu0 0.0
    %5330 = vmatpush1.msra.mxu0 0.0
    %5331 = vmatprep.subr.mxu0 0.0
    %5332 = vmatpush1.msra.mxu0 0.0
    %5333 = vmatprep.subr.mxu0 0.0
    %5334 = vmatpush1.msra.mxu0 0.0
    %5335 = vmatprep.subr.mxu0 0.0
    %5336 = vmatpush1.msra.mxu0 0.0
    %5337 = vmatprep.subr.mxu0 0.0
    %5338 = vmatpush1.msra.mxu0 0.0
    %5339 = vmatprep.mubr.f32.mxu0 0.0
    %5340 = vmatmul.mubr.f32.gmra.mrb[0].mxu0 %v5270
    %v5341 = vpop.f32.mrb[0].mxu0
    %v5342 = vadd.f32 %v5268, %v5341
    %v5343 = vpop.f32.mrb[0].mxu0
    %5344 = vmatprep.mubr.f32.mxu0 0.0
    %5345 = vmatmul.mubr.f32.gmra.mrb[0].mxu0 %v5273
    %v5346 = vpop.f32.mrb[0].mxu0
    %v5347 = vadd.f32 %v5268, %v5346
    %v5348 = vpop.f32.mrb[0].mxu0
    %5349 = vdwg.mxu0
    %v5350 = vld [vmem:[#allocation4 + $0x2a8] sm:$0xff]
    %v5351 = vld [vmem:[#allocation4 + $0x2b0] sm:$0xff]
    %v5352 = vld [vmem:[#allocation4 + $0x2b8] sm:$0xff]
    %v5353 = vld [vmem:[#allocation4 + $0x2c0] sm:$0xff]
    %v5354 = vld [vmem:[#allocation6 + $0x86] sm:$0x1]
    %v5355 = vmul.f32 %v5342, 0.35355338
    %v5356 = vmul.f32 %v5347, 0.35355338
    %v5357 = vmul.f32 %v5355, %v86
    %v5358 = vmul.f32 %v5356, %v86
    %v5359 = vmul.f32 %v5355, %v90
    %v5360 = vmul.f32 %v5356, %v90
    %v5361 = vmul.f32 %v5355, %v94
    %v5362 = vmul.f32 %v5356, %v94
    %v5363 = vmul.f32 %v5355, %v98
    %v5364 = vmul.f32 %v5356, %v98
    %5365 = vrot.lane.b32.xlu0 %v2453, 64
    %v5366 = vpop.permute.xlu0 %5365
    %5367 = vrot.lane.b32.xlu0 %v2458, 64
    %v5368 = vpop.permute.xlu0 %5367
    %v5370 = vsel %vm199, %v5357, 0
    %v5373 = vsel %vm199, %v5358, 0
    %v5376 = vsel %vm199, %v5359, 0
    %v5379 = vsel %vm199, %v5360, 0
    %v5382 = vsel %vm199, %v5361, 0
    %v5385 = vsel %vm199, %v5362, 0
    %v5388 = vsel %vm199, %v5363, 0
    %v5391 = vsel %vm199, %v5364, 0
    %v5393 = vsel %vm199, %v5366, 0
    %v5395 = vsel %vm199, %v5368, 0
    %5397 = vmatprep.subr.mxu0 0.0
    %5398 = vmatpush1.xpose.msra.mxu0 %v5393
    %5399 = vmatprep.subr.mxu0 0.0
    %5400 = vmatpush1.xpose.msra.mxu0 %v5395
    %5401 = vmatprep.subr.mxu0 0.0
    %5402 = vmatpush1.xpose.msra.mxu0 0.0
    %5403 = vmatprep.subr.mxu0 0.0
    %5404 = vmatpush1.xpose.msra.mxu0 0.0
    %5405 = vmatprep.subr.mxu0 0.0
    %5406 = vmatpush1.xpose.msra.mxu0 0.0
    %5407 = vmatprep.subr.mxu0 0.0
    %5408 = vmatpush1.xpose.msra.mxu0 0.0
    %5409 = vmatprep.subr.mxu0 0.0
    %5410 = vmatpush1.xpose.msra.mxu0 0.0
    %5411 = vmatprep.subr.mxu0 0.0
    %5412 = vmatpush1.xpose.msra.mxu0 0.0
    %5413 = vmatprep.subr.mxu0 0.0
    %5414 = vmatpush1.xpose.msra.mxu0 0.0
    %5415 = vmatprep.subr.mxu0 0.0
    %5416 = vmatpush1.xpose.msra.mxu0 0.0
    %5417 = vmatprep.subr.mxu0 0.0
    %5418 = vmatpush1.xpose.msra.mxu0 0.0
    %5419 = vmatprep.subr.mxu0 0.0
    %5420 = vmatpush1.xpose.msra.mxu0 0.0
    %5421 = vmatprep.subr.mxu0 0.0
    %5422 = vmatpush1.xpose.msra.mxu0 0.0
    %5423 = vmatprep.subr.mxu0 0.0
    %5424 = vmatpush1.xpose.msra.mxu0 0.0
    %5425 = vmatprep.subr.mxu0 0.0
    %5426 = vmatpush1.xpose.msra.mxu0 0.0
    %5427 = vmatprep.subr.mxu0 0.0
    %5428 = vmatpush1.xpose.msra.mxu0 0.0
    %5429 = vmatprep.subr.mxu0 0.0
    %5430 = vmatpush1.xpose.msra.mxu0 0.0
    %5431 = vmatprep.subr.mxu0 0.0
    %5432 = vmatpush1.xpose.msra.mxu0 0.0
    %5433 = vmatprep.subr.mxu0 0.0
    %5434 = vmatpush1.xpose.msra.mxu0 0.0
    %5435 = vmatprep.subr.mxu0 0.0
    %5436 = vmatpush1.xpose.msra.mxu0 0.0
    %5437 = vmatprep.subr.mxu0 0.0
    %5438 = vmatpush1.xpose.msra.mxu0 0.0
    %5439 = vmatprep.subr.mxu0 0.0
    %5440 = vmatpush1.xpose.msra.mxu0 0.0
    %5441 = vmatprep.subr.mxu0 0.0
    %5442 = vmatpush1.xpose.msra.mxu0 0.0
    %5443 = vmatprep.subr.mxu0 0.0
    %5444 = vmatpush1.xpose.msra.mxu0 0.0
    %5445 = vmatprep.subr.mxu0 0.0
    %5446 = vmatpush1.xpose.msra.mxu0 0.0
    %5447 = vmatprep.subr.mxu0 0.0
    %5448 = vmatpush1.xpose.msra.mxu0 0.0
    %5449 = vmatprep.subr.mxu0 0.0
    %5450 = vmatpush1.xpose.msra.mxu0 0.0
    %5451 = vmatprep.subr.mxu0 0.0
    %5452 = vmatpush1.xpose.msra.mxu0 0.0
    %5453 = vmatprep.subr.mxu0 0.0
    %5454 = vmatpush1.xpose.msra.mxu0 0.0
    %5455 = vmatprep.subr.mxu0 0.0
    %5456 = vmatpush1.xpose.msra.mxu0 0.0
    %5457 = vmatprep.subr.mxu0 0.0
    %5458 = vmatpush1.xpose.msra.mxu0 0.0
    %5459 = vmatprep.subr.mxu0 0.0
    %5460 = vmatpush1.xpose.msra.mxu0 0.0
    %5461 = vmatprep.mubr.f32.mxu0 0.0
    %5462 = vmatmul.mubr.f32.gmra.mrb[0].mxu0 %v5370
    %v5463 = vpop.f32.mrb[0].mxu0
    %v5464 = vadd.f32 %v72, %v5463
    %v5465 = vpop.f32.mrb[0].mxu0
    %5466 = vmatprep.mubr.f32.mxu0 0.0
    %5467 = vmatmul.mubr.f32.gmra.mrb[0].mxu0 %v5373
    %v5468 = vpop.f32.mrb[0].mxu0
    %v5469 = vadd.f32 %v73, %v5468
    %v5470 = vpop.f32.mrb[0].mxu0
    %5471 = vmatprep.mubr.f32.mxu0 0.0
    %5472 = vmatmul.mubr.f32.gmra.mrb[0].mxu0 %v5376
    %v5473 = vpop.f32.mrb[0].mxu0
    %v5474 = vadd.f32 %v74, %v5473
    %v5475 = vpop.f32.mrb[0].mxu0
    %5476 = vmatprep.mubr.f32.mxu0 0.0
    %5477 = vmatmul.mubr.f32.gmra.mrb[0].mxu0 %v5379
    %v5478 = vpop.f32.mrb[0].mxu0
    %v5479 = vadd.f32 %v75, %v5478
    %v5480 = vpop.f32.mrb[0].mxu0
    %5481 = vmatprep.mubr.f32.mxu0 0.0
    %5482 = vmatmul.mubr.f32.gmra.mrb[0].mxu0 %v5382
    %v5483 = vpop.f32.mrb[0].mxu0
    %v5484 = vadd.f32 %v76, %v5483
    %v5485 = vpop.f32.mrb[0].mxu0
    %5486 = vmatprep.mubr.f32.mxu0 0.0
    %5487 = vmatmul.mubr.f32.gmra.mrb[0].mxu0 %v5385
    %v5488 = vpop.f32.mrb[0].mxu0
    %v5489 = vadd.f32 %v77, %v5488
    %v5490 = vpop.f32.mrb[0].mxu0
    %5491 = vmatprep.mubr.f32.mxu0 0.0
    %5492 = vmatmul.mubr.f32.gmra.mrb[0].mxu0 %v5388
    %v5493 = vpop.f32.mrb[0].mxu0
    %v5494 = vadd.f32 %v78, %v5493
    %v5495 = vpop.f32.mrb[0].mxu0
    %5496 = vmatprep.mubr.f32.mxu0 0.0
    %5497 = vmatmul.mubr.f32.gmra.mrb[0].mxu0 %v5391
    %v5498 = vpop.f32.mrb[0].mxu0
    %v5499 = vadd.f32 %v79, %v5498
    %v5500 = vpop.f32.mrb[0].mxu0
    %5501 = vdwg.mxu0
    %v5502 = vsel %vm430, %v5464, -inf
    %5503 = vmax.xlane.f32.xlu0 %v5502
    %v5504 = vpop.xlane.xlu0 %5503
    %v5505 = vsel %vm430, %v5469, -inf
    %5506 = vmax.xlane.f32.xlu0 %v5505
    %v5507 = vpop.xlane.xlu0 %5506
    %v5508 = vsel %vm430, %v5474, -inf
    %5509 = vmax.xlane.f32.xlu0 %v5508
    %v5510 = vpop.xlane.xlu0 %5509
    %v5511 = vsel %vm430, %v5479, -inf
    %5512 = vmax.xlane.f32.xlu0 %v5511
    %v5513 = vpop.xlane.xlu0 %5512
    %v5514 = vsel %vm430, %v5484, -inf
    %5515 = vmax.xlane.f32.xlu0 %v5514
    %v5516 = vpop.xlane.xlu0 %5515
    %v5517 = vsel %vm430, %v5489, -inf
    %5518 = vmax.xlane.f32.xlu0 %v5517
    %v5519 = vpop.xlane.xlu0 %5518
    %v5520 = vsel %vm430, %v5494, -inf
    %5521 = vmax.xlane.f32.xlu0 %v5520
    %v5522 = vpop.xlane.xlu0 %5521
    %v5523 = vsel %vm430, %v5499, -inf
    %5524 = vmax.xlane.f32.xlu0 %v5523
    %v5525 = vpop.xlane.xlu0 %5524
    %v5526 = vsub.f32 %v5464, %v5504
    %v5527 = vsub.f32 %v5469, %v5507
    %v5528 = vsub.f32 %v5474, %v5510
    %v5529 = vsub.f32 %v5479, %v5513
    %v5530 = vsub.f32 %v5484, %v5516
    %v5531 = vsub.f32 %v5489, %v5519
    %v5532 = vsub.f32 %v5494, %v5522
    %v5533 = vsub.f32 %v5499, %v5525
    %v5534 = vmul.f32 %v5526, 1.442695
    %v5535 = vpow.pop %v5534
    %v5536 = vmul.f32 %v5527, 1.442695
    %v5537 = vpow.pop %v5536
    %v5538 = vmul.f32 %v5528, 1.442695
    %v5539 = vpow.pop %v5538
    %v5540 = vmul.f32 %v5529, 1.442695
    %v5541 = vpow.pop %v5540
    %v5542 = vmul.f32 %v5530, 1.442695
    %v5543 = vpow.pop %v5542
    %v5544 = vmul.f32 %v5531, 1.442695
    %v5545 = vpow.pop %v5544
    %v5546 = vmul.f32 %v5532, 1.442695
    %v5547 = vpow.pop %v5546
    %v5548 = vmul.f32 %v5533, 1.442695
    %v5549 = vpow.pop %v5548
    %v5550 = vsel %vm430, %v5535, 0.0
    %5551 = vadd.xlane.f32.xlu0 %v5550
    %v5552 = vpop.xlane.xlu0 %5551
    %v5553 = vsel %vm430, %v5537, 0.0
    %5554 = vadd.xlane.f32.xlu0 %v5553
    %v5555 = vpop.xlane.xlu0 %5554
    %v5556 = vsel %vm430, %v5539, 0.0
    %5557 = vadd.xlane.f32.xlu0 %v5556
    %v5558 = vpop.xlane.xlu0 %5557
    %v5559 = vsel %vm430, %v5541, 0.0
    %5560 = vadd.xlane.f32.xlu0 %v5559
    %v5561 = vpop.xlane.xlu0 %5560
    %v5562 = vsel %vm430, %v5543, 0.0
    %5563 = vadd.xlane.f32.xlu0 %v5562
    %v5564 = vpop.xlane.xlu0 %5563
    %v5565 = vsel %vm430, %v5545, 0.0
    %5566 = vadd.xlane.f32.xlu0 %v5565
    %v5567 = vpop.xlane.xlu0 %5566
    %v5568 = vsel %vm430, %v5547, 0.0
    %5569 = vadd.xlane.f32.xlu0 %v5568
    %v5570 = vpop.xlane.xlu0 %5569
    %v5571 = vsel %vm430, %v5549, 0.0
    %5572 = vadd.xlane.f32.xlu0 %v5571
    %v5573 = vpop.xlane.xlu0 %5572
    %v5574 = vrcp.pop %v5552
    %v5575 = vrcp.pop %v5555
    %v5576 = vrcp.pop %v5558
    %v5577 = vrcp.pop %v5561
    %v5578 = vrcp.pop %v5564
    %v5579 = vrcp.pop %v5567
    %v5580 = vrcp.pop %v5570
    %v5581 = vrcp.pop %v5573
    %v5582 = vmul.f32 %v5535, %v5574
    %v5583 = vmul.f32 %v5537, %v5575
    %v5584 = vmul.f32 %v5539, %v5576
    %v5585 = vmul.f32 %v5541, %v5577
    %v5586 = vmul.f32 %v5543, %v5578
    %v5587 = vmul.f32 %v5545, %v5579
    %v5588 = vmul.f32 %v5547, %v5580
    %v5589 = vmul.f32 %v5549, %v5581
    %5590 = vrot.lane.b32.xlu0 %v2453, 32
    %v5591 = vpop.permute.xlu0 %5590
    %5592 = vrot.lane.b32.xlu0 %v2458, 32
    %v5593 = vpop.permute.xlu0 %5592
    %v5597 = vsel %vm430, %v5582, 0
    %v5600 = vsel %vm430, %v5583, 0
    %v5603 = vsel %vm430, %v5584, 0
    %v5606 = vsel %vm430, %v5585, 0
    %v5609 = vsel %vm430, %v5586, 0
    %v5612 = vsel %vm430, %v5587, 0
    %v5615 = vsel %vm430, %v5588, 0
    %v5618 = vsel %vm430, %v5589, 0
    %5620 = vmatprep.subr.mxu0 0.0
    %5621 = vmatpush1.msra.mxu0 %v5591
    %5622 = vmatprep.subr.mxu0 0.0
    %5623 = vmatpush1.msra.mxu0 %v5593
    %5624 = vmatprep.subr.mxu0 0.0
    %5625 = vmatpush1.msra.mxu0 0.0
    %5626 = vmatprep.subr.mxu0 0.0
    %5627 = vmatpush1.msra.mxu0 0.0
    %5628 = vmatprep.subr.mxu0 0.0
    %5629 = vmatpush1.msra.mxu0 0.0
    %5630 = vmatprep.subr.mxu0 0.0
    %5631 = vmatpush1.msra.mxu0 0.0
    %5632 = vmatprep.subr.mxu0 0.0
    %5633 = vmatpush1.msra.mxu0 0.0
    %5634 = vmatprep.subr.mxu0 0.0
    %5635 = vmatpush1.msra.mxu0 0.0
    %5636 = vmatprep.subr.mxu0 0.0
    %5637 = vmatpush1.msra.mxu0 0.0
    %5638 = vmatprep.subr.mxu0 0.0
    %5639 = vmatpush1.msra.mxu0 0.0
    %5640 = vmatprep.subr.mxu0 0.0
    %5641 = vmatpush1.msra.mxu0 0.0
    %5642 = vmatprep.subr.mxu0 0.0
    %5643 = vmatpush1.msra.mxu0 0.0
    %5644 = vmatprep.subr.mxu0 0.0
    %5645 = vmatpush1.msra.mxu0 0.0
    %5646 = vmatprep.subr.mxu0 0.0
    %5647 = vmatpush1.msra.mxu0 0.0
    %5648 = vmatprep.subr.mxu0 0.0
    %5649 = vmatpush1.msra.mxu0 0.0
    %5650 = vmatprep.subr.mxu0 0.0
    %5651 = vmatpush1.msra.mxu0 0.0
    %5652 = vmatprep.subr.mxu0 0.0
    %5653 = vmatpush1.msra.mxu0 0.0
    %5654 = vmatprep.subr.mxu0 0.0
    %5655 = vmatpush1.msra.mxu0 0.0
    %5656 = vmatprep.subr.mxu0 0.0
    %5657 = vmatpush1.msra.mxu0 0.0
    %5658 = vmatprep.subr.mxu0 0.0
    %5659 = vmatpush1.msra.mxu0 0.0
    %5660 = vmatprep.subr.mxu0 0.0
    %5661 = vmatpush1.msra.mxu0 0.0
    %5662 = vmatprep.subr.mxu0 0.0
    %5663 = vmatpush1.msra.mxu0 0.0
    %5664 = vmatprep.subr.mxu0 0.0
    %5665 = vmatpush1.msra.mxu0 0.0
    %5666 = vmatprep.subr.mxu0 0.0
    %5667 = vmatpush1.msra.mxu0 0.0
    %5668 = vmatprep.subr.mxu0 0.0
    %5669 = vmatpush1.msra.mxu0 0.0
    %5670 = vmatprep.subr.mxu0 0.0
    %5671 = vmatpush1.msra.mxu0 0.0
    %5672 = vmatprep.subr.mxu0 0.0
    %5673 = vmatpush1.msra.mxu0 0.0
    %5674 = vmatprep.subr.mxu0 0.0
    %5675 = vmatpush1.msra.mxu0 0.0
    %5676 = vmatprep.subr.mxu0 0.0
    %5677 = vmatpush1.msra.mxu0 0.0
    %5678 = vmatprep.subr.mxu0 0.0
    %5679 = vmatpush1.msra.mxu0 0.0
    %5680 = vmatprep.subr.mxu0 0.0
    %5681 = vmatpush1.msra.mxu0 0.0
    %5682 = vmatprep.subr.mxu0 0.0
    %5683 = vmatpush1.msra.mxu0 0.0
    %5684 = vmatprep.mubr.f32.mxu0 0.0
    %5685 = vmatmul.mubr.f32.gmra.mrb[0].mxu0 %v5597
    %v5686 = vpop.f32.mrb[0].mxu0
    %v5687 = vadd.f32 0.0, %v5686
    %v5688 = vpop.f32.mrb[0].mxu0
    %5689 = vmatprep.mubr.f32.mxu0 0.0
    %5690 = vmatmul.mubr.f32.gmra.mrb[0].mxu0 %v5600
    %v5691 = vpop.f32.mrb[0].mxu0
    %v5692 = vadd.f32 0.0, %v5691
    %v5693 = vpop.f32.mrb[0].mxu0
    %5694 = vmatprep.mubr.f32.mxu0 0.0
    %5695 = vmatmul.mubr.f32.gmra.mrb[0].mxu0 %v5603
    %v5696 = vpop.f32.mrb[0].mxu0
    %v5697 = vadd.f32 0.0, %v5696
    %v5698 = vpop.f32.mrb[0].mxu0
    %5699 = vmatprep.mubr.f32.mxu0 0.0
    %5700 = vmatmul.mubr.f32.gmra.mrb[0].mxu0 %v5606
    %v5701 = vpop.f32.mrb[0].mxu0
    %v5702 = vadd.f32 0.0, %v5701
    %v5703 = vpop.f32.mrb[0].mxu0
    %5704 = vmatprep.mubr.f32.mxu0 0.0
    %5705 = vmatmul.mubr.f32.gmra.mrb[0].mxu0 %v5609
    %v5706 = vpop.f32.mrb[0].mxu0
    %v5707 = vadd.f32 0.0, %v5706
    %v5708 = vpop.f32.mrb[0].mxu0
    %5709 = vmatprep.mubr.f32.mxu0 0.0
    %5710 = vmatmul.mubr.f32.gmra.mrb[0].mxu0 %v5612
    %v5711 = vpop.f32.mrb[0].mxu0
    %v5712 = vadd.f32 0.0, %v5711
    %v5713 = vpop.f32.mrb[0].mxu0
    %5714 = vmatprep.mubr.f32.mxu0 0.0
    %5715 = vmatmul.mubr.f32.gmra.mrb[0].mxu0 %v5615
    %v5716 = vpop.f32.mrb[0].mxu0
    %v5717 = vadd.f32 0.0, %v5716
    %v5718 = vpop.f32.mrb[0].mxu0
    %5719 = vmatprep.mubr.f32.mxu0 0.0
    %5720 = vmatmul.mubr.f32.gmra.mrb[0].mxu0 %v5618
    %v5721 = vpop.f32.mrb[0].mxu0
    %v5722 = vadd.f32 0.0, %v5721
    %v5723 = vpop.f32.mrb[0].mxu0
    %5724 = vdwg.mxu0
    %5727 = vrot.lane.b32.xlu0 %v5697, 120
    %v5728 = vpop.permute.xlu0 %5727
    %5729 = vrot.lane.b32.xlu0 %v5702, 120
    %v5730 = vpop.permute.xlu0 %5729
    %v5731 = vsel %vm103, %v5728, 0
    %v5733 = vsel %vm103, %v5730, 0
    %5735 = vmatprep.subr.mxu0 0.0
    %5736 = vmatpush1.msra.mxu0 %v5351
    %5737 = vmatprep.subr.mxu0 0.0
    %5738 = vmatpush1.msra.mxu0 0.0
    %5739 = vmatprep.subr.mxu0 0.0
    %5740 = vmatpush1.msra.mxu0 0.0
    %5741 = vmatprep.subr.mxu0 0.0
    %5742 = vmatpush1.msra.mxu0 0.0
    %5743 = vmatprep.subr.mxu0 0.0
    %5744 = vmatpush1.msra.mxu0 0.0
    %5745 = vmatprep.subr.mxu0 0.0
    %5746 = vmatpush1.msra.mxu0 0.0
    %5747 = vmatprep.subr.mxu0 0.0
    %5748 = vmatpush1.msra.mxu0 0.0
    %5749 = vmatprep.subr.mxu0 0.0
    %5750 = vmatpush1.msra.mxu0 0.0
    %5751 = vmatprep.subr.mxu0 0.0
    %5752 = vmatpush1.msra.mxu0 0.0
    %5753 = vmatprep.subr.mxu0 0.0
    %5754 = vmatpush1.msra.mxu0 0.0
    %5755 = vmatprep.subr.mxu0 0.0
    %5756 = vmatpush1.msra.mxu0 0.0
    %5757 = vmatprep.subr.mxu0 0.0
    %5758 = vmatpush1.msra.mxu0 0.0
    %5759 = vmatprep.subr.mxu0 0.0
    %5760 = vmatpush1.msra.mxu0 0.0
    %5761 = vmatprep.subr.mxu0 0.0
    %5762 = vmatpush1.msra.mxu0 0.0
    %5763 = vmatprep.subr.mxu0 0.0
    %5764 = vmatpush1.msra.mxu0 0.0
    %5765 = vmatprep.subr.mxu0 0.0
    %5766 = vmatpush1.msra.mxu0 0.0
    %5767 = vmatprep.subr.mxu0 0.0
    %5768 = vmatpush1.msra.mxu0 0.0
    %5769 = vmatprep.subr.mxu0 0.0
    %5770 = vmatpush1.msra.mxu0 0.0
    %5771 = vmatprep.subr.mxu0 0.0
    %5772 = vmatpush1.msra.mxu0 0.0
    %5773 = vmatprep.subr.mxu0 0.0
    %5774 = vmatpush1.msra.mxu0 0.0
    %5775 = vmatprep.subr.mxu0 0.0
    %5776 = vmatpush1.msra.mxu0 0.0
    %5777 = vmatprep.subr.mxu0 0.0
    %5778 = vmatpush1.msra.mxu0 0.0
    %5779 = vmatprep.subr.mxu0 0.0
    %5780 = vmatpush1.msra.mxu0 0.0
    %5781 = vmatprep.subr.mxu0 0.0
    %5782 = vmatpush1.msra.mxu0 0.0
    %5783 = vmatprep.subr.mxu0 0.0
    %5784 = vmatpush1.msra.mxu0 0.0
    %5785 = vmatprep.subr.mxu0 0.0
    %5786 = vmatpush1.msra.mxu0 0.0
    %5787 = vmatprep.subr.mxu0 0.0
    %5788 = vmatpush1.msra.mxu0 0.0
    %5789 = vmatprep.subr.mxu0 0.0
    %5790 = vmatpush1.msra.mxu0 0.0
    %5791 = vmatprep.subr.mxu0 0.0
    %5792 = vmatpush1.msra.mxu0 0.0
    %5793 = vmatprep.subr.mxu0 0.0
    %5794 = vmatpush1.msra.mxu0 0.0
    %5795 = vmatprep.subr.mxu0 0.0
    %5796 = vmatpush1.msra.mxu0 0.0
    %5797 = vmatprep.subr.mxu0 0.0
    %5798 = vmatpush1.msra.mxu0 0.0
    %5799 = vmatprep.mubr.f32.mxu0 0.0
    %5800 = vmatmul.mubr.f32.gmra.mrb[0].mxu0 %v5731
    %v5801 = vpop.f32.mrb[0].mxu0
    %v5802 = vadd.f32 0.0, %v5801
    %v5803 = vpop.f32.mrb[0].mxu0
    %5804 = vmatprep.mubr.f32.mxu0 0.0
    %5805 = vmatmul.mubr.f32.gmra.mrb[0].mxu0 %v5733
    %v5806 = vpop.f32.mrb[0].mxu0
    %v5807 = vadd.f32 0.0, %v5806
    %v5808 = vpop.f32.mrb[0].mxu0
    %5809 = vdwg.mxu0
    %v5811 = vsel %vm103, %v5687, 0
    %v5814 = vsel %vm103, %v5692, 0
    %5816 = vmatprep.subr.mxu0 0.0
    %5817 = vmatpush1.msra.mxu0 %v5350
    %5818 = vmatprep.subr.mxu0 0.0
    %5819 = vmatpush1.msra.mxu0 0.0
    %5820 = vmatprep.subr.mxu0 0.0
    %5821 = vmatpush1.msra.mxu0 0.0
    %5822 = vmatprep.subr.mxu0 0.0
    %5823 = vmatpush1.msra.mxu0 0.0
    %5824 = vmatprep.subr.mxu0 0.0
    %5825 = vmatpush1.msra.mxu0 0.0
    %5826 = vmatprep.subr.mxu0 0.0
    %5827 = vmatpush1.msra.mxu0 0.0
    %5828 = vmatprep.subr.mxu0 0.0
    %5829 = vmatpush1.msra.mxu0 0.0
    %5830 = vmatprep.subr.mxu0 0.0
    %5831 = vmatpush1.msra.mxu0 0.0
    %5832 = vmatprep.subr.mxu0 0.0
    %5833 = vmatpush1.msra.mxu0 0.0
    %5834 = vmatprep.subr.mxu0 0.0
    %5835 = vmatpush1.msra.mxu0 0.0
    %5836 = vmatprep.subr.mxu0 0.0
    %5837 = vmatpush1.msra.mxu0 0.0
    %5838 = vmatprep.subr.mxu0 0.0
    %5839 = vmatpush1.msra.mxu0 0.0
    %5840 = vmatprep.subr.mxu0 0.0
    %5841 = vmatpush1.msra.mxu0 0.0
    %5842 = vmatprep.subr.mxu0 0.0
    %5843 = vmatpush1.msra.mxu0 0.0
    %5844 = vmatprep.subr.mxu0 0.0
    %5845 = vmatpush1.msra.mxu0 0.0
    %5846 = vmatprep.subr.mxu0 0.0
    %5847 = vmatpush1.msra.mxu0 0.0
    %5848 = vmatprep.subr.mxu0 0.0
    %5849 = vmatpush1.msra.mxu0 0.0
    %5850 = vmatprep.subr.mxu0 0.0
    %5851 = vmatpush1.msra.mxu0 0.0
    %5852 = vmatprep.subr.mxu0 0.0
    %5853 = vmatpush1.msra.mxu0 0.0
    %5854 = vmatprep.subr.mxu0 0.0
    %5855 = vmatpush1.msra.mxu0 0.0
    %5856 = vmatprep.subr.mxu0 0.0
    %5857 = vmatpush1.msra.mxu0 0.0
    %5858 = vmatprep.subr.mxu0 0.0
    %5859 = vmatpush1.msra.mxu0 0.0
    %5860 = vmatprep.subr.mxu0 0.0
    %5861 = vmatpush1.msra.mxu0 0.0
    %5862 = vmatprep.subr.mxu0 0.0
    %5863 = vmatpush1.msra.mxu0 0.0
    %5864 = vmatprep.subr.mxu0 0.0
    %5865 = vmatpush1.msra.mxu0 0.0
    %5866 = vmatprep.subr.mxu0 0.0
    %5867 = vmatpush1.msra.mxu0 0.0
    %5868 = vmatprep.subr.mxu0 0.0
    %5869 = vmatpush1.msra.mxu0 0.0
    %5870 = vmatprep.subr.mxu0 0.0
    %5871 = vmatpush1.msra.mxu0 0.0
    %5872 = vmatprep.subr.mxu0 0.0
    %5873 = vmatpush1.msra.mxu0 0.0
    %5874 = vmatprep.subr.mxu0 0.0
    %5875 = vmatpush1.msra.mxu0 0.0
    %5876 = vmatprep.subr.mxu0 0.0
    %5877 = vmatpush1.msra.mxu0 0.0
    %5878 = vmatprep.subr.mxu0 0.0
    %5879 = vmatpush1.msra.mxu0 0.0
    %5880 = vmatprep.mubr.f32.mxu0 0.0
    %5881 = vmatmul.mubr.f32.gmra.mrb[0].mxu0 %v5811
    %v5882 = vpop.f32.mrb[0].mxu0
    %v5883 = vadd.f32 %v5802, %v5882
    %v5884 = vpop.f32.mrb[0].mxu0
    %5885 = vmatprep.mubr.f32.mxu0 0.0
    %5886 = vmatmul.mubr.f32.gmra.mrb[0].mxu0 %v5814
    %v5887 = vpop.f32.mrb[0].mxu0
    %v5888 = vadd.f32 %v5807, %v5887
    %v5889 = vpop.f32.mrb[0].mxu0
    %5890 = vdwg.mxu0
    %5893 = vrot.lane.b32.xlu0 %v5707, 112
    %v5894 = vpop.permute.xlu0 %5893
    %5895 = vrot.lane.b32.xlu0 %v5712, 112
    %v5896 = vpop.permute.xlu0 %5895
    %v5897 = vsel %vm103, %v5894, 0
    %v5899 = vsel %vm103, %v5896, 0
    %5901 = vmatprep.subr.mxu0 0.0
    %5902 = vmatpush1.msra.mxu0 %v5352
    %5903 = vmatprep.subr.mxu0 0.0
    %5904 = vmatpush1.msra.mxu0 0.0
    %5905 = vmatprep.subr.mxu0 0.0
    %5906 = vmatpush1.msra.mxu0 0.0
    %5907 = vmatprep.subr.mxu0 0.0
    %5908 = vmatpush1.msra.mxu0 0.0
    %5909 = vmatprep.subr.mxu0 0.0
    %5910 = vmatpush1.msra.mxu0 0.0
    %5911 = vmatprep.subr.mxu0 0.0
    %5912 = vmatpush1.msra.mxu0 0.0
    %5913 = vmatprep.subr.mxu0 0.0
    %5914 = vmatpush1.msra.mxu0 0.0
    %5915 = vmatprep.subr.mxu0 0.0
    %5916 = vmatpush1.msra.mxu0 0.0
    %5917 = vmatprep.subr.mxu0 0.0
    %5918 = vmatpush1.msra.mxu0 0.0
    %5919 = vmatprep.subr.mxu0 0.0
    %5920 = vmatpush1.msra.mxu0 0.0
    %5921 = vmatprep.subr.mxu0 0.0
    %5922 = vmatpush1.msra.mxu0 0.0
    %5923 = vmatprep.subr.mxu0 0.0
    %5924 = vmatpush1.msra.mxu0 0.0
    %5925 = vmatprep.subr.mxu0 0.0
    %5926 = vmatpush1.msra.mxu0 0.0
    %5927 = vmatprep.subr.mxu0 0.0
    %5928 = vmatpush1.msra.mxu0 0.0
    %5929 = vmatprep.subr.mxu0 0.0
    %5930 = vmatpush1.msra.mxu0 0.0
    %5931 = vmatprep.subr.mxu0 0.0
    %5932 = vmatpush1.msra.mxu0 0.0
    %5933 = vmatprep.subr.mxu0 0.0
    %5934 = vmatpush1.msra.mxu0 0.0
    %5935 = vmatprep.subr.mxu0 0.0
    %5936 = vmatpush1.msra.mxu0 0.0
    %5937 = vmatprep.subr.mxu0 0.0
    %5938 = vmatpush1.msra.mxu0 0.0
    %5939 = vmatprep.subr.mxu0 0.0
    %5940 = vmatpush1.msra.mxu0 0.0
    %5941 = vmatprep.subr.mxu0 0.0
    %5942 = vmatpush1.msra.mxu0 0.0
    %5943 = vmatprep.subr.mxu0 0.0
    %5944 = vmatpush1.msra.mxu0 0.0
    %5945 = vmatprep.subr.mxu0 0.0
    %5946 = vmatpush1.msra.mxu0 0.0
    %5947 = vmatprep.subr.mxu0 0.0
    %5948 = vmatpush1.msra.mxu0 0.0
    %5949 = vmatprep.subr.mxu0 0.0
    %5950 = vmatpush1.msra.mxu0 0.0
    %5951 = vmatprep.subr.mxu0 0.0
    %5952 = vmatpush1.msra.mxu0 0.0
    %5953 = vmatprep.subr.mxu0 0.0
    %5954 = vmatpush1.msra.mxu0 0.0
    %5955 = vmatprep.subr.mxu0 0.0
    %5956 = vmatpush1.msra.mxu0 0.0
    %5957 = vmatprep.subr.mxu0 0.0
    %5958 = vmatpush1.msra.mxu0 0.0
    %5959 = vmatprep.subr.mxu0 0.0
    %5960 = vmatpush1.msra.mxu0 0.0
    %5961 = vmatprep.subr.mxu0 0.0
    %5962 = vmatpush1.msra.mxu0 0.0
    %5963 = vmatprep.subr.mxu0 0.0
    %5964 = vmatpush1.msra.mxu0 0.0
    %5965 = vmatprep.mubr.f32.mxu0 0.0
    %5966 = vmatmul.mubr.f32.gmra.mrb[0].mxu0 %v5897
    %v5967 = vpop.f32.mrb[0].mxu0
    %v5968 = vadd.f32 0.0, %v5967
    %v5969 = vpop.f32.mrb[0].mxu0
    %5970 = vmatprep.mubr.f32.mxu0 0.0
    %5971 = vmatmul.mubr.f32.gmra.mrb[0].mxu0 %v5899
    %v5972 = vpop.f32.mrb[0].mxu0
    %v5973 = vadd.f32 0.0, %v5972
    %v5974 = vpop.f32.mrb[0].mxu0
    %5975 = vdwg.mxu0
    %v5976 = vadd.f32 %v5883, %v5968
    %v5977 = vadd.f32 %v5888, %v5973
    %5980 = vrot.lane.b32.xlu0 %v5717, 104
    %v5981 = vpop.permute.xlu0 %5980
    %5982 = vrot.lane.b32.xlu0 %v5722, 104
    %v5983 = vpop.permute.xlu0 %5982
    %v5984 = vsel %vm103, %v5981, 0
    %v5986 = vsel %vm103, %v5983, 0
    %5988 = vmatprep.subr.mxu0 0.0
    %5989 = vmatpush1.msra.mxu0 %v5353
    %5990 = vmatprep.subr.mxu0 0.0
    %5991 = vmatpush1.msra.mxu0 0.0
    %5992 = vmatprep.subr.mxu0 0.0
    %5993 = vmatpush1.msra.mxu0 0.0
    %5994 = vmatprep.subr.mxu0 0.0
    %5995 = vmatpush1.msra.mxu0 0.0
    %5996 = vmatprep.subr.mxu0 0.0
    %5997 = vmatpush1.msra.mxu0 0.0
    %5998 = vmatprep.subr.mxu0 0.0
    %5999 = vmatpush1.msra.mxu0 0.0
    %6000 = vmatprep.subr.mxu0 0.0
    %6001 = vmatpush1.msra.mxu0 0.0
    %6002 = vmatprep.subr.mxu0 0.0
    %6003 = vmatpush1.msra.mxu0 0.0
    %6004 = vmatprep.subr.mxu0 0.0
    %6005 = vmatpush1.msra.mxu0 0.0
    %6006 = vmatprep.subr.mxu0 0.0
    %6007 = vmatpush1.msra.mxu0 0.0
    %6008 = vmatprep.subr.mxu0 0.0
    %6009 = vmatpush1.msra.mxu0 0.0
    %6010 = vmatprep.subr.mxu0 0.0
    %6011 = vmatpush1.msra.mxu0 0.0
    %6012 = vmatprep.subr.mxu0 0.0
    %6013 = vmatpush1.msra.mxu0 0.0
    %6014 = vmatprep.subr.mxu0 0.0
    %6015 = vmatpush1.msra.mxu0 0.0
    %6016 = vmatprep.subr.mxu0 0.0
    %6017 = vmatpush1.msra.mxu0 0.0
    %6018 = vmatprep.subr.mxu0 0.0
    %6019 = vmatpush1.msra.mxu0 0.0
    %6020 = vmatprep.subr.mxu0 0.0
    %6021 = vmatpush1.msra.mxu0 0.0
    %6022 = vmatprep.subr.mxu0 0.0
    %6023 = vmatpush1.msra.mxu0 0.0
    %6024 = vmatprep.subr.mxu0 0.0
    %6025 = vmatpush1.msra.mxu0 0.0
    %6026 = vmatprep.subr.mxu0 0.0
    %6027 = vmatpush1.msra.mxu0 0.0
    %6028 = vmatprep.subr.mxu0 0.0
    %6029 = vmatpush1.msra.mxu0 0.0
    %6030 = vmatprep.subr.mxu0 0.0
    %6031 = vmatpush1.msra.mxu0 0.0
    %6032 = vmatprep.subr.mxu0 0.0
    %6033 = vmatpush1.msra.mxu0 0.0
    %6034 = vmatprep.subr.mxu0 0.0
    %6035 = vmatpush1.msra.mxu0 0.0
    %6036 = vmatprep.subr.mxu0 0.0
    %6037 = vmatpush1.msra.mxu0 0.0
    %6038 = vmatprep.subr.mxu0 0.0
    %6039 = vmatpush1.msra.mxu0 0.0
    %6040 = vmatprep.subr.mxu0 0.0
    %6041 = vmatpush1.msra.mxu0 0.0
    %6042 = vmatprep.subr.mxu0 0.0
    %6043 = vmatpush1.msra.mxu0 0.0
    %6044 = vmatprep.subr.mxu0 0.0
    %6045 = vmatpush1.msra.mxu0 0.0
    %6046 = vmatprep.subr.mxu0 0.0
    %6047 = vmatpush1.msra.mxu0 0.0
    %6048 = vmatprep.subr.mxu0 0.0
    %6049 = vmatpush1.msra.mxu0 0.0
    %6050 = vmatprep.subr.mxu0 0.0
    %6051 = vmatpush1.msra.mxu0 0.0
    %6052 = vmatprep.mubr.f32.mxu0 0.0
    %6053 = vmatmul.mubr.f32.gmra.mrb[0].mxu0 %v5984
    %v6054 = vpop.f32.mrb[0].mxu0
    %v6055 = vadd.f32 0.0, %v6054
    %v6056 = vpop.f32.mrb[0].mxu0
    %6057 = vmatprep.mubr.f32.mxu0 0.0
    %6058 = vmatmul.mubr.f32.gmra.mrb[0].mxu0 %v5986
    %v6059 = vpop.f32.mrb[0].mxu0
    %v6060 = vadd.f32 0.0, %v6059
    %v6061 = vpop.f32.mrb[0].mxu0
    %6062 = vdwg.mxu0
    %v6063 = vadd.f32 %v5976, %v6055
    %v6064 = vadd.f32 %v5977, %v6060
    %v6065 = vlaneseq
    %v6066 = vshrl.u32 %v6065, 7
    %v6067 = vsub.s32 0, %v6066
    %v6068 = vrot.slane %v5354, %v6067
    %v6069 = vadd.f32 %v6063, %v6068
    %v6070 = vadd.f32 %v6064, %v6068
    %v6071 = vadd.f32 %v5258, %v6069
    %v6072 = vadd.f32 %v5259, %v6070
    %v6073 = vld [vmem:[#allocation6 + $0x8b] sm:$0x1]
    %v6074 = vld [vmem:[#allocation6 + $0x8c] sm:$0x1]
    %v6075 = vsel %vm199, %v6071, 0.0
    %6076 = vadd.xlane.f32.xlu0 %v6075
    %v6077 = vpop.xlane.xlu0 %6076
    %v6078 = vsel %vm199, %v6072, 0.0
    %6079 = vadd.xlane.f32.xlu0 %v6078
    %v6080 = vpop.xlane.xlu0 %6079
    %v6081 = vmul.f32 %v6077, %v1010
    %v6082 = vmul.f32 %v6080, %v1010
    %v6083 = vmul.f32 %v6071, %v6071
    %v6084 = vmul.f32 %v6072, %v6072
    %v6085 = vsel %vm199, %v6083, 0.0
    %6086 = vadd.xlane.f32.xlu0 %v6085
    %v6087 = vpop.xlane.xlu0 %6086
    %v6088 = vsel %vm199, %v6084, 0.0
    %6089 = vadd.xlane.f32.xlu0 %v6088
    %v6090 = vpop.xlane.xlu0 %6089
    %v6091 = vmul.f32 %v6087, %v1010
    %v6092 = vmul.f32 %v6090, %v1010
    %v6093 = vsub.f32 %v6071, %v6081
    %v6094 = vsub.f32 %v6072, %v6082
    %v6095 = vmul.f32 %v6081, %v6081
    %v6096 = vmul.f32 %v6082, %v6082
    %v6097 = vsub.f32 %v6091, %v6095
    %v6098 = vsub.f32 %v6092, %v6096
    %v6099 = vadd.f32 %v6097, 1e-05
    %v6100 = vadd.f32 %v6098, 1e-05
    %v6101 = vrsqrt.pop %v6099
    %v6102 = vrsqrt.pop %v6100
    %v6103 = vmul.f32 %v6093, %v6101
    %v6104 = vmul.f32 %v6094, %v6102
    %v6105 = vlaneseq
    %v6106 = vshrl.u32 %v6105, 7
    %v6107 = vsub.s32 0, %v6106
    %v6108 = vrot.slane %v6073, %v6107
    %v6109 = vmul.f32 %v6103, %v6108
    %v6110 = vmul.f32 %v6104, %v6108
    %v6111 = vlaneseq
    %v6112 = vshrl.u32 %v6111, 7
    %v6113 = vsub.s32 0, %v6112
    %v6114 = vrot.slane %v6074, %v6113
    %v6115 = vadd.f32 %v6109, %v6114
    %v6116 = vadd.f32 %v6110, %v6114
    %v6117 = vld [vmem:[#allocation4 + $0x2c8] sm:$0xff]
    %v6118 = vld [vmem:[#allocation4 + $0x2d0] sm:$0xff]
    %v6119 = vld [vmem:[#allocation4 + $0x2d8] sm:$0xff]
    %v6120 = vld [vmem:[#allocation4 + $0x2e0] sm:$0xff]
    %v6121 = vld [vmem:[#allocation6 + $0x87] sm:$0x1]
    %v6122 = vld [vmem:[#allocation4 + $0x2e8] sm:$0xff]
    %v6123 = vld [vmem:[#allocation4 + $0x2f0] sm:$0xff]
    %v6124 = vld [vmem:[#allocation4 + $0x2f8] sm:$0xff]
    %v6125 = vld [vmem:[#allocation4 + $0x300] sm:$0xff]
    %v6126 = vld [vmem:[#allocation4 + $0x308] sm:$0xff]
    %v6127 = vld [vmem:[#allocation4 + $0x310] sm:$0xff]
    %v6128 = vld [vmem:[#allocation4 + $0x318] sm:$0xff]
    %v6129 = vld [vmem:[#allocation4 + $0x320] sm:$0xff]
    %v6130 = vld [vmem:[#allocation6 + $0x88] sm:$0x1]
    %v6131 = vlaneseq
    %v6132 = vshrl.u32 %v6131, 7
    %v6133 = vsub.s32 0, %v6132
    %v6134 = vrot.slane %v6121, %v6133
    %v6136 = vsel %vm199, %v6115, 0
    %v6139 = vsel %vm199, %v6116, 0
    %6141 = vmatprep.subr.mxu0 0.0
    %6142 = vmatpush1.msra.mxu0 %v6117
    %6143 = vmatprep.subr.mxu0 0.0
    %6144 = vmatpush1.msra.mxu0 %v6118
    %6145 = vmatprep.subr.mxu0 0.0
    %6146 = vmatpush1.msra.mxu0 %v6119
    %6147 = vmatprep.subr.mxu0 0.0
    %6148 = vmatpush1.msra.mxu0 %v6120
    %6149 = vmatprep.subr.mxu0 0.0
    %6150 = vmatpush1.msra.mxu0 0.0
    %6151 = vmatprep.subr.mxu0 0.0
    %6152 = vmatpush1.msra.mxu0 0.0
    %6153 = vmatprep.subr.mxu0 0.0
    %6154 = vmatpush1.msra.mxu0 0.0
    %6155 = vmatprep.subr.mxu0 0.0
    %6156 = vmatpush1.msra.mxu0 0.0
    %6157 = vmatprep.subr.mxu0 0.0
    %6158 = vmatpush1.msra.mxu0 0.0
    %6159 = vmatprep.subr.mxu0 0.0
    %6160 = vmatpush1.msra.mxu0 0.0
    %6161 = vmatprep.subr.mxu0 0.0
    %6162 = vmatpush1.msra.mxu0 0.0
    %6163 = vmatprep.subr.mxu0 0.0
    %6164 = vmatpush1.msra.mxu0 0.0
    %6165 = vmatprep.subr.mxu0 0.0
    %6166 = vmatpush1.msra.mxu0 0.0
    %6167 = vmatprep.subr.mxu0 0.0
    %6168 = vmatpush1.msra.mxu0 0.0
    %6169 = vmatprep.subr.mxu0 0.0
    %6170 = vmatpush1.msra.mxu0 0.0
    %6171 = vmatprep.subr.mxu0 0.0
    %6172 = vmatpush1.msra.mxu0 0.0
    %6173 = vmatprep.subr.mxu0 0.0
    %6174 = vmatpush1.msra.mxu0 0.0
    %6175 = vmatprep.subr.mxu0 0.0
    %6176 = vmatpush1.msra.mxu0 0.0
    %6177 = vmatprep.subr.mxu0 0.0
    %6178 = vmatpush1.msra.mxu0 0.0
    %6179 = vmatprep.subr.mxu0 0.0
    %6180 = vmatpush1.msra.mxu0 0.0
    %6181 = vmatprep.subr.mxu0 0.0
    %6182 = vmatpush1.msra.mxu0 0.0
    %6183 = vmatprep.subr.mxu0 0.0
    %6184 = vmatpush1.msra.mxu0 0.0
    %6185 = vmatprep.subr.mxu0 0.0
    %6186 = vmatpush1.msra.mxu0 0.0
    %6187 = vmatprep.subr.mxu0 0.0
    %6188 = vmatpush1.msra.mxu0 0.0
    %6189 = vmatprep.subr.mxu0 0.0
    %6190 = vmatpush1.msra.mxu0 0.0
    %6191 = vmatprep.subr.mxu0 0.0
    %6192 = vmatpush1.msra.mxu0 0.0
    %6193 = vmatprep.subr.mxu0 0.0
    %6194 = vmatpush1.msra.mxu0 0.0
    %6195 = vmatprep.subr.mxu0 0.0
    %6196 = vmatpush1.msra.mxu0 0.0
    %6197 = vmatprep.subr.mxu0 0.0
    %6198 = vmatpush1.msra.mxu0 0.0
    %6199 = vmatprep.subr.mxu0 0.0
    %6200 = vmatpush1.msra.mxu0 0.0
    %6201 = vmatprep.subr.mxu0 0.0
    %6202 = vmatpush1.msra.mxu0 0.0
    %6203 = vmatprep.subr.mxu0 0.0
    %6204 = vmatpush1.msra.mxu0 0.0
    %6205 = vmatprep.mubr.f32.mxu0 0.0
    %6206 = vmatmul.mubr.f32.gmra.mrb[0].mxu0 %v6136
    %v6207 = vpop.f32.mrb[0].mxu0
    %v6208 = vadd.f32 %v6134, %v6207
    %v6209 = vpop.f32.mrb[0].mxu0
    %6210 = vmatprep.mubr.f32.mxu0 0.0
    %6211 = vmatmul.mubr.f32.gmra.mrb[0].mxu0 %v6139
    %v6212 = vpop.f32.mrb[0].mxu0
    %v6213 = vadd.f32 %v6134, %v6212
    %v6214 = vpop.f32.mrb[0].mxu0
    %6215 = vdwg.mxu0
    %v6216 = vmax.f32 %v6208, 0.0
    %v6217 = vmax.f32 %v6213, 0.0
    %v6218 = vlaneseq
    %v6219 = vshrl.u32 %v6218, 7
    %v6220 = vsub.s32 0, %v6219
    %v6221 = vrot.slane %v6130, %v6220
    %v6223 = vsel %vm1152, %v6216, 0
    %v6226 = vsel %vm1152, %v6217, 0
    %6228 = vmatprep.subr.mxu0 0.0
    %6229 = vmatpush1.msra.mxu0 %v6122
    %6230 = vmatprep.subr.mxu0 0.0
    %6231 = vmatpush1.msra.mxu0 %v6123
    %6232 = vmatprep.subr.mxu0 0.0
    %6233 = vmatpush1.msra.mxu0 %v6124
    %6234 = vmatprep.subr.mxu0 0.0
    %6235 = vmatpush1.msra.mxu0 %v6125
    %6236 = vmatprep.subr.mxu0 0.0
    %6237 = vmatpush1.msra.mxu0 %v6126
    %6238 = vmatprep.subr.mxu0 0.0
    %6239 = vmatpush1.msra.mxu0 %v6127
    %6240 = vmatprep.subr.mxu0 0.0
    %6241 = vmatpush1.msra.mxu0 %v6128
    %6242 = vmatprep.subr.mxu0 0.0
    %6243 = vmatpush1.msra.mxu0 %v6129
    %6244 = vmatprep.subr.mxu0 0.0
    %6245 = vmatpush1.msra.mxu0 0.0
    %6246 = vmatprep.subr.mxu0 0.0
    %6247 = vmatpush1.msra.mxu0 0.0
    %6248 = vmatprep.subr.mxu0 0.0
    %6249 = vmatpush1.msra.mxu0 0.0
    %6250 = vmatprep.subr.mxu0 0.0
    %6251 = vmatpush1.msra.mxu0 0.0
    %6252 = vmatprep.subr.mxu0 0.0
    %6253 = vmatpush1.msra.mxu0 0.0
    %6254 = vmatprep.subr.mxu0 0.0
    %6255 = vmatpush1.msra.mxu0 0.0
    %6256 = vmatprep.subr.mxu0 0.0
    %6257 = vmatpush1.msra.mxu0 0.0
    %6258 = vmatprep.subr.mxu0 0.0
    %6259 = vmatpush1.msra.mxu0 0.0
    %6260 = vmatprep.subr.mxu0 0.0
    %6261 = vmatpush1.msra.mxu0 0.0
    %6262 = vmatprep.subr.mxu0 0.0
    %6263 = vmatpush1.msra.mxu0 0.0
    %6264 = vmatprep.subr.mxu0 0.0
    %6265 = vmatpush1.msra.mxu0 0.0
    %6266 = vmatprep.subr.mxu0 0.0
    %6267 = vmatpush1.msra.mxu0 0.0
    %6268 = vmatprep.subr.mxu0 0.0
    %6269 = vmatpush1.msra.mxu0 0.0
    %6270 = vmatprep.subr.mxu0 0.0
    %6271 = vmatpush1.msra.mxu0 0.0
    %6272 = vmatprep.subr.mxu0 0.0
    %6273 = vmatpush1.msra.mxu0 0.0
    %6274 = vmatprep.subr.mxu0 0.0
    %6275 = vmatpush1.msra.mxu0 0.0
    %6276 = vmatprep.subr.mxu0 0.0
    %6277 = vmatpush1.msra.mxu0 0.0
    %6278 = vmatprep.subr.mxu0 0.0
    %6279 = vmatpush1.msra.mxu0 0.0
    %6280 = vmatprep.subr.mxu0 0.0
    %6281 = vmatpush1.msra.mxu0 0.0
    %6282 = vmatprep.subr.mxu0 0.0
    %6283 = vmatpush1.msra.mxu0 0.0
    %6284 = vmatprep.subr.mxu0 0.0
    %6285 = vmatpush1.msra.mxu0 0.0
    %6286 = vmatprep.subr.mxu0 0.0
    %6287 = vmatpush1.msra.mxu0 0.0
    %6288 = vmatprep.subr.mxu0 0.0
    %6289 = vmatpush1.msra.mxu0 0.0
    %6290 = vmatprep.subr.mxu0 0.0
    %6291 = vmatpush1.msra.mxu0 0.0
    %6292 = vmatprep.mubr.f32.mxu0 0.0
    %6293 = vmatmul.mubr.f32.gmra.mrb[0].mxu0 %v6223
    %v6294 = vpop.f32.mrb[0].mxu0
    %v6295 = vadd.f32 %v6221, %v6294
    %v6296 = vpop.f32.mrb[0].mxu0
    %6297 = vmatprep.mubr.f32.mxu0 0.0
    %6298 = vmatmul.mubr.f32.gmra.mrb[0].mxu0 %v6226
    %v6299 = vpop.f32.mrb[0].mxu0
    %v6300 = vadd.f32 %v6221, %v6299
    %v6301 = vpop.f32.mrb[0].mxu0
    %6302 = vdwg.mxu0
    %v6303 = vadd.f32 %v6115, %v6295
    %v6304 = vadd.f32 %v6116, %v6300
    %v6305 = vld [vmem:[#allocation6 + $0x8d] sm:$0x1]
    %v6306 = vld [vmem:[#allocation6 + $0x8e] sm:$0x1]
    %v6307 = vsel %vm199, %v6303, 0.0
    %6308 = vadd.xlane.f32.xlu0 %v6307
    %v6309 = vpop.xlane.xlu0 %6308
    %v6310 = vsel %vm199, %v6304, 0.0
    %6311 = vadd.xlane.f32.xlu0 %v6310
    %v6312 = vpop.xlane.xlu0 %6311
    %v6313 = vmul.f32 %v6309, %v1010
    %v6314 = vmul.f32 %v6312, %v1010
    %v6315 = vmul.f32 %v6303, %v6303
    %v6316 = vmul.f32 %v6304, %v6304
    %v6317 = vsel %vm199, %v6315, 0.0
    %6318 = vadd.xlane.f32.xlu0 %v6317
    %v6319 = vpop.xlane.xlu0 %6318
    %v6320 = vsel %vm199, %v6316, 0.0
    %6321 = vadd.xlane.f32.xlu0 %v6320
    %v6322 = vpop.xlane.xlu0 %6321
    %v6323 = vmul.f32 %v6319, %v1010
    %v6324 = vmul.f32 %v6322, %v1010
    %v6325 = vsub.f32 %v6303, %v6313
    %v6326 = vsub.f32 %v6304, %v6314
    %v6327 = vmul.f32 %v6313, %v6313
    %v6328 = vmul.f32 %v6314, %v6314
    %v6329 = vsub.f32 %v6323, %v6327
    %v6330 = vsub.f32 %v6324, %v6328
    %v6331 = vadd.f32 %v6329, 1e-05
    %v6332 = vadd.f32 %v6330, 1e-05
    %v6333 = vrsqrt.pop %v6331
    %v6334 = vrsqrt.pop %v6332
    %v6335 = vmul.f32 %v6325, %v6333
    %v6336 = vmul.f32 %v6326, %v6334
    %v6337 = vlaneseq
    %v6338 = vshrl.u32 %v6337, 7
    %v6339 = vsub.s32 0, %v6338
    %v6340 = vrot.slane %v6305, %v6339
    %v6341 = vmul.f32 %v6335, %v6340
    %v6342 = vmul.f32 %v6336, %v6340
    %v6343 = vlaneseq
    %v6344 = vshrl.u32 %v6343, 7
    %v6345 = vsub.s32 0, %v6344
    %v6346 = vrot.slane %v6306, %v6345
    %v6347 = vadd.f32 %v6341, %v6346
    %v6348 = vadd.f32 %v6342, %v6346
    %v6350 = vsel %vm430, %v80, 0
    %6352 = vmatprep.subr.mxu0 0.0
    %6353 = vmatpush1.msra.mxu0 %v6347
    %6354 = vmatprep.subr.mxu0 0.0
    %6355 = vmatpush1.msra.mxu0 %v6348
    %6356 = vmatprep.subr.mxu0 0.0
    %6357 = vmatpush1.msra.mxu0 0.0
    %6358 = vmatprep.subr.mxu0 0.0
    %6359 = vmatpush1.msra.mxu0 0.0
    %6360 = vmatprep.subr.mxu0 0.0
    %6361 = vmatpush1.msra.mxu0 0.0
    %6362 = vmatprep.subr.mxu0 0.0
    %6363 = vmatpush1.msra.mxu0 0.0
    %6364 = vmatprep.subr.mxu0 0.0
    %6365 = vmatpush1.msra.mxu0 0.0
    %6366 = vmatprep.subr.mxu0 0.0
    %6367 = vmatpush1.msra.mxu0 0.0
    %6368 = vmatprep.subr.mxu0 0.0
    %6369 = vmatpush1.msra.mxu0 0.0
    %6370 = vmatprep.subr.mxu0 0.0
    %6371 = vmatpush1.msra.mxu0 0.0
    %6372 = vmatprep.subr.mxu0 0.0
    %6373 = vmatpush1.msra.mxu0 0.0
    %6374 = vmatprep.subr.mxu0 0.0
    %6375 = vmatpush1.msra.mxu0 0.0
    %6376 = vmatprep.subr.mxu0 0.0
    %6377 = vmatpush1.msra.mxu0 0.0
    %6378 = vmatprep.subr.mxu0 0.0
    %6379 = vmatpush1.msra.mxu0 0.0
    %6380 = vmatprep.subr.mxu0 0.0
    %6381 = vmatpush1.msra.mxu0 0.0
    %6382 = vmatprep.subr.mxu0 0.0
    %6383 = vmatpush1.msra.mxu0 0.0
    %6384 = vmatprep.subr.mxu0 0.0
    %6385 = vmatpush1.msra.mxu0 0.0
    %6386 = vmatprep.subr.mxu0 0.0
    %6387 = vmatpush1.msra.mxu0 0.0
    %6388 = vmatprep.subr.mxu0 0.0
    %6389 = vmatpush1.msra.mxu0 0.0
    %6390 = vmatprep.subr.mxu0 0.0
    %6391 = vmatpush1.msra.mxu0 0.0
    %6392 = vmatprep.subr.mxu0 0.0
    %6393 = vmatpush1.msra.mxu0 0.0
    %6394 = vmatprep.subr.mxu0 0.0
    %6395 = vmatpush1.msra.mxu0 0.0
    %6396 = vmatprep.subr.mxu0 0.0
    %6397 = vmatpush1.msra.mxu0 0.0
    %6398 = vmatprep.subr.mxu0 0.0
    %6399 = vmatpush1.msra.mxu0 0.0
    %6400 = vmatprep.subr.mxu0 0.0
    %6401 = vmatpush1.msra.mxu0 0.0
    %6402 = vmatprep.subr.mxu0 0.0
    %6403 = vmatpush1.msra.mxu0 0.0
    %6404 = vmatprep.subr.mxu0 0.0
    %6405 = vmatpush1.msra.mxu0 0.0
    %6406 = vmatprep.subr.mxu0 0.0
    %6407 = vmatpush1.msra.mxu0 0.0
    %6408 = vmatprep.subr.mxu0 0.0
    %6409 = vmatpush1.msra.mxu0 0.0
    %6410 = vmatprep.subr.mxu0 0.0
    %6411 = vmatpush1.msra.mxu0 0.0
    %6412 = vmatprep.subr.mxu0 0.0
    %6413 = vmatpush1.msra.mxu0 0.0
    %6414 = vmatprep.subr.mxu0 0.0
    %6415 = vmatpush1.msra.mxu0 0.0
    %6416 = vmatprep.mubr.f32.mxu0 0.0
    %6417 = vmatmul.mubr.f32.gmra.mrb[0].mxu0 %v6350
    %v6418 = vpop.f32.mrb[0].mxu0
    %v6419 = vadd.f32 0.0, %v6418
    %v6420 = vpop.f32.mrb[0].mxu0
    %6421 = vdwg.mxu0
    %v6422 = vld [vmem:[#allocation6 + $0x64] sm:$0x1]
    %v6423 = vlaneseq
    %v6424 = vshrl.u32 %v6423, 7
    %v6425 = vsub.s32 0, %v6424
    %v6426 = vrot.slane %v6422, %v6425
    %v6427 = vmul.f32 %v6419, %v6426
    %vm6428 = vcmask 254976
    %v6429 = vsel %vm6428, %v6427, 0.0
    %6430 = vadd.xlane.f32.xlu0 %v6429
    %v6431 = vpop.xlane.xlu0 %6430
    %v6432 = vld [vmem:[#allocation6 + $0x65] sm:$0x1]
    %v6433 = vlaneseq
    %v6434 = vshrl.u32 %v6433, 7
    %v6435 = vsub.s32 0, %v6434
    %v6436 = vrot.slane %v6432, %v6435
    %v6437 = vadd.f32 %v6431, %v6436
    %vm6438 = vcmask 1024
    %6439 = vst.msk [vmem:[%s4] sm:$0x3] %vm6438, %v6437
    // Predicated region
    $region34: #{transformer_forward.1} parent=1 // pred_check
      _
    $region35: #{transformer_forward.1} parent=1 // pred_check_branch
      %6441 = sbr.rel (0) target = $region37
    $region36: #{transformer_forward.1} parent=1 // pred_region
      _
    $region37: #{transformer_forward.1} parent=1 // pred_fallthru
      _
    // Predicated region
    $region38: #{transformer_forward.1} parent=1 // pred_check
      _
    $region39: #{transformer_forward.1} parent=1 // pred_check_branch
      %6443 = sbr.rel (0) target = $region41
    $region40: #{transformer_forward.1} parent=1 // pred_region
      _
    $region41: #{transformer_forward.1} parent=1 // pred_fallthru
      _
    %6444 = vsyncpa [#allocation3], 1
    %6445 = vsyncpa [#allocation5], 1
    %6446 = vsyncpa [#allocation8], 1

</llo_original>
